<compile_context>
chip_gen: v5e
topology: v5e:2x2
jax: 0.10.0
libtpu: 0.0.40
codegen_flags: <defaults>
</compile_context>

<pallas_src>
import functools

import numpy as np

import jax
import jax.numpy as jnp
from jax import lax
from jax.experimental import pallas as pl
from jax.experimental.pallas import tpu as pltpu


def _round_up(x, m):
    return (x + m - 1) // m * m


def _cdiv(a, b):
    return -(-a // b)


# ----------------------------------------------------------------------------
# Fused network kernel: conv1 -> relu -> conv2 -> relu -> fc1 -> relu -> fc2.
# Processes one batch tile of `tb` samples.  Row layout inside the kernel is
# (spatial_row, sample), so every y-tap of both convs and every fc1 row block
# is a contiguous row slice.
# ----------------------------------------------------------------------------
def _fused_net_kernel(xe_ref, xo_ref, wr1_ref, wr2_ref, b1_ref, b2_ref,
                      fc1w_ref, fc1b_ref, fc2w_ref, fc2b_ref, o_ref, *, tb):
    def mm(a, b):                                   # MXU matmul, f32 accumulate
        return jnp.dot(a, b, preferred_element_type=jnp.float32)

    xe = xe_ref[...]                                # (11*tb, 1344) rows=(yb even, sample)
    xo = xo_ref[...]                                # (10*tb, 1344) rows=(yb odd , sample)
    w0 = wr1_ref[0]                                 # (1344, 320) conv1 tap yb+0
    w1 = wr1_ref[1]                                 # (1344, 320) conv1 tap yb+1

    # conv1 (2x2 stride-1 in space-to-depth coords), weights-first so the
    # y-tap combination below is just contiguous row slices.
    ye0 = mm(xe, w0)                                # S2[2r]   @ W0
    ye1 = mm(xe, w1)                                # S2[2r]   @ W1
    yo0 = mm(xo, w0)                                # S2[2r+1] @ W0
    yo1 = mm(xo, w1)                                # S2[2r+1] @ W1

    b1 = b1_ref[...]                                # (1, 320)
    # H1[2r]   = relu(S2[2r]@W0   + S2[2r+1]@W1 + b1),   r in [0,10)
    # H1[2r+1] = relu(S2[2r+1]@W0 + S2[2r+2]@W1 + b1)
    h1e = jnp.maximum(ye0[:10 * tb, :] + yo1 + b1, 0.0).astype(jnp.bfloat16)
    h1o = jnp.maximum(yo0 + ye1[tb:, :] + b1, 0.0).astype(jnp.bfloat16)

    # conv2 (stride-2 in y handled by the even/odd split above -> contiguous).
    z0 = mm(h1e, wr2_ref[0])                        # H1[2r]   @ WR2_0
    z1 = mm(h1o, wr2_ref[1])                        # H1[2r+1] @ WR2_1
    z2 = mm(h1e, wr2_ref[2])                        # H1[2r]   @ WR2_2
    z3 = mm(h1o, wr2_ref[3])                        # H1[2r+1] @ WR2_3

    b2 = b2_ref[...]                                # (1, 288)
    # H2[oy] = relu(H1[2oy]@W0 + H1[2oy+1]@W1 + H1[2oy+2]@W2 + H1[2oy+3]@W3 + b2)
    h2 = jnp.maximum(
        z0[:9 * tb, :] + z1[:9 * tb, :] + z2[tb:, :] + z3[tb:, :] + b2,
        0.0).astype(jnp.bfloat16)                   # (9*tb, 288) rows=(oy, sample)

    # fc1: contract over (oy, ox, cout) as 9 contiguous row-block matmuls.
    acc = jnp.zeros((tb, 256), jnp.float32)
    for oy in range(9):
        acc = acc + mm(h2[oy * tb:(oy + 1) * tb, :], fc1w_ref[oy])
    h3 = jnp.maximum(acc + fc1b_ref[...], 0.0).astype(jnp.bfloat16)   # (tb, 256)

    # fc2 (output lanes pre-padded to a multiple of 128 -> lane-dense store).
    out = mm(h3, fc2w_ref[...]) + fc2b_ref[...]
    o_ref[...] = out.astype(o_ref.dtype)


# ----------------------------------------------------------------------------
# Batch tiling (balanced tiles, no 28%-padding blowup) + input layout prep.
# ----------------------------------------------------------------------------
def _choose_tiling(batch, tb_max=32):
    """-> (grid_b, tb, padded_batch); tb is a multiple of 16 when grid_b > 1."""
    if batch <= tb_max:
        return 1, batch, batch
    best = None
    for tb in (32, 16):
        g = _cdiv(batch, tb)
        bp = g * tb
        if best is None or bp < best[2]:
            best = (g, tb, bp)
    return best


def _prepare_input(x_nchw, grid_b, tb):
    """(Bp,4,84,84) f32 -> even/odd space-to-depth slabs, rows=(tile, yb, sample).

    Pure index permutation + bf16 cast; left to XLA (single copy per output).
    """
    bp = x_nchw.shape[0]
    x = jnp.transpose(x_nchw, (0, 2, 3, 1))                 # NHWC (Bp,84,84,4)
    x = x.reshape(bp, 21, 4, 21, 4, 4)                      # (b, yb, dy, xb, dx, c)
    x = jnp.transpose(x, (0, 1, 3, 2, 4, 5))                # (b, yb, xb, dy, dx, c)
    x = x.reshape(bp, 21, 1344).astype(jnp.bfloat16)        # lanes = (xb, dy, dx, c)
    xe = x[:, 0::2, :]                                      # (Bp, 11, 1344) even yb
    xo = x[:, 1::2, :]                                      # (Bp, 10, 1344) odd  yb
    xe = (xe.reshape(grid_b, tb, 11, 1344).transpose(0, 2, 1, 3)
            .reshape(grid_b * 11 * tb, 1344))
    xo = (xo.reshape(grid_b, tb, 10, 1344).transpose(0, 2, 1, 3)
            .reshape(grid_b * 10 * tb, 1344))
    return xe, xo


# ----------------------------------------------------------------------------
# Forward pass (matches network.forward)
# ----------------------------------------------------------------------------
def forward(packed, x_nchw, *, actionspace, tb_max=32):
    """x_nchw: (B, 4, 84, 84) f32 -> (B, actionspace) f32."""
    batch = x_nchw.shape[0]
    grid_b, tb, bp = _choose_tiling(batch, tb_max)
    if bp != batch:
        x_nchw = jnp.pad(x_nchw, ((0, bp - batch), (0, 0), (0, 0), (0, 0)))
    xe, xo = _prepare_input(x_nchw, grid_b, tb)
    npad = packed["fc2w"].shape[1]

    weight_bytes = sum(
        int(np.prod(packed[k].shape)) * packed[k].dtype.itemsize
        for k in ("wr1", "wr2", "b1", "b2", "fc1w", "fc1b", "fc2w", "fc2b"))
    flops = bp * (2 * 42 * 1344 * 320 + 2 * 40 * 320 * 288
                  + 2 * 9 * 288 * 256 + 2 * 256 * npad)
    bytes_accessed = (int(xe.size) + int(xo.size)) * 2 + weight_bytes + bp * npad * 4

    out = pl.pallas_call(
        functools.partial(_fused_net_kernel, tb=tb),
        out_shape=jax.ShapeDtypeStruct((bp, npad), jnp.float32),
        grid=(grid_b,),
        in_specs=[
            pl.BlockSpec((11 * tb, 1344), lambda i: (i, 0)),    # xe (batch-tiled, pipelined)
            pl.BlockSpec((10 * tb, 1344), lambda i: (i, 0)),    # xo (batch-tiled, pipelined)
            pl.BlockSpec((2, 1344, 320), lambda i: (0, 0, 0)),  # conv1 packed weights (resident)
            pl.BlockSpec((4, 320, 288), lambda i: (0, 0, 0)),   # conv2 packed weights (resident)
            pl.BlockSpec((1, 320), lambda i: (0, 0)),           # conv1 bias
            pl.BlockSpec((1, 288), lambda i: (0, 0)),           # conv2 bias
            pl.BlockSpec((9, 288, 256), lambda i: (0, 0, 0)),   # fc1 weights (resident)
            pl.BlockSpec((1, 256), lambda i: (0, 0)),           # fc1 bias
            pl.BlockSpec((256, npad), lambda i: (0, 0)),        # fc2 weights (resident)
            pl.BlockSpec((1, npad), lambda i: (0, 0)),          # fc2 bias
        ],
        out_specs=pl.BlockSpec((tb, npad), lambda i: (i, 0)),
        compiler_params=pltpu.CompilerParams(
            dimension_semantics=("parallel",),                  # megacore over batch tiles
            vmem_limit_bytes=32 * 1024 * 1024,                  # fits v7x's 64 MiB/TC
        ),
        cost_estimate=pl.CostEstimate(
            flops=flops, transcendentals=0, bytes_accessed=bytes_accessed),
    )(xe, xo, packed["wr1"], packed["wr2"], packed["b1"], packed["b2"],
      packed["fc1w"], packed["fc1b"], packed["fc2w"], packed["fc2b"])
    return out[:batch, :actionspace]


# ----------------------------------------------------------------------------
# Parameters: PyTorch-layout init, then one-time packing for the fused kernel.
# ----------------------------------------------------------------------------
def init_params(key, actionspace):
    def uni(k, shape, fan_in):
        bound = 1.0 / jnp.sqrt(float(fan_in))
        return jax.random.uniform(k, shape, jnp.float32, -bound, bound)

    ks = jax.random.split(key, 8)
    return {
        "conv1_w": uni(ks[0], (16, 4, 8, 8), 4 * 8 * 8),
        "conv1_b": uni(ks[1], (16,), 4 * 8 * 8),
        "conv2_w": uni(ks[2], (32, 16, 4, 4), 16 * 4 * 4),
        "conv2_b": uni(ks[3], (32,), 16 * 4 * 4),
        "fc1_w": uni(ks[4], (256, 9 * 9 * 32), 9 * 9 * 32),   # torch (out, in)
        "fc1_b": uni(ks[5], (256,), 9 * 9 * 32),
        "fc2_w": uni(ks[6], (actionspace, 256), 256),
        "fc2_b": uni(ks[7], (actionspace,), 256),
    }


def pack_params(p, actionspace):
    """One-time packing of all weights into the fused kernel's matmul layouts.

    conv1 (after input space-to-depth by 4, lanes = (xb, dy, dx, c)):
      WR1[i][(xb,dy,dx,c), (ox,m)] = W1[m, c, 4*i+dy, 4*(xb-ox)+dx]  (xb-ox in {0,1})
    conv2 (H1 lanes = (x, cout1)):
      WR2[j][(x,c), (ox,m)]        = W2[m, c, j, x-2*ox]             (x-2*ox in [0,4))
    fc1 is split into 9 per-output-row blocks; fc2 is padded to 128 lanes.
    """
    n2 = _round_up(actionspace, 128)

    w1 = np.asarray(p["conv1_w"], np.float32)            # (16, 4, 8, 8) (m, c, ky, kx)
    w1t = np.transpose(w1, (2, 3, 1, 0))                 # (ky, kx, c, m)
    wr1 = np.zeros((2, 21, 4, 4, 4, 20, 16), np.float32)
    for i in range(2):
        for a in range(2):
            for ox in range(20):
                wr1[i, ox + a, :, :, :, ox, :] = w1t[4 * i:4 * i + 4, 4 * a:4 * a + 4, :, :]
    wr1 = wr1.reshape(2, 1344, 320)

    w2 = np.asarray(p["conv2_w"], np.float32)            # (32, 16, 4, 4) (m, c, ky, kx)
    w2t = np.transpose(w2, (2, 3, 1, 0))                 # (ky, kx, c, m)
    wr2 = np.zeros((4, 20, 16, 9, 32), np.float32)
    for ky in range(4):
        for kx in range(4):
            for ox in range(9):
                wr2[ky, 2 * ox + kx, :, ox, :] = w2t[ky, kx, :, :]
    wr2 = wr2.reshape(4, 320, 288)

    fc1 = np.asarray(p["fc1_w"], np.float32).reshape(256, 32, 9, 9)   # (out, c, y, x)
    fc1 = np.transpose(fc1, (2, 3, 1, 0)).reshape(9, 288, 256)        # (y, (x, c), out)

    fc2 = np.asarray(p["fc2_w"], np.float32).T                        # (256, A)
    fc2 = np.pad(fc2, ((0, 0), (0, n2 - actionspace)))

    return {
        "wr1": jnp.asarray(wr1, jnp.bfloat16),
        "wr2": jnp.asarray(wr2, jnp.bfloat16),
        "b1": jnp.asarray(np.tile(np.asarray(p["conv1_b"], np.float32), 20)).reshape(1, 320),
        "b2": jnp.asarray(np.tile(np.asarray(p["conv2_b"], np.float32), 9)).reshape(1, 288),
        "fc1w": jnp.asarray(fc1, jnp.bfloat16),
        "fc1b": jnp.asarray(p["fc1_b"], jnp.float32).reshape(1, 256),
        "fc2w": jnp.asarray(fc2, jnp.bfloat16),
        "fc2b": jnp.asarray(
            np.pad(np.asarray(p["fc2_b"], np.float32), (0, n2 - actionspace))).reshape(1, n2),
    }


# ----------------------------------------------------------------------------
# Pure-XLA reference (same bf16-in / f32-accumulate precision path)
# ----------------------------------------------------------------------------
def reference_forward(p, x_nchw):
    dn = ("NCHW", "OIHW", "NCHW")
    h = lax.conv_general_dilated(
        x_nchw.astype(jnp.bfloat16), p["conv1_w"].astype(jnp.bfloat16),
        (4, 4), "VALID", dimension_numbers=dn,
        preferred_element_type=jnp.float32)
    h = jnp.maximum(h + p["conv1_b"][None, :, None, None], 0.0).astype(jnp.bfloat16)
    h = lax.conv_general_dilated(
        h, p["conv2_w"].astype(jnp.bfloat16),
        (2, 2), "VALID", dimension_numbers=dn,
        preferred_element_type=jnp.float32)
    h = jnp.maximum(h + p["conv2_b"][None, :, None, None], 0.0)
    h = h.reshape(h.shape[0], -1).astype(jnp.bfloat16)              # NCHW flatten
    h = jnp.maximum(
        jnp.dot(h, p["fc1_w"].T.astype(jnp.bfloat16),
                preferred_element_type=jnp.float32) + p["fc1_b"], 0.0)
    return jnp.dot(h.astype(jnp.bfloat16), p["fc2_w"].T.astype(jnp.bfloat16),
                   preferred_element_type=jnp.float32) + p["fc2_b"]


if __name__ == "__main__":
    actionspace = 4
    key = jax.random.PRNGKey(0)
    k_params, k_input = jax.random.split(key)

    torch_params = init_params(k_params, actionspace)
    packed = pack_params(torch_params, actionspace)      # one-time weight packing

    # 84x84 spatial is implied by the module (fc expects 9*9*32 features).
    x = jax.random.uniform(k_input, (2, 4, 84, 84), jnp.float32)

    fwd = jax.jit(functools.partial(forward, actionspace=actionspace))
    out = jax.block_until_ready(fwd(packed, x))

    assert out.shape == (2, actionspace), out.shape
    assert out.dtype == jnp.float32

    ref = jax.block_until_ready(jax.jit(reference_forward)(torch_params, x))
    assert bool(jnp.allclose(out, ref, rtol=1e-2, atol=1e-2)), (
        float(jnp.max(jnp.abs(out - ref))))

    print("KERNEL_OK")
</pallas_src>

<mosaic_0001>
module attributes {stable_mosaic.version = 11 : i64} {
  func.func @_fused_net_kernel(%arg0: i32, %arg1: memref<22x1344xbf16, #tpu.memory_space<vmem>>, %arg2: memref<20x1344xbf16, #tpu.memory_space<vmem>>, %arg3: memref<2x1344x320xbf16, #tpu.memory_space<vmem>>, %arg4: memref<4x320x288xbf16, #tpu.memory_space<vmem>>, %arg5: memref<1x320xf32, #tpu.memory_space<vmem>>, %arg6: memref<1x288xf32, #tpu.memory_space<vmem>>, %arg7: memref<9x288x256xbf16, #tpu.memory_space<vmem>>, %arg8: memref<1x256xf32, #tpu.memory_space<vmem>>, %arg9: memref<256x128xbf16, #tpu.memory_space<vmem>>, %arg10: memref<1x128xf32, #tpu.memory_space<vmem>>, %arg11: memref<2x128xf32, #tpu.memory_space<vmem>>) attributes {dimension_semantics = [#tpu.dimension_semantics<parallel>], iteration_bounds = array<i64: 1>, scalar_prefetch = 0 : i64, scratch_operands = 0 : i64, tpu.core_type = #tpu.core_type<tc>, window_params = [{transform_indices = @transform_0, window_bounds = array<i64: 22, 1344>}, {transform_indices = @transform_1, window_bounds = array<i64: 20, 1344>}, {pipeline_mode = #tpu.pipeline_mode<synchronous>, transform_indices = @transform_2, window_bounds = array<i64: 2, 1344, 320>}, {pipeline_mode = #tpu.pipeline_mode<synchronous>, transform_indices = @transform_3, window_bounds = array<i64: 4, 320, 288>}, {pipeline_mode = #tpu.pipeline_mode<synchronous>, transform_indices = @transform_4, window_bounds = array<i64: 1, 320>}, {pipeline_mode = #tpu.pipeline_mode<synchronous>, transform_indices = @transform_5, window_bounds = array<i64: 1, 288>}, {pipeline_mode = #tpu.pipeline_mode<synchronous>, transform_indices = @transform_6, window_bounds = array<i64: 9, 288, 256>}, {pipeline_mode = #tpu.pipeline_mode<synchronous>, transform_indices = @transform_7, window_bounds = array<i64: 1, 256>}, {pipeline_mode = #tpu.pipeline_mode<synchronous>, transform_indices = @transform_8, window_bounds = array<i64: 256, 128>}, {pipeline_mode = #tpu.pipeline_mode<synchronous>, transform_indices = @transform_9, window_bounds = array<i64: 1, 128>}, {transform_indices = @transform_10, window_bounds = array<i64: 2, 128>}]} {
    %c0 = arith.constant 0 : index
    %c0_0 = arith.constant 0 : index
    %0 = vector.load %arg1[%c0, %c0_0] : memref<22x1344xbf16, #tpu.memory_space<vmem>>, vector<22x1344xbf16>
    %c0_1 = arith.constant 0 : index
    %c0_2 = arith.constant 0 : index
    %1 = vector.load %arg2[%c0_1, %c0_2] : memref<20x1344xbf16, #tpu.memory_space<vmem>>, vector<20x1344xbf16>
    %c0_3 = arith.constant 0 : index
    %c0_4 = arith.constant 0 : index
    %c0_5 = arith.constant 0 : index
    %2 = vector.load %arg3[%c0_3, %c0_4, %c0_5] : memref<2x1344x320xbf16, #tpu.memory_space<vmem>>, vector<1x1344x320xbf16>
    %3 = vector.shape_cast %2 : vector<1x1344x320xbf16> to vector<1344x320xbf16>
    %c1 = arith.constant 1 : index
    %c0_6 = arith.constant 0 : index
    %c0_7 = arith.constant 0 : index
    %4 = vector.load %arg3[%c1, %c0_6, %c0_7] : memref<2x1344x320xbf16, #tpu.memory_space<vmem>>, vector<1x1344x320xbf16>
    %5 = vector.shape_cast %4 : vector<1x1344x320xbf16> to vector<1344x320xbf16>
    %cst = arith.constant dense<0.000000e+00> : vector<22x320xf32>
    %6 = tpu.matmul %0, %3, %cst {dimension_numbers = #tpu.dot_dimension_numbers<[1], [0], [0], [1], [0, 0, 1, 1], [], []>} : vector<22x1344xbf16>, vector<1344x320xbf16>, vector<22x320xf32> -> vector<22x320xf32>
    %cst_8 = arith.constant dense<0.000000e+00> : vector<22x320xf32>
    %7 = tpu.matmul %0, %5, %cst_8 {dimension_numbers = #tpu.dot_dimension_numbers<[1], [0], [0], [1], [0, 0, 1, 1], [], []>} : vector<22x1344xbf16>, vector<1344x320xbf16>, vector<22x320xf32> -> vector<22x320xf32>
    %cst_9 = arith.constant dense<0.000000e+00> : vector<20x320xf32>
    %8 = tpu.matmul %1, %3, %cst_9 {dimension_numbers = #tpu.dot_dimension_numbers<[1], [0], [0], [1], [0, 0, 1, 1], [], []>} : vector<20x1344xbf16>, vector<1344x320xbf16>, vector<20x320xf32> -> vector<20x320xf32>
    %cst_10 = arith.constant dense<0.000000e+00> : vector<20x320xf32>
    %9 = tpu.matmul %1, %5, %cst_10 {dimension_numbers = #tpu.dot_dimension_numbers<[1], [0], [0], [1], [0, 0, 1, 1], [], []>} : vector<20x1344xbf16>, vector<1344x320xbf16>, vector<20x320xf32> -> vector<20x320xf32>
    %c0_11 = arith.constant 0 : index
    %c0_12 = arith.constant 0 : index
    %10 = vector.load %arg5[%c0_11, %c0_12] : memref<1x320xf32, #tpu.memory_space<vmem>>, vector<1x320xf32>
    %11 = vector.extract_strided_slice %6 {offsets = [0, 0], sizes = [20, 320], strides = [1, 1]} : vector<22x320xf32> to vector<20x320xf32>
    %12 = arith.addf %11, %9 : vector<20x320xf32>
    %13 = vector.broadcast %10 : vector<1x320xf32> to vector<20x320xf32>
    %14 = arith.addf %12, %13 : vector<20x320xf32>
    %cst_13 = arith.constant 0.000000e+00 : f32
    %15 = vector.broadcast %cst_13 : f32 to vector<20x320xf32>
    %16 = arith.maximumf %14, %15 : vector<20x320xf32>
    %17 = arith.truncf %16 : vector<20x320xf32> to vector<20x320xbf16>
    %18 = vector.extract_strided_slice %7 {offsets = [2, 0], sizes = [20, 320], strides = [1, 1]} : vector<22x320xf32> to vector<20x320xf32>
    %19 = arith.addf %8, %18 : vector<20x320xf32>
    %20 = vector.broadcast %10 : vector<1x320xf32> to vector<20x320xf32>
    %21 = arith.addf %19, %20 : vector<20x320xf32>
    %cst_14 = arith.constant 0.000000e+00 : f32
    %22 = vector.broadcast %cst_14 : f32 to vector<20x320xf32>
    %23 = arith.maximumf %21, %22 : vector<20x320xf32>
    %24 = arith.truncf %23 : vector<20x320xf32> to vector<20x320xbf16>
    %c0_15 = arith.constant 0 : index
    %c0_16 = arith.constant 0 : index
    %c0_17 = arith.constant 0 : index
    %25 = vector.load %arg4[%c0_15, %c0_16, %c0_17] : memref<4x320x288xbf16, #tpu.memory_space<vmem>>, vector<1x320x288xbf16>
    %26 = vector.shape_cast %25 : vector<1x320x288xbf16> to vector<320x288xbf16>
    %cst_18 = arith.constant dense<0.000000e+00> : vector<20x288xf32>
    %27 = tpu.matmul %17, %26, %cst_18 {dimension_numbers = #tpu.dot_dimension_numbers<[1], [0], [0], [1], [0, 0, 1, 1], [], []>} : vector<20x320xbf16>, vector<320x288xbf16>, vector<20x288xf32> -> vector<20x288xf32>
    %c1_19 = arith.constant 1 : index
    %c0_20 = arith.constant 0 : index
    %c0_21 = arith.constant 0 : index
    %28 = vector.load %arg4[%c1_19, %c0_20, %c0_21] : memref<4x320x288xbf16, #tpu.memory_space<vmem>>, vector<1x320x288xbf16>
    %29 = vector.shape_cast %28 : vector<1x320x288xbf16> to vector<320x288xbf16>
    %cst_22 = arith.constant dense<0.000000e+00> : vector<20x288xf32>
    %30 = tpu.matmul %24, %29, %cst_22 {dimension_numbers = #tpu.dot_dimension_numbers<[1], [0], [0], [1], [0, 0, 1, 1], [], []>} : vector<20x320xbf16>, vector<320x288xbf16>, vector<20x288xf32> -> vector<20x288xf32>
    %c2 = arith.constant 2 : index
    %c0_23 = arith.constant 0 : index
    %c0_24 = arith.constant 0 : index
    %31 = vector.load %arg4[%c2, %c0_23, %c0_24] : memref<4x320x288xbf16, #tpu.memory_space<vmem>>, vector<1x320x288xbf16>
    %32 = vector.shape_cast %31 : vector<1x320x288xbf16> to vector<320x288xbf16>
    %cst_25 = arith.constant dense<0.000000e+00> : vector<20x288xf32>
    %33 = tpu.matmul %17, %32, %cst_25 {dimension_numbers = #tpu.dot_dimension_numbers<[1], [0], [0], [1], [0, 0, 1, 1], [], []>} : vector<20x320xbf16>, vector<320x288xbf16>, vector<20x288xf32> -> vector<20x288xf32>
    %c3 = arith.constant 3 : index
    %c0_26 = arith.constant 0 : index
    %c0_27 = arith.constant 0 : index
    %34 = vector.load %arg4[%c3, %c0_26, %c0_27] : memref<4x320x288xbf16, #tpu.memory_space<vmem>>, vector<1x320x288xbf16>
    %35 = vector.shape_cast %34 : vector<1x320x288xbf16> to vector<320x288xbf16>
    %cst_28 = arith.constant dense<0.000000e+00> : vector<20x288xf32>
    %36 = tpu.matmul %24, %35, %cst_28 {dimension_numbers = #tpu.dot_dimension_numbers<[1], [0], [0], [1], [0, 0, 1, 1], [], []>} : vector<20x320xbf16>, vector<320x288xbf16>, vector<20x288xf32> -> vector<20x288xf32>
    %c0_29 = arith.constant 0 : index
    %c0_30 = arith.constant 0 : index
    %37 = vector.load %arg6[%c0_29, %c0_30] : memref<1x288xf32, #tpu.memory_space<vmem>>, vector<1x288xf32>
    %38 = vector.extract_strided_slice %27 {offsets = [0, 0], sizes = [18, 288], strides = [1, 1]} : vector<20x288xf32> to vector<18x288xf32>
    %39 = vector.extract_strided_slice %30 {offsets = [0, 0], sizes = [18, 288], strides = [1, 1]} : vector<20x288xf32> to vector<18x288xf32>
    %40 = arith.addf %38, %39 : vector<18x288xf32>
    %41 = vector.extract_strided_slice %33 {offsets = [2, 0], sizes = [18, 288], strides = [1, 1]} : vector<20x288xf32> to vector<18x288xf32>
    %42 = arith.addf %40, %41 : vector<18x288xf32>
    %43 = vector.extract_strided_slice %36 {offsets = [2, 0], sizes = [18, 288], strides = [1, 1]} : vector<20x288xf32> to vector<18x288xf32>
    %44 = arith.addf %42, %43 : vector<18x288xf32>
    %45 = vector.broadcast %37 : vector<1x288xf32> to vector<18x288xf32>
    %46 = arith.addf %44, %45 : vector<18x288xf32>
    %cst_31 = arith.constant 0.000000e+00 : f32
    %47 = vector.broadcast %cst_31 : f32 to vector<18x288xf32>
    %48 = arith.maximumf %46, %47 : vector<18x288xf32>
    %49 = arith.truncf %48 : vector<18x288xf32> to vector<18x288xbf16>
    %cst_32 = arith.constant 0.000000e+00 : f32
    %50 = vector.broadcast %cst_32 : f32 to vector<2x256xf32>
    %51 = vector.extract_strided_slice %49 {offsets = [0, 0], sizes = [2, 288], strides = [1, 1]} : vector<18x288xbf16> to vector<2x288xbf16>
    %c0_33 = arith.constant 0 : index
    %c0_34 = arith.constant 0 : index
    %c0_35 = arith.constant 0 : index
    %52 = vector.load %arg7[%c0_33, %c0_34, %c0_35] : memref<9x288x256xbf16, #tpu.memory_space<vmem>>, vector<1x288x256xbf16>
    %53 = vector.shape_cast %52 : vector<1x288x256xbf16> to vector<288x256xbf16>
    %cst_36 = arith.constant dense<0.000000e+00> : vector<2x256xf32>
    %54 = tpu.matmul %51, %53, %cst_36 {dimension_numbers = #tpu.dot_dimension_numbers<[1], [0], [0], [1], [0, 0, 1, 1], [], []>} : vector<2x288xbf16>, vector<288x256xbf16>, vector<2x256xf32> -> vector<2x256xf32>
    %55 = arith.addf %50, %54 : vector<2x256xf32>
    %56 = vector.extract_strided_slice %49 {offsets = [2, 0], sizes = [2, 288], strides = [1, 1]} : vector<18x288xbf16> to vector<2x288xbf16>
    %c1_37 = arith.constant 1 : index
    %c0_38 = arith.constant 0 : index
    %c0_39 = arith.constant 0 : index
    %57 = vector.load %arg7[%c1_37, %c0_38, %c0_39] : memref<9x288x256xbf16, #tpu.memory_space<vmem>>, vector<1x288x256xbf16>
    %58 = vector.shape_cast %57 : vector<1x288x256xbf16> to vector<288x256xbf16>
    %cst_40 = arith.constant dense<0.000000e+00> : vector<2x256xf32>
    %59 = tpu.matmul %56, %58, %cst_40 {dimension_numbers = #tpu.dot_dimension_numbers<[1], [0], [0], [1], [0, 0, 1, 1], [], []>} : vector<2x288xbf16>, vector<288x256xbf16>, vector<2x256xf32> -> vector<2x256xf32>
    %60 = arith.addf %55, %59 : vector<2x256xf32>
    %61 = vector.extract_strided_slice %49 {offsets = [4, 0], sizes = [2, 288], strides = [1, 1]} : vector<18x288xbf16> to vector<2x288xbf16>
    %c2_41 = arith.constant 2 : index
    %c0_42 = arith.constant 0 : index
    %c0_43 = arith.constant 0 : index
    %62 = vector.load %arg7[%c2_41, %c0_42, %c0_43] : memref<9x288x256xbf16, #tpu.memory_space<vmem>>, vector<1x288x256xbf16>
    %63 = vector.shape_cast %62 : vector<1x288x256xbf16> to vector<288x256xbf16>
    %cst_44 = arith.constant dense<0.000000e+00> : vector<2x256xf32>
    %64 = tpu.matmul %61, %63, %cst_44 {dimension_numbers = #tpu.dot_dimension_numbers<[1], [0], [0], [1], [0, 0, 1, 1], [], []>} : vector<2x288xbf16>, vector<288x256xbf16>, vector<2x256xf32> -> vector<2x256xf32>
    %65 = arith.addf %60, %64 : vector<2x256xf32>
    %66 = vector.extract_strided_slice %49 {offsets = [6, 0], sizes = [2, 288], strides = [1, 1]} : vector<18x288xbf16> to vector<2x288xbf16>
    %c3_45 = arith.constant 3 : index
    %c0_46 = arith.constant 0 : index
    %c0_47 = arith.constant 0 : index
    %67 = vector.load %arg7[%c3_45, %c0_46, %c0_47] : memref<9x288x256xbf16, #tpu.memory_space<vmem>>, vector<1x288x256xbf16>
    %68 = vector.shape_cast %67 : vector<1x288x256xbf16> to vector<288x256xbf16>
    %cst_48 = arith.constant dense<0.000000e+00> : vector<2x256xf32>
    %69 = tpu.matmul %66, %68, %cst_48 {dimension_numbers = #tpu.dot_dimension_numbers<[1], [0], [0], [1], [0, 0, 1, 1], [], []>} : vector<2x288xbf16>, vector<288x256xbf16>, vector<2x256xf32> -> vector<2x256xf32>
    %70 = arith.addf %65, %69 : vector<2x256xf32>
    %71 = vector.extract_strided_slice %49 {offsets = [8, 0], sizes = [2, 288], strides = [1, 1]} : vector<18x288xbf16> to vector<2x288xbf16>
    %c4 = arith.constant 4 : index
    %c0_49 = arith.constant 0 : index
    %c0_50 = arith.constant 0 : index
    %72 = vector.load %arg7[%c4, %c0_49, %c0_50] : memref<9x288x256xbf16, #tpu.memory_space<vmem>>, vector<1x288x256xbf16>
    %73 = vector.shape_cast %72 : vector<1x288x256xbf16> to vector<288x256xbf16>
    %cst_51 = arith.constant dense<0.000000e+00> : vector<2x256xf32>
    %74 = tpu.matmul %71, %73, %cst_51 {dimension_numbers = #tpu.dot_dimension_numbers<[1], [0], [0], [1], [0, 0, 1, 1], [], []>} : vector<2x288xbf16>, vector<288x256xbf16>, vector<2x256xf32> -> vector<2x256xf32>
    %75 = arith.addf %70, %74 : vector<2x256xf32>
    %76 = vector.extract_strided_slice %49 {offsets = [10, 0], sizes = [2, 288], strides = [1, 1]} : vector<18x288xbf16> to vector<2x288xbf16>
    %c5 = arith.constant 5 : index
    %c0_52 = arith.constant 0 : index
    %c0_53 = arith.constant 0 : index
    %77 = vector.load %arg7[%c5, %c0_52, %c0_53] : memref<9x288x256xbf16, #tpu.memory_space<vmem>>, vector<1x288x256xbf16>
    %78 = vector.shape_cast %77 : vector<1x288x256xbf16> to vector<288x256xbf16>
    %cst_54 = arith.constant dense<0.000000e+00> : vector<2x256xf32>
    %79 = tpu.matmul %76, %78, %cst_54 {dimension_numbers = #tpu.dot_dimension_numbers<[1], [0], [0], [1], [0, 0, 1, 1], [], []>} : vector<2x288xbf16>, vector<288x256xbf16>, vector<2x256xf32> -> vector<2x256xf32>
    %80 = arith.addf %75, %79 : vector<2x256xf32>
    %81 = vector.extract_strided_slice %49 {offsets = [12, 0], sizes = [2, 288], strides = [1, 1]} : vector<18x288xbf16> to vector<2x288xbf16>
    %c6 = arith.constant 6 : index
    %c0_55 = arith.constant 0 : index
    %c0_56 = arith.constant 0 : index
    %82 = vector.load %arg7[%c6, %c0_55, %c0_56] : memref<9x288x256xbf16, #tpu.memory_space<vmem>>, vector<1x288x256xbf16>
    %83 = vector.shape_cast %82 : vector<1x288x256xbf16> to vector<288x256xbf16>
    %cst_57 = arith.constant dense<0.000000e+00> : vector<2x256xf32>
    %84 = tpu.matmul %81, %83, %cst_57 {dimension_numbers = #tpu.dot_dimension_numbers<[1], [0], [0], [1], [0, 0, 1, 1], [], []>} : vector<2x288xbf16>, vector<288x256xbf16>, vector<2x256xf32> -> vector<2x256xf32>
    %85 = arith.addf %80, %84 : vector<2x256xf32>
    %86 = vector.extract_strided_slice %49 {offsets = [14, 0], sizes = [2, 288], strides = [1, 1]} : vector<18x288xbf16> to vector<2x288xbf16>
    %c7 = arith.constant 7 : index
    %c0_58 = arith.constant 0 : index
    %c0_59 = arith.constant 0 : index
    %87 = vector.load %arg7[%c7, %c0_58, %c0_59] : memref<9x288x256xbf16, #tpu.memory_space<vmem>>, vector<1x288x256xbf16>
    %88 = vector.shape_cast %87 : vector<1x288x256xbf16> to vector<288x256xbf16>
    %cst_60 = arith.constant dense<0.000000e+00> : vector<2x256xf32>
    %89 = tpu.matmul %86, %88, %cst_60 {dimension_numbers = #tpu.dot_dimension_numbers<[1], [0], [0], [1], [0, 0, 1, 1], [], []>} : vector<2x288xbf16>, vector<288x256xbf16>, vector<2x256xf32> -> vector<2x256xf32>
    %90 = arith.addf %85, %89 : vector<2x256xf32>
    %91 = vector.extract_strided_slice %49 {offsets = [16, 0], sizes = [2, 288], strides = [1, 1]} : vector<18x288xbf16> to vector<2x288xbf16>
    %c8 = arith.constant 8 : index
    %c0_61 = arith.constant 0 : index
    %c0_62 = arith.constant 0 : index
    %92 = vector.load %arg7[%c8, %c0_61, %c0_62] : memref<9x288x256xbf16, #tpu.memory_space<vmem>>, vector<1x288x256xbf16>
    %93 = vector.shape_cast %92 : vector<1x288x256xbf16> to vector<288x256xbf16>
    %cst_63 = arith.constant dense<0.000000e+00> : vector<2x256xf32>
    %94 = tpu.matmul %91, %93, %cst_63 {dimension_numbers = #tpu.dot_dimension_numbers<[1], [0], [0], [1], [0, 0, 1, 1], [], []>} : vector<2x288xbf16>, vector<288x256xbf16>, vector<2x256xf32> -> vector<2x256xf32>
    %95 = arith.addf %90, %94 : vector<2x256xf32>
    %c0_64 = arith.constant 0 : index
    %c0_65 = arith.constant 0 : index
    %96 = vector.load %arg8[%c0_64, %c0_65] : memref<1x256xf32, #tpu.memory_space<vmem>>, vector<1x256xf32>
    %97 = vector.broadcast %96 : vector<1x256xf32> to vector<2x256xf32>
    %98 = arith.addf %95, %97 : vector<2x256xf32>
    %cst_66 = arith.constant 0.000000e+00 : f32
    %99 = vector.broadcast %cst_66 : f32 to vector<2x256xf32>
    %100 = arith.maximumf %98, %99 : vector<2x256xf32>
    %101 = arith.truncf %100 : vector<2x256xf32> to vector<2x256xbf16>
    %c0_67 = arith.constant 0 : index
    %c0_68 = arith.constant 0 : index
    %102 = vector.load %arg9[%c0_67, %c0_68] : memref<256x128xbf16, #tpu.memory_space<vmem>>, vector<256x128xbf16>
    %cst_69 = arith.constant dense<0.000000e+00> : vector<2x128xf32>
    %103 = tpu.matmul %101, %102, %cst_69 {dimension_numbers = #tpu.dot_dimension_numbers<[1], [0], [0], [1], [0, 0, 1, 1], [], []>} : vector<2x256xbf16>, vector<256x128xbf16>, vector<2x128xf32> -> vector<2x128xf32>
    %c0_70 = arith.constant 0 : index
    %c0_71 = arith.constant 0 : index
    %104 = vector.load %arg10[%c0_70, %c0_71] : memref<1x128xf32, #tpu.memory_space<vmem>>, vector<1x128xf32>
    %105 = vector.broadcast %104 : vector<1x128xf32> to vector<2x128xf32>
    %106 = arith.addf %103, %105 : vector<2x128xf32>
    %c0_72 = arith.constant 0 : index
    %c0_73 = arith.constant 0 : index
    %107 = vector.load %arg11[%c0_72, %c0_73] : memref<2x128xf32, #tpu.memory_space<vmem>>, vector<2x128xf32>
    tpu.vector_store %arg11[%c0_72, %c0_73], %106 {strides = array<i32>} : memref<2x128xf32, #tpu.memory_space<vmem>>, vector<2x128xf32>,
    return
  }
  func.func @transform_0(%arg0: i32) -> (i32, i32) {
    %c0_i32 = arith.constant 0 : i32
    %c0_i32_0 = arith.constant 0 : i32
    return %arg0, %c0_i32 : i32, i32
  }
  func.func @transform_1(%arg0: i32) -> (i32, i32) {
    %c0_i32 = arith.constant 0 : i32
    %c0_i32_0 = arith.constant 0 : i32
    return %arg0, %c0_i32 : i32, i32
  }
  func.func @transform_2(%arg0: i32) -> (i32, i32, i32) {
    %c0_i32 = arith.constant 0 : i32
    %c0_i32_0 = arith.constant 0 : i32
    %c0_i32_1 = arith.constant 0 : i32
    %c0_i32_2 = arith.constant 0 : i32
    return %c0_i32, %c0_i32_0, %c0_i32_1 : i32, i32, i32
  }
  func.func @transform_3(%arg0: i32) -> (i32, i32, i32) {
    %c0_i32 = arith.constant 0 : i32
    %c0_i32_0 = arith.constant 0 : i32
    %c0_i32_1 = arith.constant 0 : i32
    %c0_i32_2 = arith.constant 0 : i32
    return %c0_i32, %c0_i32_0, %c0_i32_1 : i32, i32, i32
  }
  func.func @transform_4(%arg0: i32) -> (i32, i32) {
    %c0_i32 = arith.constant 0 : i32
    %c0_i32_0 = arith.constant 0 : i32
    %c0_i32_1 = arith.constant 0 : i32
    return %c0_i32, %c0_i32_0 : i32, i32
  }
  func.func @transform_5(%arg0: i32) -> (i32, i32) {
    %c0_i32 = arith.constant 0 : i32
    %c0_i32_0 = arith.constant 0 : i32
    %c0_i32_1 = arith.constant 0 : i32
    return %c0_i32, %c0_i32_0 : i32, i32
  }
  func.func @transform_6(%arg0: i32) -> (i32, i32, i32) {
    %c0_i32 = arith.constant 0 : i32
    %c0_i32_0 = arith.constant 0 : i32
    %c0_i32_1 = arith.constant 0 : i32
    %c0_i32_2 = arith.constant 0 : i32
    return %c0_i32, %c0_i32_0, %c0_i32_1 : i32, i32, i32
  }
  func.func @transform_7(%arg0: i32) -> (i32, i32) {
    %c0_i32 = arith.constant 0 : i32
    %c0_i32_0 = arith.constant 0 : i32
    %c0_i32_1 = arith.constant 0 : i32
    return %c0_i32, %c0_i32_0 : i32, i32
  }
  func.func @transform_8(%arg0: i32) -> (i32, i32) {
    %c0_i32 = arith.constant 0 : i32
    %c0_i32_0 = arith.constant 0 : i32
    %c0_i32_1 = arith.constant 0 : i32
    return %c0_i32, %c0_i32_0 : i32, i32
  }
  func.func @transform_9(%arg0: i32) -> (i32, i32) {
    %c0_i32 = arith.constant 0 : i32
    %c0_i32_0 = arith.constant 0 : i32
    %c0_i32_1 = arith.constant 0 : i32
    return %c0_i32, %c0_i32_0 : i32, i32
  }
  func.func @transform_10(%arg0: i32) -> (i32, i32) {
    %c0_i32 = arith.constant 0 : i32
    %c0_i32_0 = arith.constant 0 : i32
    return %arg0, %c0_i32 : i32, i32
  }
}

</mosaic_0001>

<llo_original>
// kernel: forward.1
$region0: #{forward.1}
  #allocation0 [shape = 'u32[]', space=smem, size = 0x4, offset = 0x4, fixed_abs, tag = 'smem constant byte address 0x4 - core index']
  #allocation1 [shape = 'u32[72,128]{1,0:T(1,128)}', space=vmem, size = 0x9000, scoped, tag = 'internal scratch']
  %s0 = inlined_call_operand.vmem [shape: bf16[22,1344], index: 0, kind: input, shape index: {}]
  %s1 = inlined_call_operand.vmem [shape: bf16[20,1344], index: 1, kind: input, shape index: {}]
  %s2 = inlined_call_operand.vmem [shape: bf16[2,1344,320], index: 2, kind: input, shape index: {}]
  %s3 = inlined_call_operand.vmem [shape: bf16[4,320,288], index: 3, kind: input, shape index: {}]
  %s4 = inlined_call_operand.vmem [shape: f32[1,320], index: 4, kind: input, shape index: {}]
  %s5 = inlined_call_operand.vmem [shape: f32[1,288], index: 5, kind: input, shape index: {}]
  %s6 = inlined_call_operand.vmem [shape: bf16[9,288,256], index: 6, kind: input, shape index: {}]
  %s7 = inlined_call_operand.vmem [shape: f32[1,256], index: 7, kind: input, shape index: {}]
  %s8 = inlined_call_operand.vmem [shape: bf16[256,128], index: 8, kind: input, shape index: {}]
  %s9 = inlined_call_operand.vmem [shape: f32[1,128], index: 9, kind: input, shape index: {}]
  %s10 = inlined_call_operand.hbm [shape: f32[2,128], index: 10, kind: output, shape index: {}]
  %s11 = sld [smem:[#allocation0]]
  $region50: #{forward.1} parent=0
    _
  %s13 = ssub.s32 1, %s11
  %s14 = scalar_select 0, %s13, %s11
  $region1: #{forward.1} parent=0
    #allocation2 [shape = 'u8[1024]{0}', space=vmem, size = 0x400, scoped, tag = 'output window, operand 0, single buffered']
    #allocation3 [shape = 's32[1]{0}', space=sflag, size = 0x4, scoped, tag = 'scoped memory for forward.1']
    %15 = vsyncpa [#allocation3], 0
    // Predicated region
    $region2: #{forward.1} parent=1 // pred_check
      _
    $region3: #{forward.1} parent=1 // pred_check_branch
      %17 = sbr.rel (0) target = $region5
    $region4: #{forward.1} parent=1 // pred_region
      _
    $region5: #{forward.1} parent=1 // pred_fallthru
      _
    // Predicated region
    $region6: #{forward.1} parent=1 // pred_check
      _
    $region7: #{forward.1} parent=1 // pred_check_branch
      %19 = sbr.rel (0) target = $region9
    $region8: #{forward.1} parent=1 // pred_region
      _
    $region9: #{forward.1} parent=1 // pred_fallthru
      _
    // Predicated region
    $region10: #{forward.1} parent=1 // pred_check
      _
    $region11: #{forward.1} parent=1 // pred_check_branch
      %21 = sbr.rel (0) target = $region13
    $region12: #{forward.1} parent=1 // pred_region
      _
    $region13: #{forward.1} parent=1 // pred_fallthru
      _
    // Predicated region
    $region14: #{forward.1} parent=1 // pred_check
      _
    $region15: #{forward.1} parent=1 // pred_check_branch
      %23 = sbr.rel (0) target = $region17
    $region16: #{forward.1} parent=1 // pred_region
      _
    $region17: #{forward.1} parent=1 // pred_fallthru
      _
    // Predicated region
    $region18: #{forward.1} parent=1 // pred_check
      _
    $region19: #{forward.1} parent=1 // pred_check_branch
      %25 = sbr.rel (0) target = $region21
    $region20: #{forward.1} parent=1 // pred_region
      _
    $region21: #{forward.1} parent=1 // pred_fallthru
      _
    // Predicated region
    $region22: #{forward.1} parent=1 // pred_check
      _
    $region23: #{forward.1} parent=1 // pred_check_branch
      %27 = sbr.rel (0) target = $region25
    $region24: #{forward.1} parent=1 // pred_region
      _
    $region25: #{forward.1} parent=1 // pred_fallthru
      _
    // Predicated region
    $region26: #{forward.1} parent=1 // pred_check
      _
    $region27: #{forward.1} parent=1 // pred_check_branch
      %29 = sbr.rel (0) target = $region29
    $region28: #{forward.1} parent=1 // pred_region
      _
    $region29: #{forward.1} parent=1 // pred_fallthru
      _
    // Predicated region
    $region30: #{forward.1} parent=1 // pred_check
      _
    $region31: #{forward.1} parent=1 // pred_check_branch
      %31 = sbr.rel (0) target = $region33
    $region32: #{forward.1} parent=1 // pred_region
      _
    $region33: #{forward.1} parent=1 // pred_fallthru
      _
    // Predicated region
    $region34: #{forward.1} parent=1 // pred_check
      _
    $region35: #{forward.1} parent=1 // pred_check_branch
      %33 = sbr.rel (0) target = $region37
    $region36: #{forward.1} parent=1 // pred_region
      _
    $region37: #{forward.1} parent=1 // pred_fallthru
      _
    // Predicated region
    $region38: #{forward.1} parent=1 // pred_check
      _
    $region39: #{forward.1} parent=1 // pred_check_branch
      %35 = sbr.rel (0) target = $region41
    $region40: #{forward.1} parent=1 // pred_region
      _
    $region41: #{forward.1} parent=1 // pred_fallthru
      _
    %v37 = vld [vmem:[%s0] sm:$0xff]
    %v38 = vld [vmem:[%s0 + $0x8] sm:$0xff]
    %v39 = vld [vmem:[%s0 + $0x10] sm:$0xff]
    %v40 = vld [vmem:[%s0 + $0x18] sm:$0xff]
    %v41 = vld [vmem:[%s0 + $0x20] sm:$0xff]
    %v42 = vld [vmem:[%s0 + $0x28] sm:$0xf]
    %v43 = vld [vmem:[%s0 + $0x2c] sm:$0xff]
    %v44 = vld [vmem:[%s0 + $0x34] sm:$0xff]
    %v45 = vld [vmem:[%s0 + $0x3c] sm:$0xff]
    %v46 = vld [vmem:[%s0 + $0x44] sm:$0xff]
    %v47 = vld [vmem:[%s0 + $0x4c] sm:$0xff]
    %v48 = vld [vmem:[%s0 + $0x54] sm:$0xf]
    %v49 = vld [vmem:[%s0 + $0x58] sm:$0x77]
    %v50 = vld [vmem:[%s0 + $0x60] sm:$0x77]
    %v51 = vld [vmem:[%s0 + $0x68] sm:$0x77]
    %v52 = vld [vmem:[%s0 + $0x70] sm:$0x77]
    %v53 = vld [vmem:[%s0 + $0x78] sm:$0x77]
    %v54 = vld [vmem:[%s0 + $0x80] sm:$0x7]
    %v55 = vld [vmem:[%s1] sm:$0xff]
    %v56 = vld [vmem:[%s1 + $0x8] sm:$0xff]
    %v57 = vld [vmem:[%s1 + $0x10] sm:$0xff]
    %v58 = vld [vmem:[%s1 + $0x18] sm:$0xff]
    %v59 = vld [vmem:[%s1 + $0x20] sm:$0xff]
    %v60 = vld [vmem:[%s1 + $0x28] sm:$0xf]
    %v61 = vld [vmem:[%s1 + $0x2c] sm:$0xff]
    %v62 = vld [vmem:[%s1 + $0x34] sm:$0xff]
    %v63 = vld [vmem:[%s1 + $0x3c] sm:$0xff]
    %v64 = vld [vmem:[%s1 + $0x44] sm:$0xff]
    %v65 = vld [vmem:[%s1 + $0x4c] sm:$0xff]
    %v66 = vld [vmem:[%s1 + $0x54] sm:$0xf]
    %v67 = vld [vmem:[%s1 + $0x58] sm:$0x33]
    %v68 = vld [vmem:[%s1 + $0x60] sm:$0x33]
    %v69 = vld [vmem:[%s1 + $0x68] sm:$0x33]
    %v70 = vld [vmem:[%s1 + $0x70] sm:$0x33]
    %v71 = vld [vmem:[%s1 + $0x78] sm:$0x33]
    %v72 = vld [vmem:[%s1 + $0x80] sm:$0x3]
    %v73 = vld [vmem:[%s2] sm:$0xff]
    %v74 = vld [vmem:[%s2 + $0x8] sm:$0xf]
    %v75 = vld [vmem:[%s2 + $0xc] sm:$0xff]
    %v76 = vld [vmem:[%s2 + $0x14] sm:$0xf]
    %v77 = vld [vmem:[%s2 + $0x18] sm:$0xff]
    %v78 = vld [vmem:[%s2 + $0x20] sm:$0xf]
    %v79 = vld [vmem:[%s2 + $0x24] sm:$0xff]
    %v80 = vld [vmem:[%s2 + $0x2c] sm:$0xf]
    %v81 = vld [vmem:[%s2 + $0x30] sm:$0xff]
    %v82 = vld [vmem:[%s2 + $0x38] sm:$0xf]
    %v83 = vld [vmem:[%s2 + $0x3c] sm:$0xff]
    %v84 = vld [vmem:[%s2 + $0x44] sm:$0xf]
    %v85 = vld [vmem:[%s2 + $0x48] sm:$0xff]
    %v86 = vld [vmem:[%s2 + $0x50] sm:$0xf]
    %v87 = vld [vmem:[%s2 + $0x54] sm:$0xff]
    %v88 = vld [vmem:[%s2 + $0x5c] sm:$0xf]
    %v89 = vld [vmem:[%s2 + $0x60] sm:$0xff]
    %v90 = vld [vmem:[%s2 + $0x68] sm:$0xf]
    %v91 = vld [vmem:[%s2 + $0x6c] sm:$0xff]
    %v92 = vld [vmem:[%s2 + $0x74] sm:$0xf]
    %v93 = vld [vmem:[%s2 + $0x78] sm:$0xff]
    %v94 = vld [vmem:[%s2 + $0x80] sm:$0xf]
    %v95 = vld [vmem:[%s2 + $0x84] sm:$0xff]
    %v96 = vld [vmem:[%s2 + $0x8c] sm:$0xf]
    %v97 = vld [vmem:[%s2 + $0x90] sm:$0xff]
    %v98 = vld [vmem:[%s2 + $0x98] sm:$0xf]
    %v99 = vld [vmem:[%s2 + $0x9c] sm:$0xff]
    %v100 = vld [vmem:[%s2 + $0xa4] sm:$0xf]
    %v101 = vld [vmem:[%s2 + $0xa8] sm:$0xff]
    %v102 = vld [vmem:[%s2 + $0xb0] sm:$0xf]
    %v103 = vld [vmem:[%s2 + $0xb4] sm:$0xff]
    %v104 = vld [vmem:[%s2 + $0xbc] sm:$0xf]
    %v105 = vld [vmem:[%s2 + $0xc0] sm:$0xff]
    %v106 = vld [vmem:[%s2 + $0xc8] sm:$0xf]
    %v107 = vld [vmem:[%s2 + $0xcc] sm:$0xff]
    %v108 = vld [vmem:[%s2 + $0xd4] sm:$0xf]
    %v109 = vld [vmem:[%s2 + $0xd8] sm:$0xff]
    %v110 = vld [vmem:[%s2 + $0xe0] sm:$0xf]
    %v111 = vld [vmem:[%s2 + $0xe4] sm:$0xff]
    %v112 = vld [vmem:[%s2 + $0xec] sm:$0xf]
    %v113 = vld [vmem:[%s2 + $0xf0] sm:$0xff]
    %v114 = vld [vmem:[%s2 + $0xf8] sm:$0xf]
    %v115 = vld [vmem:[%s2 + $0xfc] sm:$0xff]
    %v116 = vld [vmem:[%s2 + $0x104] sm:$0xf]
    %v117 = vld [vmem:[%s2 + $0x108] sm:$0xff]
    %v118 = vld [vmem:[%s2 + $0x110] sm:$0xf]
    %v119 = vld [vmem:[%s2 + $0x114] sm:$0xff]
    %v120 = vld [vmem:[%s2 + $0x11c] sm:$0xf]
    %v121 = vld [vmem:[%s2 + $0x120] sm:$0xff]
    %v122 = vld [vmem:[%s2 + $0x128] sm:$0xf]
    %v123 = vld [vmem:[%s2 + $0x12c] sm:$0xff]
    %v124 = vld [vmem:[%s2 + $0x134] sm:$0xf]
    %v125 = vld [vmem:[%s2 + $0x138] sm:$0xff]
    %v126 = vld [vmem:[%s2 + $0x140] sm:$0xf]
    %v127 = vld [vmem:[%s2 + $0x144] sm:$0xff]
    %v128 = vld [vmem:[%s2 + $0x14c] sm:$0xf]
    %v129 = vld [vmem:[%s2 + $0x150] sm:$0xff]
    %v130 = vld [vmem:[%s2 + $0x158] sm:$0xf]
    %v131 = vld [vmem:[%s2 + $0x15c] sm:$0xff]
    %v132 = vld [vmem:[%s2 + $0x164] sm:$0xf]
    %v133 = vld [vmem:[%s2 + $0x168] sm:$0xff]
    %v134 = vld [vmem:[%s2 + $0x170] sm:$0xf]
    %v135 = vld [vmem:[%s2 + $0x174] sm:$0xff]
    %v136 = vld [vmem:[%s2 + $0x17c] sm:$0xf]
    %v137 = vld [vmem:[%s2 + $0x180] sm:$0xff]
    %v138 = vld [vmem:[%s2 + $0x188] sm:$0xf]
    %v139 = vld [vmem:[%s2 + $0x18c] sm:$0xff]
    %v140 = vld [vmem:[%s2 + $0x194] sm:$0xf]
    %v141 = vld [vmem:[%s2 + $0x198] sm:$0xff]
    %v142 = vld [vmem:[%s2 + $0x1a0] sm:$0xf]
    %v143 = vld [vmem:[%s2 + $0x1a4] sm:$0xff]
    %v144 = vld [vmem:[%s2 + $0x1ac] sm:$0xf]
    %v145 = vld [vmem:[%s2 + $0x1b0] sm:$0xff]
    %v146 = vld [vmem:[%s2 + $0x1b8] sm:$0xf]
    %v147 = vld [vmem:[%s2 + $0x1bc] sm:$0xff]
    %v148 = vld [vmem:[%s2 + $0x1c4] sm:$0xf]
    %v149 = vld [vmem:[%s2 + $0x1c8] sm:$0xff]
    %v150 = vld [vmem:[%s2 + $0x1d0] sm:$0xf]
    %v151 = vld [vmem:[%s2 + $0x1d4] sm:$0xff]
    %v152 = vld [vmem:[%s2 + $0x1dc] sm:$0xf]
    %v153 = vld [vmem:[%s2 + $0x1e0] sm:$0xff]
    %v154 = vld [vmem:[%s2 + $0x1e8] sm:$0xf]
    %v155 = vld [vmem:[%s2 + $0x1ec] sm:$0xff]
    %v156 = vld [vmem:[%s2 + $0x1f4] sm:$0xf]
    %v157 = vld [vmem:[%s2 + $0x1f8] sm:$0xff]
    %v158 = vld [vmem:[%s2 + $0x200] sm:$0xf]
    %v159 = vld [vmem:[%s2 + $0x204] sm:$0xff]
    %v160 = vld [vmem:[%s2 + $0x20c] sm:$0xf]
    %v161 = vld [vmem:[%s2 + $0x210] sm:$0xff]
    %v162 = vld [vmem:[%s2 + $0x218] sm:$0xf]
    %v163 = vld [vmem:[%s2 + $0x21c] sm:$0xff]
    %v164 = vld [vmem:[%s2 + $0x224] sm:$0xf]
    %v165 = vld [vmem:[%s2 + $0x228] sm:$0xff]
    %v166 = vld [vmem:[%s2 + $0x230] sm:$0xf]
    %v167 = vld [vmem:[%s2 + $0x234] sm:$0xff]
    %v168 = vld [vmem:[%s2 + $0x23c] sm:$0xf]
    %v169 = vld [vmem:[%s2 + $0x240] sm:$0xff]
    %v170 = vld [vmem:[%s2 + $0x248] sm:$0xf]
    %v171 = vld [vmem:[%s2 + $0x24c] sm:$0xff]
    %v172 = vld [vmem:[%s2 + $0x254] sm:$0xf]
    %v173 = vld [vmem:[%s2 + $0x258] sm:$0xff]
    %v174 = vld [vmem:[%s2 + $0x260] sm:$0xf]
    %v175 = vld [vmem:[%s2 + $0x264] sm:$0xff]
    %v176 = vld [vmem:[%s2 + $0x26c] sm:$0xf]
    %v177 = vld [vmem:[%s2 + $0x270] sm:$0xff]
    %v178 = vld [vmem:[%s2 + $0x278] sm:$0xf]
    %v179 = vld [vmem:[%s2 + $0x27c] sm:$0xff]
    %v180 = vld [vmem:[%s2 + $0x284] sm:$0xf]
    %v181 = vld [vmem:[%s2 + $0x288] sm:$0xff]
    %v182 = vld [vmem:[%s2 + $0x290] sm:$0xf]
    %v183 = vld [vmem:[%s2 + $0x294] sm:$0xff]
    %v184 = vld [vmem:[%s2 + $0x29c] sm:$0xf]
    %v185 = vld [vmem:[%s2 + $0x2a0] sm:$0xff]
    %v186 = vld [vmem:[%s2 + $0x2a8] sm:$0xf]
    %v187 = vld [vmem:[%s2 + $0x2ac] sm:$0xff]
    %v188 = vld [vmem:[%s2 + $0x2b4] sm:$0xf]
    %v189 = vld [vmem:[%s2 + $0x2b8] sm:$0xff]
    %v190 = vld [vmem:[%s2 + $0x2c0] sm:$0xf]
    %v191 = vld [vmem:[%s2 + $0x2c4] sm:$0xff]
    %v192 = vld [vmem:[%s2 + $0x2cc] sm:$0xf]
    %v193 = vld [vmem:[%s2 + $0x2d0] sm:$0xff]
    %v194 = vld [vmem:[%s2 + $0x2d8] sm:$0xf]
    %v195 = vld [vmem:[%s2 + $0x2dc] sm:$0xff]
    %v196 = vld [vmem:[%s2 + $0x2e4] sm:$0xf]
    %v197 = vld [vmem:[%s2 + $0x2e8] sm:$0xff]
    %v198 = vld [vmem:[%s2 + $0x2f0] sm:$0xf]
    %v199 = vld [vmem:[%s2 + $0x2f4] sm:$0xff]
    %v200 = vld [vmem:[%s2 + $0x2fc] sm:$0xf]
    %v201 = vld [vmem:[%s2 + $0x300] sm:$0xff]
    %v202 = vld [vmem:[%s2 + $0x308] sm:$0xf]
    %v203 = vld [vmem:[%s2 + $0x30c] sm:$0xff]
    %v204 = vld [vmem:[%s2 + $0x314] sm:$0xf]
    %v205 = vld [vmem:[%s2 + $0x318] sm:$0xff]
    %v206 = vld [vmem:[%s2 + $0x320] sm:$0xf]
    %v207 = vld [vmem:[%s2 + $0x324] sm:$0xff]
    %v208 = vld [vmem:[%s2 + $0x32c] sm:$0xf]
    %v209 = vld [vmem:[%s2 + $0x330] sm:$0xff]
    %v210 = vld [vmem:[%s2 + $0x338] sm:$0xf]
    %v211 = vld [vmem:[%s2 + $0x33c] sm:$0xff]
    %v212 = vld [vmem:[%s2 + $0x344] sm:$0xf]
    %v213 = vld [vmem:[%s2 + $0x348] sm:$0xff]
    %v214 = vld [vmem:[%s2 + $0x350] sm:$0xf]
    %v215 = vld [vmem:[%s2 + $0x354] sm:$0xff]
    %v216 = vld [vmem:[%s2 + $0x35c] sm:$0xf]
    %v217 = vld [vmem:[%s2 + $0x360] sm:$0xff]
    %v218 = vld [vmem:[%s2 + $0x368] sm:$0xf]
    %v219 = vld [vmem:[%s2 + $0x36c] sm:$0xff]
    %v220 = vld [vmem:[%s2 + $0x374] sm:$0xf]
    %v221 = vld [vmem:[%s2 + $0x378] sm:$0xff]
    %v222 = vld [vmem:[%s2 + $0x380] sm:$0xf]
    %v223 = vld [vmem:[%s2 + $0x384] sm:$0xff]
    %v224 = vld [vmem:[%s2 + $0x38c] sm:$0xf]
    %v225 = vld [vmem:[%s2 + $0x390] sm:$0xff]
    %v226 = vld [vmem:[%s2 + $0x398] sm:$0xf]
    %v227 = vld [vmem:[%s2 + $0x39c] sm:$0xff]
    %v228 = vld [vmem:[%s2 + $0x3a4] sm:$0xf]
    %v229 = vld [vmem:[%s2 + $0x3a8] sm:$0xff]
    %v230 = vld [vmem:[%s2 + $0x3b0] sm:$0xf]
    %v231 = vld [vmem:[%s2 + $0x3b4] sm:$0xff]
    %v232 = vld [vmem:[%s2 + $0x3bc] sm:$0xf]
    %v233 = vld [vmem:[%s2 + $0x3c0] sm:$0xff]
    %v234 = vld [vmem:[%s2 + $0x3c8] sm:$0xf]
    %v235 = vld [vmem:[%s2 + $0x3cc] sm:$0xff]
    %v236 = vld [vmem:[%s2 + $0x3d4] sm:$0xf]
    %v237 = vld [vmem:[%s2 + $0x3d8] sm:$0xff]
    %v238 = vld [vmem:[%s2 + $0x3e0] sm:$0xf]
    %v239 = vld [vmem:[%s2 + $0x3e4] sm:$0xff]
    %v240 = vld [vmem:[%s2 + $0x3ec] sm:$0xf]
    %v241 = vld [vmem:[%s2 + $0x3f0] sm:$0xff]
    %v242 = vld [vmem:[%s2 + $0x3f8] sm:$0xf]
    %v243 = vld [vmem:[%s2 + $0x3fc] sm:$0xff]
    %v244 = vld [vmem:[%s2 + $0x404] sm:$0xf]
    %v245 = vld [vmem:[%s2 + $0x408] sm:$0xff]
    %v246 = vld [vmem:[%s2 + $0x410] sm:$0xf]
    %v247 = vld [vmem:[%s2 + $0x414] sm:$0xff]
    %v248 = vld [vmem:[%s2 + $0x41c] sm:$0xf]
    %v249 = vld [vmem:[%s2 + $0x420] sm:$0xff]
    %v250 = vld [vmem:[%s2 + $0x428] sm:$0xf]
    %v251 = vld [vmem:[%s2 + $0x42c] sm:$0xff]
    %v252 = vld [vmem:[%s2 + $0x434] sm:$0xf]
    %v253 = vld [vmem:[%s2 + $0x438] sm:$0xff]
    %v254 = vld [vmem:[%s2 + $0x440] sm:$0xf]
    %v255 = vld [vmem:[%s2 + $0x444] sm:$0xff]
    %v256 = vld [vmem:[%s2 + $0x44c] sm:$0xf]
    %v257 = vld [vmem:[%s2 + $0x450] sm:$0xff]
    %v258 = vld [vmem:[%s2 + $0x458] sm:$0xf]
    %v259 = vld [vmem:[%s2 + $0x45c] sm:$0xff]
    %v260 = vld [vmem:[%s2 + $0x464] sm:$0xf]
    %v261 = vld [vmem:[%s2 + $0x468] sm:$0xff]
    %v262 = vld [vmem:[%s2 + $0x470] sm:$0xf]
    %v263 = vld [vmem:[%s2 + $0x474] sm:$0xff]
    %v264 = vld [vmem:[%s2 + $0x47c] sm:$0xf]
    %v265 = vld [vmem:[%s2 + $0x480] sm:$0xff]
    %v266 = vld [vmem:[%s2 + $0x488] sm:$0xf]
    %v267 = vld [vmem:[%s2 + $0x48c] sm:$0xff]
    %v268 = vld [vmem:[%s2 + $0x494] sm:$0xf]
    %v269 = vld [vmem:[%s2 + $0x498] sm:$0xff]
    %v270 = vld [vmem:[%s2 + $0x4a0] sm:$0xf]
    %v271 = vld [vmem:[%s2 + $0x4a4] sm:$0xff]
    %v272 = vld [vmem:[%s2 + $0x4ac] sm:$0xf]
    %v273 = vld [vmem:[%s2 + $0x4b0] sm:$0xff]
    %v274 = vld [vmem:[%s2 + $0x4b8] sm:$0xf]
    %v275 = vld [vmem:[%s2 + $0x4bc] sm:$0xff]
    %v276 = vld [vmem:[%s2 + $0x4c4] sm:$0xf]
    %v277 = vld [vmem:[%s2 + $0x4c8] sm:$0xff]
    %v278 = vld [vmem:[%s2 + $0x4d0] sm:$0xf]
    %v279 = vld [vmem:[%s2 + $0x4d4] sm:$0xff]
    %v280 = vld [vmem:[%s2 + $0x4dc] sm:$0xf]
    %v281 = vld [vmem:[%s2 + $0x4e0] sm:$0xff]
    %v282 = vld [vmem:[%s2 + $0x4e8] sm:$0xf]
    %v283 = vld [vmem:[%s2 + $0x4ec] sm:$0xff]
    %v284 = vld [vmem:[%s2 + $0x4f4] sm:$0xf]
    %v285 = vld [vmem:[%s2 + $0x4f8] sm:$0xff]
    %v286 = vld [vmem:[%s2 + $0x500] sm:$0xf]
    %v287 = vld [vmem:[%s2 + $0x504] sm:$0xff]
    %v288 = vld [vmem:[%s2 + $0x50c] sm:$0xf]
    %v289 = vld [vmem:[%s2 + $0x510] sm:$0xff]
    %v290 = vld [vmem:[%s2 + $0x518] sm:$0xf]
    %v291 = vld [vmem:[%s2 + $0x51c] sm:$0xff]
    %v292 = vld [vmem:[%s2 + $0x524] sm:$0xf]
    %v293 = vld [vmem:[%s2 + $0x528] sm:$0xff]
    %v294 = vld [vmem:[%s2 + $0x530] sm:$0xf]
    %v295 = vld [vmem:[%s2 + $0x534] sm:$0xff]
    %v296 = vld [vmem:[%s2 + $0x53c] sm:$0xf]
    %v297 = vld [vmem:[%s2 + $0x540] sm:$0xff]
    %v298 = vld [vmem:[%s2 + $0x548] sm:$0xf]
    %v299 = vld [vmem:[%s2 + $0x54c] sm:$0xff]
    %v300 = vld [vmem:[%s2 + $0x554] sm:$0xf]
    %v301 = vld [vmem:[%s2 + $0x558] sm:$0xff]
    %v302 = vld [vmem:[%s2 + $0x560] sm:$0xf]
    %v303 = vld [vmem:[%s2 + $0x564] sm:$0xff]
    %v304 = vld [vmem:[%s2 + $0x56c] sm:$0xf]
    %v305 = vld [vmem:[%s2 + $0x570] sm:$0xff]
    %v306 = vld [vmem:[%s2 + $0x578] sm:$0xf]
    %v307 = vld [vmem:[%s2 + $0x57c] sm:$0xff]
    %v308 = vld [vmem:[%s2 + $0x584] sm:$0xf]
    %v309 = vld [vmem:[%s2 + $0x588] sm:$0xff]
    %v310 = vld [vmem:[%s2 + $0x590] sm:$0xf]
    %v311 = vld [vmem:[%s2 + $0x594] sm:$0xff]
    %v312 = vld [vmem:[%s2 + $0x59c] sm:$0xf]
    %v313 = vld [vmem:[%s2 + $0x5a0] sm:$0xff]
    %v314 = vld [vmem:[%s2 + $0x5a8] sm:$0xf]
    %v315 = vld [vmem:[%s2 + $0x5ac] sm:$0xff]
    %v316 = vld [vmem:[%s2 + $0x5b4] sm:$0xf]
    %v317 = vld [vmem:[%s2 + $0x5b8] sm:$0xff]
    %v318 = vld [vmem:[%s2 + $0x5c0] sm:$0xf]
    %v319 = vld [vmem:[%s2 + $0x5c4] sm:$0xff]
    %v320 = vld [vmem:[%s2 + $0x5cc] sm:$0xf]
    %v321 = vld [vmem:[%s2 + $0x5d0] sm:$0xff]
    %v322 = vld [vmem:[%s2 + $0x5d8] sm:$0xf]
    %v323 = vld [vmem:[%s2 + $0x5dc] sm:$0xff]
    %v324 = vld [vmem:[%s2 + $0x5e4] sm:$0xf]
    %v325 = vld [vmem:[%s2 + $0x5e8] sm:$0xff]
    %v326 = vld [vmem:[%s2 + $0x5f0] sm:$0xf]
    %v327 = vld [vmem:[%s2 + $0x5f4] sm:$0xff]
    %v328 = vld [vmem:[%s2 + $0x5fc] sm:$0xf]
    %v329 = vld [vmem:[%s2 + $0x600] sm:$0xff]
    %v330 = vld [vmem:[%s2 + $0x608] sm:$0xf]
    %v331 = vld [vmem:[%s2 + $0x60c] sm:$0xff]
    %v332 = vld [vmem:[%s2 + $0x614] sm:$0xf]
    %v333 = vld [vmem:[%s2 + $0x618] sm:$0xff]
    %v334 = vld [vmem:[%s2 + $0x620] sm:$0xf]
    %v335 = vld [vmem:[%s2 + $0x624] sm:$0xff]
    %v336 = vld [vmem:[%s2 + $0x62c] sm:$0xf]
    %v337 = vld [vmem:[%s2 + $0x630] sm:$0xff]
    %v338 = vld [vmem:[%s2 + $0x638] sm:$0xf]
    %v339 = vld [vmem:[%s2 + $0x63c] sm:$0xff]
    %v340 = vld [vmem:[%s2 + $0x644] sm:$0xf]
    %v341 = vld [vmem:[%s2 + $0x648] sm:$0xff]
    %v342 = vld [vmem:[%s2 + $0x650] sm:$0xf]
    %v343 = vld [vmem:[%s2 + $0x654] sm:$0xff]
    %v344 = vld [vmem:[%s2 + $0x65c] sm:$0xf]
    %v345 = vld [vmem:[%s2 + $0x660] sm:$0xff]
    %v346 = vld [vmem:[%s2 + $0x668] sm:$0xf]
    %v347 = vld [vmem:[%s2 + $0x66c] sm:$0xff]
    %v348 = vld [vmem:[%s2 + $0x674] sm:$0xf]
    %v349 = vld [vmem:[%s2 + $0x678] sm:$0xff]
    %v350 = vld [vmem:[%s2 + $0x680] sm:$0xf]
    %v351 = vld [vmem:[%s2 + $0x684] sm:$0xff]
    %v352 = vld [vmem:[%s2 + $0x68c] sm:$0xf]
    %v353 = vld [vmem:[%s2 + $0x690] sm:$0xff]
    %v354 = vld [vmem:[%s2 + $0x698] sm:$0xf]
    %v355 = vld [vmem:[%s2 + $0x69c] sm:$0xff]
    %v356 = vld [vmem:[%s2 + $0x6a4] sm:$0xf]
    %v357 = vld [vmem:[%s2 + $0x6a8] sm:$0xff]
    %v358 = vld [vmem:[%s2 + $0x6b0] sm:$0xf]
    %v359 = vld [vmem:[%s2 + $0x6b4] sm:$0xff]
    %v360 = vld [vmem:[%s2 + $0x6bc] sm:$0xf]
    %v361 = vld [vmem:[%s2 + $0x6c0] sm:$0xff]
    %v362 = vld [vmem:[%s2 + $0x6c8] sm:$0xf]
    %v363 = vld [vmem:[%s2 + $0x6cc] sm:$0xff]
    %v364 = vld [vmem:[%s2 + $0x6d4] sm:$0xf]
    %v365 = vld [vmem:[%s2 + $0x6d8] sm:$0xff]
    %v366 = vld [vmem:[%s2 + $0x6e0] sm:$0xf]
    %v367 = vld [vmem:[%s2 + $0x6e4] sm:$0xff]
    %v368 = vld [vmem:[%s2 + $0x6ec] sm:$0xf]
    %v369 = vld [vmem:[%s2 + $0x6f0] sm:$0xff]
    %v370 = vld [vmem:[%s2 + $0x6f8] sm:$0xf]
    %v371 = vld [vmem:[%s2 + $0x6fc] sm:$0xff]
    %v372 = vld [vmem:[%s2 + $0x704] sm:$0xf]
    %v373 = vld [vmem:[%s2 + $0x708] sm:$0xff]
    %v374 = vld [vmem:[%s2 + $0x710] sm:$0xf]
    %v375 = vld [vmem:[%s2 + $0x714] sm:$0xff]
    %v376 = vld [vmem:[%s2 + $0x71c] sm:$0xf]
    %v377 = vld [vmem:[%s2 + $0x720] sm:$0xff]
    %v378 = vld [vmem:[%s2 + $0x728] sm:$0xf]
    %v379 = vld [vmem:[%s2 + $0x72c] sm:$0xff]
    %v380 = vld [vmem:[%s2 + $0x734] sm:$0xf]
    %v381 = vld [vmem:[%s2 + $0x738] sm:$0xff]
    %v382 = vld [vmem:[%s2 + $0x740] sm:$0xf]
    %v383 = vld [vmem:[%s2 + $0x744] sm:$0xff]
    %v384 = vld [vmem:[%s2 + $0x74c] sm:$0xf]
    %v385 = vld [vmem:[%s2 + $0x750] sm:$0xff]
    %v386 = vld [vmem:[%s2 + $0x758] sm:$0xf]
    %v387 = vld [vmem:[%s2 + $0x75c] sm:$0xff]
    %v388 = vld [vmem:[%s2 + $0x764] sm:$0xf]
    %v389 = vld [vmem:[%s2 + $0x768] sm:$0xff]
    %v390 = vld [vmem:[%s2 + $0x770] sm:$0xf]
    %v391 = vld [vmem:[%s2 + $0x774] sm:$0xff]
    %v392 = vld [vmem:[%s2 + $0x77c] sm:$0xf]
    %v393 = vld [vmem:[%s2 + $0x780] sm:$0xff]
    %v394 = vld [vmem:[%s2 + $0x788] sm:$0xf]
    %v395 = vld [vmem:[%s2 + $0x78c] sm:$0xff]
    %v396 = vld [vmem:[%s2 + $0x794] sm:$0xf]
    %v397 = vld [vmem:[%s2 + $0x798] sm:$0xff]
    %v398 = vld [vmem:[%s2 + $0x7a0] sm:$0xf]
    %v399 = vld [vmem:[%s2 + $0x7a4] sm:$0xff]
    %v400 = vld [vmem:[%s2 + $0x7ac] sm:$0xf]
    %v401 = vld [vmem:[%s2 + $0x7b0] sm:$0xff]
    %v402 = vld [vmem:[%s2 + $0x7b8] sm:$0xf]
    %v403 = vld [vmem:[%s2 + $0x7bc] sm:$0xff]
    %v404 = vld [vmem:[%s2 + $0x7c4] sm:$0xf]
    %v405 = vld [vmem:[%s2 + $0x7c8] sm:$0xff]
    %v406 = vld [vmem:[%s2 + $0x7d0] sm:$0xf]
    %v407 = vld [vmem:[%s2 + $0x7d4] sm:$0xff]
    %v408 = vld [vmem:[%s2 + $0x7dc] sm:$0xf]
    %s409 = scalar_lea.vmem %s2, 2016
    %v410 = vld [vmem:[%s409] sm:$0xff]
    %v411 = vld [vmem:[%s409 + $0x8] sm:$0xf]
    %v412 = vld [vmem:[%s409 + $0xc] sm:$0xff]
    %v413 = vld [vmem:[%s409 + $0x14] sm:$0xf]
    %v414 = vld [vmem:[%s409 + $0x18] sm:$0xff]
    %v415 = vld [vmem:[%s409 + $0x20] sm:$0xf]
    %v416 = vld [vmem:[%s409 + $0x24] sm:$0xff]
    %v417 = vld [vmem:[%s409 + $0x2c] sm:$0xf]
    %v418 = vld [vmem:[%s409 + $0x30] sm:$0xff]
    %v419 = vld [vmem:[%s409 + $0x38] sm:$0xf]
    %v420 = vld [vmem:[%s409 + $0x3c] sm:$0xff]
    %v421 = vld [vmem:[%s409 + $0x44] sm:$0xf]
    %v422 = vld [vmem:[%s409 + $0x48] sm:$0xff]
    %v423 = vld [vmem:[%s409 + $0x50] sm:$0xf]
    %v424 = vld [vmem:[%s409 + $0x54] sm:$0xff]
    %v425 = vld [vmem:[%s409 + $0x5c] sm:$0xf]
    %v426 = vld [vmem:[%s409 + $0x60] sm:$0xff]
    %v427 = vld [vmem:[%s409 + $0x68] sm:$0xf]
    %v428 = vld [vmem:[%s409 + $0x6c] sm:$0xff]
    %v429 = vld [vmem:[%s409 + $0x74] sm:$0xf]
    %v430 = vld [vmem:[%s409 + $0x78] sm:$0xff]
    %v431 = vld [vmem:[%s409 + $0x80] sm:$0xf]
    %v432 = vld [vmem:[%s409 + $0x84] sm:$0xff]
    %v433 = vld [vmem:[%s409 + $0x8c] sm:$0xf]
    %v434 = vld [vmem:[%s409 + $0x90] sm:$0xff]
    %v435 = vld [vmem:[%s409 + $0x98] sm:$0xf]
    %v436 = vld [vmem:[%s409 + $0x9c] sm:$0xff]
    %v437 = vld [vmem:[%s409 + $0xa4] sm:$0xf]
    %v438 = vld [vmem:[%s409 + $0xa8] sm:$0xff]
    %v439 = vld [vmem:[%s409 + $0xb0] sm:$0xf]
    %v440 = vld [vmem:[%s409 + $0xb4] sm:$0xff]
    %v441 = vld [vmem:[%s409 + $0xbc] sm:$0xf]
    %v442 = vld [vmem:[%s409 + $0xc0] sm:$0xff]
    %v443 = vld [vmem:[%s409 + $0xc8] sm:$0xf]
    %v444 = vld [vmem:[%s409 + $0xcc] sm:$0xff]
    %v445 = vld [vmem:[%s409 + $0xd4] sm:$0xf]
    %v446 = vld [vmem:[%s409 + $0xd8] sm:$0xff]
    %v447 = vld [vmem:[%s409 + $0xe0] sm:$0xf]
    %v448 = vld [vmem:[%s409 + $0xe4] sm:$0xff]
    %v449 = vld [vmem:[%s409 + $0xec] sm:$0xf]
    %v450 = vld [vmem:[%s409 + $0xf0] sm:$0xff]
    %v451 = vld [vmem:[%s409 + $0xf8] sm:$0xf]
    %v452 = vld [vmem:[%s409 + $0xfc] sm:$0xff]
    %v453 = vld [vmem:[%s409 + $0x104] sm:$0xf]
    %v454 = vld [vmem:[%s409 + $0x108] sm:$0xff]
    %v455 = vld [vmem:[%s409 + $0x110] sm:$0xf]
    %v456 = vld [vmem:[%s409 + $0x114] sm:$0xff]
    %v457 = vld [vmem:[%s409 + $0x11c] sm:$0xf]
    %v458 = vld [vmem:[%s409 + $0x120] sm:$0xff]
    %v459 = vld [vmem:[%s409 + $0x128] sm:$0xf]
    %v460 = vld [vmem:[%s409 + $0x12c] sm:$0xff]
    %v461 = vld [vmem:[%s409 + $0x134] sm:$0xf]
    %v462 = vld [vmem:[%s409 + $0x138] sm:$0xff]
    %v463 = vld [vmem:[%s409 + $0x140] sm:$0xf]
    %v464 = vld [vmem:[%s409 + $0x144] sm:$0xff]
    %v465 = vld [vmem:[%s409 + $0x14c] sm:$0xf]
    %v466 = vld [vmem:[%s409 + $0x150] sm:$0xff]
    %v467 = vld [vmem:[%s409 + $0x158] sm:$0xf]
    %v468 = vld [vmem:[%s409 + $0x15c] sm:$0xff]
    %v469 = vld [vmem:[%s409 + $0x164] sm:$0xf]
    %v470 = vld [vmem:[%s409 + $0x168] sm:$0xff]
    %v471 = vld [vmem:[%s409 + $0x170] sm:$0xf]
    %v472 = vld [vmem:[%s409 + $0x174] sm:$0xff]
    %v473 = vld [vmem:[%s409 + $0x17c] sm:$0xf]
    %v474 = vld [vmem:[%s409 + $0x180] sm:$0xff]
    %v475 = vld [vmem:[%s409 + $0x188] sm:$0xf]
    %v476 = vld [vmem:[%s409 + $0x18c] sm:$0xff]
    %v477 = vld [vmem:[%s409 + $0x194] sm:$0xf]
    %v478 = vld [vmem:[%s409 + $0x198] sm:$0xff]
    %v479 = vld [vmem:[%s409 + $0x1a0] sm:$0xf]
    %v480 = vld [vmem:[%s409 + $0x1a4] sm:$0xff]
    %v481 = vld [vmem:[%s409 + $0x1ac] sm:$0xf]
    %v482 = vld [vmem:[%s409 + $0x1b0] sm:$0xff]
    %v483 = vld [vmem:[%s409 + $0x1b8] sm:$0xf]
    %v484 = vld [vmem:[%s409 + $0x1bc] sm:$0xff]
    %v485 = vld [vmem:[%s409 + $0x1c4] sm:$0xf]
    %v486 = vld [vmem:[%s409 + $0x1c8] sm:$0xff]
    %v487 = vld [vmem:[%s409 + $0x1d0] sm:$0xf]
    %v488 = vld [vmem:[%s409 + $0x1d4] sm:$0xff]
    %v489 = vld [vmem:[%s409 + $0x1dc] sm:$0xf]
    %v490 = vld [vmem:[%s409 + $0x1e0] sm:$0xff]
    %v491 = vld [vmem:[%s409 + $0x1e8] sm:$0xf]
    %v492 = vld [vmem:[%s409 + $0x1ec] sm:$0xff]
    %v493 = vld [vmem:[%s409 + $0x1f4] sm:$0xf]
    %v494 = vld [vmem:[%s409 + $0x1f8] sm:$0xff]
    %v495 = vld [vmem:[%s409 + $0x200] sm:$0xf]
    %v496 = vld [vmem:[%s409 + $0x204] sm:$0xff]
    %v497 = vld [vmem:[%s409 + $0x20c] sm:$0xf]
    %v498 = vld [vmem:[%s409 + $0x210] sm:$0xff]
    %v499 = vld [vmem:[%s409 + $0x218] sm:$0xf]
    %v500 = vld [vmem:[%s409 + $0x21c] sm:$0xff]
    %v501 = vld [vmem:[%s409 + $0x224] sm:$0xf]
    %v502 = vld [vmem:[%s409 + $0x228] sm:$0xff]
    %v503 = vld [vmem:[%s409 + $0x230] sm:$0xf]
    %v504 = vld [vmem:[%s409 + $0x234] sm:$0xff]
    %v505 = vld [vmem:[%s409 + $0x23c] sm:$0xf]
    %v506 = vld [vmem:[%s409 + $0x240] sm:$0xff]
    %v507 = vld [vmem:[%s409 + $0x248] sm:$0xf]
    %v508 = vld [vmem:[%s409 + $0x24c] sm:$0xff]
    %v509 = vld [vmem:[%s409 + $0x254] sm:$0xf]
    %v510 = vld [vmem:[%s409 + $0x258] sm:$0xff]
    %v511 = vld [vmem:[%s409 + $0x260] sm:$0xf]
    %v512 = vld [vmem:[%s409 + $0x264] sm:$0xff]
    %v513 = vld [vmem:[%s409 + $0x26c] sm:$0xf]
    %v514 = vld [vmem:[%s409 + $0x270] sm:$0xff]
    %v515 = vld [vmem:[%s409 + $0x278] sm:$0xf]
    %v516 = vld [vmem:[%s409 + $0x27c] sm:$0xff]
    %v517 = vld [vmem:[%s409 + $0x284] sm:$0xf]
    %v518 = vld [vmem:[%s409 + $0x288] sm:$0xff]
    %v519 = vld [vmem:[%s409 + $0x290] sm:$0xf]
    %v520 = vld [vmem:[%s409 + $0x294] sm:$0xff]
    %v521 = vld [vmem:[%s409 + $0x29c] sm:$0xf]
    %v522 = vld [vmem:[%s409 + $0x2a0] sm:$0xff]
    %v523 = vld [vmem:[%s409 + $0x2a8] sm:$0xf]
    %v524 = vld [vmem:[%s409 + $0x2ac] sm:$0xff]
    %v525 = vld [vmem:[%s409 + $0x2b4] sm:$0xf]
    %v526 = vld [vmem:[%s409 + $0x2b8] sm:$0xff]
    %v527 = vld [vmem:[%s409 + $0x2c0] sm:$0xf]
    %v528 = vld [vmem:[%s409 + $0x2c4] sm:$0xff]
    %v529 = vld [vmem:[%s409 + $0x2cc] sm:$0xf]
    %v530 = vld [vmem:[%s409 + $0x2d0] sm:$0xff]
    %v531 = vld [vmem:[%s409 + $0x2d8] sm:$0xf]
    %v532 = vld [vmem:[%s409 + $0x2dc] sm:$0xff]
    %v533 = vld [vmem:[%s409 + $0x2e4] sm:$0xf]
    %v534 = vld [vmem:[%s409 + $0x2e8] sm:$0xff]
    %v535 = vld [vmem:[%s409 + $0x2f0] sm:$0xf]
    %v536 = vld [vmem:[%s409 + $0x2f4] sm:$0xff]
    %v537 = vld [vmem:[%s409 + $0x2fc] sm:$0xf]
    %v538 = vld [vmem:[%s409 + $0x300] sm:$0xff]
    %v539 = vld [vmem:[%s409 + $0x308] sm:$0xf]
    %v540 = vld [vmem:[%s409 + $0x30c] sm:$0xff]
    %v541 = vld [vmem:[%s409 + $0x314] sm:$0xf]
    %v542 = vld [vmem:[%s409 + $0x318] sm:$0xff]
    %v543 = vld [vmem:[%s409 + $0x320] sm:$0xf]
    %v544 = vld [vmem:[%s409 + $0x324] sm:$0xff]
    %v545 = vld [vmem:[%s409 + $0x32c] sm:$0xf]
    %v546 = vld [vmem:[%s409 + $0x330] sm:$0xff]
    %v547 = vld [vmem:[%s409 + $0x338] sm:$0xf]
    %v548 = vld [vmem:[%s409 + $0x33c] sm:$0xff]
    %v549 = vld [vmem:[%s409 + $0x344] sm:$0xf]
    %v550 = vld [vmem:[%s409 + $0x348] sm:$0xff]
    %v551 = vld [vmem:[%s409 + $0x350] sm:$0xf]
    %v552 = vld [vmem:[%s409 + $0x354] sm:$0xff]
    %v553 = vld [vmem:[%s409 + $0x35c] sm:$0xf]
    %v554 = vld [vmem:[%s409 + $0x360] sm:$0xff]
    %v555 = vld [vmem:[%s409 + $0x368] sm:$0xf]
    %v556 = vld [vmem:[%s409 + $0x36c] sm:$0xff]
    %v557 = vld [vmem:[%s409 + $0x374] sm:$0xf]
    %v558 = vld [vmem:[%s409 + $0x378] sm:$0xff]
    %v559 = vld [vmem:[%s409 + $0x380] sm:$0xf]
    %v560 = vld [vmem:[%s409 + $0x384] sm:$0xff]
    %v561 = vld [vmem:[%s409 + $0x38c] sm:$0xf]
    %v562 = vld [vmem:[%s409 + $0x390] sm:$0xff]
    %v563 = vld [vmem:[%s409 + $0x398] sm:$0xf]
    %v564 = vld [vmem:[%s409 + $0x39c] sm:$0xff]
    %v565 = vld [vmem:[%s409 + $0x3a4] sm:$0xf]
    %v566 = vld [vmem:[%s409 + $0x3a8] sm:$0xff]
    %v567 = vld [vmem:[%s409 + $0x3b0] sm:$0xf]
    %v568 = vld [vmem:[%s409 + $0x3b4] sm:$0xff]
    %v569 = vld [vmem:[%s409 + $0x3bc] sm:$0xf]
    %v570 = vld [vmem:[%s409 + $0x3c0] sm:$0xff]
    %v571 = vld [vmem:[%s409 + $0x3c8] sm:$0xf]
    %v572 = vld [vmem:[%s409 + $0x3cc] sm:$0xff]
    %v573 = vld [vmem:[%s409 + $0x3d4] sm:$0xf]
    %v574 = vld [vmem:[%s409 + $0x3d8] sm:$0xff]
    %v575 = vld [vmem:[%s409 + $0x3e0] sm:$0xf]
    %v576 = vld [vmem:[%s409 + $0x3e4] sm:$0xff]
    %v577 = vld [vmem:[%s409 + $0x3ec] sm:$0xf]
    %v578 = vld [vmem:[%s409 + $0x3f0] sm:$0xff]
    %v579 = vld [vmem:[%s409 + $0x3f8] sm:$0xf]
    %v580 = vld [vmem:[%s409 + $0x3fc] sm:$0xff]
    %v581 = vld [vmem:[%s409 + $0x404] sm:$0xf]
    %v582 = vld [vmem:[%s409 + $0x408] sm:$0xff]
    %v583 = vld [vmem:[%s409 + $0x410] sm:$0xf]
    %v584 = vld [vmem:[%s409 + $0x414] sm:$0xff]
    %v585 = vld [vmem:[%s409 + $0x41c] sm:$0xf]
    %v586 = vld [vmem:[%s409 + $0x420] sm:$0xff]
    %v587 = vld [vmem:[%s409 + $0x428] sm:$0xf]
    %v588 = vld [vmem:[%s409 + $0x42c] sm:$0xff]
    %v589 = vld [vmem:[%s409 + $0x434] sm:$0xf]
    %v590 = vld [vmem:[%s409 + $0x438] sm:$0xff]
    %v591 = vld [vmem:[%s409 + $0x440] sm:$0xf]
    %v592 = vld [vmem:[%s409 + $0x444] sm:$0xff]
    %v593 = vld [vmem:[%s409 + $0x44c] sm:$0xf]
    %v594 = vld [vmem:[%s409 + $0x450] sm:$0xff]
    %v595 = vld [vmem:[%s409 + $0x458] sm:$0xf]
    %v596 = vld [vmem:[%s409 + $0x45c] sm:$0xff]
    %v597 = vld [vmem:[%s409 + $0x464] sm:$0xf]
    %v598 = vld [vmem:[%s409 + $0x468] sm:$0xff]
    %v599 = vld [vmem:[%s409 + $0x470] sm:$0xf]
    %v600 = vld [vmem:[%s409 + $0x474] sm:$0xff]
    %v601 = vld [vmem:[%s409 + $0x47c] sm:$0xf]
    %v602 = vld [vmem:[%s409 + $0x480] sm:$0xff]
    %v603 = vld [vmem:[%s409 + $0x488] sm:$0xf]
    %v604 = vld [vmem:[%s409 + $0x48c] sm:$0xff]
    %v605 = vld [vmem:[%s409 + $0x494] sm:$0xf]
    %v606 = vld [vmem:[%s409 + $0x498] sm:$0xff]
    %v607 = vld [vmem:[%s409 + $0x4a0] sm:$0xf]
    %v608 = vld [vmem:[%s409 + $0x4a4] sm:$0xff]
    %v609 = vld [vmem:[%s409 + $0x4ac] sm:$0xf]
    %v610 = vld [vmem:[%s409 + $0x4b0] sm:$0xff]
    %v611 = vld [vmem:[%s409 + $0x4b8] sm:$0xf]
    %v612 = vld [vmem:[%s409 + $0x4bc] sm:$0xff]
    %v613 = vld [vmem:[%s409 + $0x4c4] sm:$0xf]
    %v614 = vld [vmem:[%s409 + $0x4c8] sm:$0xff]
    %v615 = vld [vmem:[%s409 + $0x4d0] sm:$0xf]
    %v616 = vld [vmem:[%s409 + $0x4d4] sm:$0xff]
    %v617 = vld [vmem:[%s409 + $0x4dc] sm:$0xf]
    %v618 = vld [vmem:[%s409 + $0x4e0] sm:$0xff]
    %v619 = vld [vmem:[%s409 + $0x4e8] sm:$0xf]
    %v620 = vld [vmem:[%s409 + $0x4ec] sm:$0xff]
    %v621 = vld [vmem:[%s409 + $0x4f4] sm:$0xf]
    %v622 = vld [vmem:[%s409 + $0x4f8] sm:$0xff]
    %v623 = vld [vmem:[%s409 + $0x500] sm:$0xf]
    %v624 = vld [vmem:[%s409 + $0x504] sm:$0xff]
    %v625 = vld [vmem:[%s409 + $0x50c] sm:$0xf]
    %v626 = vld [vmem:[%s409 + $0x510] sm:$0xff]
    %v627 = vld [vmem:[%s409 + $0x518] sm:$0xf]
    %v628 = vld [vmem:[%s409 + $0x51c] sm:$0xff]
    %v629 = vld [vmem:[%s409 + $0x524] sm:$0xf]
    %v630 = vld [vmem:[%s409 + $0x528] sm:$0xff]
    %v631 = vld [vmem:[%s409 + $0x530] sm:$0xf]
    %v632 = vld [vmem:[%s409 + $0x534] sm:$0xff]
    %v633 = vld [vmem:[%s409 + $0x53c] sm:$0xf]
    %v634 = vld [vmem:[%s409 + $0x540] sm:$0xff]
    %v635 = vld [vmem:[%s409 + $0x548] sm:$0xf]
    %v636 = vld [vmem:[%s409 + $0x54c] sm:$0xff]
    %v637 = vld [vmem:[%s409 + $0x554] sm:$0xf]
    %v638 = vld [vmem:[%s409 + $0x558] sm:$0xff]
    %v639 = vld [vmem:[%s409 + $0x560] sm:$0xf]
    %v640 = vld [vmem:[%s409 + $0x564] sm:$0xff]
    %v641 = vld [vmem:[%s409 + $0x56c] sm:$0xf]
    %v642 = vld [vmem:[%s409 + $0x570] sm:$0xff]
    %v643 = vld [vmem:[%s409 + $0x578] sm:$0xf]
    %v644 = vld [vmem:[%s409 + $0x57c] sm:$0xff]
    %v645 = vld [vmem:[%s409 + $0x584] sm:$0xf]
    %v646 = vld [vmem:[%s409 + $0x588] sm:$0xff]
    %v647 = vld [vmem:[%s409 + $0x590] sm:$0xf]
    %v648 = vld [vmem:[%s409 + $0x594] sm:$0xff]
    %v649 = vld [vmem:[%s409 + $0x59c] sm:$0xf]
    %v650 = vld [vmem:[%s409 + $0x5a0] sm:$0xff]
    %v651 = vld [vmem:[%s409 + $0x5a8] sm:$0xf]
    %v652 = vld [vmem:[%s409 + $0x5ac] sm:$0xff]
    %v653 = vld [vmem:[%s409 + $0x5b4] sm:$0xf]
    %v654 = vld [vmem:[%s409 + $0x5b8] sm:$0xff]
    %v655 = vld [vmem:[%s409 + $0x5c0] sm:$0xf]
    %v656 = vld [vmem:[%s409 + $0x5c4] sm:$0xff]
    %v657 = vld [vmem:[%s409 + $0x5cc] sm:$0xf]
    %v658 = vld [vmem:[%s409 + $0x5d0] sm:$0xff]
    %v659 = vld [vmem:[%s409 + $0x5d8] sm:$0xf]
    %v660 = vld [vmem:[%s409 + $0x5dc] sm:$0xff]
    %v661 = vld [vmem:[%s409 + $0x5e4] sm:$0xf]
    %v662 = vld [vmem:[%s409 + $0x5e8] sm:$0xff]
    %v663 = vld [vmem:[%s409 + $0x5f0] sm:$0xf]
    %v664 = vld [vmem:[%s409 + $0x5f4] sm:$0xff]
    %v665 = vld [vmem:[%s409 + $0x5fc] sm:$0xf]
    %v666 = vld [vmem:[%s409 + $0x600] sm:$0xff]
    %v667 = vld [vmem:[%s409 + $0x608] sm:$0xf]
    %v668 = vld [vmem:[%s409 + $0x60c] sm:$0xff]
    %v669 = vld [vmem:[%s409 + $0x614] sm:$0xf]
    %v670 = vld [vmem:[%s409 + $0x618] sm:$0xff]
    %v671 = vld [vmem:[%s409 + $0x620] sm:$0xf]
    %v672 = vld [vmem:[%s409 + $0x624] sm:$0xff]
    %v673 = vld [vmem:[%s409 + $0x62c] sm:$0xf]
    %v674 = vld [vmem:[%s409 + $0x630] sm:$0xff]
    %v675 = vld [vmem:[%s409 + $0x638] sm:$0xf]
    %v676 = vld [vmem:[%s409 + $0x63c] sm:$0xff]
    %v677 = vld [vmem:[%s409 + $0x644] sm:$0xf]
    %v678 = vld [vmem:[%s409 + $0x648] sm:$0xff]
    %v679 = vld [vmem:[%s409 + $0x650] sm:$0xf]
    %v680 = vld [vmem:[%s409 + $0x654] sm:$0xff]
    %v681 = vld [vmem:[%s409 + $0x65c] sm:$0xf]
    %v682 = vld [vmem:[%s409 + $0x660] sm:$0xff]
    %v683 = vld [vmem:[%s409 + $0x668] sm:$0xf]
    %v684 = vld [vmem:[%s409 + $0x66c] sm:$0xff]
    %v685 = vld [vmem:[%s409 + $0x674] sm:$0xf]
    %v686 = vld [vmem:[%s409 + $0x678] sm:$0xff]
    %v687 = vld [vmem:[%s409 + $0x680] sm:$0xf]
    %v688 = vld [vmem:[%s409 + $0x684] sm:$0xff]
    %v689 = vld [vmem:[%s409 + $0x68c] sm:$0xf]
    %v690 = vld [vmem:[%s409 + $0x690] sm:$0xff]
    %v691 = vld [vmem:[%s409 + $0x698] sm:$0xf]
    %v692 = vld [vmem:[%s409 + $0x69c] sm:$0xff]
    %v693 = vld [vmem:[%s409 + $0x6a4] sm:$0xf]
    %v694 = vld [vmem:[%s409 + $0x6a8] sm:$0xff]
    %v695 = vld [vmem:[%s409 + $0x6b0] sm:$0xf]
    %v696 = vld [vmem:[%s409 + $0x6b4] sm:$0xff]
    %v697 = vld [vmem:[%s409 + $0x6bc] sm:$0xf]
    %v698 = vld [vmem:[%s409 + $0x6c0] sm:$0xff]
    %v699 = vld [vmem:[%s409 + $0x6c8] sm:$0xf]
    %v700 = vld [vmem:[%s409 + $0x6cc] sm:$0xff]
    %v701 = vld [vmem:[%s409 + $0x6d4] sm:$0xf]
    %v702 = vld [vmem:[%s409 + $0x6d8] sm:$0xff]
    %v703 = vld [vmem:[%s409 + $0x6e0] sm:$0xf]
    %v704 = vld [vmem:[%s409 + $0x6e4] sm:$0xff]
    %v705 = vld [vmem:[%s409 + $0x6ec] sm:$0xf]
    %v706 = vld [vmem:[%s409 + $0x6f0] sm:$0xff]
    %v707 = vld [vmem:[%s409 + $0x6f8] sm:$0xf]
    %v708 = vld [vmem:[%s409 + $0x6fc] sm:$0xff]
    %v709 = vld [vmem:[%s409 + $0x704] sm:$0xf]
    %v710 = vld [vmem:[%s409 + $0x708] sm:$0xff]
    %v711 = vld [vmem:[%s409 + $0x710] sm:$0xf]
    %v712 = vld [vmem:[%s409 + $0x714] sm:$0xff]
    %v713 = vld [vmem:[%s409 + $0x71c] sm:$0xf]
    %v714 = vld [vmem:[%s409 + $0x720] sm:$0xff]
    %v715 = vld [vmem:[%s409 + $0x728] sm:$0xf]
    %v716 = vld [vmem:[%s409 + $0x72c] sm:$0xff]
    %v717 = vld [vmem:[%s409 + $0x734] sm:$0xf]
    %v718 = vld [vmem:[%s409 + $0x738] sm:$0xff]
    %v719 = vld [vmem:[%s409 + $0x740] sm:$0xf]
    %v720 = vld [vmem:[%s409 + $0x744] sm:$0xff]
    %v721 = vld [vmem:[%s409 + $0x74c] sm:$0xf]
    %v722 = vld [vmem:[%s409 + $0x750] sm:$0xff]
    %v723 = vld [vmem:[%s409 + $0x758] sm:$0xf]
    %v724 = vld [vmem:[%s409 + $0x75c] sm:$0xff]
    %v725 = vld [vmem:[%s409 + $0x764] sm:$0xf]
    %v726 = vld [vmem:[%s409 + $0x768] sm:$0xff]
    %v727 = vld [vmem:[%s409 + $0x770] sm:$0xf]
    %v728 = vld [vmem:[%s409 + $0x774] sm:$0xff]
    %v729 = vld [vmem:[%s409 + $0x77c] sm:$0xf]
    %v730 = vld [vmem:[%s409 + $0x780] sm:$0xff]
    %v731 = vld [vmem:[%s409 + $0x788] sm:$0xf]
    %v732 = vld [vmem:[%s409 + $0x78c] sm:$0xff]
    %v733 = vld [vmem:[%s409 + $0x794] sm:$0xf]
    %v734 = vld [vmem:[%s409 + $0x798] sm:$0xff]
    %v735 = vld [vmem:[%s409 + $0x7a0] sm:$0xf]
    %v736 = vld [vmem:[%s409 + $0x7a4] sm:$0xff]
    %v737 = vld [vmem:[%s409 + $0x7ac] sm:$0xf]
    %v738 = vld [vmem:[%s409 + $0x7b0] sm:$0xff]
    %v739 = vld [vmem:[%s409 + $0x7b8] sm:$0xf]
    %v740 = vld [vmem:[%s409 + $0x7bc] sm:$0xff]
    %v741 = vld [vmem:[%s409 + $0x7c4] sm:$0xf]
    %v742 = vld [vmem:[%s409 + $0x7c8] sm:$0xff]
    %v743 = vld [vmem:[%s409 + $0x7d0] sm:$0xf]
    %v744 = vld [vmem:[%s409 + $0x7d4] sm:$0xff]
    %v745 = vld [vmem:[%s409 + $0x7dc] sm:$0xf]
    %v764 = vunpack.c.l.b16 %v37
    %v765 = vunpack.c.h.b16 %v37
    %v766 = vunpack.c.l.b16 %v38
    %v767 = vunpack.c.h.b16 %v38
    %v768 = vunpack.c.l.b16 %v39
    %v769 = vunpack.c.h.b16 %v39
    %v770 = vunpack.c.l.b16 %v40
    %v771 = vunpack.c.h.b16 %v40
    %v772 = vunpack.c.l.b16 %v41
    %v773 = vunpack.c.h.b16 %v41
    %v774 = vunpack.c.l.b16 %v42
    %v775 = vunpack.c.l.b16 %v43
    %v776 = vunpack.c.h.b16 %v43
    %v777 = vunpack.c.l.b16 %v44
    %v778 = vunpack.c.h.b16 %v44
    %v779 = vunpack.c.l.b16 %v45
    %v780 = vunpack.c.h.b16 %v45
    %v781 = vunpack.c.l.b16 %v46
    %v782 = vunpack.c.h.b16 %v46
    %v783 = vunpack.c.l.b16 %v47
    %v784 = vunpack.c.h.b16 %v47
    %v785 = vunpack.c.l.b16 %v48
    %v786 = vunpack.c.l.b16 %v49
    %v787 = vunpack.c.h.b16 %v49
    %v788 = vunpack.c.l.b16 %v50
    %v789 = vunpack.c.h.b16 %v50
    %v790 = vunpack.c.l.b16 %v51
    %v791 = vunpack.c.h.b16 %v51
    %v792 = vunpack.c.l.b16 %v52
    %v793 = vunpack.c.h.b16 %v52
    %v794 = vunpack.c.l.b16 %v53
    %v795 = vunpack.c.h.b16 %v53
    %v796 = vunpack.c.l.b16 %v54
    %v797 = vpack.c.b16 %v775, %v764
    %v798 = vpack.c.b16 %v776, %v765
    %v799 = vpack.c.b16 %v777, %v766
    %v800 = vpack.c.b16 %v778, %v767
    %v801 = vpack.c.b16 %v779, %v768
    %v802 = vpack.c.b16 %v780, %v769
    %v803 = vpack.c.b16 %v781, %v770
    %v804 = vpack.c.b16 %v782, %v771
    %v805 = vpack.c.b16 %v783, %v772
    %v806 = vpack.c.b16 %v784, %v773
    %v807 = vpack.c.b16 %v785, %v774
    %v808 = vpack.c.b16 %v786, %v786
    %v809 = vpack.c.b16 %v787, %v787
    %v810 = vpack.c.b16 %v788, %v788
    %v811 = vpack.c.b16 %v789, %v789
    %v812 = vpack.c.b16 %v790, %v790
    %v813 = vpack.c.b16 %v791, %v791
    %v814 = vpack.c.b16 %v792, %v792
    %v815 = vpack.c.b16 %v793, %v793
    %v816 = vpack.c.b16 %v794, %v794
    %v817 = vpack.c.b16 %v795, %v795
    %v818 = vpack.c.b16 %v796, %v796
    %v1175 = vunpack.c.l.b16 %v73
    %v1176 = vunpack.c.h.b16 %v73
    %v1177 = vunpack.c.l.b16 %v74
    %v1178 = vunpack.c.l.b16 %v75
    %v1179 = vunpack.c.h.b16 %v75
    %v1180 = vunpack.c.l.b16 %v76
    %v1181 = vunpack.c.l.b16 %v77
    %v1182 = vunpack.c.h.b16 %v77
    %v1183 = vunpack.c.l.b16 %v78
    %v1184 = vunpack.c.l.b16 %v79
    %v1185 = vunpack.c.h.b16 %v79
    %v1186 = vunpack.c.l.b16 %v80
    %v1187 = vunpack.c.l.b16 %v81
    %v1188 = vunpack.c.h.b16 %v81
    %v1189 = vunpack.c.l.b16 %v82
    %v1190 = vunpack.c.l.b16 %v83
    %v1191 = vunpack.c.h.b16 %v83
    %v1192 = vunpack.c.l.b16 %v84
    %v1193 = vunpack.c.l.b16 %v85
    %v1194 = vunpack.c.h.b16 %v85
    %v1195 = vunpack.c.l.b16 %v86
    %v1196 = vunpack.c.l.b16 %v87
    %v1197 = vunpack.c.h.b16 %v87
    %v1198 = vunpack.c.l.b16 %v88
    %v1199 = vunpack.c.l.b16 %v89
    %v1200 = vunpack.c.h.b16 %v89
    %v1201 = vunpack.c.l.b16 %v90
    %v1202 = vunpack.c.l.b16 %v91
    %v1203 = vunpack.c.h.b16 %v91
    %v1204 = vunpack.c.l.b16 %v92
    %v1205 = vunpack.c.l.b16 %v93
    %v1206 = vunpack.c.h.b16 %v93
    %v1207 = vunpack.c.l.b16 %v94
    %v1208 = vunpack.c.l.b16 %v95
    %v1209 = vunpack.c.h.b16 %v95
    %v1210 = vunpack.c.l.b16 %v96
    %v1211 = vunpack.c.l.b16 %v97
    %v1212 = vunpack.c.h.b16 %v97
    %v1213 = vunpack.c.l.b16 %v98
    %v1214 = vunpack.c.l.b16 %v99
    %v1215 = vunpack.c.h.b16 %v99
    %v1216 = vunpack.c.l.b16 %v100
    %v1217 = vunpack.c.l.b16 %v101
    %v1218 = vunpack.c.h.b16 %v101
    %v1219 = vunpack.c.l.b16 %v102
    %v1220 = vunpack.c.l.b16 %v103
    %v1221 = vunpack.c.h.b16 %v103
    %v1222 = vunpack.c.l.b16 %v104
    %v1223 = vunpack.c.l.b16 %v105
    %v1224 = vunpack.c.h.b16 %v105
    %v1225 = vunpack.c.l.b16 %v106
    %v1226 = vunpack.c.l.b16 %v107
    %v1227 = vunpack.c.h.b16 %v107
    %v1228 = vunpack.c.l.b16 %v108
    %v1229 = vunpack.c.l.b16 %v109
    %v1230 = vunpack.c.h.b16 %v109
    %v1231 = vunpack.c.l.b16 %v110
    %v1232 = vunpack.c.l.b16 %v111
    %v1233 = vunpack.c.h.b16 %v111
    %v1234 = vunpack.c.l.b16 %v112
    %v1235 = vunpack.c.l.b16 %v113
    %v1236 = vunpack.c.h.b16 %v113
    %v1237 = vunpack.c.l.b16 %v114
    %v1238 = vunpack.c.l.b16 %v115
    %v1239 = vunpack.c.h.b16 %v115
    %v1240 = vunpack.c.l.b16 %v116
    %v1241 = vunpack.c.l.b16 %v117
    %v1242 = vunpack.c.h.b16 %v117
    %v1243 = vunpack.c.l.b16 %v118
    %v1244 = vunpack.c.l.b16 %v119
    %v1245 = vunpack.c.h.b16 %v119
    %v1246 = vunpack.c.l.b16 %v120
    %v1247 = vunpack.c.l.b16 %v121
    %v1248 = vunpack.c.h.b16 %v121
    %v1249 = vunpack.c.l.b16 %v122
    %v1250 = vunpack.c.l.b16 %v123
    %v1251 = vunpack.c.h.b16 %v123
    %v1252 = vunpack.c.l.b16 %v124
    %v1253 = vunpack.c.l.b16 %v125
    %v1254 = vunpack.c.h.b16 %v125
    %v1255 = vunpack.c.l.b16 %v126
    %v1256 = vunpack.c.l.b16 %v127
    %v1257 = vunpack.c.h.b16 %v127
    %v1258 = vunpack.c.l.b16 %v128
    %v1259 = vunpack.c.l.b16 %v129
    %v1260 = vunpack.c.h.b16 %v129
    %v1261 = vunpack.c.l.b16 %v130
    %v1262 = vunpack.c.l.b16 %v131
    %v1263 = vunpack.c.h.b16 %v131
    %v1264 = vunpack.c.l.b16 %v132
    %v1265 = vunpack.c.l.b16 %v133
    %v1266 = vunpack.c.h.b16 %v133
    %v1267 = vunpack.c.l.b16 %v134
    %v1268 = vunpack.c.l.b16 %v135
    %v1269 = vunpack.c.h.b16 %v135
    %v1270 = vunpack.c.l.b16 %v136
    %v1271 = vunpack.c.l.b16 %v137
    %v1272 = vunpack.c.h.b16 %v137
    %v1273 = vunpack.c.l.b16 %v138
    %v1274 = vunpack.c.l.b16 %v139
    %v1275 = vunpack.c.h.b16 %v139
    %v1276 = vunpack.c.l.b16 %v140
    %v1277 = vunpack.c.l.b16 %v141
    %v1278 = vunpack.c.h.b16 %v141
    %v1279 = vunpack.c.l.b16 %v142
    %v1280 = vunpack.c.l.b16 %v143
    %v1281 = vunpack.c.h.b16 %v143
    %v1282 = vunpack.c.l.b16 %v144
    %v1283 = vunpack.c.l.b16 %v145
    %v1284 = vunpack.c.h.b16 %v145
    %v1285 = vunpack.c.l.b16 %v146
    %v1286 = vunpack.c.l.b16 %v147
    %v1287 = vunpack.c.h.b16 %v147
    %v1288 = vunpack.c.l.b16 %v148
    %v1289 = vunpack.c.l.b16 %v149
    %v1290 = vunpack.c.h.b16 %v149
    %v1291 = vunpack.c.l.b16 %v150
    %v1292 = vunpack.c.l.b16 %v151
    %v1293 = vunpack.c.h.b16 %v151
    %v1294 = vunpack.c.l.b16 %v152
    %v1295 = vunpack.c.l.b16 %v153
    %v1296 = vunpack.c.h.b16 %v153
    %v1297 = vunpack.c.l.b16 %v154
    %v1298 = vunpack.c.l.b16 %v155
    %v1299 = vunpack.c.h.b16 %v155
    %v1300 = vunpack.c.l.b16 %v156
    %v1301 = vunpack.c.l.b16 %v157
    %v1302 = vunpack.c.h.b16 %v157
    %v1303 = vunpack.c.l.b16 %v158
    %v1304 = vunpack.c.l.b16 %v159
    %v1305 = vunpack.c.h.b16 %v159
    %v1306 = vunpack.c.l.b16 %v160
    %v1307 = vunpack.c.l.b16 %v161
    %v1308 = vunpack.c.h.b16 %v161
    %v1309 = vunpack.c.l.b16 %v162
    %v1310 = vunpack.c.l.b16 %v163
    %v1311 = vunpack.c.h.b16 %v163
    %v1312 = vunpack.c.l.b16 %v164
    %v1313 = vunpack.c.l.b16 %v165
    %v1314 = vunpack.c.h.b16 %v165
    %v1315 = vunpack.c.l.b16 %v166
    %v1316 = vunpack.c.l.b16 %v167
    %v1317 = vunpack.c.h.b16 %v167
    %v1318 = vunpack.c.l.b16 %v168
    %v1319 = vunpack.c.l.b16 %v169
    %v1320 = vunpack.c.h.b16 %v169
    %v1321 = vunpack.c.l.b16 %v170
    %v1322 = vunpack.c.l.b16 %v171
    %v1323 = vunpack.c.h.b16 %v171
    %v1324 = vunpack.c.l.b16 %v172
    %v1325 = vunpack.c.l.b16 %v173
    %v1326 = vunpack.c.h.b16 %v173
    %v1327 = vunpack.c.l.b16 %v174
    %v1328 = vunpack.c.l.b16 %v175
    %v1329 = vunpack.c.h.b16 %v175
    %v1330 = vunpack.c.l.b16 %v176
    %v1331 = vunpack.c.l.b16 %v177
    %v1332 = vunpack.c.h.b16 %v177
    %v1333 = vunpack.c.l.b16 %v178
    %v1334 = vunpack.c.l.b16 %v179
    %v1335 = vunpack.c.h.b16 %v179
    %v1336 = vunpack.c.l.b16 %v180
    %v1337 = vunpack.c.l.b16 %v181
    %v1338 = vunpack.c.h.b16 %v181
    %v1339 = vunpack.c.l.b16 %v182
    %v1340 = vunpack.c.l.b16 %v183
    %v1341 = vunpack.c.h.b16 %v183
    %v1342 = vunpack.c.l.b16 %v184
    %v1343 = vunpack.c.l.b16 %v185
    %v1344 = vunpack.c.h.b16 %v185
    %v1345 = vunpack.c.l.b16 %v186
    %v1346 = vunpack.c.l.b16 %v187
    %v1347 = vunpack.c.h.b16 %v187
    %v1348 = vunpack.c.l.b16 %v188
    %v1349 = vunpack.c.l.b16 %v189
    %v1350 = vunpack.c.h.b16 %v189
    %v1351 = vunpack.c.l.b16 %v190
    %v1352 = vunpack.c.l.b16 %v191
    %v1353 = vunpack.c.h.b16 %v191
    %v1354 = vunpack.c.l.b16 %v192
    %v1355 = vunpack.c.l.b16 %v193
    %v1356 = vunpack.c.h.b16 %v193
    %v1357 = vunpack.c.l.b16 %v194
    %v1358 = vunpack.c.l.b16 %v195
    %v1359 = vunpack.c.h.b16 %v195
    %v1360 = vunpack.c.l.b16 %v196
    %v1361 = vunpack.c.l.b16 %v197
    %v1362 = vunpack.c.h.b16 %v197
    %v1363 = vunpack.c.l.b16 %v198
    %v1364 = vunpack.c.l.b16 %v199
    %v1365 = vunpack.c.h.b16 %v199
    %v1366 = vunpack.c.l.b16 %v200
    %v1367 = vunpack.c.l.b16 %v201
    %v1368 = vunpack.c.h.b16 %v201
    %v1369 = vunpack.c.l.b16 %v202
    %v1370 = vunpack.c.l.b16 %v203
    %v1371 = vunpack.c.h.b16 %v203
    %v1372 = vunpack.c.l.b16 %v204
    %v1373 = vunpack.c.l.b16 %v205
    %v1374 = vunpack.c.h.b16 %v205
    %v1375 = vunpack.c.l.b16 %v206
    %v1376 = vunpack.c.l.b16 %v207
    %v1377 = vunpack.c.h.b16 %v207
    %v1378 = vunpack.c.l.b16 %v208
    %v1379 = vunpack.c.l.b16 %v209
    %v1380 = vunpack.c.h.b16 %v209
    %v1381 = vunpack.c.l.b16 %v210
    %v1382 = vunpack.c.l.b16 %v211
    %v1383 = vunpack.c.h.b16 %v211
    %v1384 = vunpack.c.l.b16 %v212
    %v1385 = vunpack.c.l.b16 %v213
    %v1386 = vunpack.c.h.b16 %v213
    %v1387 = vunpack.c.l.b16 %v214
    %v1388 = vunpack.c.l.b16 %v215
    %v1389 = vunpack.c.h.b16 %v215
    %v1390 = vunpack.c.l.b16 %v216
    %v1391 = vunpack.c.l.b16 %v217
    %v1392 = vunpack.c.h.b16 %v217
    %v1393 = vunpack.c.l.b16 %v218
    %v1394 = vunpack.c.l.b16 %v219
    %v1395 = vunpack.c.h.b16 %v219
    %v1396 = vunpack.c.l.b16 %v220
    %v1397 = vunpack.c.l.b16 %v221
    %v1398 = vunpack.c.h.b16 %v221
    %v1399 = vunpack.c.l.b16 %v222
    %v1400 = vunpack.c.l.b16 %v223
    %v1401 = vunpack.c.h.b16 %v223
    %v1402 = vunpack.c.l.b16 %v224
    %v1403 = vunpack.c.l.b16 %v225
    %v1404 = vunpack.c.h.b16 %v225
    %v1405 = vunpack.c.l.b16 %v226
    %v1406 = vunpack.c.l.b16 %v227
    %v1407 = vunpack.c.h.b16 %v227
    %v1408 = vunpack.c.l.b16 %v228
    %v1409 = vunpack.c.l.b16 %v229
    %v1410 = vunpack.c.h.b16 %v229
    %v1411 = vunpack.c.l.b16 %v230
    %v1412 = vunpack.c.l.b16 %v231
    %v1413 = vunpack.c.h.b16 %v231
    %v1414 = vunpack.c.l.b16 %v232
    %v1415 = vunpack.c.l.b16 %v233
    %v1416 = vunpack.c.h.b16 %v233
    %v1417 = vunpack.c.l.b16 %v234
    %v1418 = vunpack.c.l.b16 %v235
    %v1419 = vunpack.c.h.b16 %v235
    %v1420 = vunpack.c.l.b16 %v236
    %v1421 = vunpack.c.l.b16 %v237
    %v1422 = vunpack.c.h.b16 %v237
    %v1423 = vunpack.c.l.b16 %v238
    %v1424 = vunpack.c.l.b16 %v239
    %v1425 = vunpack.c.h.b16 %v239
    %v1426 = vunpack.c.l.b16 %v240
    %v1427 = vunpack.c.l.b16 %v241
    %v1428 = vunpack.c.h.b16 %v241
    %v1429 = vunpack.c.l.b16 %v242
    %v1430 = vunpack.c.l.b16 %v243
    %v1431 = vunpack.c.h.b16 %v243
    %v1432 = vunpack.c.l.b16 %v244
    %v1433 = vunpack.c.l.b16 %v245
    %v1434 = vunpack.c.h.b16 %v245
    %v1435 = vunpack.c.l.b16 %v246
    %v1436 = vunpack.c.l.b16 %v247
    %v1437 = vunpack.c.h.b16 %v247
    %v1438 = vunpack.c.l.b16 %v248
    %v1439 = vunpack.c.l.b16 %v249
    %v1440 = vunpack.c.h.b16 %v249
    %v1441 = vunpack.c.l.b16 %v250
    %v1442 = vunpack.c.l.b16 %v251
    %v1443 = vunpack.c.h.b16 %v251
    %v1444 = vunpack.c.l.b16 %v252
    %v1445 = vunpack.c.l.b16 %v253
    %v1446 = vunpack.c.h.b16 %v253
    %v1447 = vunpack.c.l.b16 %v254
    %v1448 = vunpack.c.l.b16 %v255
    %v1449 = vunpack.c.h.b16 %v255
    %v1450 = vunpack.c.l.b16 %v256
    %v1451 = vunpack.c.l.b16 %v257
    %v1452 = vunpack.c.h.b16 %v257
    %v1453 = vunpack.c.l.b16 %v258
    %v1454 = vunpack.c.l.b16 %v259
    %v1455 = vunpack.c.h.b16 %v259
    %v1456 = vunpack.c.l.b16 %v260
    %v1457 = vunpack.c.l.b16 %v261
    %v1458 = vunpack.c.h.b16 %v261
    %v1459 = vunpack.c.l.b16 %v262
    %v1460 = vunpack.c.l.b16 %v263
    %v1461 = vunpack.c.h.b16 %v263
    %v1462 = vunpack.c.l.b16 %v264
    %v1463 = vunpack.c.l.b16 %v265
    %v1464 = vunpack.c.h.b16 %v265
    %v1465 = vunpack.c.l.b16 %v266
    %v1466 = vunpack.c.l.b16 %v267
    %v1467 = vunpack.c.h.b16 %v267
    %v1468 = vunpack.c.l.b16 %v268
    %v1469 = vunpack.c.l.b16 %v269
    %v1470 = vunpack.c.h.b16 %v269
    %v1471 = vunpack.c.l.b16 %v270
    %v1472 = vunpack.c.l.b16 %v271
    %v1473 = vunpack.c.h.b16 %v271
    %v1474 = vunpack.c.l.b16 %v272
    %v1475 = vunpack.c.l.b16 %v273
    %v1476 = vunpack.c.h.b16 %v273
    %v1477 = vunpack.c.l.b16 %v274
    %v1478 = vunpack.c.l.b16 %v275
    %v1479 = vunpack.c.h.b16 %v275
    %v1480 = vunpack.c.l.b16 %v276
    %v1481 = vunpack.c.l.b16 %v277
    %v1482 = vunpack.c.h.b16 %v277
    %v1483 = vunpack.c.l.b16 %v278
    %v1484 = vunpack.c.l.b16 %v279
    %v1485 = vunpack.c.h.b16 %v279
    %v1486 = vunpack.c.l.b16 %v280
    %v1487 = vunpack.c.l.b16 %v281
    %v1488 = vunpack.c.h.b16 %v281
    %v1489 = vunpack.c.l.b16 %v282
    %v1490 = vunpack.c.l.b16 %v283
    %v1491 = vunpack.c.h.b16 %v283
    %v1492 = vunpack.c.l.b16 %v284
    %v1493 = vunpack.c.l.b16 %v285
    %v1494 = vunpack.c.h.b16 %v285
    %v1495 = vunpack.c.l.b16 %v286
    %v1496 = vunpack.c.l.b16 %v287
    %v1497 = vunpack.c.h.b16 %v287
    %v1498 = vunpack.c.l.b16 %v288
    %v1499 = vunpack.c.l.b16 %v289
    %v1500 = vunpack.c.h.b16 %v289
    %v1501 = vunpack.c.l.b16 %v290
    %v1502 = vunpack.c.l.b16 %v291
    %v1503 = vunpack.c.h.b16 %v291
    %v1504 = vunpack.c.l.b16 %v292
    %v1505 = vunpack.c.l.b16 %v293
    %v1506 = vunpack.c.h.b16 %v293
    %v1507 = vunpack.c.l.b16 %v294
    %v1508 = vunpack.c.l.b16 %v295
    %v1509 = vunpack.c.h.b16 %v295
    %v1510 = vunpack.c.l.b16 %v296
    %v1511 = vunpack.c.l.b16 %v297
    %v1512 = vunpack.c.h.b16 %v297
    %v1513 = vunpack.c.l.b16 %v298
    %v1514 = vunpack.c.l.b16 %v299
    %v1515 = vunpack.c.h.b16 %v299
    %v1516 = vunpack.c.l.b16 %v300
    %v1517 = vunpack.c.l.b16 %v301
    %v1518 = vunpack.c.h.b16 %v301
    %v1519 = vunpack.c.l.b16 %v302
    %v1520 = vunpack.c.l.b16 %v303
    %v1521 = vunpack.c.h.b16 %v303
    %v1522 = vunpack.c.l.b16 %v304
    %v1523 = vunpack.c.l.b16 %v305
    %v1524 = vunpack.c.h.b16 %v305
    %v1525 = vunpack.c.l.b16 %v306
    %v1526 = vunpack.c.l.b16 %v307
    %v1527 = vunpack.c.h.b16 %v307
    %v1528 = vunpack.c.l.b16 %v308
    %v1529 = vunpack.c.l.b16 %v309
    %v1530 = vunpack.c.h.b16 %v309
    %v1531 = vunpack.c.l.b16 %v310
    %v1532 = vunpack.c.l.b16 %v311
    %v1533 = vunpack.c.h.b16 %v311
    %v1534 = vunpack.c.l.b16 %v312
    %v1535 = vunpack.c.l.b16 %v313
    %v1536 = vunpack.c.h.b16 %v313
    %v1537 = vunpack.c.l.b16 %v314
    %v1538 = vunpack.c.l.b16 %v315
    %v1539 = vunpack.c.h.b16 %v315
    %v1540 = vunpack.c.l.b16 %v316
    %v1541 = vunpack.c.l.b16 %v317
    %v1542 = vunpack.c.h.b16 %v317
    %v1543 = vunpack.c.l.b16 %v318
    %v1544 = vunpack.c.l.b16 %v319
    %v1545 = vunpack.c.h.b16 %v319
    %v1546 = vunpack.c.l.b16 %v320
    %v1547 = vunpack.c.l.b16 %v321
    %v1548 = vunpack.c.h.b16 %v321
    %v1549 = vunpack.c.l.b16 %v322
    %v1550 = vunpack.c.l.b16 %v323
    %v1551 = vunpack.c.h.b16 %v323
    %v1552 = vunpack.c.l.b16 %v324
    %v1553 = vunpack.c.l.b16 %v325
    %v1554 = vunpack.c.h.b16 %v325
    %v1555 = vunpack.c.l.b16 %v326
    %v1556 = vunpack.c.l.b16 %v327
    %v1557 = vunpack.c.h.b16 %v327
    %v1558 = vunpack.c.l.b16 %v328
    %v1559 = vunpack.c.l.b16 %v329
    %v1560 = vunpack.c.h.b16 %v329
    %v1561 = vunpack.c.l.b16 %v330
    %v1562 = vunpack.c.l.b16 %v331
    %v1563 = vunpack.c.h.b16 %v331
    %v1564 = vunpack.c.l.b16 %v332
    %v1565 = vunpack.c.l.b16 %v333
    %v1566 = vunpack.c.h.b16 %v333
    %v1567 = vunpack.c.l.b16 %v334
    %v1568 = vunpack.c.l.b16 %v335
    %v1569 = vunpack.c.h.b16 %v335
    %v1570 = vunpack.c.l.b16 %v336
    %v1571 = vunpack.c.l.b16 %v337
    %v1572 = vunpack.c.h.b16 %v337
    %v1573 = vunpack.c.l.b16 %v338
    %v1574 = vunpack.c.l.b16 %v339
    %v1575 = vunpack.c.h.b16 %v339
    %v1576 = vunpack.c.l.b16 %v340
    %v1577 = vunpack.c.l.b16 %v341
    %v1578 = vunpack.c.h.b16 %v341
    %v1579 = vunpack.c.l.b16 %v342
    %v1580 = vunpack.c.l.b16 %v343
    %v1581 = vunpack.c.h.b16 %v343
    %v1582 = vunpack.c.l.b16 %v344
    %v1583 = vunpack.c.l.b16 %v345
    %v1584 = vunpack.c.h.b16 %v345
    %v1585 = vunpack.c.l.b16 %v346
    %v1586 = vunpack.c.l.b16 %v347
    %v1587 = vunpack.c.h.b16 %v347
    %v1588 = vunpack.c.l.b16 %v348
    %v1589 = vunpack.c.l.b16 %v349
    %v1590 = vunpack.c.h.b16 %v349
    %v1591 = vunpack.c.l.b16 %v350
    %v1592 = vunpack.c.l.b16 %v351
    %v1593 = vunpack.c.h.b16 %v351
    %v1594 = vunpack.c.l.b16 %v352
    %v1595 = vunpack.c.l.b16 %v353
    %v1596 = vunpack.c.h.b16 %v353
    %v1597 = vunpack.c.l.b16 %v354
    %v1598 = vunpack.c.l.b16 %v355
    %v1599 = vunpack.c.h.b16 %v355
    %v1600 = vunpack.c.l.b16 %v356
    %v1601 = vunpack.c.l.b16 %v357
    %v1602 = vunpack.c.h.b16 %v357
    %v1603 = vunpack.c.l.b16 %v358
    %v1604 = vunpack.c.l.b16 %v359
    %v1605 = vunpack.c.h.b16 %v359
    %v1606 = vunpack.c.l.b16 %v360
    %v1607 = vunpack.c.l.b16 %v361
    %v1608 = vunpack.c.h.b16 %v361
    %v1609 = vunpack.c.l.b16 %v362
    %v1610 = vunpack.c.l.b16 %v363
    %v1611 = vunpack.c.h.b16 %v363
    %v1612 = vunpack.c.l.b16 %v364
    %v1613 = vunpack.c.l.b16 %v365
    %v1614 = vunpack.c.h.b16 %v365
    %v1615 = vunpack.c.l.b16 %v366
    %v1616 = vunpack.c.l.b16 %v367
    %v1617 = vunpack.c.h.b16 %v367
    %v1618 = vunpack.c.l.b16 %v368
    %v1619 = vunpack.c.l.b16 %v369
    %v1620 = vunpack.c.h.b16 %v369
    %v1621 = vunpack.c.l.b16 %v370
    %v1622 = vunpack.c.l.b16 %v371
    %v1623 = vunpack.c.h.b16 %v371
    %v1624 = vunpack.c.l.b16 %v372
    %v1625 = vunpack.c.l.b16 %v373
    %v1626 = vunpack.c.h.b16 %v373
    %v1627 = vunpack.c.l.b16 %v374
    %v1628 = vunpack.c.l.b16 %v375
    %v1629 = vunpack.c.h.b16 %v375
    %v1630 = vunpack.c.l.b16 %v376
    %v1631 = vunpack.c.l.b16 %v377
    %v1632 = vunpack.c.h.b16 %v377
    %v1633 = vunpack.c.l.b16 %v378
    %v1634 = vunpack.c.l.b16 %v379
    %v1635 = vunpack.c.h.b16 %v379
    %v1636 = vunpack.c.l.b16 %v380
    %v1637 = vunpack.c.l.b16 %v381
    %v1638 = vunpack.c.h.b16 %v381
    %v1639 = vunpack.c.l.b16 %v382
    %v1640 = vunpack.c.l.b16 %v383
    %v1641 = vunpack.c.h.b16 %v383
    %v1642 = vunpack.c.l.b16 %v384
    %v1643 = vunpack.c.l.b16 %v385
    %v1644 = vunpack.c.h.b16 %v385
    %v1645 = vunpack.c.l.b16 %v386
    %v1646 = vunpack.c.l.b16 %v387
    %v1647 = vunpack.c.h.b16 %v387
    %v1648 = vunpack.c.l.b16 %v388
    %v1649 = vunpack.c.l.b16 %v389
    %v1650 = vunpack.c.h.b16 %v389
    %v1651 = vunpack.c.l.b16 %v390
    %v1652 = vunpack.c.l.b16 %v391
    %v1653 = vunpack.c.h.b16 %v391
    %v1654 = vunpack.c.l.b16 %v392
    %v1655 = vunpack.c.l.b16 %v393
    %v1656 = vunpack.c.h.b16 %v393
    %v1657 = vunpack.c.l.b16 %v394
    %v1658 = vunpack.c.l.b16 %v395
    %v1659 = vunpack.c.h.b16 %v395
    %v1660 = vunpack.c.l.b16 %v396
    %v1661 = vunpack.c.l.b16 %v397
    %v1662 = vunpack.c.h.b16 %v397
    %v1663 = vunpack.c.l.b16 %v398
    %v1664 = vunpack.c.l.b16 %v399
    %v1665 = vunpack.c.h.b16 %v399
    %v1666 = vunpack.c.l.b16 %v400
    %v1667 = vunpack.c.l.b16 %v401
    %v1668 = vunpack.c.h.b16 %v401
    %v1669 = vunpack.c.l.b16 %v402
    %v1670 = vunpack.c.l.b16 %v403
    %v1671 = vunpack.c.h.b16 %v403
    %v1672 = vunpack.c.l.b16 %v404
    %v1673 = vunpack.c.l.b16 %v405
    %v1674 = vunpack.c.h.b16 %v405
    %v1675 = vunpack.c.l.b16 %v406
    %v1676 = vunpack.c.l.b16 %v407
    %v1677 = vunpack.c.h.b16 %v407
    %v1678 = vunpack.c.l.b16 %v408
    %v1679 = vpack.c.b16 %v1178, %v1175
    %v1680 = vpack.c.b16 %v1179, %v1176
    %v1681 = vpack.c.b16 %v1180, %v1177
    %v1682 = vpack.c.b16 %v1184, %v1181
    %v1683 = vpack.c.b16 %v1185, %v1182
    %v1684 = vpack.c.b16 %v1186, %v1183
    %v1685 = vpack.c.b16 %v1190, %v1187
    %v1686 = vpack.c.b16 %v1191, %v1188
    %v1687 = vpack.c.b16 %v1192, %v1189
    %v1688 = vpack.c.b16 %v1196, %v1193
    %v1689 = vpack.c.b16 %v1197, %v1194
    %v1690 = vpack.c.b16 %v1198, %v1195
    %v1691 = vpack.c.b16 %v1202, %v1199
    %v1692 = vpack.c.b16 %v1203, %v1200
    %v1693 = vpack.c.b16 %v1204, %v1201
    %v1694 = vpack.c.b16 %v1208, %v1205
    %v1695 = vpack.c.b16 %v1209, %v1206
    %v1696 = vpack.c.b16 %v1210, %v1207
    %v1697 = vpack.c.b16 %v1214, %v1211
    %v1698 = vpack.c.b16 %v1215, %v1212
    %v1699 = vpack.c.b16 %v1216, %v1213
    %v1700 = vpack.c.b16 %v1220, %v1217
    %v1701 = vpack.c.b16 %v1221, %v1218
    %v1702 = vpack.c.b16 %v1222, %v1219
    %v1703 = vpack.c.b16 %v1226, %v1223
    %v1704 = vpack.c.b16 %v1227, %v1224
    %v1705 = vpack.c.b16 %v1228, %v1225
    %v1706 = vpack.c.b16 %v1232, %v1229
    %v1707 = vpack.c.b16 %v1233, %v1230
    %v1708 = vpack.c.b16 %v1234, %v1231
    %v1709 = vpack.c.b16 %v1238, %v1235
    %v1710 = vpack.c.b16 %v1239, %v1236
    %v1711 = vpack.c.b16 %v1240, %v1237
    %v1712 = vpack.c.b16 %v1244, %v1241
    %v1713 = vpack.c.b16 %v1245, %v1242
    %v1714 = vpack.c.b16 %v1246, %v1243
    %v1715 = vpack.c.b16 %v1250, %v1247
    %v1716 = vpack.c.b16 %v1251, %v1248
    %v1717 = vpack.c.b16 %v1252, %v1249
    %v1718 = vpack.c.b16 %v1256, %v1253
    %v1719 = vpack.c.b16 %v1257, %v1254
    %v1720 = vpack.c.b16 %v1258, %v1255
    %v1721 = vpack.c.b16 %v1262, %v1259
    %v1722 = vpack.c.b16 %v1263, %v1260
    %v1723 = vpack.c.b16 %v1264, %v1261
    %v1724 = vpack.c.b16 %v1268, %v1265
    %v1725 = vpack.c.b16 %v1269, %v1266
    %v1726 = vpack.c.b16 %v1270, %v1267
    %v1727 = vpack.c.b16 %v1274, %v1271
    %v1728 = vpack.c.b16 %v1275, %v1272
    %v1729 = vpack.c.b16 %v1276, %v1273
    %v1730 = vpack.c.b16 %v1280, %v1277
    %v1731 = vpack.c.b16 %v1281, %v1278
    %v1732 = vpack.c.b16 %v1282, %v1279
    %v1733 = vpack.c.b16 %v1286, %v1283
    %v1734 = vpack.c.b16 %v1287, %v1284
    %v1735 = vpack.c.b16 %v1288, %v1285
    %v1736 = vpack.c.b16 %v1292, %v1289
    %v1737 = vpack.c.b16 %v1293, %v1290
    %v1738 = vpack.c.b16 %v1294, %v1291
    %v1739 = vpack.c.b16 %v1298, %v1295
    %v1740 = vpack.c.b16 %v1299, %v1296
    %v1741 = vpack.c.b16 %v1300, %v1297
    %v1742 = vpack.c.b16 %v1304, %v1301
    %v1743 = vpack.c.b16 %v1305, %v1302
    %v1744 = vpack.c.b16 %v1306, %v1303
    %v1745 = vpack.c.b16 %v1310, %v1307
    %v1746 = vpack.c.b16 %v1311, %v1308
    %v1747 = vpack.c.b16 %v1312, %v1309
    %v1748 = vpack.c.b16 %v1316, %v1313
    %v1749 = vpack.c.b16 %v1317, %v1314
    %v1750 = vpack.c.b16 %v1318, %v1315
    %v1751 = vpack.c.b16 %v1322, %v1319
    %v1752 = vpack.c.b16 %v1323, %v1320
    %v1753 = vpack.c.b16 %v1324, %v1321
    %v1754 = vpack.c.b16 %v1328, %v1325
    %v1755 = vpack.c.b16 %v1329, %v1326
    %v1756 = vpack.c.b16 %v1330, %v1327
    %v1757 = vpack.c.b16 %v1334, %v1331
    %v1758 = vpack.c.b16 %v1335, %v1332
    %v1759 = vpack.c.b16 %v1336, %v1333
    %v1760 = vpack.c.b16 %v1340, %v1337
    %v1761 = vpack.c.b16 %v1341, %v1338
    %v1762 = vpack.c.b16 %v1342, %v1339
    %v1763 = vpack.c.b16 %v1346, %v1343
    %v1764 = vpack.c.b16 %v1347, %v1344
    %v1765 = vpack.c.b16 %v1348, %v1345
    %v1766 = vpack.c.b16 %v1352, %v1349
    %v1767 = vpack.c.b16 %v1353, %v1350
    %v1768 = vpack.c.b16 %v1354, %v1351
    %v1769 = vpack.c.b16 %v1358, %v1355
    %v1770 = vpack.c.b16 %v1359, %v1356
    %v1771 = vpack.c.b16 %v1360, %v1357
    %v1772 = vpack.c.b16 %v1364, %v1361
    %v1773 = vpack.c.b16 %v1365, %v1362
    %v1774 = vpack.c.b16 %v1366, %v1363
    %v1775 = vpack.c.b16 %v1370, %v1367
    %v1776 = vpack.c.b16 %v1371, %v1368
    %v1777 = vpack.c.b16 %v1372, %v1369
    %v1778 = vpack.c.b16 %v1376, %v1373
    %v1779 = vpack.c.b16 %v1377, %v1374
    %v1780 = vpack.c.b16 %v1378, %v1375
    %v1781 = vpack.c.b16 %v1382, %v1379
    %v1782 = vpack.c.b16 %v1383, %v1380
    %v1783 = vpack.c.b16 %v1384, %v1381
    %v1784 = vpack.c.b16 %v1388, %v1385
    %v1785 = vpack.c.b16 %v1389, %v1386
    %v1786 = vpack.c.b16 %v1390, %v1387
    %v1787 = vpack.c.b16 %v1394, %v1391
    %v1788 = vpack.c.b16 %v1395, %v1392
    %v1789 = vpack.c.b16 %v1396, %v1393
    %v1790 = vpack.c.b16 %v1400, %v1397
    %v1791 = vpack.c.b16 %v1401, %v1398
    %v1792 = vpack.c.b16 %v1402, %v1399
    %v1793 = vpack.c.b16 %v1406, %v1403
    %v1794 = vpack.c.b16 %v1407, %v1404
    %v1795 = vpack.c.b16 %v1408, %v1405
    %v1796 = vpack.c.b16 %v1412, %v1409
    %v1797 = vpack.c.b16 %v1413, %v1410
    %v1798 = vpack.c.b16 %v1414, %v1411
    %v1799 = vpack.c.b16 %v1418, %v1415
    %v1800 = vpack.c.b16 %v1419, %v1416
    %v1801 = vpack.c.b16 %v1420, %v1417
    %v1802 = vpack.c.b16 %v1424, %v1421
    %v1803 = vpack.c.b16 %v1425, %v1422
    %v1804 = vpack.c.b16 %v1426, %v1423
    %v1805 = vpack.c.b16 %v1430, %v1427
    %v1806 = vpack.c.b16 %v1431, %v1428
    %v1807 = vpack.c.b16 %v1432, %v1429
    %v1808 = vpack.c.b16 %v1436, %v1433
    %v1809 = vpack.c.b16 %v1437, %v1434
    %v1810 = vpack.c.b16 %v1438, %v1435
    %v1811 = vpack.c.b16 %v1442, %v1439
    %v1812 = vpack.c.b16 %v1443, %v1440
    %v1813 = vpack.c.b16 %v1444, %v1441
    %v1814 = vpack.c.b16 %v1448, %v1445
    %v1815 = vpack.c.b16 %v1449, %v1446
    %v1816 = vpack.c.b16 %v1450, %v1447
    %v1817 = vpack.c.b16 %v1454, %v1451
    %v1818 = vpack.c.b16 %v1455, %v1452
    %v1819 = vpack.c.b16 %v1456, %v1453
    %v1820 = vpack.c.b16 %v1460, %v1457
    %v1821 = vpack.c.b16 %v1461, %v1458
    %v1822 = vpack.c.b16 %v1462, %v1459
    %v1823 = vpack.c.b16 %v1466, %v1463
    %v1824 = vpack.c.b16 %v1467, %v1464
    %v1825 = vpack.c.b16 %v1468, %v1465
    %v1826 = vpack.c.b16 %v1472, %v1469
    %v1827 = vpack.c.b16 %v1473, %v1470
    %v1828 = vpack.c.b16 %v1474, %v1471
    %v1829 = vpack.c.b16 %v1478, %v1475
    %v1830 = vpack.c.b16 %v1479, %v1476
    %v1831 = vpack.c.b16 %v1480, %v1477
    %v1832 = vpack.c.b16 %v1484, %v1481
    %v1833 = vpack.c.b16 %v1485, %v1482
    %v1834 = vpack.c.b16 %v1486, %v1483
    %v1835 = vpack.c.b16 %v1490, %v1487
    %v1836 = vpack.c.b16 %v1491, %v1488
    %v1837 = vpack.c.b16 %v1492, %v1489
    %v1838 = vpack.c.b16 %v1496, %v1493
    %v1839 = vpack.c.b16 %v1497, %v1494
    %v1840 = vpack.c.b16 %v1498, %v1495
    %v1841 = vpack.c.b16 %v1502, %v1499
    %v1842 = vpack.c.b16 %v1503, %v1500
    %v1843 = vpack.c.b16 %v1504, %v1501
    %v1844 = vpack.c.b16 %v1508, %v1505
    %v1845 = vpack.c.b16 %v1509, %v1506
    %v1846 = vpack.c.b16 %v1510, %v1507
    %v1847 = vpack.c.b16 %v1514, %v1511
    %v1848 = vpack.c.b16 %v1515, %v1512
    %v1849 = vpack.c.b16 %v1516, %v1513
    %v1850 = vpack.c.b16 %v1520, %v1517
    %v1851 = vpack.c.b16 %v1521, %v1518
    %v1852 = vpack.c.b16 %v1522, %v1519
    %v1853 = vpack.c.b16 %v1526, %v1523
    %v1854 = vpack.c.b16 %v1527, %v1524
    %v1855 = vpack.c.b16 %v1528, %v1525
    %v1856 = vpack.c.b16 %v1532, %v1529
    %v1857 = vpack.c.b16 %v1533, %v1530
    %v1858 = vpack.c.b16 %v1534, %v1531
    %v1859 = vpack.c.b16 %v1538, %v1535
    %v1860 = vpack.c.b16 %v1539, %v1536
    %v1861 = vpack.c.b16 %v1540, %v1537
    %v1862 = vpack.c.b16 %v1544, %v1541
    %v1863 = vpack.c.b16 %v1545, %v1542
    %v1864 = vpack.c.b16 %v1546, %v1543
    %v1865 = vpack.c.b16 %v1550, %v1547
    %v1866 = vpack.c.b16 %v1551, %v1548
    %v1867 = vpack.c.b16 %v1552, %v1549
    %v1868 = vpack.c.b16 %v1556, %v1553
    %v1869 = vpack.c.b16 %v1557, %v1554
    %v1870 = vpack.c.b16 %v1558, %v1555
    %v1871 = vpack.c.b16 %v1562, %v1559
    %v1872 = vpack.c.b16 %v1563, %v1560
    %v1873 = vpack.c.b16 %v1564, %v1561
    %v1874 = vpack.c.b16 %v1568, %v1565
    %v1875 = vpack.c.b16 %v1569, %v1566
    %v1876 = vpack.c.b16 %v1570, %v1567
    %v1877 = vpack.c.b16 %v1574, %v1571
    %v1878 = vpack.c.b16 %v1575, %v1572
    %v1879 = vpack.c.b16 %v1576, %v1573
    %v1880 = vpack.c.b16 %v1580, %v1577
    %v1881 = vpack.c.b16 %v1581, %v1578
    %v1882 = vpack.c.b16 %v1582, %v1579
    %v1883 = vpack.c.b16 %v1586, %v1583
    %v1884 = vpack.c.b16 %v1587, %v1584
    %v1885 = vpack.c.b16 %v1588, %v1585
    %v1886 = vpack.c.b16 %v1592, %v1589
    %v1887 = vpack.c.b16 %v1593, %v1590
    %v1888 = vpack.c.b16 %v1594, %v1591
    %v1889 = vpack.c.b16 %v1598, %v1595
    %v1890 = vpack.c.b16 %v1599, %v1596
    %v1891 = vpack.c.b16 %v1600, %v1597
    %v1892 = vpack.c.b16 %v1604, %v1601
    %v1893 = vpack.c.b16 %v1605, %v1602
    %v1894 = vpack.c.b16 %v1606, %v1603
    %v1895 = vpack.c.b16 %v1610, %v1607
    %v1896 = vpack.c.b16 %v1611, %v1608
    %v1897 = vpack.c.b16 %v1612, %v1609
    %v1898 = vpack.c.b16 %v1616, %v1613
    %v1899 = vpack.c.b16 %v1617, %v1614
    %v1900 = vpack.c.b16 %v1618, %v1615
    %v1901 = vpack.c.b16 %v1622, %v1619
    %v1902 = vpack.c.b16 %v1623, %v1620
    %v1903 = vpack.c.b16 %v1624, %v1621
    %v1904 = vpack.c.b16 %v1628, %v1625
    %v1905 = vpack.c.b16 %v1629, %v1626
    %v1906 = vpack.c.b16 %v1630, %v1627
    %v1907 = vpack.c.b16 %v1634, %v1631
    %v1908 = vpack.c.b16 %v1635, %v1632
    %v1909 = vpack.c.b16 %v1636, %v1633
    %v1910 = vpack.c.b16 %v1640, %v1637
    %v1911 = vpack.c.b16 %v1641, %v1638
    %v1912 = vpack.c.b16 %v1642, %v1639
    %v1913 = vpack.c.b16 %v1646, %v1643
    %v1914 = vpack.c.b16 %v1647, %v1644
    %v1915 = vpack.c.b16 %v1648, %v1645
    %v1916 = vpack.c.b16 %v1652, %v1649
    %v1917 = vpack.c.b16 %v1653, %v1650
    %v1918 = vpack.c.b16 %v1654, %v1651
    %v1919 = vpack.c.b16 %v1658, %v1655
    %v1920 = vpack.c.b16 %v1659, %v1656
    %v1921 = vpack.c.b16 %v1660, %v1657
    %v1922 = vpack.c.b16 %v1664, %v1661
    %v1923 = vpack.c.b16 %v1665, %v1662
    %v1924 = vpack.c.b16 %v1666, %v1663
    %v1925 = vpack.c.b16 %v1670, %v1667
    %v1926 = vpack.c.b16 %v1671, %v1668
    %v1927 = vpack.c.b16 %v1672, %v1669
    %v1928 = vpack.c.b16 %v1676, %v1673
    %v1929 = vpack.c.b16 %v1677, %v1674
    %v1930 = vpack.c.b16 %v1678, %v1675
    %vm2183 = vcmask 523264
    %v2185 = vsel %vm2183, %v807, 0
    %v2188 = vsel %vm2183, %v818, 0
    %2190 = vmatpush.bf16.msra.mxu0 %v1700
    %2191 = vmatpush.bf16.msra.mxu0 %v1697
    %2192 = vmatpush.bf16.msra.mxu0 %v1694
    %2193 = vmatpush.bf16.msra.mxu0 %v1691
    %2194 = vmatpush.bf16.msra.mxu0 %v1688
    %2195 = vmatpush.bf16.msra.mxu0 %v1685
    %2196 = vmatpush.bf16.msra.mxu0 %v1682
    %2197 = vmatpush.bf16.msra.mxu0 %v1679
    %2198 = vmatmul.bf16.gmra.mxu0 %v797
    %v2199 = vpop.f32.mrf.mxu0
    %v2200 = vadd.f32 0.0, %v2199
    %v2201 = vpop.f32.mrf.mxu0
    %v2202 = vadd.f32 0.0, %v2201
    %2203 = vmatmul.bf16.gmra.mxu0 %v808
    %v2204 = vpop.f32.mrf.mxu0
    %v2205 = vadd.f32 0.0, %v2204
    %v2206 = vpop.f32.mrf.mxu0
    %2207 = vdwg.mxu0
    %2208 = vmatpush.bf16.msra.mxu0 %v1724
    %2209 = vmatpush.bf16.msra.mxu0 %v1721
    %2210 = vmatpush.bf16.msra.mxu0 %v1718
    %2211 = vmatpush.bf16.msra.mxu0 %v1715
    %2212 = vmatpush.bf16.msra.mxu0 %v1712
    %2213 = vmatpush.bf16.msra.mxu0 %v1709
    %2214 = vmatpush.bf16.msra.mxu0 %v1706
    %2215 = vmatpush.bf16.msra.mxu0 %v1703
    %2216 = vmatmul.bf16.gmra.mxu0 %v798
    %v2217 = vpop.f32.mrf.mxu0
    %v2218 = vadd.f32 %v2200, %v2217
    %v2219 = vpop.f32.mrf.mxu0
    %v2220 = vadd.f32 %v2202, %v2219
    %2221 = vmatmul.bf16.gmra.mxu0 %v809
    %v2222 = vpop.f32.mrf.mxu0
    %v2223 = vadd.f32 %v2205, %v2222
    %v2224 = vpop.f32.mrf.mxu0
    %2225 = vdwg.mxu0
    %2226 = vmatpush.bf16.msra.mxu0 %v1748
    %2227 = vmatpush.bf16.msra.mxu0 %v1745
    %2228 = vmatpush.bf16.msra.mxu0 %v1742
    %2229 = vmatpush.bf16.msra.mxu0 %v1739
    %2230 = vmatpush.bf16.msra.mxu0 %v1736
    %2231 = vmatpush.bf16.msra.mxu0 %v1733
    %2232 = vmatpush.bf16.msra.mxu0 %v1730
    %2233 = vmatpush.bf16.msra.mxu0 %v1727
    %2234 = vmatmul.bf16.gmra.mxu0 %v799
    %v2235 = vpop.f32.mrf.mxu0
    %v2236 = vadd.f32 %v2218, %v2235
    %v2237 = vpop.f32.mrf.mxu0
    %v2238 = vadd.f32 %v2220, %v2237
    %2239 = vmatmul.bf16.gmra.mxu0 %v810
    %v2240 = vpop.f32.mrf.mxu0
    %v2241 = vadd.f32 %v2223, %v2240
    %v2242 = vpop.f32.mrf.mxu0
    %2243 = vdwg.mxu0
    %2244 = vmatpush.bf16.msra.mxu0 %v1772
    %2245 = vmatpush.bf16.msra.mxu0 %v1769
    %2246 = vmatpush.bf16.msra.mxu0 %v1766
    %2247 = vmatpush.bf16.msra.mxu0 %v1763
    %2248 = vmatpush.bf16.msra.mxu0 %v1760
    %2249 = vmatpush.bf16.msra.mxu0 %v1757
    %2250 = vmatpush.bf16.msra.mxu0 %v1754
    %2251 = vmatpush.bf16.msra.mxu0 %v1751
    %2252 = vmatmul.bf16.gmra.mxu0 %v800
    %v2253 = vpop.f32.mrf.mxu0
    %v2254 = vadd.f32 %v2236, %v2253
    %v2255 = vpop.f32.mrf.mxu0
    %v2256 = vadd.f32 %v2238, %v2255
    %2257 = vmatmul.bf16.gmra.mxu0 %v811
    %v2258 = vpop.f32.mrf.mxu0
    %v2259 = vadd.f32 %v2241, %v2258
    %v2260 = vpop.f32.mrf.mxu0
    %2261 = vdwg.mxu0
    %2262 = vmatpush.bf16.msra.mxu0 %v1796
    %2263 = vmatpush.bf16.msra.mxu0 %v1793
    %2264 = vmatpush.bf16.msra.mxu0 %v1790
    %2265 = vmatpush.bf16.msra.mxu0 %v1787
    %2266 = vmatpush.bf16.msra.mxu0 %v1784
    %2267 = vmatpush.bf16.msra.mxu0 %v1781
    %2268 = vmatpush.bf16.msra.mxu0 %v1778
    %2269 = vmatpush.bf16.msra.mxu0 %v1775
    %2270 = vmatmul.bf16.gmra.mxu0 %v801
    %v2271 = vpop.f32.mrf.mxu0
    %v2272 = vadd.f32 %v2254, %v2271
    %v2273 = vpop.f32.mrf.mxu0
    %v2274 = vadd.f32 %v2256, %v2273
    %2275 = vmatmul.bf16.gmra.mxu0 %v812
    %v2276 = vpop.f32.mrf.mxu0
    %v2277 = vadd.f32 %v2259, %v2276
    %v2278 = vpop.f32.mrf.mxu0
    %2279 = vdwg.mxu0
    %2280 = vmatpush.bf16.msra.mxu0 %v1820
    %2281 = vmatpush.bf16.msra.mxu0 %v1817
    %2282 = vmatpush.bf16.msra.mxu0 %v1814
    %2283 = vmatpush.bf16.msra.mxu0 %v1811
    %2284 = vmatpush.bf16.msra.mxu0 %v1808
    %2285 = vmatpush.bf16.msra.mxu0 %v1805
    %2286 = vmatpush.bf16.msra.mxu0 %v1802
    %2287 = vmatpush.bf16.msra.mxu0 %v1799
    %2288 = vmatmul.bf16.gmra.mxu0 %v802
    %v2289 = vpop.f32.mrf.mxu0
    %v2290 = vadd.f32 %v2272, %v2289
    %v2291 = vpop.f32.mrf.mxu0
    %v2292 = vadd.f32 %v2274, %v2291
    %2293 = vmatmul.bf16.gmra.mxu0 %v813
    %v2294 = vpop.f32.mrf.mxu0
    %v2295 = vadd.f32 %v2277, %v2294
    %v2296 = vpop.f32.mrf.mxu0
    %2297 = vdwg.mxu0
    %2298 = vmatpush.bf16.msra.mxu0 %v1844
    %2299 = vmatpush.bf16.msra.mxu0 %v1841
    %2300 = vmatpush.bf16.msra.mxu0 %v1838
    %2301 = vmatpush.bf16.msra.mxu0 %v1835
    %2302 = vmatpush.bf16.msra.mxu0 %v1832
    %2303 = vmatpush.bf16.msra.mxu0 %v1829
    %2304 = vmatpush.bf16.msra.mxu0 %v1826
    %2305 = vmatpush.bf16.msra.mxu0 %v1823
    %2306 = vmatmul.bf16.gmra.mxu0 %v803
    %v2307 = vpop.f32.mrf.mxu0
    %v2308 = vadd.f32 %v2290, %v2307
    %v2309 = vpop.f32.mrf.mxu0
    %v2310 = vadd.f32 %v2292, %v2309
    %2311 = vmatmul.bf16.gmra.mxu0 %v814
    %v2312 = vpop.f32.mrf.mxu0
    %v2313 = vadd.f32 %v2295, %v2312
    %v2314 = vpop.f32.mrf.mxu0
    %2315 = vdwg.mxu0
    %2316 = vmatpush.bf16.msra.mxu0 %v1868
    %2317 = vmatpush.bf16.msra.mxu0 %v1865
    %2318 = vmatpush.bf16.msra.mxu0 %v1862
    %2319 = vmatpush.bf16.msra.mxu0 %v1859
    %2320 = vmatpush.bf16.msra.mxu0 %v1856
    %2321 = vmatpush.bf16.msra.mxu0 %v1853
    %2322 = vmatpush.bf16.msra.mxu0 %v1850
    %2323 = vmatpush.bf16.msra.mxu0 %v1847
    %2324 = vmatmul.bf16.gmra.mxu0 %v804
    %v2325 = vpop.f32.mrf.mxu0
    %v2326 = vadd.f32 %v2308, %v2325
    %v2327 = vpop.f32.mrf.mxu0
    %v2328 = vadd.f32 %v2310, %v2327
    %2329 = vmatmul.bf16.gmra.mxu0 %v815
    %v2330 = vpop.f32.mrf.mxu0
    %v2331 = vadd.f32 %v2313, %v2330
    %v2332 = vpop.f32.mrf.mxu0
    %2333 = vdwg.mxu0
    %2334 = vmatpush.bf16.msra.mxu0 %v1892
    %2335 = vmatpush.bf16.msra.mxu0 %v1889
    %2336 = vmatpush.bf16.msra.mxu0 %v1886
    %2337 = vmatpush.bf16.msra.mxu0 %v1883
    %2338 = vmatpush.bf16.msra.mxu0 %v1880
    %2339 = vmatpush.bf16.msra.mxu0 %v1877
    %2340 = vmatpush.bf16.msra.mxu0 %v1874
    %2341 = vmatpush.bf16.msra.mxu0 %v1871
    %2342 = vmatmul.bf16.gmra.mxu0 %v805
    %v2343 = vpop.f32.mrf.mxu0
    %v2344 = vadd.f32 %v2326, %v2343
    %v2345 = vpop.f32.mrf.mxu0
    %v2346 = vadd.f32 %v2328, %v2345
    %2347 = vmatmul.bf16.gmra.mxu0 %v816
    %v2348 = vpop.f32.mrf.mxu0
    %v2349 = vadd.f32 %v2331, %v2348
    %v2350 = vpop.f32.mrf.mxu0
    %2351 = vdwg.mxu0
    %2352 = vmatpush.bf16.msra.mxu0 %v1916
    %2353 = vmatpush.bf16.msra.mxu0 %v1913
    %2354 = vmatpush.bf16.msra.mxu0 %v1910
    %2355 = vmatpush.bf16.msra.mxu0 %v1907
    %2356 = vmatpush.bf16.msra.mxu0 %v1904
    %2357 = vmatpush.bf16.msra.mxu0 %v1901
    %2358 = vmatpush.bf16.msra.mxu0 %v1898
    %2359 = vmatpush.bf16.msra.mxu0 %v1895
    %2360 = vmatmul.bf16.gmra.mxu0 %v806
    %v2361 = vpop.f32.mrf.mxu0
    %v2362 = vadd.f32 %v2344, %v2361
    %v2363 = vpop.f32.mrf.mxu0
    %v2364 = vadd.f32 %v2346, %v2363
    %2365 = vmatmul.bf16.gmra.mxu0 %v817
    %v2366 = vpop.f32.mrf.mxu0
    %v2367 = vadd.f32 %v2349, %v2366
    %v2368 = vpop.f32.mrf.mxu0
    %2369 = vdwg.mxu0
    %2370 = vmatpush.bf16.msra.mxu0 0
    %2371 = vmatpush.bf16.msra.mxu0 0
    %2372 = vmatpush.bf16.msra.mxu0 0
    %2373 = vmatpush.bf16.msra.mxu0 0
    %2374 = vmatpush.bf16.msra.mxu0 %v1928
    %2375 = vmatpush.bf16.msra.mxu0 %v1925
    %2376 = vmatpush.bf16.msra.mxu0 %v1922
    %2377 = vmatpush.bf16.msra.mxu0 %v1919
    %2378 = vmatmul.bf16.gmra.mxu0 %v2185
    %v2379 = vpop.f32.mrf.mxu0
    %v2380 = vadd.f32 %v2362, %v2379
    %v2381 = vpop.f32.mrf.mxu0
    %v2382 = vadd.f32 %v2364, %v2381
    %2383 = vmatmul.bf16.gmra.mxu0 %v2188
    %v2384 = vpop.f32.mrf.mxu0
    %v2385 = vadd.f32 %v2367, %v2384
    %v2386 = vpop.f32.mrf.mxu0
    %2387 = vdwg.mxu0
    %2388 = vmatpush.bf16.msra.mxu0 %v1701
    %2389 = vmatpush.bf16.msra.mxu0 %v1698
    %2390 = vmatpush.bf16.msra.mxu0 %v1695
    %2391 = vmatpush.bf16.msra.mxu0 %v1692
    %2392 = vmatpush.bf16.msra.mxu0 %v1689
    %2393 = vmatpush.bf16.msra.mxu0 %v1686
    %2394 = vmatpush.bf16.msra.mxu0 %v1683
    %2395 = vmatpush.bf16.msra.mxu0 %v1680
    %2396 = vmatmul.bf16.gmra.mxu0 %v797
    %v2397 = vpop.f32.mrf.mxu0
    %v2398 = vadd.f32 0.0, %v2397
    %v2399 = vpop.f32.mrf.mxu0
    %v2400 = vadd.f32 0.0, %v2399
    %2401 = vmatmul.bf16.gmra.mxu0 %v808
    %v2402 = vpop.f32.mrf.mxu0
    %v2403 = vadd.f32 0.0, %v2402
    %v2404 = vpop.f32.mrf.mxu0
    %2405 = vdwg.mxu0
    %2406 = vmatpush.bf16.msra.mxu0 %v1725
    %2407 = vmatpush.bf16.msra.mxu0 %v1722
    %2408 = vmatpush.bf16.msra.mxu0 %v1719
    %2409 = vmatpush.bf16.msra.mxu0 %v1716
    %2410 = vmatpush.bf16.msra.mxu0 %v1713
    %2411 = vmatpush.bf16.msra.mxu0 %v1710
    %2412 = vmatpush.bf16.msra.mxu0 %v1707
    %2413 = vmatpush.bf16.msra.mxu0 %v1704
    %2414 = vmatmul.bf16.gmra.mxu0 %v798
    %v2415 = vpop.f32.mrf.mxu0
    %v2416 = vadd.f32 %v2398, %v2415
    %v2417 = vpop.f32.mrf.mxu0
    %v2418 = vadd.f32 %v2400, %v2417
    %2419 = vmatmul.bf16.gmra.mxu0 %v809
    %v2420 = vpop.f32.mrf.mxu0
    %v2421 = vadd.f32 %v2403, %v2420
    %v2422 = vpop.f32.mrf.mxu0
    %2423 = vdwg.mxu0
    %2424 = vmatpush.bf16.msra.mxu0 %v1749
    %2425 = vmatpush.bf16.msra.mxu0 %v1746
    %2426 = vmatpush.bf16.msra.mxu0 %v1743
    %2427 = vmatpush.bf16.msra.mxu0 %v1740
    %2428 = vmatpush.bf16.msra.mxu0 %v1737
    %2429 = vmatpush.bf16.msra.mxu0 %v1734
    %2430 = vmatpush.bf16.msra.mxu0 %v1731
    %2431 = vmatpush.bf16.msra.mxu0 %v1728
    %2432 = vmatmul.bf16.gmra.mxu0 %v799
    %v2433 = vpop.f32.mrf.mxu0
    %v2434 = vadd.f32 %v2416, %v2433
    %v2435 = vpop.f32.mrf.mxu0
    %v2436 = vadd.f32 %v2418, %v2435
    %2437 = vmatmul.bf16.gmra.mxu0 %v810
    %v2438 = vpop.f32.mrf.mxu0
    %v2439 = vadd.f32 %v2421, %v2438
    %v2440 = vpop.f32.mrf.mxu0
    %2441 = vdwg.mxu0
    %2442 = vmatpush.bf16.msra.mxu0 %v1773
    %2443 = vmatpush.bf16.msra.mxu0 %v1770
    %2444 = vmatpush.bf16.msra.mxu0 %v1767
    %2445 = vmatpush.bf16.msra.mxu0 %v1764
    %2446 = vmatpush.bf16.msra.mxu0 %v1761
    %2447 = vmatpush.bf16.msra.mxu0 %v1758
    %2448 = vmatpush.bf16.msra.mxu0 %v1755
    %2449 = vmatpush.bf16.msra.mxu0 %v1752
    %2450 = vmatmul.bf16.gmra.mxu0 %v800
    %v2451 = vpop.f32.mrf.mxu0
    %v2452 = vadd.f32 %v2434, %v2451
    %v2453 = vpop.f32.mrf.mxu0
    %v2454 = vadd.f32 %v2436, %v2453
    %2455 = vmatmul.bf16.gmra.mxu0 %v811
    %v2456 = vpop.f32.mrf.mxu0
    %v2457 = vadd.f32 %v2439, %v2456
    %v2458 = vpop.f32.mrf.mxu0
    %2459 = vdwg.mxu0
    %2460 = vmatpush.bf16.msra.mxu0 %v1797
    %2461 = vmatpush.bf16.msra.mxu0 %v1794
    %2462 = vmatpush.bf16.msra.mxu0 %v1791
    %2463 = vmatpush.bf16.msra.mxu0 %v1788
    %2464 = vmatpush.bf16.msra.mxu0 %v1785
    %2465 = vmatpush.bf16.msra.mxu0 %v1782
    %2466 = vmatpush.bf16.msra.mxu0 %v1779
    %2467 = vmatpush.bf16.msra.mxu0 %v1776
    %2468 = vmatmul.bf16.gmra.mxu0 %v801
    %v2469 = vpop.f32.mrf.mxu0
    %v2470 = vadd.f32 %v2452, %v2469
    %v2471 = vpop.f32.mrf.mxu0
    %v2472 = vadd.f32 %v2454, %v2471
    %2473 = vmatmul.bf16.gmra.mxu0 %v812
    %v2474 = vpop.f32.mrf.mxu0
    %v2475 = vadd.f32 %v2457, %v2474
    %v2476 = vpop.f32.mrf.mxu0
    %2477 = vdwg.mxu0
    %2478 = vmatpush.bf16.msra.mxu0 %v1821
    %2479 = vmatpush.bf16.msra.mxu0 %v1818
    %2480 = vmatpush.bf16.msra.mxu0 %v1815
    %2481 = vmatpush.bf16.msra.mxu0 %v1812
    %2482 = vmatpush.bf16.msra.mxu0 %v1809
    %2483 = vmatpush.bf16.msra.mxu0 %v1806
    %2484 = vmatpush.bf16.msra.mxu0 %v1803
    %2485 = vmatpush.bf16.msra.mxu0 %v1800
    %2486 = vmatmul.bf16.gmra.mxu0 %v802
    %v2487 = vpop.f32.mrf.mxu0
    %v2488 = vadd.f32 %v2470, %v2487
    %v2489 = vpop.f32.mrf.mxu0
    %v2490 = vadd.f32 %v2472, %v2489
    %2491 = vmatmul.bf16.gmra.mxu0 %v813
    %v2492 = vpop.f32.mrf.mxu0
    %v2493 = vadd.f32 %v2475, %v2492
    %v2494 = vpop.f32.mrf.mxu0
    %2495 = vdwg.mxu0
    %2496 = vmatpush.bf16.msra.mxu0 %v1845
    %2497 = vmatpush.bf16.msra.mxu0 %v1842
    %2498 = vmatpush.bf16.msra.mxu0 %v1839
    %2499 = vmatpush.bf16.msra.mxu0 %v1836
    %2500 = vmatpush.bf16.msra.mxu0 %v1833
    %2501 = vmatpush.bf16.msra.mxu0 %v1830
    %2502 = vmatpush.bf16.msra.mxu0 %v1827
    %2503 = vmatpush.bf16.msra.mxu0 %v1824
    %2504 = vmatmul.bf16.gmra.mxu0 %v803
    %v2505 = vpop.f32.mrf.mxu0
    %v2506 = vadd.f32 %v2488, %v2505
    %v2507 = vpop.f32.mrf.mxu0
    %v2508 = vadd.f32 %v2490, %v2507
    %2509 = vmatmul.bf16.gmra.mxu0 %v814
    %v2510 = vpop.f32.mrf.mxu0
    %v2511 = vadd.f32 %v2493, %v2510
    %v2512 = vpop.f32.mrf.mxu0
    %2513 = vdwg.mxu0
    %2514 = vmatpush.bf16.msra.mxu0 %v1869
    %2515 = vmatpush.bf16.msra.mxu0 %v1866
    %2516 = vmatpush.bf16.msra.mxu0 %v1863
    %2517 = vmatpush.bf16.msra.mxu0 %v1860
    %2518 = vmatpush.bf16.msra.mxu0 %v1857
    %2519 = vmatpush.bf16.msra.mxu0 %v1854
    %2520 = vmatpush.bf16.msra.mxu0 %v1851
    %2521 = vmatpush.bf16.msra.mxu0 %v1848
    %2522 = vmatmul.bf16.gmra.mxu0 %v804
    %v2523 = vpop.f32.mrf.mxu0
    %v2524 = vadd.f32 %v2506, %v2523
    %v2525 = vpop.f32.mrf.mxu0
    %v2526 = vadd.f32 %v2508, %v2525
    %2527 = vmatmul.bf16.gmra.mxu0 %v815
    %v2528 = vpop.f32.mrf.mxu0
    %v2529 = vadd.f32 %v2511, %v2528
    %v2530 = vpop.f32.mrf.mxu0
    %2531 = vdwg.mxu0
    %2532 = vmatpush.bf16.msra.mxu0 %v1893
    %2533 = vmatpush.bf16.msra.mxu0 %v1890
    %2534 = vmatpush.bf16.msra.mxu0 %v1887
    %2535 = vmatpush.bf16.msra.mxu0 %v1884
    %2536 = vmatpush.bf16.msra.mxu0 %v1881
    %2537 = vmatpush.bf16.msra.mxu0 %v1878
    %2538 = vmatpush.bf16.msra.mxu0 %v1875
    %2539 = vmatpush.bf16.msra.mxu0 %v1872
    %2540 = vmatmul.bf16.gmra.mxu0 %v805
    %v2541 = vpop.f32.mrf.mxu0
    %v2542 = vadd.f32 %v2524, %v2541
    %v2543 = vpop.f32.mrf.mxu0
    %v2544 = vadd.f32 %v2526, %v2543
    %2545 = vmatmul.bf16.gmra.mxu0 %v816
    %v2546 = vpop.f32.mrf.mxu0
    %v2547 = vadd.f32 %v2529, %v2546
    %v2548 = vpop.f32.mrf.mxu0
    %2549 = vdwg.mxu0
    %2550 = vmatpush.bf16.msra.mxu0 %v1917
    %2551 = vmatpush.bf16.msra.mxu0 %v1914
    %2552 = vmatpush.bf16.msra.mxu0 %v1911
    %2553 = vmatpush.bf16.msra.mxu0 %v1908
    %2554 = vmatpush.bf16.msra.mxu0 %v1905
    %2555 = vmatpush.bf16.msra.mxu0 %v1902
    %2556 = vmatpush.bf16.msra.mxu0 %v1899
    %2557 = vmatpush.bf16.msra.mxu0 %v1896
    %2558 = vmatmul.bf16.gmra.mxu0 %v806
    %v2559 = vpop.f32.mrf.mxu0
    %v2560 = vadd.f32 %v2542, %v2559
    %v2561 = vpop.f32.mrf.mxu0
    %v2562 = vadd.f32 %v2544, %v2561
    %2563 = vmatmul.bf16.gmra.mxu0 %v817
    %v2564 = vpop.f32.mrf.mxu0
    %v2565 = vadd.f32 %v2547, %v2564
    %v2566 = vpop.f32.mrf.mxu0
    %2567 = vdwg.mxu0
    %2568 = vmatpush.bf16.msra.mxu0 0
    %2569 = vmatpush.bf16.msra.mxu0 0
    %2570 = vmatpush.bf16.msra.mxu0 0
    %2571 = vmatpush.bf16.msra.mxu0 0
    %2572 = vmatpush.bf16.msra.mxu0 %v1929
    %2573 = vmatpush.bf16.msra.mxu0 %v1926
    %2574 = vmatpush.bf16.msra.mxu0 %v1923
    %2575 = vmatpush.bf16.msra.mxu0 %v1920
    %2576 = vmatmul.bf16.gmra.mxu0 %v2185
    %v2577 = vpop.f32.mrf.mxu0
    %v2578 = vadd.f32 %v2560, %v2577
    %v2579 = vpop.f32.mrf.mxu0
    %v2580 = vadd.f32 %v2562, %v2579
    %2581 = vmatmul.bf16.gmra.mxu0 %v2188
    %v2582 = vpop.f32.mrf.mxu0
    %v2583 = vadd.f32 %v2565, %v2582
    %v2584 = vpop.f32.mrf.mxu0
    %2585 = vdwg.mxu0
    %2586 = vmatpush.bf16.msra.mxu0 %v1702
    %2587 = vmatpush.bf16.msra.mxu0 %v1699
    %2588 = vmatpush.bf16.msra.mxu0 %v1696
    %2589 = vmatpush.bf16.msra.mxu0 %v1693
    %2590 = vmatpush.bf16.msra.mxu0 %v1690
    %2591 = vmatpush.bf16.msra.mxu0 %v1687
    %2592 = vmatpush.bf16.msra.mxu0 %v1684
    %2593 = vmatpush.bf16.msra.mxu0 %v1681
    %2594 = vmatmul.bf16.gmra.mxu0 %v797
    %v2595 = vpop.f32.mrf.mxu0
    %v2596 = vadd.f32 0.0, %v2595
    %v2597 = vpop.f32.mrf.mxu0
    %v2598 = vadd.f32 0.0, %v2597
    %2599 = vmatmul.bf16.gmra.mxu0 %v808
    %v2600 = vpop.f32.mrf.mxu0
    %v2601 = vadd.f32 0.0, %v2600
    %v2602 = vpop.f32.mrf.mxu0
    %2603 = vdwg.mxu0
    %2604 = vmatpush.bf16.msra.mxu0 %v1726
    %2605 = vmatpush.bf16.msra.mxu0 %v1723
    %2606 = vmatpush.bf16.msra.mxu0 %v1720
    %2607 = vmatpush.bf16.msra.mxu0 %v1717
    %2608 = vmatpush.bf16.msra.mxu0 %v1714
    %2609 = vmatpush.bf16.msra.mxu0 %v1711
    %2610 = vmatpush.bf16.msra.mxu0 %v1708
    %2611 = vmatpush.bf16.msra.mxu0 %v1705
    %2612 = vmatmul.bf16.gmra.mxu0 %v798
    %v2613 = vpop.f32.mrf.mxu0
    %v2614 = vadd.f32 %v2596, %v2613
    %v2615 = vpop.f32.mrf.mxu0
    %v2616 = vadd.f32 %v2598, %v2615
    %2617 = vmatmul.bf16.gmra.mxu0 %v809
    %v2618 = vpop.f32.mrf.mxu0
    %v2619 = vadd.f32 %v2601, %v2618
    %v2620 = vpop.f32.mrf.mxu0
    %2621 = vdwg.mxu0
    %2622 = vmatpush.bf16.msra.mxu0 %v1750
    %2623 = vmatpush.bf16.msra.mxu0 %v1747
    %2624 = vmatpush.bf16.msra.mxu0 %v1744
    %2625 = vmatpush.bf16.msra.mxu0 %v1741
    %2626 = vmatpush.bf16.msra.mxu0 %v1738
    %2627 = vmatpush.bf16.msra.mxu0 %v1735
    %2628 = vmatpush.bf16.msra.mxu0 %v1732
    %2629 = vmatpush.bf16.msra.mxu0 %v1729
    %2630 = vmatmul.bf16.gmra.mxu0 %v799
    %v2631 = vpop.f32.mrf.mxu0
    %v2632 = vadd.f32 %v2614, %v2631
    %v2633 = vpop.f32.mrf.mxu0
    %v2634 = vadd.f32 %v2616, %v2633
    %2635 = vmatmul.bf16.gmra.mxu0 %v810
    %v2636 = vpop.f32.mrf.mxu0
    %v2637 = vadd.f32 %v2619, %v2636
    %v2638 = vpop.f32.mrf.mxu0
    %2639 = vdwg.mxu0
    %2640 = vmatpush.bf16.msra.mxu0 %v1774
    %2641 = vmatpush.bf16.msra.mxu0 %v1771
    %2642 = vmatpush.bf16.msra.mxu0 %v1768
    %2643 = vmatpush.bf16.msra.mxu0 %v1765
    %2644 = vmatpush.bf16.msra.mxu0 %v1762
    %2645 = vmatpush.bf16.msra.mxu0 %v1759
    %2646 = vmatpush.bf16.msra.mxu0 %v1756
    %2647 = vmatpush.bf16.msra.mxu0 %v1753
    %2648 = vmatmul.bf16.gmra.mxu0 %v800
    %v2649 = vpop.f32.mrf.mxu0
    %v2650 = vadd.f32 %v2632, %v2649
    %v2651 = vpop.f32.mrf.mxu0
    %v2652 = vadd.f32 %v2634, %v2651
    %2653 = vmatmul.bf16.gmra.mxu0 %v811
    %v2654 = vpop.f32.mrf.mxu0
    %v2655 = vadd.f32 %v2637, %v2654
    %v2656 = vpop.f32.mrf.mxu0
    %2657 = vdwg.mxu0
    %2658 = vmatpush.bf16.msra.mxu0 %v1798
    %2659 = vmatpush.bf16.msra.mxu0 %v1795
    %2660 = vmatpush.bf16.msra.mxu0 %v1792
    %2661 = vmatpush.bf16.msra.mxu0 %v1789
    %2662 = vmatpush.bf16.msra.mxu0 %v1786
    %2663 = vmatpush.bf16.msra.mxu0 %v1783
    %2664 = vmatpush.bf16.msra.mxu0 %v1780
    %2665 = vmatpush.bf16.msra.mxu0 %v1777
    %2666 = vmatmul.bf16.gmra.mxu0 %v801
    %v2667 = vpop.f32.mrf.mxu0
    %v2668 = vadd.f32 %v2650, %v2667
    %v2669 = vpop.f32.mrf.mxu0
    %v2670 = vadd.f32 %v2652, %v2669
    %2671 = vmatmul.bf16.gmra.mxu0 %v812
    %v2672 = vpop.f32.mrf.mxu0
    %v2673 = vadd.f32 %v2655, %v2672
    %v2674 = vpop.f32.mrf.mxu0
    %2675 = vdwg.mxu0
    %2676 = vmatpush.bf16.msra.mxu0 %v1822
    %2677 = vmatpush.bf16.msra.mxu0 %v1819
    %2678 = vmatpush.bf16.msra.mxu0 %v1816
    %2679 = vmatpush.bf16.msra.mxu0 %v1813
    %2680 = vmatpush.bf16.msra.mxu0 %v1810
    %2681 = vmatpush.bf16.msra.mxu0 %v1807
    %2682 = vmatpush.bf16.msra.mxu0 %v1804
    %2683 = vmatpush.bf16.msra.mxu0 %v1801
    %2684 = vmatmul.bf16.gmra.mxu0 %v802
    %v2685 = vpop.f32.mrf.mxu0
    %v2686 = vadd.f32 %v2668, %v2685
    %v2687 = vpop.f32.mrf.mxu0
    %v2688 = vadd.f32 %v2670, %v2687
    %2689 = vmatmul.bf16.gmra.mxu0 %v813
    %v2690 = vpop.f32.mrf.mxu0
    %v2691 = vadd.f32 %v2673, %v2690
    %v2692 = vpop.f32.mrf.mxu0
    %2693 = vdwg.mxu0
    %2694 = vmatpush.bf16.msra.mxu0 %v1846
    %2695 = vmatpush.bf16.msra.mxu0 %v1843
    %2696 = vmatpush.bf16.msra.mxu0 %v1840
    %2697 = vmatpush.bf16.msra.mxu0 %v1837
    %2698 = vmatpush.bf16.msra.mxu0 %v1834
    %2699 = vmatpush.bf16.msra.mxu0 %v1831
    %2700 = vmatpush.bf16.msra.mxu0 %v1828
    %2701 = vmatpush.bf16.msra.mxu0 %v1825
    %2702 = vmatmul.bf16.gmra.mxu0 %v803
    %v2703 = vpop.f32.mrf.mxu0
    %v2704 = vadd.f32 %v2686, %v2703
    %v2705 = vpop.f32.mrf.mxu0
    %v2706 = vadd.f32 %v2688, %v2705
    %2707 = vmatmul.bf16.gmra.mxu0 %v814
    %v2708 = vpop.f32.mrf.mxu0
    %v2709 = vadd.f32 %v2691, %v2708
    %v2710 = vpop.f32.mrf.mxu0
    %2711 = vdwg.mxu0
    %2712 = vmatpush.bf16.msra.mxu0 %v1870
    %2713 = vmatpush.bf16.msra.mxu0 %v1867
    %2714 = vmatpush.bf16.msra.mxu0 %v1864
    %2715 = vmatpush.bf16.msra.mxu0 %v1861
    %2716 = vmatpush.bf16.msra.mxu0 %v1858
    %2717 = vmatpush.bf16.msra.mxu0 %v1855
    %2718 = vmatpush.bf16.msra.mxu0 %v1852
    %2719 = vmatpush.bf16.msra.mxu0 %v1849
    %2720 = vmatmul.bf16.gmra.mxu0 %v804
    %v2721 = vpop.f32.mrf.mxu0
    %v2722 = vadd.f32 %v2704, %v2721
    %v2723 = vpop.f32.mrf.mxu0
    %v2724 = vadd.f32 %v2706, %v2723
    %2725 = vmatmul.bf16.gmra.mxu0 %v815
    %v2726 = vpop.f32.mrf.mxu0
    %v2727 = vadd.f32 %v2709, %v2726
    %v2728 = vpop.f32.mrf.mxu0
    %2729 = vdwg.mxu0
    %2730 = vmatpush.bf16.msra.mxu0 %v1894
    %2731 = vmatpush.bf16.msra.mxu0 %v1891
    %2732 = vmatpush.bf16.msra.mxu0 %v1888
    %2733 = vmatpush.bf16.msra.mxu0 %v1885
    %2734 = vmatpush.bf16.msra.mxu0 %v1882
    %2735 = vmatpush.bf16.msra.mxu0 %v1879
    %2736 = vmatpush.bf16.msra.mxu0 %v1876
    %2737 = vmatpush.bf16.msra.mxu0 %v1873
    %2738 = vmatmul.bf16.gmra.mxu0 %v805
    %v2739 = vpop.f32.mrf.mxu0
    %v2740 = vadd.f32 %v2722, %v2739
    %v2741 = vpop.f32.mrf.mxu0
    %v2742 = vadd.f32 %v2724, %v2741
    %2743 = vmatmul.bf16.gmra.mxu0 %v816
    %v2744 = vpop.f32.mrf.mxu0
    %v2745 = vadd.f32 %v2727, %v2744
    %v2746 = vpop.f32.mrf.mxu0
    %2747 = vdwg.mxu0
    %2748 = vmatpush.bf16.msra.mxu0 %v1918
    %2749 = vmatpush.bf16.msra.mxu0 %v1915
    %2750 = vmatpush.bf16.msra.mxu0 %v1912
    %2751 = vmatpush.bf16.msra.mxu0 %v1909
    %2752 = vmatpush.bf16.msra.mxu0 %v1906
    %2753 = vmatpush.bf16.msra.mxu0 %v1903
    %2754 = vmatpush.bf16.msra.mxu0 %v1900
    %2755 = vmatpush.bf16.msra.mxu0 %v1897
    %2756 = vmatmul.bf16.gmra.mxu0 %v806
    %v2757 = vpop.f32.mrf.mxu0
    %v2758 = vadd.f32 %v2740, %v2757
    %v2759 = vpop.f32.mrf.mxu0
    %v2760 = vadd.f32 %v2742, %v2759
    %2761 = vmatmul.bf16.gmra.mxu0 %v817
    %v2762 = vpop.f32.mrf.mxu0
    %v2763 = vadd.f32 %v2745, %v2762
    %v2764 = vpop.f32.mrf.mxu0
    %2765 = vdwg.mxu0
    %2766 = vmatpush.bf16.msra.mxu0 0
    %2767 = vmatpush.bf16.msra.mxu0 0
    %2768 = vmatpush.bf16.msra.mxu0 0
    %2769 = vmatpush.bf16.msra.mxu0 0
    %2770 = vmatpush.bf16.msra.mxu0 %v1930
    %2771 = vmatpush.bf16.msra.mxu0 %v1927
    %2772 = vmatpush.bf16.msra.mxu0 %v1924
    %2773 = vmatpush.bf16.msra.mxu0 %v1921
    %2774 = vmatmul.bf16.gmra.mxu0 %v2185
    %v2775 = vpop.f32.mrf.mxu0
    %v2776 = vadd.f32 %v2758, %v2775
    %v2777 = vpop.f32.mrf.mxu0
    %v2778 = vadd.f32 %v2760, %v2777
    %2779 = vmatmul.bf16.gmra.mxu0 %v2188
    %v2780 = vpop.f32.mrf.mxu0
    %v2781 = vadd.f32 %v2763, %v2780
    %v2782 = vpop.f32.mrf.mxu0
    %2783 = vdwg.mxu0
    %v3120 = vunpack.c.l.b16 %v410
    %v3121 = vunpack.c.h.b16 %v410
    %v3122 = vunpack.c.l.b16 %v411
    %v3123 = vunpack.c.l.b16 %v412
    %v3124 = vunpack.c.h.b16 %v412
    %v3125 = vunpack.c.l.b16 %v413
    %v3126 = vunpack.c.l.b16 %v414
    %v3127 = vunpack.c.h.b16 %v414
    %v3128 = vunpack.c.l.b16 %v415
    %v3129 = vunpack.c.l.b16 %v416
    %v3130 = vunpack.c.h.b16 %v416
    %v3131 = vunpack.c.l.b16 %v417
    %v3132 = vunpack.c.l.b16 %v418
    %v3133 = vunpack.c.h.b16 %v418
    %v3134 = vunpack.c.l.b16 %v419
    %v3135 = vunpack.c.l.b16 %v420
    %v3136 = vunpack.c.h.b16 %v420
    %v3137 = vunpack.c.l.b16 %v421
    %v3138 = vunpack.c.l.b16 %v422
    %v3139 = vunpack.c.h.b16 %v422
    %v3140 = vunpack.c.l.b16 %v423
    %v3141 = vunpack.c.l.b16 %v424
    %v3142 = vunpack.c.h.b16 %v424
    %v3143 = vunpack.c.l.b16 %v425
    %v3144 = vunpack.c.l.b16 %v426
    %v3145 = vunpack.c.h.b16 %v426
    %v3146 = vunpack.c.l.b16 %v427
    %v3147 = vunpack.c.l.b16 %v428
    %v3148 = vunpack.c.h.b16 %v428
    %v3149 = vunpack.c.l.b16 %v429
    %v3150 = vunpack.c.l.b16 %v430
    %v3151 = vunpack.c.h.b16 %v430
    %v3152 = vunpack.c.l.b16 %v431
    %v3153 = vunpack.c.l.b16 %v432
    %v3154 = vunpack.c.h.b16 %v432
    %v3155 = vunpack.c.l.b16 %v433
    %v3156 = vunpack.c.l.b16 %v434
    %v3157 = vunpack.c.h.b16 %v434
    %v3158 = vunpack.c.l.b16 %v435
    %v3159 = vunpack.c.l.b16 %v436
    %v3160 = vunpack.c.h.b16 %v436
    %v3161 = vunpack.c.l.b16 %v437
    %v3162 = vunpack.c.l.b16 %v438
    %v3163 = vunpack.c.h.b16 %v438
    %v3164 = vunpack.c.l.b16 %v439
    %v3165 = vunpack.c.l.b16 %v440
    %v3166 = vunpack.c.h.b16 %v440
    %v3167 = vunpack.c.l.b16 %v441
    %v3168 = vunpack.c.l.b16 %v442
    %v3169 = vunpack.c.h.b16 %v442
    %v3170 = vunpack.c.l.b16 %v443
    %v3171 = vunpack.c.l.b16 %v444
    %v3172 = vunpack.c.h.b16 %v444
    %v3173 = vunpack.c.l.b16 %v445
    %v3174 = vunpack.c.l.b16 %v446
    %v3175 = vunpack.c.h.b16 %v446
    %v3176 = vunpack.c.l.b16 %v447
    %v3177 = vunpack.c.l.b16 %v448
    %v3178 = vunpack.c.h.b16 %v448
    %v3179 = vunpack.c.l.b16 %v449
    %v3180 = vunpack.c.l.b16 %v450
    %v3181 = vunpack.c.h.b16 %v450
    %v3182 = vunpack.c.l.b16 %v451
    %v3183 = vunpack.c.l.b16 %v452
    %v3184 = vunpack.c.h.b16 %v452
    %v3185 = vunpack.c.l.b16 %v453
    %v3186 = vunpack.c.l.b16 %v454
    %v3187 = vunpack.c.h.b16 %v454
    %v3188 = vunpack.c.l.b16 %v455
    %v3189 = vunpack.c.l.b16 %v456
    %v3190 = vunpack.c.h.b16 %v456
    %v3191 = vunpack.c.l.b16 %v457
    %v3192 = vunpack.c.l.b16 %v458
    %v3193 = vunpack.c.h.b16 %v458
    %v3194 = vunpack.c.l.b16 %v459
    %v3195 = vunpack.c.l.b16 %v460
    %v3196 = vunpack.c.h.b16 %v460
    %v3197 = vunpack.c.l.b16 %v461
    %v3198 = vunpack.c.l.b16 %v462
    %v3199 = vunpack.c.h.b16 %v462
    %v3200 = vunpack.c.l.b16 %v463
    %v3201 = vunpack.c.l.b16 %v464
    %v3202 = vunpack.c.h.b16 %v464
    %v3203 = vunpack.c.l.b16 %v465
    %v3204 = vunpack.c.l.b16 %v466
    %v3205 = vunpack.c.h.b16 %v466
    %v3206 = vunpack.c.l.b16 %v467
    %v3207 = vunpack.c.l.b16 %v468
    %v3208 = vunpack.c.h.b16 %v468
    %v3209 = vunpack.c.l.b16 %v469
    %v3210 = vunpack.c.l.b16 %v470
    %v3211 = vunpack.c.h.b16 %v470
    %v3212 = vunpack.c.l.b16 %v471
    %v3213 = vunpack.c.l.b16 %v472
    %v3214 = vunpack.c.h.b16 %v472
    %v3215 = vunpack.c.l.b16 %v473
    %v3216 = vunpack.c.l.b16 %v474
    %v3217 = vunpack.c.h.b16 %v474
    %v3218 = vunpack.c.l.b16 %v475
    %v3219 = vunpack.c.l.b16 %v476
    %v3220 = vunpack.c.h.b16 %v476
    %v3221 = vunpack.c.l.b16 %v477
    %v3222 = vunpack.c.l.b16 %v478
    %v3223 = vunpack.c.h.b16 %v478
    %v3224 = vunpack.c.l.b16 %v479
    %v3225 = vunpack.c.l.b16 %v480
    %v3226 = vunpack.c.h.b16 %v480
    %v3227 = vunpack.c.l.b16 %v481
    %v3228 = vunpack.c.l.b16 %v482
    %v3229 = vunpack.c.h.b16 %v482
    %v3230 = vunpack.c.l.b16 %v483
    %v3231 = vunpack.c.l.b16 %v484
    %v3232 = vunpack.c.h.b16 %v484
    %v3233 = vunpack.c.l.b16 %v485
    %v3234 = vunpack.c.l.b16 %v486
    %v3235 = vunpack.c.h.b16 %v486
    %v3236 = vunpack.c.l.b16 %v487
    %v3237 = vunpack.c.l.b16 %v488
    %v3238 = vunpack.c.h.b16 %v488
    %v3239 = vunpack.c.l.b16 %v489
    %v3240 = vunpack.c.l.b16 %v490
    %v3241 = vunpack.c.h.b16 %v490
    %v3242 = vunpack.c.l.b16 %v491
    %v3243 = vunpack.c.l.b16 %v492
    %v3244 = vunpack.c.h.b16 %v492
    %v3245 = vunpack.c.l.b16 %v493
    %v3246 = vunpack.c.l.b16 %v494
    %v3247 = vunpack.c.h.b16 %v494
    %v3248 = vunpack.c.l.b16 %v495
    %v3249 = vunpack.c.l.b16 %v496
    %v3250 = vunpack.c.h.b16 %v496
    %v3251 = vunpack.c.l.b16 %v497
    %v3252 = vunpack.c.l.b16 %v498
    %v3253 = vunpack.c.h.b16 %v498
    %v3254 = vunpack.c.l.b16 %v499
    %v3255 = vunpack.c.l.b16 %v500
    %v3256 = vunpack.c.h.b16 %v500
    %v3257 = vunpack.c.l.b16 %v501
    %v3258 = vunpack.c.l.b16 %v502
    %v3259 = vunpack.c.h.b16 %v502
    %v3260 = vunpack.c.l.b16 %v503
    %v3261 = vunpack.c.l.b16 %v504
    %v3262 = vunpack.c.h.b16 %v504
    %v3263 = vunpack.c.l.b16 %v505
    %v3264 = vunpack.c.l.b16 %v506
    %v3265 = vunpack.c.h.b16 %v506
    %v3266 = vunpack.c.l.b16 %v507
    %v3267 = vunpack.c.l.b16 %v508
    %v3268 = vunpack.c.h.b16 %v508
    %v3269 = vunpack.c.l.b16 %v509
    %v3270 = vunpack.c.l.b16 %v510
    %v3271 = vunpack.c.h.b16 %v510
    %v3272 = vunpack.c.l.b16 %v511
    %v3273 = vunpack.c.l.b16 %v512
    %v3274 = vunpack.c.h.b16 %v512
    %v3275 = vunpack.c.l.b16 %v513
    %v3276 = vunpack.c.l.b16 %v514
    %v3277 = vunpack.c.h.b16 %v514
    %v3278 = vunpack.c.l.b16 %v515
    %v3279 = vunpack.c.l.b16 %v516
    %v3280 = vunpack.c.h.b16 %v516
    %v3281 = vunpack.c.l.b16 %v517
    %v3282 = vunpack.c.l.b16 %v518
    %v3283 = vunpack.c.h.b16 %v518
    %v3284 = vunpack.c.l.b16 %v519
    %v3285 = vunpack.c.l.b16 %v520
    %v3286 = vunpack.c.h.b16 %v520
    %v3287 = vunpack.c.l.b16 %v521
    %v3288 = vunpack.c.l.b16 %v522
    %v3289 = vunpack.c.h.b16 %v522
    %v3290 = vunpack.c.l.b16 %v523
    %v3291 = vunpack.c.l.b16 %v524
    %v3292 = vunpack.c.h.b16 %v524
    %v3293 = vunpack.c.l.b16 %v525
    %v3294 = vunpack.c.l.b16 %v526
    %v3295 = vunpack.c.h.b16 %v526
    %v3296 = vunpack.c.l.b16 %v527
    %v3297 = vunpack.c.l.b16 %v528
    %v3298 = vunpack.c.h.b16 %v528
    %v3299 = vunpack.c.l.b16 %v529
    %v3300 = vunpack.c.l.b16 %v530
    %v3301 = vunpack.c.h.b16 %v530
    %v3302 = vunpack.c.l.b16 %v531
    %v3303 = vunpack.c.l.b16 %v532
    %v3304 = vunpack.c.h.b16 %v532
    %v3305 = vunpack.c.l.b16 %v533
    %v3306 = vunpack.c.l.b16 %v534
    %v3307 = vunpack.c.h.b16 %v534
    %v3308 = vunpack.c.l.b16 %v535
    %v3309 = vunpack.c.l.b16 %v536
    %v3310 = vunpack.c.h.b16 %v536
    %v3311 = vunpack.c.l.b16 %v537
    %v3312 = vunpack.c.l.b16 %v538
    %v3313 = vunpack.c.h.b16 %v538
    %v3314 = vunpack.c.l.b16 %v539
    %v3315 = vunpack.c.l.b16 %v540
    %v3316 = vunpack.c.h.b16 %v540
    %v3317 = vunpack.c.l.b16 %v541
    %v3318 = vunpack.c.l.b16 %v542
    %v3319 = vunpack.c.h.b16 %v542
    %v3320 = vunpack.c.l.b16 %v543
    %v3321 = vunpack.c.l.b16 %v544
    %v3322 = vunpack.c.h.b16 %v544
    %v3323 = vunpack.c.l.b16 %v545
    %v3324 = vunpack.c.l.b16 %v546
    %v3325 = vunpack.c.h.b16 %v546
    %v3326 = vunpack.c.l.b16 %v547
    %v3327 = vunpack.c.l.b16 %v548
    %v3328 = vunpack.c.h.b16 %v548
    %v3329 = vunpack.c.l.b16 %v549
    %v3330 = vunpack.c.l.b16 %v550
    %v3331 = vunpack.c.h.b16 %v550
    %v3332 = vunpack.c.l.b16 %v551
    %v3333 = vunpack.c.l.b16 %v552
    %v3334 = vunpack.c.h.b16 %v552
    %v3335 = vunpack.c.l.b16 %v553
    %v3336 = vunpack.c.l.b16 %v554
    %v3337 = vunpack.c.h.b16 %v554
    %v3338 = vunpack.c.l.b16 %v555
    %v3339 = vunpack.c.l.b16 %v556
    %v3340 = vunpack.c.h.b16 %v556
    %v3341 = vunpack.c.l.b16 %v557
    %v3342 = vunpack.c.l.b16 %v558
    %v3343 = vunpack.c.h.b16 %v558
    %v3344 = vunpack.c.l.b16 %v559
    %v3345 = vunpack.c.l.b16 %v560
    %v3346 = vunpack.c.h.b16 %v560
    %v3347 = vunpack.c.l.b16 %v561
    %v3348 = vunpack.c.l.b16 %v562
    %v3349 = vunpack.c.h.b16 %v562
    %v3350 = vunpack.c.l.b16 %v563
    %v3351 = vunpack.c.l.b16 %v564
    %v3352 = vunpack.c.h.b16 %v564
    %v3353 = vunpack.c.l.b16 %v565
    %v3354 = vunpack.c.l.b16 %v566
    %v3355 = vunpack.c.h.b16 %v566
    %v3356 = vunpack.c.l.b16 %v567
    %v3357 = vunpack.c.l.b16 %v568
    %v3358 = vunpack.c.h.b16 %v568
    %v3359 = vunpack.c.l.b16 %v569
    %v3360 = vunpack.c.l.b16 %v570
    %v3361 = vunpack.c.h.b16 %v570
    %v3362 = vunpack.c.l.b16 %v571
    %v3363 = vunpack.c.l.b16 %v572
    %v3364 = vunpack.c.h.b16 %v572
    %v3365 = vunpack.c.l.b16 %v573
    %v3366 = vunpack.c.l.b16 %v574
    %v3367 = vunpack.c.h.b16 %v574
    %v3368 = vunpack.c.l.b16 %v575
    %v3369 = vunpack.c.l.b16 %v576
    %v3370 = vunpack.c.h.b16 %v576
    %v3371 = vunpack.c.l.b16 %v577
    %v3372 = vunpack.c.l.b16 %v578
    %v3373 = vunpack.c.h.b16 %v578
    %v3374 = vunpack.c.l.b16 %v579
    %v3375 = vunpack.c.l.b16 %v580
    %v3376 = vunpack.c.h.b16 %v580
    %v3377 = vunpack.c.l.b16 %v581
    %v3378 = vunpack.c.l.b16 %v582
    %v3379 = vunpack.c.h.b16 %v582
    %v3380 = vunpack.c.l.b16 %v583
    %v3381 = vunpack.c.l.b16 %v584
    %v3382 = vunpack.c.h.b16 %v584
    %v3383 = vunpack.c.l.b16 %v585
    %v3384 = vunpack.c.l.b16 %v586
    %v3385 = vunpack.c.h.b16 %v586
    %v3386 = vunpack.c.l.b16 %v587
    %v3387 = vunpack.c.l.b16 %v588
    %v3388 = vunpack.c.h.b16 %v588
    %v3389 = vunpack.c.l.b16 %v589
    %v3390 = vunpack.c.l.b16 %v590
    %v3391 = vunpack.c.h.b16 %v590
    %v3392 = vunpack.c.l.b16 %v591
    %v3393 = vunpack.c.l.b16 %v592
    %v3394 = vunpack.c.h.b16 %v592
    %v3395 = vunpack.c.l.b16 %v593
    %v3396 = vunpack.c.l.b16 %v594
    %v3397 = vunpack.c.h.b16 %v594
    %v3398 = vunpack.c.l.b16 %v595
    %v3399 = vunpack.c.l.b16 %v596
    %v3400 = vunpack.c.h.b16 %v596
    %v3401 = vunpack.c.l.b16 %v597
    %v3402 = vunpack.c.l.b16 %v598
    %v3403 = vunpack.c.h.b16 %v598
    %v3404 = vunpack.c.l.b16 %v599
    %v3405 = vunpack.c.l.b16 %v600
    %v3406 = vunpack.c.h.b16 %v600
    %v3407 = vunpack.c.l.b16 %v601
    %v3408 = vunpack.c.l.b16 %v602
    %v3409 = vunpack.c.h.b16 %v602
    %v3410 = vunpack.c.l.b16 %v603
    %v3411 = vunpack.c.l.b16 %v604
    %v3412 = vunpack.c.h.b16 %v604
    %v3413 = vunpack.c.l.b16 %v605
    %v3414 = vunpack.c.l.b16 %v606
    %v3415 = vunpack.c.h.b16 %v606
    %v3416 = vunpack.c.l.b16 %v607
    %v3417 = vunpack.c.l.b16 %v608
    %v3418 = vunpack.c.h.b16 %v608
    %v3419 = vunpack.c.l.b16 %v609
    %v3420 = vunpack.c.l.b16 %v610
    %v3421 = vunpack.c.h.b16 %v610
    %v3422 = vunpack.c.l.b16 %v611
    %v3423 = vunpack.c.l.b16 %v612
    %v3424 = vunpack.c.h.b16 %v612
    %v3425 = vunpack.c.l.b16 %v613
    %v3426 = vunpack.c.l.b16 %v614
    %v3427 = vunpack.c.h.b16 %v614
    %v3428 = vunpack.c.l.b16 %v615
    %v3429 = vunpack.c.l.b16 %v616
    %v3430 = vunpack.c.h.b16 %v616
    %v3431 = vunpack.c.l.b16 %v617
    %v3432 = vunpack.c.l.b16 %v618
    %v3433 = vunpack.c.h.b16 %v618
    %v3434 = vunpack.c.l.b16 %v619
    %v3435 = vunpack.c.l.b16 %v620
    %v3436 = vunpack.c.h.b16 %v620
    %v3437 = vunpack.c.l.b16 %v621
    %v3438 = vunpack.c.l.b16 %v622
    %v3439 = vunpack.c.h.b16 %v622
    %v3440 = vunpack.c.l.b16 %v623
    %v3441 = vunpack.c.l.b16 %v624
    %v3442 = vunpack.c.h.b16 %v624
    %v3443 = vunpack.c.l.b16 %v625
    %v3444 = vunpack.c.l.b16 %v626
    %v3445 = vunpack.c.h.b16 %v626
    %v3446 = vunpack.c.l.b16 %v627
    %v3447 = vunpack.c.l.b16 %v628
    %v3448 = vunpack.c.h.b16 %v628
    %v3449 = vunpack.c.l.b16 %v629
    %v3450 = vunpack.c.l.b16 %v630
    %v3451 = vunpack.c.h.b16 %v630
    %v3452 = vunpack.c.l.b16 %v631
    %v3453 = vunpack.c.l.b16 %v632
    %v3454 = vunpack.c.h.b16 %v632
    %v3455 = vunpack.c.l.b16 %v633
    %v3456 = vunpack.c.l.b16 %v634
    %v3457 = vunpack.c.h.b16 %v634
    %v3458 = vunpack.c.l.b16 %v635
    %v3459 = vunpack.c.l.b16 %v636
    %v3460 = vunpack.c.h.b16 %v636
    %v3461 = vunpack.c.l.b16 %v637
    %v3462 = vunpack.c.l.b16 %v638
    %v3463 = vunpack.c.h.b16 %v638
    %v3464 = vunpack.c.l.b16 %v639
    %v3465 = vunpack.c.l.b16 %v640
    %v3466 = vunpack.c.h.b16 %v640
    %v3467 = vunpack.c.l.b16 %v641
    %v3468 = vunpack.c.l.b16 %v642
    %v3469 = vunpack.c.h.b16 %v642
    %v3470 = vunpack.c.l.b16 %v643
    %v3471 = vunpack.c.l.b16 %v644
    %v3472 = vunpack.c.h.b16 %v644
    %v3473 = vunpack.c.l.b16 %v645
    %v3474 = vunpack.c.l.b16 %v646
    %v3475 = vunpack.c.h.b16 %v646
    %v3476 = vunpack.c.l.b16 %v647
    %v3477 = vunpack.c.l.b16 %v648
    %v3478 = vunpack.c.h.b16 %v648
    %v3479 = vunpack.c.l.b16 %v649
    %v3480 = vunpack.c.l.b16 %v650
    %v3481 = vunpack.c.h.b16 %v650
    %v3482 = vunpack.c.l.b16 %v651
    %v3483 = vunpack.c.l.b16 %v652
    %v3484 = vunpack.c.h.b16 %v652
    %v3485 = vunpack.c.l.b16 %v653
    %v3486 = vunpack.c.l.b16 %v654
    %v3487 = vunpack.c.h.b16 %v654
    %v3488 = vunpack.c.l.b16 %v655
    %v3489 = vunpack.c.l.b16 %v656
    %v3490 = vunpack.c.h.b16 %v656
    %v3491 = vunpack.c.l.b16 %v657
    %v3492 = vunpack.c.l.b16 %v658
    %v3493 = vunpack.c.h.b16 %v658
    %v3494 = vunpack.c.l.b16 %v659
    %v3495 = vunpack.c.l.b16 %v660
    %v3496 = vunpack.c.h.b16 %v660
    %v3497 = vunpack.c.l.b16 %v661
    %v3498 = vunpack.c.l.b16 %v662
    %v3499 = vunpack.c.h.b16 %v662
    %v3500 = vunpack.c.l.b16 %v663
    %v3501 = vunpack.c.l.b16 %v664
    %v3502 = vunpack.c.h.b16 %v664
    %v3503 = vunpack.c.l.b16 %v665
    %v3504 = vunpack.c.l.b16 %v666
    %v3505 = vunpack.c.h.b16 %v666
    %v3506 = vunpack.c.l.b16 %v667
    %v3507 = vunpack.c.l.b16 %v668
    %v3508 = vunpack.c.h.b16 %v668
    %v3509 = vunpack.c.l.b16 %v669
    %v3510 = vunpack.c.l.b16 %v670
    %v3511 = vunpack.c.h.b16 %v670
    %v3512 = vunpack.c.l.b16 %v671
    %v3513 = vunpack.c.l.b16 %v672
    %v3514 = vunpack.c.h.b16 %v672
    %v3515 = vunpack.c.l.b16 %v673
    %v3516 = vunpack.c.l.b16 %v674
    %v3517 = vunpack.c.h.b16 %v674
    %v3518 = vunpack.c.l.b16 %v675
    %v3519 = vunpack.c.l.b16 %v676
    %v3520 = vunpack.c.h.b16 %v676
    %v3521 = vunpack.c.l.b16 %v677
    %v3522 = vunpack.c.l.b16 %v678
    %v3523 = vunpack.c.h.b16 %v678
    %v3524 = vunpack.c.l.b16 %v679
    %v3525 = vunpack.c.l.b16 %v680
    %v3526 = vunpack.c.h.b16 %v680
    %v3527 = vunpack.c.l.b16 %v681
    %v3528 = vunpack.c.l.b16 %v682
    %v3529 = vunpack.c.h.b16 %v682
    %v3530 = vunpack.c.l.b16 %v683
    %v3531 = vunpack.c.l.b16 %v684
    %v3532 = vunpack.c.h.b16 %v684
    %v3533 = vunpack.c.l.b16 %v685
    %v3534 = vunpack.c.l.b16 %v686
    %v3535 = vunpack.c.h.b16 %v686
    %v3536 = vunpack.c.l.b16 %v687
    %v3537 = vunpack.c.l.b16 %v688
    %v3538 = vunpack.c.h.b16 %v688
    %v3539 = vunpack.c.l.b16 %v689
    %v3540 = vunpack.c.l.b16 %v690
    %v3541 = vunpack.c.h.b16 %v690
    %v3542 = vunpack.c.l.b16 %v691
    %v3543 = vunpack.c.l.b16 %v692
    %v3544 = vunpack.c.h.b16 %v692
    %v3545 = vunpack.c.l.b16 %v693
    %v3546 = vunpack.c.l.b16 %v694
    %v3547 = vunpack.c.h.b16 %v694
    %v3548 = vunpack.c.l.b16 %v695
    %v3549 = vunpack.c.l.b16 %v696
    %v3550 = vunpack.c.h.b16 %v696
    %v3551 = vunpack.c.l.b16 %v697
    %v3552 = vunpack.c.l.b16 %v698
    %v3553 = vunpack.c.h.b16 %v698
    %v3554 = vunpack.c.l.b16 %v699
    %v3555 = vunpack.c.l.b16 %v700
    %v3556 = vunpack.c.h.b16 %v700
    %v3557 = vunpack.c.l.b16 %v701
    %v3558 = vunpack.c.l.b16 %v702
    %v3559 = vunpack.c.h.b16 %v702
    %v3560 = vunpack.c.l.b16 %v703
    %v3561 = vunpack.c.l.b16 %v704
    %v3562 = vunpack.c.h.b16 %v704
    %v3563 = vunpack.c.l.b16 %v705
    %v3564 = vunpack.c.l.b16 %v706
    %v3565 = vunpack.c.h.b16 %v706
    %v3566 = vunpack.c.l.b16 %v707
    %v3567 = vunpack.c.l.b16 %v708
    %v3568 = vunpack.c.h.b16 %v708
    %v3569 = vunpack.c.l.b16 %v709
    %v3570 = vunpack.c.l.b16 %v710
    %v3571 = vunpack.c.h.b16 %v710
    %v3572 = vunpack.c.l.b16 %v711
    %v3573 = vunpack.c.l.b16 %v712
    %v3574 = vunpack.c.h.b16 %v712
    %v3575 = vunpack.c.l.b16 %v713
    %v3576 = vunpack.c.l.b16 %v714
    %v3577 = vunpack.c.h.b16 %v714
    %v3578 = vunpack.c.l.b16 %v715
    %v3579 = vunpack.c.l.b16 %v716
    %v3580 = vunpack.c.h.b16 %v716
    %v3581 = vunpack.c.l.b16 %v717
    %v3582 = vunpack.c.l.b16 %v718
    %v3583 = vunpack.c.h.b16 %v718
    %v3584 = vunpack.c.l.b16 %v719
    %v3585 = vunpack.c.l.b16 %v720
    %v3586 = vunpack.c.h.b16 %v720
    %v3587 = vunpack.c.l.b16 %v721
    %v3588 = vunpack.c.l.b16 %v722
    %v3589 = vunpack.c.h.b16 %v722
    %v3590 = vunpack.c.l.b16 %v723
    %v3591 = vunpack.c.l.b16 %v724
    %v3592 = vunpack.c.h.b16 %v724
    %v3593 = vunpack.c.l.b16 %v725
    %v3594 = vunpack.c.l.b16 %v726
    %v3595 = vunpack.c.h.b16 %v726
    %v3596 = vunpack.c.l.b16 %v727
    %v3597 = vunpack.c.l.b16 %v728
    %v3598 = vunpack.c.h.b16 %v728
    %v3599 = vunpack.c.l.b16 %v729
    %v3600 = vunpack.c.l.b16 %v730
    %v3601 = vunpack.c.h.b16 %v730
    %v3602 = vunpack.c.l.b16 %v731
    %v3603 = vunpack.c.l.b16 %v732
    %v3604 = vunpack.c.h.b16 %v732
    %v3605 = vunpack.c.l.b16 %v733
    %v3606 = vunpack.c.l.b16 %v734
    %v3607 = vunpack.c.h.b16 %v734
    %v3608 = vunpack.c.l.b16 %v735
    %v3609 = vunpack.c.l.b16 %v736
    %v3610 = vunpack.c.h.b16 %v736
    %v3611 = vunpack.c.l.b16 %v737
    %v3612 = vunpack.c.l.b16 %v738
    %v3613 = vunpack.c.h.b16 %v738
    %v3614 = vunpack.c.l.b16 %v739
    %v3615 = vunpack.c.l.b16 %v740
    %v3616 = vunpack.c.h.b16 %v740
    %v3617 = vunpack.c.l.b16 %v741
    %v3618 = vunpack.c.l.b16 %v742
    %v3619 = vunpack.c.h.b16 %v742
    %v3620 = vunpack.c.l.b16 %v743
    %v3621 = vunpack.c.l.b16 %v744
    %v3622 = vunpack.c.h.b16 %v744
    %v3623 = vunpack.c.l.b16 %v745
    %v3624 = vpack.c.b16 %v3123, %v3120
    %v3625 = vpack.c.b16 %v3124, %v3121
    %v3626 = vpack.c.b16 %v3125, %v3122
    %v3627 = vpack.c.b16 %v3129, %v3126
    %v3628 = vpack.c.b16 %v3130, %v3127
    %v3629 = vpack.c.b16 %v3131, %v3128
    %v3630 = vpack.c.b16 %v3135, %v3132
    %v3631 = vpack.c.b16 %v3136, %v3133
    %v3632 = vpack.c.b16 %v3137, %v3134
    %v3633 = vpack.c.b16 %v3141, %v3138
    %v3634 = vpack.c.b16 %v3142, %v3139
    %v3635 = vpack.c.b16 %v3143, %v3140
    %v3636 = vpack.c.b16 %v3147, %v3144
    %v3637 = vpack.c.b16 %v3148, %v3145
    %v3638 = vpack.c.b16 %v3149, %v3146
    %v3639 = vpack.c.b16 %v3153, %v3150
    %v3640 = vpack.c.b16 %v3154, %v3151
    %v3641 = vpack.c.b16 %v3155, %v3152
    %v3642 = vpack.c.b16 %v3159, %v3156
    %v3643 = vpack.c.b16 %v3160, %v3157
    %v3644 = vpack.c.b16 %v3161, %v3158
    %v3645 = vpack.c.b16 %v3165, %v3162
    %v3646 = vpack.c.b16 %v3166, %v3163
    %v3647 = vpack.c.b16 %v3167, %v3164
    %v3648 = vpack.c.b16 %v3171, %v3168
    %v3649 = vpack.c.b16 %v3172, %v3169
    %v3650 = vpack.c.b16 %v3173, %v3170
    %v3651 = vpack.c.b16 %v3177, %v3174
    %v3652 = vpack.c.b16 %v3178, %v3175
    %v3653 = vpack.c.b16 %v3179, %v3176
    %v3654 = vpack.c.b16 %v3183, %v3180
    %v3655 = vpack.c.b16 %v3184, %v3181
    %v3656 = vpack.c.b16 %v3185, %v3182
    %v3657 = vpack.c.b16 %v3189, %v3186
    %v3658 = vpack.c.b16 %v3190, %v3187
    %v3659 = vpack.c.b16 %v3191, %v3188
    %v3660 = vpack.c.b16 %v3195, %v3192
    %v3661 = vpack.c.b16 %v3196, %v3193
    %v3662 = vpack.c.b16 %v3197, %v3194
    %v3663 = vpack.c.b16 %v3201, %v3198
    %v3664 = vpack.c.b16 %v3202, %v3199
    %v3665 = vpack.c.b16 %v3203, %v3200
    %v3666 = vpack.c.b16 %v3207, %v3204
    %v3667 = vpack.c.b16 %v3208, %v3205
    %v3668 = vpack.c.b16 %v3209, %v3206
    %v3669 = vpack.c.b16 %v3213, %v3210
    %v3670 = vpack.c.b16 %v3214, %v3211
    %v3671 = vpack.c.b16 %v3215, %v3212
    %v3672 = vpack.c.b16 %v3219, %v3216
    %v3673 = vpack.c.b16 %v3220, %v3217
    %v3674 = vpack.c.b16 %v3221, %v3218
    %v3675 = vpack.c.b16 %v3225, %v3222
    %v3676 = vpack.c.b16 %v3226, %v3223
    %v3677 = vpack.c.b16 %v3227, %v3224
    %v3678 = vpack.c.b16 %v3231, %v3228
    %v3679 = vpack.c.b16 %v3232, %v3229
    %v3680 = vpack.c.b16 %v3233, %v3230
    %v3681 = vpack.c.b16 %v3237, %v3234
    %v3682 = vpack.c.b16 %v3238, %v3235
    %v3683 = vpack.c.b16 %v3239, %v3236
    %v3684 = vpack.c.b16 %v3243, %v3240
    %v3685 = vpack.c.b16 %v3244, %v3241
    %v3686 = vpack.c.b16 %v3245, %v3242
    %v3687 = vpack.c.b16 %v3249, %v3246
    %v3688 = vpack.c.b16 %v3250, %v3247
    %v3689 = vpack.c.b16 %v3251, %v3248
    %v3690 = vpack.c.b16 %v3255, %v3252
    %v3691 = vpack.c.b16 %v3256, %v3253
    %v3692 = vpack.c.b16 %v3257, %v3254
    %v3693 = vpack.c.b16 %v3261, %v3258
    %v3694 = vpack.c.b16 %v3262, %v3259
    %v3695 = vpack.c.b16 %v3263, %v3260
    %v3696 = vpack.c.b16 %v3267, %v3264
    %v3697 = vpack.c.b16 %v3268, %v3265
    %v3698 = vpack.c.b16 %v3269, %v3266
    %v3699 = vpack.c.b16 %v3273, %v3270
    %v3700 = vpack.c.b16 %v3274, %v3271
    %v3701 = vpack.c.b16 %v3275, %v3272
    %v3702 = vpack.c.b16 %v3279, %v3276
    %v3703 = vpack.c.b16 %v3280, %v3277
    %v3704 = vpack.c.b16 %v3281, %v3278
    %v3705 = vpack.c.b16 %v3285, %v3282
    %v3706 = vpack.c.b16 %v3286, %v3283
    %v3707 = vpack.c.b16 %v3287, %v3284
    %v3708 = vpack.c.b16 %v3291, %v3288
    %v3709 = vpack.c.b16 %v3292, %v3289
    %v3710 = vpack.c.b16 %v3293, %v3290
    %v3711 = vpack.c.b16 %v3297, %v3294
    %v3712 = vpack.c.b16 %v3298, %v3295
    %v3713 = vpack.c.b16 %v3299, %v3296
    %v3714 = vpack.c.b16 %v3303, %v3300
    %v3715 = vpack.c.b16 %v3304, %v3301
    %v3716 = vpack.c.b16 %v3305, %v3302
    %v3717 = vpack.c.b16 %v3309, %v3306
    %v3718 = vpack.c.b16 %v3310, %v3307
    %v3719 = vpack.c.b16 %v3311, %v3308
    %v3720 = vpack.c.b16 %v3315, %v3312
    %v3721 = vpack.c.b16 %v3316, %v3313
    %v3722 = vpack.c.b16 %v3317, %v3314
    %v3723 = vpack.c.b16 %v3321, %v3318
    %v3724 = vpack.c.b16 %v3322, %v3319
    %v3725 = vpack.c.b16 %v3323, %v3320
    %v3726 = vpack.c.b16 %v3327, %v3324
    %v3727 = vpack.c.b16 %v3328, %v3325
    %v3728 = vpack.c.b16 %v3329, %v3326
    %v3729 = vpack.c.b16 %v3333, %v3330
    %v3730 = vpack.c.b16 %v3334, %v3331
    %v3731 = vpack.c.b16 %v3335, %v3332
    %v3732 = vpack.c.b16 %v3339, %v3336
    %v3733 = vpack.c.b16 %v3340, %v3337
    %v3734 = vpack.c.b16 %v3341, %v3338
    %v3735 = vpack.c.b16 %v3345, %v3342
    %v3736 = vpack.c.b16 %v3346, %v3343
    %v3737 = vpack.c.b16 %v3347, %v3344
    %v3738 = vpack.c.b16 %v3351, %v3348
    %v3739 = vpack.c.b16 %v3352, %v3349
    %v3740 = vpack.c.b16 %v3353, %v3350
    %v3741 = vpack.c.b16 %v3357, %v3354
    %v3742 = vpack.c.b16 %v3358, %v3355
    %v3743 = vpack.c.b16 %v3359, %v3356
    %v3744 = vpack.c.b16 %v3363, %v3360
    %v3745 = vpack.c.b16 %v3364, %v3361
    %v3746 = vpack.c.b16 %v3365, %v3362
    %v3747 = vpack.c.b16 %v3369, %v3366
    %v3748 = vpack.c.b16 %v3370, %v3367
    %v3749 = vpack.c.b16 %v3371, %v3368
    %v3750 = vpack.c.b16 %v3375, %v3372
    %v3751 = vpack.c.b16 %v3376, %v3373
    %v3752 = vpack.c.b16 %v3377, %v3374
    %v3753 = vpack.c.b16 %v3381, %v3378
    %v3754 = vpack.c.b16 %v3382, %v3379
    %v3755 = vpack.c.b16 %v3383, %v3380
    %v3756 = vpack.c.b16 %v3387, %v3384
    %v3757 = vpack.c.b16 %v3388, %v3385
    %v3758 = vpack.c.b16 %v3389, %v3386
    %v3759 = vpack.c.b16 %v3393, %v3390
    %v3760 = vpack.c.b16 %v3394, %v3391
    %v3761 = vpack.c.b16 %v3395, %v3392
    %v3762 = vpack.c.b16 %v3399, %v3396
    %v3763 = vpack.c.b16 %v3400, %v3397
    %v3764 = vpack.c.b16 %v3401, %v3398
    %v3765 = vpack.c.b16 %v3405, %v3402
    %v3766 = vpack.c.b16 %v3406, %v3403
    %v3767 = vpack.c.b16 %v3407, %v3404
    %v3768 = vpack.c.b16 %v3411, %v3408
    %v3769 = vpack.c.b16 %v3412, %v3409
    %v3770 = vpack.c.b16 %v3413, %v3410
    %v3771 = vpack.c.b16 %v3417, %v3414
    %v3772 = vpack.c.b16 %v3418, %v3415
    %v3773 = vpack.c.b16 %v3419, %v3416
    %v3774 = vpack.c.b16 %v3423, %v3420
    %v3775 = vpack.c.b16 %v3424, %v3421
    %v3776 = vpack.c.b16 %v3425, %v3422
    %v3777 = vpack.c.b16 %v3429, %v3426
    %v3778 = vpack.c.b16 %v3430, %v3427
    %v3779 = vpack.c.b16 %v3431, %v3428
    %v3780 = vpack.c.b16 %v3435, %v3432
    %v3781 = vpack.c.b16 %v3436, %v3433
    %v3782 = vpack.c.b16 %v3437, %v3434
    %v3783 = vpack.c.b16 %v3441, %v3438
    %v3784 = vpack.c.b16 %v3442, %v3439
    %v3785 = vpack.c.b16 %v3443, %v3440
    %v3786 = vpack.c.b16 %v3447, %v3444
    %v3787 = vpack.c.b16 %v3448, %v3445
    %v3788 = vpack.c.b16 %v3449, %v3446
    %v3789 = vpack.c.b16 %v3453, %v3450
    %v3790 = vpack.c.b16 %v3454, %v3451
    %v3791 = vpack.c.b16 %v3455, %v3452
    %v3792 = vpack.c.b16 %v3459, %v3456
    %v3793 = vpack.c.b16 %v3460, %v3457
    %v3794 = vpack.c.b16 %v3461, %v3458
    %v3795 = vpack.c.b16 %v3465, %v3462
    %v3796 = vpack.c.b16 %v3466, %v3463
    %v3797 = vpack.c.b16 %v3467, %v3464
    %v3798 = vpack.c.b16 %v3471, %v3468
    %v3799 = vpack.c.b16 %v3472, %v3469
    %v3800 = vpack.c.b16 %v3473, %v3470
    %v3801 = vpack.c.b16 %v3477, %v3474
    %v3802 = vpack.c.b16 %v3478, %v3475
    %v3803 = vpack.c.b16 %v3479, %v3476
    %v3804 = vpack.c.b16 %v3483, %v3480
    %v3805 = vpack.c.b16 %v3484, %v3481
    %v3806 = vpack.c.b16 %v3485, %v3482
    %v3807 = vpack.c.b16 %v3489, %v3486
    %v3808 = vpack.c.b16 %v3490, %v3487
    %v3809 = vpack.c.b16 %v3491, %v3488
    %v3810 = vpack.c.b16 %v3495, %v3492
    %v3811 = vpack.c.b16 %v3496, %v3493
    %v3812 = vpack.c.b16 %v3497, %v3494
    %v3813 = vpack.c.b16 %v3501, %v3498
    %v3814 = vpack.c.b16 %v3502, %v3499
    %v3815 = vpack.c.b16 %v3503, %v3500
    %v3816 = vpack.c.b16 %v3507, %v3504
    %v3817 = vpack.c.b16 %v3508, %v3505
    %v3818 = vpack.c.b16 %v3509, %v3506
    %v3819 = vpack.c.b16 %v3513, %v3510
    %v3820 = vpack.c.b16 %v3514, %v3511
    %v3821 = vpack.c.b16 %v3515, %v3512
    %v3822 = vpack.c.b16 %v3519, %v3516
    %v3823 = vpack.c.b16 %v3520, %v3517
    %v3824 = vpack.c.b16 %v3521, %v3518
    %v3825 = vpack.c.b16 %v3525, %v3522
    %v3826 = vpack.c.b16 %v3526, %v3523
    %v3827 = vpack.c.b16 %v3527, %v3524
    %v3828 = vpack.c.b16 %v3531, %v3528
    %v3829 = vpack.c.b16 %v3532, %v3529
    %v3830 = vpack.c.b16 %v3533, %v3530
    %v3831 = vpack.c.b16 %v3537, %v3534
    %v3832 = vpack.c.b16 %v3538, %v3535
    %v3833 = vpack.c.b16 %v3539, %v3536
    %v3834 = vpack.c.b16 %v3543, %v3540
    %v3835 = vpack.c.b16 %v3544, %v3541
    %v3836 = vpack.c.b16 %v3545, %v3542
    %v3837 = vpack.c.b16 %v3549, %v3546
    %v3838 = vpack.c.b16 %v3550, %v3547
    %v3839 = vpack.c.b16 %v3551, %v3548
    %v3840 = vpack.c.b16 %v3555, %v3552
    %v3841 = vpack.c.b16 %v3556, %v3553
    %v3842 = vpack.c.b16 %v3557, %v3554
    %v3843 = vpack.c.b16 %v3561, %v3558
    %v3844 = vpack.c.b16 %v3562, %v3559
    %v3845 = vpack.c.b16 %v3563, %v3560
    %v3846 = vpack.c.b16 %v3567, %v3564
    %v3847 = vpack.c.b16 %v3568, %v3565
    %v3848 = vpack.c.b16 %v3569, %v3566
    %v3849 = vpack.c.b16 %v3573, %v3570
    %v3850 = vpack.c.b16 %v3574, %v3571
    %v3851 = vpack.c.b16 %v3575, %v3572
    %v3852 = vpack.c.b16 %v3579, %v3576
    %v3853 = vpack.c.b16 %v3580, %v3577
    %v3854 = vpack.c.b16 %v3581, %v3578
    %v3855 = vpack.c.b16 %v3585, %v3582
    %v3856 = vpack.c.b16 %v3586, %v3583
    %v3857 = vpack.c.b16 %v3587, %v3584
    %v3858 = vpack.c.b16 %v3591, %v3588
    %v3859 = vpack.c.b16 %v3592, %v3589
    %v3860 = vpack.c.b16 %v3593, %v3590
    %v3861 = vpack.c.b16 %v3597, %v3594
    %v3862 = vpack.c.b16 %v3598, %v3595
    %v3863 = vpack.c.b16 %v3599, %v3596
    %v3864 = vpack.c.b16 %v3603, %v3600
    %v3865 = vpack.c.b16 %v3604, %v3601
    %v3866 = vpack.c.b16 %v3605, %v3602
    %v3867 = vpack.c.b16 %v3609, %v3606
    %v3868 = vpack.c.b16 %v3610, %v3607
    %v3869 = vpack.c.b16 %v3611, %v3608
    %v3870 = vpack.c.b16 %v3615, %v3612
    %v3871 = vpack.c.b16 %v3616, %v3613
    %v3872 = vpack.c.b16 %v3617, %v3614
    %v3873 = vpack.c.b16 %v3621, %v3618
    %v3874 = vpack.c.b16 %v3622, %v3619
    %v3875 = vpack.c.b16 %v3623, %v3620
    %4128 = vmatpush.bf16.msra.mxu0 %v3645
    %4129 = vmatpush.bf16.msra.mxu0 %v3642
    %4130 = vmatpush.bf16.msra.mxu0 %v3639
    %4131 = vmatpush.bf16.msra.mxu0 %v3636
    %4132 = vmatpush.bf16.msra.mxu0 %v3633
    %4133 = vmatpush.bf16.msra.mxu0 %v3630
    %4134 = vmatpush.bf16.msra.mxu0 %v3627
    %4135 = vmatpush.bf16.msra.mxu0 %v3624
    %4136 = vmatmul.bf16.gmra.mxu0 %v797
    %v4137 = vpop.f32.mrf.mxu0
    %v4138 = vadd.f32 0.0, %v4137
    %v4139 = vpop.f32.mrf.mxu0
    %v4140 = vadd.f32 0.0, %v4139
    %4141 = vmatmul.bf16.gmra.mxu0 %v808
    %v4142 = vpop.f32.mrf.mxu0
    %v4143 = vadd.f32 0.0, %v4142
    %v4144 = vpop.f32.mrf.mxu0
    %4145 = vdwg.mxu0
    %4146 = vmatpush.bf16.msra.mxu0 %v3669
    %4147 = vmatpush.bf16.msra.mxu0 %v3666
    %4148 = vmatpush.bf16.msra.mxu0 %v3663
    %4149 = vmatpush.bf16.msra.mxu0 %v3660
    %4150 = vmatpush.bf16.msra.mxu0 %v3657
    %4151 = vmatpush.bf16.msra.mxu0 %v3654
    %4152 = vmatpush.bf16.msra.mxu0 %v3651
    %4153 = vmatpush.bf16.msra.mxu0 %v3648
    %4154 = vmatmul.bf16.gmra.mxu0 %v798
    %v4155 = vpop.f32.mrf.mxu0
    %v4156 = vadd.f32 %v4138, %v4155
    %v4157 = vpop.f32.mrf.mxu0
    %v4158 = vadd.f32 %v4140, %v4157
    %4159 = vmatmul.bf16.gmra.mxu0 %v809
    %v4160 = vpop.f32.mrf.mxu0
    %v4161 = vadd.f32 %v4143, %v4160
    %v4162 = vpop.f32.mrf.mxu0
    %4163 = vdwg.mxu0
    %4164 = vmatpush.bf16.msra.mxu0 %v3693
    %4165 = vmatpush.bf16.msra.mxu0 %v3690
    %4166 = vmatpush.bf16.msra.mxu0 %v3687
    %4167 = vmatpush.bf16.msra.mxu0 %v3684
    %4168 = vmatpush.bf16.msra.mxu0 %v3681
    %4169 = vmatpush.bf16.msra.mxu0 %v3678
    %4170 = vmatpush.bf16.msra.mxu0 %v3675
    %4171 = vmatpush.bf16.msra.mxu0 %v3672
    %4172 = vmatmul.bf16.gmra.mxu0 %v799
    %v4173 = vpop.f32.mrf.mxu0
    %v4174 = vadd.f32 %v4156, %v4173
    %v4175 = vpop.f32.mrf.mxu0
    %v4176 = vadd.f32 %v4158, %v4175
    %4177 = vmatmul.bf16.gmra.mxu0 %v810
    %v4178 = vpop.f32.mrf.mxu0
    %v4179 = vadd.f32 %v4161, %v4178
    %v4180 = vpop.f32.mrf.mxu0
    %4181 = vdwg.mxu0
    %4182 = vmatpush.bf16.msra.mxu0 %v3717
    %4183 = vmatpush.bf16.msra.mxu0 %v3714
    %4184 = vmatpush.bf16.msra.mxu0 %v3711
    %4185 = vmatpush.bf16.msra.mxu0 %v3708
    %4186 = vmatpush.bf16.msra.mxu0 %v3705
    %4187 = vmatpush.bf16.msra.mxu0 %v3702
    %4188 = vmatpush.bf16.msra.mxu0 %v3699
    %4189 = vmatpush.bf16.msra.mxu0 %v3696
    %4190 = vmatmul.bf16.gmra.mxu0 %v800
    %v4191 = vpop.f32.mrf.mxu0
    %v4192 = vadd.f32 %v4174, %v4191
    %v4193 = vpop.f32.mrf.mxu0
    %v4194 = vadd.f32 %v4176, %v4193
    %4195 = vmatmul.bf16.gmra.mxu0 %v811
    %v4196 = vpop.f32.mrf.mxu0
    %v4197 = vadd.f32 %v4179, %v4196
    %v4198 = vpop.f32.mrf.mxu0
    %4199 = vdwg.mxu0
    %4200 = vmatpush.bf16.msra.mxu0 %v3741
    %4201 = vmatpush.bf16.msra.mxu0 %v3738
    %4202 = vmatpush.bf16.msra.mxu0 %v3735
    %4203 = vmatpush.bf16.msra.mxu0 %v3732
    %4204 = vmatpush.bf16.msra.mxu0 %v3729
    %4205 = vmatpush.bf16.msra.mxu0 %v3726
    %4206 = vmatpush.bf16.msra.mxu0 %v3723
    %4207 = vmatpush.bf16.msra.mxu0 %v3720
    %4208 = vmatmul.bf16.gmra.mxu0 %v801
    %v4209 = vpop.f32.mrf.mxu0
    %v4210 = vadd.f32 %v4192, %v4209
    %v4211 = vpop.f32.mrf.mxu0
    %v4212 = vadd.f32 %v4194, %v4211
    %4213 = vmatmul.bf16.gmra.mxu0 %v812
    %v4214 = vpop.f32.mrf.mxu0
    %v4215 = vadd.f32 %v4197, %v4214
    %v4216 = vpop.f32.mrf.mxu0
    %4217 = vdwg.mxu0
    %4218 = vmatpush.bf16.msra.mxu0 %v3765
    %4219 = vmatpush.bf16.msra.mxu0 %v3762
    %4220 = vmatpush.bf16.msra.mxu0 %v3759
    %4221 = vmatpush.bf16.msra.mxu0 %v3756
    %4222 = vmatpush.bf16.msra.mxu0 %v3753
    %4223 = vmatpush.bf16.msra.mxu0 %v3750
    %4224 = vmatpush.bf16.msra.mxu0 %v3747
    %4225 = vmatpush.bf16.msra.mxu0 %v3744
    %4226 = vmatmul.bf16.gmra.mxu0 %v802
    %v4227 = vpop.f32.mrf.mxu0
    %v4228 = vadd.f32 %v4210, %v4227
    %v4229 = vpop.f32.mrf.mxu0
    %v4230 = vadd.f32 %v4212, %v4229
    %4231 = vmatmul.bf16.gmra.mxu0 %v813
    %v4232 = vpop.f32.mrf.mxu0
    %v4233 = vadd.f32 %v4215, %v4232
    %v4234 = vpop.f32.mrf.mxu0
    %4235 = vdwg.mxu0
    %4236 = vmatpush.bf16.msra.mxu0 %v3789
    %4237 = vmatpush.bf16.msra.mxu0 %v3786
    %4238 = vmatpush.bf16.msra.mxu0 %v3783
    %4239 = vmatpush.bf16.msra.mxu0 %v3780
    %4240 = vmatpush.bf16.msra.mxu0 %v3777
    %4241 = vmatpush.bf16.msra.mxu0 %v3774
    %4242 = vmatpush.bf16.msra.mxu0 %v3771
    %4243 = vmatpush.bf16.msra.mxu0 %v3768
    %4244 = vmatmul.bf16.gmra.mxu0 %v803
    %v4245 = vpop.f32.mrf.mxu0
    %v4246 = vadd.f32 %v4228, %v4245
    %v4247 = vpop.f32.mrf.mxu0
    %v4248 = vadd.f32 %v4230, %v4247
    %4249 = vmatmul.bf16.gmra.mxu0 %v814
    %v4250 = vpop.f32.mrf.mxu0
    %v4251 = vadd.f32 %v4233, %v4250
    %v4252 = vpop.f32.mrf.mxu0
    %4253 = vdwg.mxu0
    %4254 = vmatpush.bf16.msra.mxu0 %v3813
    %4255 = vmatpush.bf16.msra.mxu0 %v3810
    %4256 = vmatpush.bf16.msra.mxu0 %v3807
    %4257 = vmatpush.bf16.msra.mxu0 %v3804
    %4258 = vmatpush.bf16.msra.mxu0 %v3801
    %4259 = vmatpush.bf16.msra.mxu0 %v3798
    %4260 = vmatpush.bf16.msra.mxu0 %v3795
    %4261 = vmatpush.bf16.msra.mxu0 %v3792
    %4262 = vmatmul.bf16.gmra.mxu0 %v804
    %v4263 = vpop.f32.mrf.mxu0
    %v4264 = vadd.f32 %v4246, %v4263
    %v4265 = vpop.f32.mrf.mxu0
    %v4266 = vadd.f32 %v4248, %v4265
    %4267 = vmatmul.bf16.gmra.mxu0 %v815
    %v4268 = vpop.f32.mrf.mxu0
    %v4269 = vadd.f32 %v4251, %v4268
    %v4270 = vpop.f32.mrf.mxu0
    %4271 = vdwg.mxu0
    %4272 = vmatpush.bf16.msra.mxu0 %v3837
    %4273 = vmatpush.bf16.msra.mxu0 %v3834
    %4274 = vmatpush.bf16.msra.mxu0 %v3831
    %4275 = vmatpush.bf16.msra.mxu0 %v3828
    %4276 = vmatpush.bf16.msra.mxu0 %v3825
    %4277 = vmatpush.bf16.msra.mxu0 %v3822
    %4278 = vmatpush.bf16.msra.mxu0 %v3819
    %4279 = vmatpush.bf16.msra.mxu0 %v3816
    %4280 = vmatmul.bf16.gmra.mxu0 %v805
    %v4281 = vpop.f32.mrf.mxu0
    %v4282 = vadd.f32 %v4264, %v4281
    %v4283 = vpop.f32.mrf.mxu0
    %v4284 = vadd.f32 %v4266, %v4283
    %4285 = vmatmul.bf16.gmra.mxu0 %v816
    %v4286 = vpop.f32.mrf.mxu0
    %v4287 = vadd.f32 %v4269, %v4286
    %v4288 = vpop.f32.mrf.mxu0
    %4289 = vdwg.mxu0
    %4290 = vmatpush.bf16.msra.mxu0 %v3861
    %4291 = vmatpush.bf16.msra.mxu0 %v3858
    %4292 = vmatpush.bf16.msra.mxu0 %v3855
    %4293 = vmatpush.bf16.msra.mxu0 %v3852
    %4294 = vmatpush.bf16.msra.mxu0 %v3849
    %4295 = vmatpush.bf16.msra.mxu0 %v3846
    %4296 = vmatpush.bf16.msra.mxu0 %v3843
    %4297 = vmatpush.bf16.msra.mxu0 %v3840
    %4298 = vmatmul.bf16.gmra.mxu0 %v806
    %v4299 = vpop.f32.mrf.mxu0
    %v4300 = vadd.f32 %v4282, %v4299
    %v4301 = vpop.f32.mrf.mxu0
    %v4302 = vadd.f32 %v4284, %v4301
    %4303 = vmatmul.bf16.gmra.mxu0 %v817
    %v4304 = vpop.f32.mrf.mxu0
    %v4305 = vadd.f32 %v4287, %v4304
    %v4306 = vpop.f32.mrf.mxu0
    %4307 = vdwg.mxu0
    %4308 = vmatpush.bf16.msra.mxu0 0
    %4309 = vmatpush.bf16.msra.mxu0 0
    %4310 = vmatpush.bf16.msra.mxu0 0
    %4311 = vmatpush.bf16.msra.mxu0 0
    %4312 = vmatpush.bf16.msra.mxu0 %v3873
    %4313 = vmatpush.bf16.msra.mxu0 %v3870
    %4314 = vmatpush.bf16.msra.mxu0 %v3867
    %4315 = vmatpush.bf16.msra.mxu0 %v3864
    %4316 = vmatmul.bf16.gmra.mxu0 %v2185
    %v4317 = vpop.f32.mrf.mxu0
    %v4318 = vadd.f32 %v4300, %v4317
    %v4319 = vpop.f32.mrf.mxu0
    %v4320 = vadd.f32 %v4302, %v4319
    %4321 = vmatmul.bf16.gmra.mxu0 %v2188
    %v4322 = vpop.f32.mrf.mxu0
    %v4323 = vadd.f32 %v4305, %v4322
    %v4324 = vpop.f32.mrf.mxu0
    %4325 = vdwg.mxu0
    %4326 = vmatpush.bf16.msra.mxu0 %v3646
    %4327 = vmatpush.bf16.msra.mxu0 %v3643
    %4328 = vmatpush.bf16.msra.mxu0 %v3640
    %4329 = vmatpush.bf16.msra.mxu0 %v3637
    %4330 = vmatpush.bf16.msra.mxu0 %v3634
    %4331 = vmatpush.bf16.msra.mxu0 %v3631
    %4332 = vmatpush.bf16.msra.mxu0 %v3628
    %4333 = vmatpush.bf16.msra.mxu0 %v3625
    %4334 = vmatmul.bf16.gmra.mxu0 %v797
    %v4335 = vpop.f32.mrf.mxu0
    %v4336 = vadd.f32 0.0, %v4335
    %v4337 = vpop.f32.mrf.mxu0
    %v4338 = vadd.f32 0.0, %v4337
    %4339 = vmatmul.bf16.gmra.mxu0 %v808
    %v4340 = vpop.f32.mrf.mxu0
    %v4341 = vadd.f32 0.0, %v4340
    %v4342 = vpop.f32.mrf.mxu0
    %4343 = vdwg.mxu0
    %4344 = vmatpush.bf16.msra.mxu0 %v3670
    %4345 = vmatpush.bf16.msra.mxu0 %v3667
    %4346 = vmatpush.bf16.msra.mxu0 %v3664
    %4347 = vmatpush.bf16.msra.mxu0 %v3661
    %4348 = vmatpush.bf16.msra.mxu0 %v3658
    %4349 = vmatpush.bf16.msra.mxu0 %v3655
    %4350 = vmatpush.bf16.msra.mxu0 %v3652
    %4351 = vmatpush.bf16.msra.mxu0 %v3649
    %4352 = vmatmul.bf16.gmra.mxu0 %v798
    %v4353 = vpop.f32.mrf.mxu0
    %v4354 = vadd.f32 %v4336, %v4353
    %v4355 = vpop.f32.mrf.mxu0
    %v4356 = vadd.f32 %v4338, %v4355
    %4357 = vmatmul.bf16.gmra.mxu0 %v809
    %v4358 = vpop.f32.mrf.mxu0
    %v4359 = vadd.f32 %v4341, %v4358
    %v4360 = vpop.f32.mrf.mxu0
    %4361 = vdwg.mxu0
    %4362 = vmatpush.bf16.msra.mxu0 %v3694
    %4363 = vmatpush.bf16.msra.mxu0 %v3691
    %4364 = vmatpush.bf16.msra.mxu0 %v3688
    %4365 = vmatpush.bf16.msra.mxu0 %v3685
    %4366 = vmatpush.bf16.msra.mxu0 %v3682
    %4367 = vmatpush.bf16.msra.mxu0 %v3679
    %4368 = vmatpush.bf16.msra.mxu0 %v3676
    %4369 = vmatpush.bf16.msra.mxu0 %v3673
    %4370 = vmatmul.bf16.gmra.mxu0 %v799
    %v4371 = vpop.f32.mrf.mxu0
    %v4372 = vadd.f32 %v4354, %v4371
    %v4373 = vpop.f32.mrf.mxu0
    %v4374 = vadd.f32 %v4356, %v4373
    %4375 = vmatmul.bf16.gmra.mxu0 %v810
    %v4376 = vpop.f32.mrf.mxu0
    %v4377 = vadd.f32 %v4359, %v4376
    %v4378 = vpop.f32.mrf.mxu0
    %4379 = vdwg.mxu0
    %4380 = vmatpush.bf16.msra.mxu0 %v3718
    %4381 = vmatpush.bf16.msra.mxu0 %v3715
    %4382 = vmatpush.bf16.msra.mxu0 %v3712
    %4383 = vmatpush.bf16.msra.mxu0 %v3709
    %4384 = vmatpush.bf16.msra.mxu0 %v3706
    %4385 = vmatpush.bf16.msra.mxu0 %v3703
    %4386 = vmatpush.bf16.msra.mxu0 %v3700
    %4387 = vmatpush.bf16.msra.mxu0 %v3697
    %4388 = vmatmul.bf16.gmra.mxu0 %v800
    %v4389 = vpop.f32.mrf.mxu0
    %v4390 = vadd.f32 %v4372, %v4389
    %v4391 = vpop.f32.mrf.mxu0
    %v4392 = vadd.f32 %v4374, %v4391
    %4393 = vmatmul.bf16.gmra.mxu0 %v811
    %v4394 = vpop.f32.mrf.mxu0
    %v4395 = vadd.f32 %v4377, %v4394
    %v4396 = vpop.f32.mrf.mxu0
    %4397 = vdwg.mxu0
    %4398 = vmatpush.bf16.msra.mxu0 %v3742
    %4399 = vmatpush.bf16.msra.mxu0 %v3739
    %4400 = vmatpush.bf16.msra.mxu0 %v3736
    %4401 = vmatpush.bf16.msra.mxu0 %v3733
    %4402 = vmatpush.bf16.msra.mxu0 %v3730
    %4403 = vmatpush.bf16.msra.mxu0 %v3727
    %4404 = vmatpush.bf16.msra.mxu0 %v3724
    %4405 = vmatpush.bf16.msra.mxu0 %v3721
    %4406 = vmatmul.bf16.gmra.mxu0 %v801
    %v4407 = vpop.f32.mrf.mxu0
    %v4408 = vadd.f32 %v4390, %v4407
    %v4409 = vpop.f32.mrf.mxu0
    %v4410 = vadd.f32 %v4392, %v4409
    %4411 = vmatmul.bf16.gmra.mxu0 %v812
    %v4412 = vpop.f32.mrf.mxu0
    %v4413 = vadd.f32 %v4395, %v4412
    %v4414 = vpop.f32.mrf.mxu0
    %4415 = vdwg.mxu0
    %4416 = vmatpush.bf16.msra.mxu0 %v3766
    %4417 = vmatpush.bf16.msra.mxu0 %v3763
    %4418 = vmatpush.bf16.msra.mxu0 %v3760
    %4419 = vmatpush.bf16.msra.mxu0 %v3757
    %4420 = vmatpush.bf16.msra.mxu0 %v3754
    %4421 = vmatpush.bf16.msra.mxu0 %v3751
    %4422 = vmatpush.bf16.msra.mxu0 %v3748
    %4423 = vmatpush.bf16.msra.mxu0 %v3745
    %4424 = vmatmul.bf16.gmra.mxu0 %v802
    %v4425 = vpop.f32.mrf.mxu0
    %v4426 = vadd.f32 %v4408, %v4425
    %v4427 = vpop.f32.mrf.mxu0
    %v4428 = vadd.f32 %v4410, %v4427
    %4429 = vmatmul.bf16.gmra.mxu0 %v813
    %v4430 = vpop.f32.mrf.mxu0
    %v4431 = vadd.f32 %v4413, %v4430
    %v4432 = vpop.f32.mrf.mxu0
    %4433 = vdwg.mxu0
    %4434 = vmatpush.bf16.msra.mxu0 %v3790
    %4435 = vmatpush.bf16.msra.mxu0 %v3787
    %4436 = vmatpush.bf16.msra.mxu0 %v3784
    %4437 = vmatpush.bf16.msra.mxu0 %v3781
    %4438 = vmatpush.bf16.msra.mxu0 %v3778
    %4439 = vmatpush.bf16.msra.mxu0 %v3775
    %4440 = vmatpush.bf16.msra.mxu0 %v3772
    %4441 = vmatpush.bf16.msra.mxu0 %v3769
    %4442 = vmatmul.bf16.gmra.mxu0 %v803
    %v4443 = vpop.f32.mrf.mxu0
    %v4444 = vadd.f32 %v4426, %v4443
    %v4445 = vpop.f32.mrf.mxu0
    %v4446 = vadd.f32 %v4428, %v4445
    %4447 = vmatmul.bf16.gmra.mxu0 %v814
    %v4448 = vpop.f32.mrf.mxu0
    %v4449 = vadd.f32 %v4431, %v4448
    %v4450 = vpop.f32.mrf.mxu0
    %4451 = vdwg.mxu0
    %4452 = vmatpush.bf16.msra.mxu0 %v3814
    %4453 = vmatpush.bf16.msra.mxu0 %v3811
    %4454 = vmatpush.bf16.msra.mxu0 %v3808
    %4455 = vmatpush.bf16.msra.mxu0 %v3805
    %4456 = vmatpush.bf16.msra.mxu0 %v3802
    %4457 = vmatpush.bf16.msra.mxu0 %v3799
    %4458 = vmatpush.bf16.msra.mxu0 %v3796
    %4459 = vmatpush.bf16.msra.mxu0 %v3793
    %4460 = vmatmul.bf16.gmra.mxu0 %v804
    %v4461 = vpop.f32.mrf.mxu0
    %v4462 = vadd.f32 %v4444, %v4461
    %v4463 = vpop.f32.mrf.mxu0
    %v4464 = vadd.f32 %v4446, %v4463
    %4465 = vmatmul.bf16.gmra.mxu0 %v815
    %v4466 = vpop.f32.mrf.mxu0
    %v4467 = vadd.f32 %v4449, %v4466
    %v4468 = vpop.f32.mrf.mxu0
    %4469 = vdwg.mxu0
    %4470 = vmatpush.bf16.msra.mxu0 %v3838
    %4471 = vmatpush.bf16.msra.mxu0 %v3835
    %4472 = vmatpush.bf16.msra.mxu0 %v3832
    %4473 = vmatpush.bf16.msra.mxu0 %v3829
    %4474 = vmatpush.bf16.msra.mxu0 %v3826
    %4475 = vmatpush.bf16.msra.mxu0 %v3823
    %4476 = vmatpush.bf16.msra.mxu0 %v3820
    %4477 = vmatpush.bf16.msra.mxu0 %v3817
    %4478 = vmatmul.bf16.gmra.mxu0 %v805
    %v4479 = vpop.f32.mrf.mxu0
    %v4480 = vadd.f32 %v4462, %v4479
    %v4481 = vpop.f32.mrf.mxu0
    %v4482 = vadd.f32 %v4464, %v4481
    %4483 = vmatmul.bf16.gmra.mxu0 %v816
    %v4484 = vpop.f32.mrf.mxu0
    %v4485 = vadd.f32 %v4467, %v4484
    %v4486 = vpop.f32.mrf.mxu0
    %4487 = vdwg.mxu0
    %4488 = vmatpush.bf16.msra.mxu0 %v3862
    %4489 = vmatpush.bf16.msra.mxu0 %v3859
    %4490 = vmatpush.bf16.msra.mxu0 %v3856
    %4491 = vmatpush.bf16.msra.mxu0 %v3853
    %4492 = vmatpush.bf16.msra.mxu0 %v3850
    %4493 = vmatpush.bf16.msra.mxu0 %v3847
    %4494 = vmatpush.bf16.msra.mxu0 %v3844
    %4495 = vmatpush.bf16.msra.mxu0 %v3841
    %4496 = vmatmul.bf16.gmra.mxu0 %v806
    %v4497 = vpop.f32.mrf.mxu0
    %v4498 = vadd.f32 %v4480, %v4497
    %v4499 = vpop.f32.mrf.mxu0
    %v4500 = vadd.f32 %v4482, %v4499
    %4501 = vmatmul.bf16.gmra.mxu0 %v817
    %v4502 = vpop.f32.mrf.mxu0
    %v4503 = vadd.f32 %v4485, %v4502
    %v4504 = vpop.f32.mrf.mxu0
    %4505 = vdwg.mxu0
    %4506 = vmatpush.bf16.msra.mxu0 0
    %4507 = vmatpush.bf16.msra.mxu0 0
    %4508 = vmatpush.bf16.msra.mxu0 0
    %4509 = vmatpush.bf16.msra.mxu0 0
    %4510 = vmatpush.bf16.msra.mxu0 %v3874
    %4511 = vmatpush.bf16.msra.mxu0 %v3871
    %4512 = vmatpush.bf16.msra.mxu0 %v3868
    %4513 = vmatpush.bf16.msra.mxu0 %v3865
    %4514 = vmatmul.bf16.gmra.mxu0 %v2185
    %v4515 = vpop.f32.mrf.mxu0
    %v4516 = vadd.f32 %v4498, %v4515
    %v4517 = vpop.f32.mrf.mxu0
    %v4518 = vadd.f32 %v4500, %v4517
    %4519 = vmatmul.bf16.gmra.mxu0 %v2188
    %v4520 = vpop.f32.mrf.mxu0
    %v4521 = vadd.f32 %v4503, %v4520
    %v4522 = vpop.f32.mrf.mxu0
    %4523 = vdwg.mxu0
    %4524 = vmatpush.bf16.msra.mxu0 %v3647
    %4525 = vmatpush.bf16.msra.mxu0 %v3644
    %4526 = vmatpush.bf16.msra.mxu0 %v3641
    %4527 = vmatpush.bf16.msra.mxu0 %v3638
    %4528 = vmatpush.bf16.msra.mxu0 %v3635
    %4529 = vmatpush.bf16.msra.mxu0 %v3632
    %4530 = vmatpush.bf16.msra.mxu0 %v3629
    %4531 = vmatpush.bf16.msra.mxu0 %v3626
    %4532 = vmatmul.bf16.gmra.mxu0 %v797
    %v4533 = vpop.f32.mrf.mxu0
    %v4534 = vadd.f32 0.0, %v4533
    %v4535 = vpop.f32.mrf.mxu0
    %v4536 = vadd.f32 0.0, %v4535
    %4537 = vmatmul.bf16.gmra.mxu0 %v808
    %v4538 = vpop.f32.mrf.mxu0
    %v4539 = vadd.f32 0.0, %v4538
    %v4540 = vpop.f32.mrf.mxu0
    %4541 = vdwg.mxu0
    %4542 = vmatpush.bf16.msra.mxu0 %v3671
    %4543 = vmatpush.bf16.msra.mxu0 %v3668
    %4544 = vmatpush.bf16.msra.mxu0 %v3665
    %4545 = vmatpush.bf16.msra.mxu0 %v3662
    %4546 = vmatpush.bf16.msra.mxu0 %v3659
    %4547 = vmatpush.bf16.msra.mxu0 %v3656
    %4548 = vmatpush.bf16.msra.mxu0 %v3653
    %4549 = vmatpush.bf16.msra.mxu0 %v3650
    %4550 = vmatmul.bf16.gmra.mxu0 %v798
    %v4551 = vpop.f32.mrf.mxu0
    %v4552 = vadd.f32 %v4534, %v4551
    %v4553 = vpop.f32.mrf.mxu0
    %v4554 = vadd.f32 %v4536, %v4553
    %4555 = vmatmul.bf16.gmra.mxu0 %v809
    %v4556 = vpop.f32.mrf.mxu0
    %v4557 = vadd.f32 %v4539, %v4556
    %v4558 = vpop.f32.mrf.mxu0
    %4559 = vdwg.mxu0
    %4560 = vmatpush.bf16.msra.mxu0 %v3695
    %4561 = vmatpush.bf16.msra.mxu0 %v3692
    %4562 = vmatpush.bf16.msra.mxu0 %v3689
    %4563 = vmatpush.bf16.msra.mxu0 %v3686
    %4564 = vmatpush.bf16.msra.mxu0 %v3683
    %4565 = vmatpush.bf16.msra.mxu0 %v3680
    %4566 = vmatpush.bf16.msra.mxu0 %v3677
    %4567 = vmatpush.bf16.msra.mxu0 %v3674
    %4568 = vmatmul.bf16.gmra.mxu0 %v799
    %v4569 = vpop.f32.mrf.mxu0
    %v4570 = vadd.f32 %v4552, %v4569
    %v4571 = vpop.f32.mrf.mxu0
    %v4572 = vadd.f32 %v4554, %v4571
    %4573 = vmatmul.bf16.gmra.mxu0 %v810
    %v4574 = vpop.f32.mrf.mxu0
    %v4575 = vadd.f32 %v4557, %v4574
    %v4576 = vpop.f32.mrf.mxu0
    %4577 = vdwg.mxu0
    %4578 = vmatpush.bf16.msra.mxu0 %v3719
    %4579 = vmatpush.bf16.msra.mxu0 %v3716
    %4580 = vmatpush.bf16.msra.mxu0 %v3713
    %4581 = vmatpush.bf16.msra.mxu0 %v3710
    %4582 = vmatpush.bf16.msra.mxu0 %v3707
    %4583 = vmatpush.bf16.msra.mxu0 %v3704
    %4584 = vmatpush.bf16.msra.mxu0 %v3701
    %4585 = vmatpush.bf16.msra.mxu0 %v3698
    %4586 = vmatmul.bf16.gmra.mxu0 %v800
    %v4587 = vpop.f32.mrf.mxu0
    %v4588 = vadd.f32 %v4570, %v4587
    %v4589 = vpop.f32.mrf.mxu0
    %v4590 = vadd.f32 %v4572, %v4589
    %4591 = vmatmul.bf16.gmra.mxu0 %v811
    %v4592 = vpop.f32.mrf.mxu0
    %v4593 = vadd.f32 %v4575, %v4592
    %v4594 = vpop.f32.mrf.mxu0
    %4595 = vdwg.mxu0
    %4596 = vmatpush.bf16.msra.mxu0 %v3743
    %4597 = vmatpush.bf16.msra.mxu0 %v3740
    %4598 = vmatpush.bf16.msra.mxu0 %v3737
    %4599 = vmatpush.bf16.msra.mxu0 %v3734
    %4600 = vmatpush.bf16.msra.mxu0 %v3731
    %4601 = vmatpush.bf16.msra.mxu0 %v3728
    %4602 = vmatpush.bf16.msra.mxu0 %v3725
    %4603 = vmatpush.bf16.msra.mxu0 %v3722
    %4604 = vmatmul.bf16.gmra.mxu0 %v801
    %v4605 = vpop.f32.mrf.mxu0
    %v4606 = vadd.f32 %v4588, %v4605
    %v4607 = vpop.f32.mrf.mxu0
    %v4608 = vadd.f32 %v4590, %v4607
    %4609 = vmatmul.bf16.gmra.mxu0 %v812
    %v4610 = vpop.f32.mrf.mxu0
    %v4611 = vadd.f32 %v4593, %v4610
    %v4612 = vpop.f32.mrf.mxu0
    %4613 = vdwg.mxu0
    %4614 = vmatpush.bf16.msra.mxu0 %v3767
    %4615 = vmatpush.bf16.msra.mxu0 %v3764
    %4616 = vmatpush.bf16.msra.mxu0 %v3761
    %4617 = vmatpush.bf16.msra.mxu0 %v3758
    %4618 = vmatpush.bf16.msra.mxu0 %v3755
    %4619 = vmatpush.bf16.msra.mxu0 %v3752
    %4620 = vmatpush.bf16.msra.mxu0 %v3749
    %4621 = vmatpush.bf16.msra.mxu0 %v3746
    %4622 = vmatmul.bf16.gmra.mxu0 %v802
    %v4623 = vpop.f32.mrf.mxu0
    %v4624 = vadd.f32 %v4606, %v4623
    %v4625 = vpop.f32.mrf.mxu0
    %v4626 = vadd.f32 %v4608, %v4625
    %4627 = vmatmul.bf16.gmra.mxu0 %v813
    %v4628 = vpop.f32.mrf.mxu0
    %v4629 = vadd.f32 %v4611, %v4628
    %v4630 = vpop.f32.mrf.mxu0
    %4631 = vdwg.mxu0
    %4632 = vmatpush.bf16.msra.mxu0 %v3791
    %4633 = vmatpush.bf16.msra.mxu0 %v3788
    %4634 = vmatpush.bf16.msra.mxu0 %v3785
    %4635 = vmatpush.bf16.msra.mxu0 %v3782
    %4636 = vmatpush.bf16.msra.mxu0 %v3779
    %4637 = vmatpush.bf16.msra.mxu0 %v3776
    %4638 = vmatpush.bf16.msra.mxu0 %v3773
    %4639 = vmatpush.bf16.msra.mxu0 %v3770
    %4640 = vmatmul.bf16.gmra.mxu0 %v803
    %v4641 = vpop.f32.mrf.mxu0
    %v4642 = vadd.f32 %v4624, %v4641
    %v4643 = vpop.f32.mrf.mxu0
    %v4644 = vadd.f32 %v4626, %v4643
    %4645 = vmatmul.bf16.gmra.mxu0 %v814
    %v4646 = vpop.f32.mrf.mxu0
    %v4647 = vadd.f32 %v4629, %v4646
    %v4648 = vpop.f32.mrf.mxu0
    %4649 = vdwg.mxu0
    %4650 = vmatpush.bf16.msra.mxu0 %v3815
    %4651 = vmatpush.bf16.msra.mxu0 %v3812
    %4652 = vmatpush.bf16.msra.mxu0 %v3809
    %4653 = vmatpush.bf16.msra.mxu0 %v3806
    %4654 = vmatpush.bf16.msra.mxu0 %v3803
    %4655 = vmatpush.bf16.msra.mxu0 %v3800
    %4656 = vmatpush.bf16.msra.mxu0 %v3797
    %4657 = vmatpush.bf16.msra.mxu0 %v3794
    %4658 = vmatmul.bf16.gmra.mxu0 %v804
    %v4659 = vpop.f32.mrf.mxu0
    %v4660 = vadd.f32 %v4642, %v4659
    %v4661 = vpop.f32.mrf.mxu0
    %v4662 = vadd.f32 %v4644, %v4661
    %4663 = vmatmul.bf16.gmra.mxu0 %v815
    %v4664 = vpop.f32.mrf.mxu0
    %v4665 = vadd.f32 %v4647, %v4664
    %v4666 = vpop.f32.mrf.mxu0
    %4667 = vdwg.mxu0
    %4668 = vmatpush.bf16.msra.mxu0 %v3839
    %4669 = vmatpush.bf16.msra.mxu0 %v3836
    %4670 = vmatpush.bf16.msra.mxu0 %v3833
    %4671 = vmatpush.bf16.msra.mxu0 %v3830
    %4672 = vmatpush.bf16.msra.mxu0 %v3827
    %4673 = vmatpush.bf16.msra.mxu0 %v3824
    %4674 = vmatpush.bf16.msra.mxu0 %v3821
    %4675 = vmatpush.bf16.msra.mxu0 %v3818
    %4676 = vmatmul.bf16.gmra.mxu0 %v805
    %v4677 = vpop.f32.mrf.mxu0
    %v4678 = vadd.f32 %v4660, %v4677
    %v4679 = vpop.f32.mrf.mxu0
    %v4680 = vadd.f32 %v4662, %v4679
    %4681 = vmatmul.bf16.gmra.mxu0 %v816
    %v4682 = vpop.f32.mrf.mxu0
    %v4683 = vadd.f32 %v4665, %v4682
    %v4684 = vpop.f32.mrf.mxu0
    %4685 = vdwg.mxu0
    %4686 = vmatpush.bf16.msra.mxu0 %v3863
    %4687 = vmatpush.bf16.msra.mxu0 %v3860
    %4688 = vmatpush.bf16.msra.mxu0 %v3857
    %4689 = vmatpush.bf16.msra.mxu0 %v3854
    %4690 = vmatpush.bf16.msra.mxu0 %v3851
    %4691 = vmatpush.bf16.msra.mxu0 %v3848
    %4692 = vmatpush.bf16.msra.mxu0 %v3845
    %4693 = vmatpush.bf16.msra.mxu0 %v3842
    %4694 = vmatmul.bf16.gmra.mxu0 %v806
    %v4695 = vpop.f32.mrf.mxu0
    %v4696 = vadd.f32 %v4678, %v4695
    %v4697 = vpop.f32.mrf.mxu0
    %v4698 = vadd.f32 %v4680, %v4697
    %4699 = vmatmul.bf16.gmra.mxu0 %v817
    %v4700 = vpop.f32.mrf.mxu0
    %v4701 = vadd.f32 %v4683, %v4700
    %v4702 = vpop.f32.mrf.mxu0
    %4703 = vdwg.mxu0
    %4704 = vmatpush.bf16.msra.mxu0 0
    %4705 = vmatpush.bf16.msra.mxu0 0
    %4706 = vmatpush.bf16.msra.mxu0 0
    %4707 = vmatpush.bf16.msra.mxu0 0
    %4708 = vmatpush.bf16.msra.mxu0 %v3875
    %4709 = vmatpush.bf16.msra.mxu0 %v3872
    %4710 = vmatpush.bf16.msra.mxu0 %v3869
    %4711 = vmatpush.bf16.msra.mxu0 %v3866
    %4712 = vmatmul.bf16.gmra.mxu0 %v2185
    %v4713 = vpop.f32.mrf.mxu0
    %v4714 = vadd.f32 %v4696, %v4713
    %v4715 = vpop.f32.mrf.mxu0
    %v4716 = vadd.f32 %v4698, %v4715
    %4717 = vmatmul.bf16.gmra.mxu0 %v2188
    %v4718 = vpop.f32.mrf.mxu0
    %v4719 = vadd.f32 %v4701, %v4718
    %v4720 = vpop.f32.mrf.mxu0
    %4721 = vdwg.mxu0
    %v4740 = vunpack.c.l.b16 %v55
    %v4741 = vunpack.c.h.b16 %v55
    %v4742 = vunpack.c.l.b16 %v56
    %v4743 = vunpack.c.h.b16 %v56
    %v4744 = vunpack.c.l.b16 %v57
    %v4745 = vunpack.c.h.b16 %v57
    %v4746 = vunpack.c.l.b16 %v58
    %v4747 = vunpack.c.h.b16 %v58
    %v4748 = vunpack.c.l.b16 %v59
    %v4749 = vunpack.c.h.b16 %v59
    %v4750 = vunpack.c.l.b16 %v60
    %v4751 = vunpack.c.l.b16 %v61
    %v4752 = vunpack.c.h.b16 %v61
    %v4753 = vunpack.c.l.b16 %v62
    %v4754 = vunpack.c.h.b16 %v62
    %v4755 = vunpack.c.l.b16 %v63
    %v4756 = vunpack.c.h.b16 %v63
    %v4757 = vunpack.c.l.b16 %v64
    %v4758 = vunpack.c.h.b16 %v64
    %v4759 = vunpack.c.l.b16 %v65
    %v4760 = vunpack.c.h.b16 %v65
    %v4761 = vunpack.c.l.b16 %v66
    %v4762 = vunpack.c.l.b16 %v67
    %v4763 = vunpack.c.h.b16 %v67
    %v4764 = vunpack.c.l.b16 %v68
    %v4765 = vunpack.c.h.b16 %v68
    %v4766 = vunpack.c.l.b16 %v69
    %v4767 = vunpack.c.h.b16 %v69
    %v4768 = vunpack.c.l.b16 %v70
    %v4769 = vunpack.c.h.b16 %v70
    %v4770 = vunpack.c.l.b16 %v71
    %v4771 = vunpack.c.h.b16 %v71
    %v4772 = vunpack.c.l.b16 %v72
    %v4773 = vpack.c.b16 %v4751, %v4740
    %v4774 = vpack.c.b16 %v4752, %v4741
    %v4775 = vpack.c.b16 %v4753, %v4742
    %v4776 = vpack.c.b16 %v4754, %v4743
    %v4777 = vpack.c.b16 %v4755, %v4744
    %v4778 = vpack.c.b16 %v4756, %v4745
    %v4779 = vpack.c.b16 %v4757, %v4746
    %v4780 = vpack.c.b16 %v4758, %v4747
    %v4781 = vpack.c.b16 %v4759, %v4748
    %v4782 = vpack.c.b16 %v4760, %v4749
    %v4783 = vpack.c.b16 %v4761, %v4750
    %v4784 = vpack.c.b16 %v4762, %v4762
    %v4785 = vpack.c.b16 %v4763, %v4763
    %v4786 = vpack.c.b16 %v4764, %v4764
    %v4787 = vpack.c.b16 %v4765, %v4765
    %v4788 = vpack.c.b16 %v4766, %v4766
    %v4789 = vpack.c.b16 %v4767, %v4767
    %v4790 = vpack.c.b16 %v4768, %v4768
    %v4791 = vpack.c.b16 %v4769, %v4769
    %v4792 = vpack.c.b16 %v4770, %v4770
    %v4793 = vpack.c.b16 %v4771, %v4771
    %v4794 = vpack.c.b16 %v4772, %v4772
    %v4816 = vsel %vm2183, %v4783, 0
    %v4819 = vsel %vm2183, %v4794, 0
    %4821 = vmatpush.bf16.msra.mxu0 %v3645
    %4822 = vmatpush.bf16.msra.mxu0 %v3642
    %4823 = vmatpush.bf16.msra.mxu0 %v3639
    %4824 = vmatpush.bf16.msra.mxu0 %v3636
    %4825 = vmatpush.bf16.msra.mxu0 %v3633
    %4826 = vmatpush.bf16.msra.mxu0 %v3630
    %4827 = vmatpush.bf16.msra.mxu0 %v3627
    %4828 = vmatpush.bf16.msra.mxu0 %v3624
    %4829 = vmatmul.bf16.gmra.mxu0 %v4773
    %v4830 = vpop.f32.mrf.mxu0
    %v4831 = vadd.f32 0.0, %v4830
    %v4832 = vpop.f32.mrf.mxu0
    %v4833 = vadd.f32 0.0, %v4832
    %4834 = vmatmul.bf16.gmra.mxu0 %v4784
    %v4835 = vpop.f32.mrf.mxu0
    %v4836 = vadd.f32 0.0, %v4835
    %v4837 = vpop.f32.mrf.mxu0
    %4838 = vdwg.mxu0
    %4839 = vmatpush.bf16.msra.mxu0 %v3669
    %4840 = vmatpush.bf16.msra.mxu0 %v3666
    %4841 = vmatpush.bf16.msra.mxu0 %v3663
    %4842 = vmatpush.bf16.msra.mxu0 %v3660
    %4843 = vmatpush.bf16.msra.mxu0 %v3657
    %4844 = vmatpush.bf16.msra.mxu0 %v3654
    %4845 = vmatpush.bf16.msra.mxu0 %v3651
    %4846 = vmatpush.bf16.msra.mxu0 %v3648
    %4847 = vmatmul.bf16.gmra.mxu0 %v4774
    %v4848 = vpop.f32.mrf.mxu0
    %v4849 = vadd.f32 %v4831, %v4848
    %v4850 = vpop.f32.mrf.mxu0
    %v4851 = vadd.f32 %v4833, %v4850
    %4852 = vmatmul.bf16.gmra.mxu0 %v4785
    %v4853 = vpop.f32.mrf.mxu0
    %v4854 = vadd.f32 %v4836, %v4853
    %v4855 = vpop.f32.mrf.mxu0
    %4856 = vdwg.mxu0
    %4857 = vmatpush.bf16.msra.mxu0 %v3693
    %4858 = vmatpush.bf16.msra.mxu0 %v3690
    %4859 = vmatpush.bf16.msra.mxu0 %v3687
    %4860 = vmatpush.bf16.msra.mxu0 %v3684
    %4861 = vmatpush.bf16.msra.mxu0 %v3681
    %4862 = vmatpush.bf16.msra.mxu0 %v3678
    %4863 = vmatpush.bf16.msra.mxu0 %v3675
    %4864 = vmatpush.bf16.msra.mxu0 %v3672
    %4865 = vmatmul.bf16.gmra.mxu0 %v4775
    %v4866 = vpop.f32.mrf.mxu0
    %v4867 = vadd.f32 %v4849, %v4866
    %v4868 = vpop.f32.mrf.mxu0
    %v4869 = vadd.f32 %v4851, %v4868
    %4870 = vmatmul.bf16.gmra.mxu0 %v4786
    %v4871 = vpop.f32.mrf.mxu0
    %v4872 = vadd.f32 %v4854, %v4871
    %v4873 = vpop.f32.mrf.mxu0
    %4874 = vdwg.mxu0
    %4875 = vmatpush.bf16.msra.mxu0 %v3717
    %4876 = vmatpush.bf16.msra.mxu0 %v3714
    %4877 = vmatpush.bf16.msra.mxu0 %v3711
    %4878 = vmatpush.bf16.msra.mxu0 %v3708
    %4879 = vmatpush.bf16.msra.mxu0 %v3705
    %4880 = vmatpush.bf16.msra.mxu0 %v3702
    %4881 = vmatpush.bf16.msra.mxu0 %v3699
    %4882 = vmatpush.bf16.msra.mxu0 %v3696
    %4883 = vmatmul.bf16.gmra.mxu0 %v4776
    %v4884 = vpop.f32.mrf.mxu0
    %v4885 = vadd.f32 %v4867, %v4884
    %v4886 = vpop.f32.mrf.mxu0
    %v4887 = vadd.f32 %v4869, %v4886
    %4888 = vmatmul.bf16.gmra.mxu0 %v4787
    %v4889 = vpop.f32.mrf.mxu0
    %v4890 = vadd.f32 %v4872, %v4889
    %v4891 = vpop.f32.mrf.mxu0
    %4892 = vdwg.mxu0
    %4893 = vmatpush.bf16.msra.mxu0 %v3741
    %4894 = vmatpush.bf16.msra.mxu0 %v3738
    %4895 = vmatpush.bf16.msra.mxu0 %v3735
    %4896 = vmatpush.bf16.msra.mxu0 %v3732
    %4897 = vmatpush.bf16.msra.mxu0 %v3729
    %4898 = vmatpush.bf16.msra.mxu0 %v3726
    %4899 = vmatpush.bf16.msra.mxu0 %v3723
    %4900 = vmatpush.bf16.msra.mxu0 %v3720
    %4901 = vmatmul.bf16.gmra.mxu0 %v4777
    %v4902 = vpop.f32.mrf.mxu0
    %v4903 = vadd.f32 %v4885, %v4902
    %v4904 = vpop.f32.mrf.mxu0
    %v4905 = vadd.f32 %v4887, %v4904
    %4906 = vmatmul.bf16.gmra.mxu0 %v4788
    %v4907 = vpop.f32.mrf.mxu0
    %v4908 = vadd.f32 %v4890, %v4907
    %v4909 = vpop.f32.mrf.mxu0
    %4910 = vdwg.mxu0
    %4911 = vmatpush.bf16.msra.mxu0 %v3765
    %4912 = vmatpush.bf16.msra.mxu0 %v3762
    %4913 = vmatpush.bf16.msra.mxu0 %v3759
    %4914 = vmatpush.bf16.msra.mxu0 %v3756
    %4915 = vmatpush.bf16.msra.mxu0 %v3753
    %4916 = vmatpush.bf16.msra.mxu0 %v3750
    %4917 = vmatpush.bf16.msra.mxu0 %v3747
    %4918 = vmatpush.bf16.msra.mxu0 %v3744
    %4919 = vmatmul.bf16.gmra.mxu0 %v4778
    %v4920 = vpop.f32.mrf.mxu0
    %v4921 = vadd.f32 %v4903, %v4920
    %v4922 = vpop.f32.mrf.mxu0
    %v4923 = vadd.f32 %v4905, %v4922
    %4924 = vmatmul.bf16.gmra.mxu0 %v4789
    %v4925 = vpop.f32.mrf.mxu0
    %v4926 = vadd.f32 %v4908, %v4925
    %v4927 = vpop.f32.mrf.mxu0
    %4928 = vdwg.mxu0
    %4929 = vmatpush.bf16.msra.mxu0 %v3789
    %4930 = vmatpush.bf16.msra.mxu0 %v3786
    %4931 = vmatpush.bf16.msra.mxu0 %v3783
    %4932 = vmatpush.bf16.msra.mxu0 %v3780
    %4933 = vmatpush.bf16.msra.mxu0 %v3777
    %4934 = vmatpush.bf16.msra.mxu0 %v3774
    %4935 = vmatpush.bf16.msra.mxu0 %v3771
    %4936 = vmatpush.bf16.msra.mxu0 %v3768
    %4937 = vmatmul.bf16.gmra.mxu0 %v4779
    %v4938 = vpop.f32.mrf.mxu0
    %v4939 = vadd.f32 %v4921, %v4938
    %v4940 = vpop.f32.mrf.mxu0
    %v4941 = vadd.f32 %v4923, %v4940
    %4942 = vmatmul.bf16.gmra.mxu0 %v4790
    %v4943 = vpop.f32.mrf.mxu0
    %v4944 = vadd.f32 %v4926, %v4943
    %v4945 = vpop.f32.mrf.mxu0
    %4946 = vdwg.mxu0
    %4947 = vmatpush.bf16.msra.mxu0 %v3813
    %4948 = vmatpush.bf16.msra.mxu0 %v3810
    %4949 = vmatpush.bf16.msra.mxu0 %v3807
    %4950 = vmatpush.bf16.msra.mxu0 %v3804
    %4951 = vmatpush.bf16.msra.mxu0 %v3801
    %4952 = vmatpush.bf16.msra.mxu0 %v3798
    %4953 = vmatpush.bf16.msra.mxu0 %v3795
    %4954 = vmatpush.bf16.msra.mxu0 %v3792
    %4955 = vmatmul.bf16.gmra.mxu0 %v4780
    %v4956 = vpop.f32.mrf.mxu0
    %v4957 = vadd.f32 %v4939, %v4956
    %v4958 = vpop.f32.mrf.mxu0
    %v4959 = vadd.f32 %v4941, %v4958
    %4960 = vmatmul.bf16.gmra.mxu0 %v4791
    %v4961 = vpop.f32.mrf.mxu0
    %v4962 = vadd.f32 %v4944, %v4961
    %v4963 = vpop.f32.mrf.mxu0
    %4964 = vdwg.mxu0
    %4965 = vmatpush.bf16.msra.mxu0 %v3837
    %4966 = vmatpush.bf16.msra.mxu0 %v3834
    %4967 = vmatpush.bf16.msra.mxu0 %v3831
    %4968 = vmatpush.bf16.msra.mxu0 %v3828
    %4969 = vmatpush.bf16.msra.mxu0 %v3825
    %4970 = vmatpush.bf16.msra.mxu0 %v3822
    %4971 = vmatpush.bf16.msra.mxu0 %v3819
    %4972 = vmatpush.bf16.msra.mxu0 %v3816
    %4973 = vmatmul.bf16.gmra.mxu0 %v4781
    %v4974 = vpop.f32.mrf.mxu0
    %v4975 = vadd.f32 %v4957, %v4974
    %v4976 = vpop.f32.mrf.mxu0
    %v4977 = vadd.f32 %v4959, %v4976
    %4978 = vmatmul.bf16.gmra.mxu0 %v4792
    %v4979 = vpop.f32.mrf.mxu0
    %v4980 = vadd.f32 %v4962, %v4979
    %v4981 = vpop.f32.mrf.mxu0
    %4982 = vdwg.mxu0
    %4983 = vmatpush.bf16.msra.mxu0 %v3861
    %4984 = vmatpush.bf16.msra.mxu0 %v3858
    %4985 = vmatpush.bf16.msra.mxu0 %v3855
    %4986 = vmatpush.bf16.msra.mxu0 %v3852
    %4987 = vmatpush.bf16.msra.mxu0 %v3849
    %4988 = vmatpush.bf16.msra.mxu0 %v3846
    %4989 = vmatpush.bf16.msra.mxu0 %v3843
    %4990 = vmatpush.bf16.msra.mxu0 %v3840
    %4991 = vmatmul.bf16.gmra.mxu0 %v4782
    %v4992 = vpop.f32.mrf.mxu0
    %v4993 = vadd.f32 %v4975, %v4992
    %v4994 = vpop.f32.mrf.mxu0
    %v4995 = vadd.f32 %v4977, %v4994
    %4996 = vmatmul.bf16.gmra.mxu0 %v4793
    %v4997 = vpop.f32.mrf.mxu0
    %v4998 = vadd.f32 %v4980, %v4997
    %v4999 = vpop.f32.mrf.mxu0
    %5000 = vdwg.mxu0
    %5001 = vmatpush.bf16.msra.mxu0 0
    %5002 = vmatpush.bf16.msra.mxu0 0
    %5003 = vmatpush.bf16.msra.mxu0 0
    %5004 = vmatpush.bf16.msra.mxu0 0
    %5005 = vmatpush.bf16.msra.mxu0 %v3873
    %5006 = vmatpush.bf16.msra.mxu0 %v3870
    %5007 = vmatpush.bf16.msra.mxu0 %v3867
    %5008 = vmatpush.bf16.msra.mxu0 %v3864
    %5009 = vmatmul.bf16.gmra.mxu0 %v4816
    %v5010 = vpop.f32.mrf.mxu0
    %v5011 = vadd.f32 %v4993, %v5010
    %v5012 = vpop.f32.mrf.mxu0
    %v5013 = vadd.f32 %v4995, %v5012
    %5014 = vmatmul.bf16.gmra.mxu0 %v4819
    %v5015 = vpop.f32.mrf.mxu0
    %v5016 = vadd.f32 %v4998, %v5015
    %v5017 = vpop.f32.mrf.mxu0
    %5018 = vdwg.mxu0
    %5019 = vmatpush.bf16.msra.mxu0 %v3646
    %5020 = vmatpush.bf16.msra.mxu0 %v3643
    %5021 = vmatpush.bf16.msra.mxu0 %v3640
    %5022 = vmatpush.bf16.msra.mxu0 %v3637
    %5023 = vmatpush.bf16.msra.mxu0 %v3634
    %5024 = vmatpush.bf16.msra.mxu0 %v3631
    %5025 = vmatpush.bf16.msra.mxu0 %v3628
    %5026 = vmatpush.bf16.msra.mxu0 %v3625
    %5027 = vmatmul.bf16.gmra.mxu0 %v4773
    %v5028 = vpop.f32.mrf.mxu0
    %v5029 = vadd.f32 0.0, %v5028
    %v5030 = vpop.f32.mrf.mxu0
    %v5031 = vadd.f32 0.0, %v5030
    %5032 = vmatmul.bf16.gmra.mxu0 %v4784
    %v5033 = vpop.f32.mrf.mxu0
    %v5034 = vadd.f32 0.0, %v5033
    %v5035 = vpop.f32.mrf.mxu0
    %5036 = vdwg.mxu0
    %5037 = vmatpush.bf16.msra.mxu0 %v3670
    %5038 = vmatpush.bf16.msra.mxu0 %v3667
    %5039 = vmatpush.bf16.msra.mxu0 %v3664
    %5040 = vmatpush.bf16.msra.mxu0 %v3661
    %5041 = vmatpush.bf16.msra.mxu0 %v3658
    %5042 = vmatpush.bf16.msra.mxu0 %v3655
    %5043 = vmatpush.bf16.msra.mxu0 %v3652
    %5044 = vmatpush.bf16.msra.mxu0 %v3649
    %5045 = vmatmul.bf16.gmra.mxu0 %v4774
    %v5046 = vpop.f32.mrf.mxu0
    %v5047 = vadd.f32 %v5029, %v5046
    %v5048 = vpop.f32.mrf.mxu0
    %v5049 = vadd.f32 %v5031, %v5048
    %5050 = vmatmul.bf16.gmra.mxu0 %v4785
    %v5051 = vpop.f32.mrf.mxu0
    %v5052 = vadd.f32 %v5034, %v5051
    %v5053 = vpop.f32.mrf.mxu0
    %5054 = vdwg.mxu0
    %5055 = vmatpush.bf16.msra.mxu0 %v3694
    %5056 = vmatpush.bf16.msra.mxu0 %v3691
    %5057 = vmatpush.bf16.msra.mxu0 %v3688
    %5058 = vmatpush.bf16.msra.mxu0 %v3685
    %5059 = vmatpush.bf16.msra.mxu0 %v3682
    %5060 = vmatpush.bf16.msra.mxu0 %v3679
    %5061 = vmatpush.bf16.msra.mxu0 %v3676
    %5062 = vmatpush.bf16.msra.mxu0 %v3673
    %5063 = vmatmul.bf16.gmra.mxu0 %v4775
    %v5064 = vpop.f32.mrf.mxu0
    %v5065 = vadd.f32 %v5047, %v5064
    %v5066 = vpop.f32.mrf.mxu0
    %v5067 = vadd.f32 %v5049, %v5066
    %5068 = vmatmul.bf16.gmra.mxu0 %v4786
    %v5069 = vpop.f32.mrf.mxu0
    %v5070 = vadd.f32 %v5052, %v5069
    %v5071 = vpop.f32.mrf.mxu0
    %5072 = vdwg.mxu0
    %5073 = vmatpush.bf16.msra.mxu0 %v3718
    %5074 = vmatpush.bf16.msra.mxu0 %v3715
    %5075 = vmatpush.bf16.msra.mxu0 %v3712
    %5076 = vmatpush.bf16.msra.mxu0 %v3709
    %5077 = vmatpush.bf16.msra.mxu0 %v3706
    %5078 = vmatpush.bf16.msra.mxu0 %v3703
    %5079 = vmatpush.bf16.msra.mxu0 %v3700
    %5080 = vmatpush.bf16.msra.mxu0 %v3697
    %5081 = vmatmul.bf16.gmra.mxu0 %v4776
    %v5082 = vpop.f32.mrf.mxu0
    %v5083 = vadd.f32 %v5065, %v5082
    %v5084 = vpop.f32.mrf.mxu0
    %v5085 = vadd.f32 %v5067, %v5084
    %5086 = vmatmul.bf16.gmra.mxu0 %v4787
    %v5087 = vpop.f32.mrf.mxu0
    %v5088 = vadd.f32 %v5070, %v5087
    %v5089 = vpop.f32.mrf.mxu0
    %5090 = vdwg.mxu0
    %5091 = vmatpush.bf16.msra.mxu0 %v3742
    %5092 = vmatpush.bf16.msra.mxu0 %v3739
    %5093 = vmatpush.bf16.msra.mxu0 %v3736
    %5094 = vmatpush.bf16.msra.mxu0 %v3733
    %5095 = vmatpush.bf16.msra.mxu0 %v3730
    %5096 = vmatpush.bf16.msra.mxu0 %v3727
    %5097 = vmatpush.bf16.msra.mxu0 %v3724
    %5098 = vmatpush.bf16.msra.mxu0 %v3721
    %5099 = vmatmul.bf16.gmra.mxu0 %v4777
    %v5100 = vpop.f32.mrf.mxu0
    %v5101 = vadd.f32 %v5083, %v5100
    %v5102 = vpop.f32.mrf.mxu0
    %v5103 = vadd.f32 %v5085, %v5102
    %5104 = vmatmul.bf16.gmra.mxu0 %v4788
    %v5105 = vpop.f32.mrf.mxu0
    %v5106 = vadd.f32 %v5088, %v5105
    %v5107 = vpop.f32.mrf.mxu0
    %5108 = vdwg.mxu0
    %5109 = vmatpush.bf16.msra.mxu0 %v3766
    %5110 = vmatpush.bf16.msra.mxu0 %v3763
    %5111 = vmatpush.bf16.msra.mxu0 %v3760
    %5112 = vmatpush.bf16.msra.mxu0 %v3757
    %5113 = vmatpush.bf16.msra.mxu0 %v3754
    %5114 = vmatpush.bf16.msra.mxu0 %v3751
    %5115 = vmatpush.bf16.msra.mxu0 %v3748
    %5116 = vmatpush.bf16.msra.mxu0 %v3745
    %5117 = vmatmul.bf16.gmra.mxu0 %v4778
    %v5118 = vpop.f32.mrf.mxu0
    %v5119 = vadd.f32 %v5101, %v5118
    %v5120 = vpop.f32.mrf.mxu0
    %v5121 = vadd.f32 %v5103, %v5120
    %5122 = vmatmul.bf16.gmra.mxu0 %v4789
    %v5123 = vpop.f32.mrf.mxu0
    %v5124 = vadd.f32 %v5106, %v5123
    %v5125 = vpop.f32.mrf.mxu0
    %5126 = vdwg.mxu0
    %5127 = vmatpush.bf16.msra.mxu0 %v3790
    %5128 = vmatpush.bf16.msra.mxu0 %v3787
    %5129 = vmatpush.bf16.msra.mxu0 %v3784
    %5130 = vmatpush.bf16.msra.mxu0 %v3781
    %5131 = vmatpush.bf16.msra.mxu0 %v3778
    %5132 = vmatpush.bf16.msra.mxu0 %v3775
    %5133 = vmatpush.bf16.msra.mxu0 %v3772
    %5134 = vmatpush.bf16.msra.mxu0 %v3769
    %5135 = vmatmul.bf16.gmra.mxu0 %v4779
    %v5136 = vpop.f32.mrf.mxu0
    %v5137 = vadd.f32 %v5119, %v5136
    %v5138 = vpop.f32.mrf.mxu0
    %v5139 = vadd.f32 %v5121, %v5138
    %5140 = vmatmul.bf16.gmra.mxu0 %v4790
    %v5141 = vpop.f32.mrf.mxu0
    %v5142 = vadd.f32 %v5124, %v5141
    %v5143 = vpop.f32.mrf.mxu0
    %5144 = vdwg.mxu0
    %5145 = vmatpush.bf16.msra.mxu0 %v3814
    %5146 = vmatpush.bf16.msra.mxu0 %v3811
    %5147 = vmatpush.bf16.msra.mxu0 %v3808
    %5148 = vmatpush.bf16.msra.mxu0 %v3805
    %5149 = vmatpush.bf16.msra.mxu0 %v3802
    %5150 = vmatpush.bf16.msra.mxu0 %v3799
    %5151 = vmatpush.bf16.msra.mxu0 %v3796
    %5152 = vmatpush.bf16.msra.mxu0 %v3793
    %5153 = vmatmul.bf16.gmra.mxu0 %v4780
    %v5154 = vpop.f32.mrf.mxu0
    %v5155 = vadd.f32 %v5137, %v5154
    %v5156 = vpop.f32.mrf.mxu0
    %v5157 = vadd.f32 %v5139, %v5156
    %5158 = vmatmul.bf16.gmra.mxu0 %v4791
    %v5159 = vpop.f32.mrf.mxu0
    %v5160 = vadd.f32 %v5142, %v5159
    %v5161 = vpop.f32.mrf.mxu0
    %5162 = vdwg.mxu0
    %5163 = vmatpush.bf16.msra.mxu0 %v3838
    %5164 = vmatpush.bf16.msra.mxu0 %v3835
    %5165 = vmatpush.bf16.msra.mxu0 %v3832
    %5166 = vmatpush.bf16.msra.mxu0 %v3829
    %5167 = vmatpush.bf16.msra.mxu0 %v3826
    %5168 = vmatpush.bf16.msra.mxu0 %v3823
    %5169 = vmatpush.bf16.msra.mxu0 %v3820
    %5170 = vmatpush.bf16.msra.mxu0 %v3817
    %5171 = vmatmul.bf16.gmra.mxu0 %v4781
    %v5172 = vpop.f32.mrf.mxu0
    %v5173 = vadd.f32 %v5155, %v5172
    %v5174 = vpop.f32.mrf.mxu0
    %v5175 = vadd.f32 %v5157, %v5174
    %5176 = vmatmul.bf16.gmra.mxu0 %v4792
    %v5177 = vpop.f32.mrf.mxu0
    %v5178 = vadd.f32 %v5160, %v5177
    %v5179 = vpop.f32.mrf.mxu0
    %5180 = vdwg.mxu0
    %5181 = vmatpush.bf16.msra.mxu0 %v3862
    %5182 = vmatpush.bf16.msra.mxu0 %v3859
    %5183 = vmatpush.bf16.msra.mxu0 %v3856
    %5184 = vmatpush.bf16.msra.mxu0 %v3853
    %5185 = vmatpush.bf16.msra.mxu0 %v3850
    %5186 = vmatpush.bf16.msra.mxu0 %v3847
    %5187 = vmatpush.bf16.msra.mxu0 %v3844
    %5188 = vmatpush.bf16.msra.mxu0 %v3841
    %5189 = vmatmul.bf16.gmra.mxu0 %v4782
    %v5190 = vpop.f32.mrf.mxu0
    %v5191 = vadd.f32 %v5173, %v5190
    %v5192 = vpop.f32.mrf.mxu0
    %v5193 = vadd.f32 %v5175, %v5192
    %5194 = vmatmul.bf16.gmra.mxu0 %v4793
    %v5195 = vpop.f32.mrf.mxu0
    %v5196 = vadd.f32 %v5178, %v5195
    %v5197 = vpop.f32.mrf.mxu0
    %5198 = vdwg.mxu0
    %5199 = vmatpush.bf16.msra.mxu0 0
    %5200 = vmatpush.bf16.msra.mxu0 0
    %5201 = vmatpush.bf16.msra.mxu0 0
    %5202 = vmatpush.bf16.msra.mxu0 0
    %5203 = vmatpush.bf16.msra.mxu0 %v3874
    %5204 = vmatpush.bf16.msra.mxu0 %v3871
    %5205 = vmatpush.bf16.msra.mxu0 %v3868
    %5206 = vmatpush.bf16.msra.mxu0 %v3865
    %5207 = vmatmul.bf16.gmra.mxu0 %v4816
    %v5208 = vpop.f32.mrf.mxu0
    %v5209 = vadd.f32 %v5191, %v5208
    %v5210 = vpop.f32.mrf.mxu0
    %v5211 = vadd.f32 %v5193, %v5210
    %5212 = vmatmul.bf16.gmra.mxu0 %v4819
    %v5213 = vpop.f32.mrf.mxu0
    %v5214 = vadd.f32 %v5196, %v5213
    %v5215 = vpop.f32.mrf.mxu0
    %5216 = vdwg.mxu0
    %5217 = vmatpush.bf16.msra.mxu0 %v3647
    %5218 = vmatpush.bf16.msra.mxu0 %v3644
    %5219 = vmatpush.bf16.msra.mxu0 %v3641
    %5220 = vmatpush.bf16.msra.mxu0 %v3638
    %5221 = vmatpush.bf16.msra.mxu0 %v3635
    %5222 = vmatpush.bf16.msra.mxu0 %v3632
    %5223 = vmatpush.bf16.msra.mxu0 %v3629
    %5224 = vmatpush.bf16.msra.mxu0 %v3626
    %5225 = vmatmul.bf16.gmra.mxu0 %v4773
    %v5226 = vpop.f32.mrf.mxu0
    %v5227 = vadd.f32 0.0, %v5226
    %v5228 = vpop.f32.mrf.mxu0
    %v5229 = vadd.f32 0.0, %v5228
    %5230 = vmatmul.bf16.gmra.mxu0 %v4784
    %v5231 = vpop.f32.mrf.mxu0
    %v5232 = vadd.f32 0.0, %v5231
    %v5233 = vpop.f32.mrf.mxu0
    %5234 = vdwg.mxu0
    %5235 = vmatpush.bf16.msra.mxu0 %v3671
    %5236 = vmatpush.bf16.msra.mxu0 %v3668
    %5237 = vmatpush.bf16.msra.mxu0 %v3665
    %5238 = vmatpush.bf16.msra.mxu0 %v3662
    %5239 = vmatpush.bf16.msra.mxu0 %v3659
    %5240 = vmatpush.bf16.msra.mxu0 %v3656
    %5241 = vmatpush.bf16.msra.mxu0 %v3653
    %5242 = vmatpush.bf16.msra.mxu0 %v3650
    %5243 = vmatmul.bf16.gmra.mxu0 %v4774
    %v5244 = vpop.f32.mrf.mxu0
    %v5245 = vadd.f32 %v5227, %v5244
    %v5246 = vpop.f32.mrf.mxu0
    %v5247 = vadd.f32 %v5229, %v5246
    %5248 = vmatmul.bf16.gmra.mxu0 %v4785
    %v5249 = vpop.f32.mrf.mxu0
    %v5250 = vadd.f32 %v5232, %v5249
    %v5251 = vpop.f32.mrf.mxu0
    %5252 = vdwg.mxu0
    %5253 = vmatpush.bf16.msra.mxu0 %v3695
    %5254 = vmatpush.bf16.msra.mxu0 %v3692
    %5255 = vmatpush.bf16.msra.mxu0 %v3689
    %5256 = vmatpush.bf16.msra.mxu0 %v3686
    %5257 = vmatpush.bf16.msra.mxu0 %v3683
    %5258 = vmatpush.bf16.msra.mxu0 %v3680
    %5259 = vmatpush.bf16.msra.mxu0 %v3677
    %5260 = vmatpush.bf16.msra.mxu0 %v3674
    %5261 = vmatmul.bf16.gmra.mxu0 %v4775
    %v5262 = vpop.f32.mrf.mxu0
    %v5263 = vadd.f32 %v5245, %v5262
    %v5264 = vpop.f32.mrf.mxu0
    %v5265 = vadd.f32 %v5247, %v5264
    %5266 = vmatmul.bf16.gmra.mxu0 %v4786
    %v5267 = vpop.f32.mrf.mxu0
    %v5268 = vadd.f32 %v5250, %v5267
    %v5269 = vpop.f32.mrf.mxu0
    %5270 = vdwg.mxu0
    %5271 = vmatpush.bf16.msra.mxu0 %v3719
    %5272 = vmatpush.bf16.msra.mxu0 %v3716
    %5273 = vmatpush.bf16.msra.mxu0 %v3713
    %5274 = vmatpush.bf16.msra.mxu0 %v3710
    %5275 = vmatpush.bf16.msra.mxu0 %v3707
    %5276 = vmatpush.bf16.msra.mxu0 %v3704
    %5277 = vmatpush.bf16.msra.mxu0 %v3701
    %5278 = vmatpush.bf16.msra.mxu0 %v3698
    %5279 = vmatmul.bf16.gmra.mxu0 %v4776
    %v5280 = vpop.f32.mrf.mxu0
    %v5281 = vadd.f32 %v5263, %v5280
    %v5282 = vpop.f32.mrf.mxu0
    %v5283 = vadd.f32 %v5265, %v5282
    %5284 = vmatmul.bf16.gmra.mxu0 %v4787
    %v5285 = vpop.f32.mrf.mxu0
    %v5286 = vadd.f32 %v5268, %v5285
    %v5287 = vpop.f32.mrf.mxu0
    %5288 = vdwg.mxu0
    %5289 = vmatpush.bf16.msra.mxu0 %v3743
    %5290 = vmatpush.bf16.msra.mxu0 %v3740
    %5291 = vmatpush.bf16.msra.mxu0 %v3737
    %5292 = vmatpush.bf16.msra.mxu0 %v3734
    %5293 = vmatpush.bf16.msra.mxu0 %v3731
    %5294 = vmatpush.bf16.msra.mxu0 %v3728
    %5295 = vmatpush.bf16.msra.mxu0 %v3725
    %5296 = vmatpush.bf16.msra.mxu0 %v3722
    %5297 = vmatmul.bf16.gmra.mxu0 %v4777
    %v5298 = vpop.f32.mrf.mxu0
    %v5299 = vadd.f32 %v5281, %v5298
    %v5300 = vpop.f32.mrf.mxu0
    %v5301 = vadd.f32 %v5283, %v5300
    %5302 = vmatmul.bf16.gmra.mxu0 %v4788
    %v5303 = vpop.f32.mrf.mxu0
    %v5304 = vadd.f32 %v5286, %v5303
    %v5305 = vpop.f32.mrf.mxu0
    %5306 = vdwg.mxu0
    %5307 = vmatpush.bf16.msra.mxu0 %v3767
    %5308 = vmatpush.bf16.msra.mxu0 %v3764
    %5309 = vmatpush.bf16.msra.mxu0 %v3761
    %5310 = vmatpush.bf16.msra.mxu0 %v3758
    %5311 = vmatpush.bf16.msra.mxu0 %v3755
    %5312 = vmatpush.bf16.msra.mxu0 %v3752
    %5313 = vmatpush.bf16.msra.mxu0 %v3749
    %5314 = vmatpush.bf16.msra.mxu0 %v3746
    %5315 = vmatmul.bf16.gmra.mxu0 %v4778
    %v5316 = vpop.f32.mrf.mxu0
    %v5317 = vadd.f32 %v5299, %v5316
    %v5318 = vpop.f32.mrf.mxu0
    %v5319 = vadd.f32 %v5301, %v5318
    %5320 = vmatmul.bf16.gmra.mxu0 %v4789
    %v5321 = vpop.f32.mrf.mxu0
    %v5322 = vadd.f32 %v5304, %v5321
    %v5323 = vpop.f32.mrf.mxu0
    %5324 = vdwg.mxu0
    %5325 = vmatpush.bf16.msra.mxu0 %v3791
    %5326 = vmatpush.bf16.msra.mxu0 %v3788
    %5327 = vmatpush.bf16.msra.mxu0 %v3785
    %5328 = vmatpush.bf16.msra.mxu0 %v3782
    %5329 = vmatpush.bf16.msra.mxu0 %v3779
    %5330 = vmatpush.bf16.msra.mxu0 %v3776
    %5331 = vmatpush.bf16.msra.mxu0 %v3773
    %5332 = vmatpush.bf16.msra.mxu0 %v3770
    %5333 = vmatmul.bf16.gmra.mxu0 %v4779
    %v5334 = vpop.f32.mrf.mxu0
    %v5335 = vadd.f32 %v5317, %v5334
    %v5336 = vpop.f32.mrf.mxu0
    %v5337 = vadd.f32 %v5319, %v5336
    %5338 = vmatmul.bf16.gmra.mxu0 %v4790
    %v5339 = vpop.f32.mrf.mxu0
    %v5340 = vadd.f32 %v5322, %v5339
    %v5341 = vpop.f32.mrf.mxu0
    %5342 = vdwg.mxu0
    %5343 = vmatpush.bf16.msra.mxu0 %v3815
    %5344 = vmatpush.bf16.msra.mxu0 %v3812
    %5345 = vmatpush.bf16.msra.mxu0 %v3809
    %5346 = vmatpush.bf16.msra.mxu0 %v3806
    %5347 = vmatpush.bf16.msra.mxu0 %v3803
    %5348 = vmatpush.bf16.msra.mxu0 %v3800
    %5349 = vmatpush.bf16.msra.mxu0 %v3797
    %5350 = vmatpush.bf16.msra.mxu0 %v3794
    %5351 = vmatmul.bf16.gmra.mxu0 %v4780
    %v5352 = vpop.f32.mrf.mxu0
    %v5353 = vadd.f32 %v5335, %v5352
    %v5354 = vpop.f32.mrf.mxu0
    %v5355 = vadd.f32 %v5337, %v5354
    %5356 = vmatmul.bf16.gmra.mxu0 %v4791
    %v5357 = vpop.f32.mrf.mxu0
    %v5358 = vadd.f32 %v5340, %v5357
    %v5359 = vpop.f32.mrf.mxu0
    %5360 = vdwg.mxu0
    %5361 = vmatpush.bf16.msra.mxu0 %v3839
    %5362 = vmatpush.bf16.msra.mxu0 %v3836
    %5363 = vmatpush.bf16.msra.mxu0 %v3833
    %5364 = vmatpush.bf16.msra.mxu0 %v3830
    %5365 = vmatpush.bf16.msra.mxu0 %v3827
    %5366 = vmatpush.bf16.msra.mxu0 %v3824
    %5367 = vmatpush.bf16.msra.mxu0 %v3821
    %5368 = vmatpush.bf16.msra.mxu0 %v3818
    %5369 = vmatmul.bf16.gmra.mxu0 %v4781
    %v5370 = vpop.f32.mrf.mxu0
    %v5371 = vadd.f32 %v5353, %v5370
    %v5372 = vpop.f32.mrf.mxu0
    %v5373 = vadd.f32 %v5355, %v5372
    %5374 = vmatmul.bf16.gmra.mxu0 %v4792
    %v5375 = vpop.f32.mrf.mxu0
    %v5376 = vadd.f32 %v5358, %v5375
    %v5377 = vpop.f32.mrf.mxu0
    %5378 = vdwg.mxu0
    %5379 = vmatpush.bf16.msra.mxu0 %v3863
    %5380 = vmatpush.bf16.msra.mxu0 %v3860
    %5381 = vmatpush.bf16.msra.mxu0 %v3857
    %5382 = vmatpush.bf16.msra.mxu0 %v3854
    %5383 = vmatpush.bf16.msra.mxu0 %v3851
    %5384 = vmatpush.bf16.msra.mxu0 %v3848
    %5385 = vmatpush.bf16.msra.mxu0 %v3845
    %5386 = vmatpush.bf16.msra.mxu0 %v3842
    %5387 = vmatmul.bf16.gmra.mxu0 %v4782
    %v5388 = vpop.f32.mrf.mxu0
    %v5389 = vadd.f32 %v5371, %v5388
    %v5390 = vpop.f32.mrf.mxu0
    %v5391 = vadd.f32 %v5373, %v5390
    %5392 = vmatmul.bf16.gmra.mxu0 %v4793
    %v5393 = vpop.f32.mrf.mxu0
    %v5394 = vadd.f32 %v5376, %v5393
    %v5395 = vpop.f32.mrf.mxu0
    %5396 = vdwg.mxu0
    %5397 = vmatpush.bf16.msra.mxu0 0
    %5398 = vmatpush.bf16.msra.mxu0 0
    %5399 = vmatpush.bf16.msra.mxu0 0
    %5400 = vmatpush.bf16.msra.mxu0 0
    %5401 = vmatpush.bf16.msra.mxu0 %v3875
    %5402 = vmatpush.bf16.msra.mxu0 %v3872
    %5403 = vmatpush.bf16.msra.mxu0 %v3869
    %5404 = vmatpush.bf16.msra.mxu0 %v3866
    %5405 = vmatmul.bf16.gmra.mxu0 %v4816
    %v5406 = vpop.f32.mrf.mxu0
    %v5407 = vadd.f32 %v5389, %v5406
    %v5408 = vpop.f32.mrf.mxu0
    %v5409 = vadd.f32 %v5391, %v5408
    %5410 = vmatmul.bf16.gmra.mxu0 %v4819
    %v5411 = vpop.f32.mrf.mxu0
    %v5412 = vadd.f32 %v5394, %v5411
    %v5413 = vpop.f32.mrf.mxu0
    %5414 = vdwg.mxu0
    %v5415 = vld [vmem:[%s4] sm:$0x7]
    %v5416 = vadd.f32 %v2380, %v5011
    %v5417 = vadd.f32 %v2578, %v5209
    %v5418 = vadd.f32 %v2776, %v5407
    %v5419 = vadd.f32 %v2382, %v5013
    %v5420 = vadd.f32 %v2580, %v5211
    %v5421 = vadd.f32 %v2778, %v5409
    %v5422 = vadd.f32 %v2385, %v5016
    %v5423 = vadd.f32 %v2583, %v5214
    %v5424 = vadd.f32 %v2781, %v5412
    %v5426 = vperm.slane %v5415, 0
    %v5427 = vperm.slane %v5415, 1
    %v5428 = vperm.slane %v5415, 2
    %v5432 = vadd.f32 %v5416, %v5426
    %v5433 = vadd.f32 %v5417, %v5427
    %v5434 = vadd.f32 %v5418, %v5428
    %v5435 = vadd.f32 %v5419, %v5426
    %v5436 = vadd.f32 %v5420, %v5427
    %v5437 = vadd.f32 %v5421, %v5428
    %v5438 = vadd.f32 %v5422, %v5426
    %v5439 = vadd.f32 %v5423, %v5427
    %v5440 = vadd.f32 %v5424, %v5428
    %v5441 = vmax.f32 %v5432, 0.0
    %v5442 = vmax.f32 %v5433, 0.0
    %v5443 = vmax.f32 %v5434, 0.0
    %v5444 = vmax.f32 %v5435, 0.0
    %v5445 = vmax.f32 %v5436, 0.0
    %v5446 = vmax.f32 %v5437, 0.0
    %v5447 = vmax.f32 %v5438, 0.0
    %v5448 = vmax.f32 %v5439, 0.0
    %v5449 = vmax.f32 %v5440, 0.0
    %v5450 = vpack.c.bf16 %v5444, %v5441
    %v5451 = vpack.c.bf16 %v5445, %v5442
    %v5452 = vpack.c.bf16 %v5446, %v5443
    %v5453 = vpack.c.bf16 %v5447, %v5447
    %v5454 = vpack.c.bf16 %v5448, %v5448
    %v5455 = vpack.c.bf16 %v5449, %v5449
    %vm5465 = vcmask 1045504
    %v5466 = vrot.slane %v4318, 2
    %v5467 = vrot.slane %v4320, 2
    %v5468 = vsel %vm5465, %v5466, %v5467
    %v5469 = vrot.slane %v4516, 2
    %v5470 = vrot.slane %v4518, 2
    %v5471 = vsel %vm5465, %v5469, %v5470
    %v5472 = vrot.slane %v4714, 2
    %v5473 = vrot.slane %v4716, 2
    %v5474 = vsel %vm5465, %v5472, %v5473
    %v5475 = vrot.slane %v4323, 2
    %v5476 = vsel %vm5465, %v5467, %v5475
    %v5477 = vrot.slane %v4521, 2
    %v5478 = vsel %vm5465, %v5470, %v5477
    %v5479 = vrot.slane %v4719, 2
    %v5480 = vsel %vm5465, %v5473, %v5479
    %5490 = vmatpush.bf16.msra.mxu0 %v1700
    %5491 = vmatpush.bf16.msra.mxu0 %v1697
    %5492 = vmatpush.bf16.msra.mxu0 %v1694
    %5493 = vmatpush.bf16.msra.mxu0 %v1691
    %5494 = vmatpush.bf16.msra.mxu0 %v1688
    %5495 = vmatpush.bf16.msra.mxu0 %v1685
    %5496 = vmatpush.bf16.msra.mxu0 %v1682
    %5497 = vmatpush.bf16.msra.mxu0 %v1679
    %5498 = vmatmul.bf16.gmra.mxu0 %v4773
    %v5499 = vpop.f32.mrf.mxu0
    %v5500 = vadd.f32 %v5468, %v5499
    %v5501 = vpop.f32.mrf.mxu0
    %v5502 = vadd.f32 %v5476, %v5501
    %5503 = vmatmul.bf16.gmra.mxu0 %v4784
    %v5504 = vpop.f32.mrf.mxu0
    %v5505 = vadd.f32 %v5475, %v5504
    %v5506 = vpop.f32.mrf.mxu0
    %5507 = vdwg.mxu0
    %5508 = vmatpush.bf16.msra.mxu0 %v1724
    %5509 = vmatpush.bf16.msra.mxu0 %v1721
    %5510 = vmatpush.bf16.msra.mxu0 %v1718
    %5511 = vmatpush.bf16.msra.mxu0 %v1715
    %5512 = vmatpush.bf16.msra.mxu0 %v1712
    %5513 = vmatpush.bf16.msra.mxu0 %v1709
    %5514 = vmatpush.bf16.msra.mxu0 %v1706
    %5515 = vmatpush.bf16.msra.mxu0 %v1703
    %5516 = vmatmul.bf16.gmra.mxu0 %v4774
    %v5517 = vpop.f32.mrf.mxu0
    %v5518 = vadd.f32 %v5500, %v5517
    %v5519 = vpop.f32.mrf.mxu0
    %v5520 = vadd.f32 %v5502, %v5519
    %5521 = vmatmul.bf16.gmra.mxu0 %v4785
    %v5522 = vpop.f32.mrf.mxu0
    %v5523 = vadd.f32 %v5505, %v5522
    %v5524 = vpop.f32.mrf.mxu0
    %5525 = vdwg.mxu0
    %5526 = vmatpush.bf16.msra.mxu0 %v1748
    %5527 = vmatpush.bf16.msra.mxu0 %v1745
    %5528 = vmatpush.bf16.msra.mxu0 %v1742
    %5529 = vmatpush.bf16.msra.mxu0 %v1739
    %5530 = vmatpush.bf16.msra.mxu0 %v1736
    %5531 = vmatpush.bf16.msra.mxu0 %v1733
    %5532 = vmatpush.bf16.msra.mxu0 %v1730
    %5533 = vmatpush.bf16.msra.mxu0 %v1727
    %5534 = vmatmul.bf16.gmra.mxu0 %v4775
    %v5535 = vpop.f32.mrf.mxu0
    %v5536 = vadd.f32 %v5518, %v5535
    %v5537 = vpop.f32.mrf.mxu0
    %v5538 = vadd.f32 %v5520, %v5537
    %5539 = vmatmul.bf16.gmra.mxu0 %v4786
    %v5540 = vpop.f32.mrf.mxu0
    %v5541 = vadd.f32 %v5523, %v5540
    %v5542 = vpop.f32.mrf.mxu0
    %5543 = vdwg.mxu0
    %5544 = vmatpush.bf16.msra.mxu0 %v1772
    %5545 = vmatpush.bf16.msra.mxu0 %v1769
    %5546 = vmatpush.bf16.msra.mxu0 %v1766
    %5547 = vmatpush.bf16.msra.mxu0 %v1763
    %5548 = vmatpush.bf16.msra.mxu0 %v1760
    %5549 = vmatpush.bf16.msra.mxu0 %v1757
    %5550 = vmatpush.bf16.msra.mxu0 %v1754
    %5551 = vmatpush.bf16.msra.mxu0 %v1751
    %5552 = vmatmul.bf16.gmra.mxu0 %v4776
    %v5553 = vpop.f32.mrf.mxu0
    %v5554 = vadd.f32 %v5536, %v5553
    %v5555 = vpop.f32.mrf.mxu0
    %v5556 = vadd.f32 %v5538, %v5555
    %5557 = vmatmul.bf16.gmra.mxu0 %v4787
    %v5558 = vpop.f32.mrf.mxu0
    %v5559 = vadd.f32 %v5541, %v5558
    %v5560 = vpop.f32.mrf.mxu0
    %5561 = vdwg.mxu0
    %5562 = vmatpush.bf16.msra.mxu0 %v1796
    %5563 = vmatpush.bf16.msra.mxu0 %v1793
    %5564 = vmatpush.bf16.msra.mxu0 %v1790
    %5565 = vmatpush.bf16.msra.mxu0 %v1787
    %5566 = vmatpush.bf16.msra.mxu0 %v1784
    %5567 = vmatpush.bf16.msra.mxu0 %v1781
    %5568 = vmatpush.bf16.msra.mxu0 %v1778
    %5569 = vmatpush.bf16.msra.mxu0 %v1775
    %5570 = vmatmul.bf16.gmra.mxu0 %v4777
    %v5571 = vpop.f32.mrf.mxu0
    %v5572 = vadd.f32 %v5554, %v5571
    %v5573 = vpop.f32.mrf.mxu0
    %v5574 = vadd.f32 %v5556, %v5573
    %5575 = vmatmul.bf16.gmra.mxu0 %v4788
    %v5576 = vpop.f32.mrf.mxu0
    %v5577 = vadd.f32 %v5559, %v5576
    %v5578 = vpop.f32.mrf.mxu0
    %5579 = vdwg.mxu0
    %5580 = vmatpush.bf16.msra.mxu0 %v1820
    %5581 = vmatpush.bf16.msra.mxu0 %v1817
    %5582 = vmatpush.bf16.msra.mxu0 %v1814
    %5583 = vmatpush.bf16.msra.mxu0 %v1811
    %5584 = vmatpush.bf16.msra.mxu0 %v1808
    %5585 = vmatpush.bf16.msra.mxu0 %v1805
    %5586 = vmatpush.bf16.msra.mxu0 %v1802
    %5587 = vmatpush.bf16.msra.mxu0 %v1799
    %5588 = vmatmul.bf16.gmra.mxu0 %v4778
    %v5589 = vpop.f32.mrf.mxu0
    %v5590 = vadd.f32 %v5572, %v5589
    %v5591 = vpop.f32.mrf.mxu0
    %v5592 = vadd.f32 %v5574, %v5591
    %5593 = vmatmul.bf16.gmra.mxu0 %v4789
    %v5594 = vpop.f32.mrf.mxu0
    %v5595 = vadd.f32 %v5577, %v5594
    %v5596 = vpop.f32.mrf.mxu0
    %5597 = vdwg.mxu0
    %5598 = vmatpush.bf16.msra.mxu0 %v1844
    %5599 = vmatpush.bf16.msra.mxu0 %v1841
    %5600 = vmatpush.bf16.msra.mxu0 %v1838
    %5601 = vmatpush.bf16.msra.mxu0 %v1835
    %5602 = vmatpush.bf16.msra.mxu0 %v1832
    %5603 = vmatpush.bf16.msra.mxu0 %v1829
    %5604 = vmatpush.bf16.msra.mxu0 %v1826
    %5605 = vmatpush.bf16.msra.mxu0 %v1823
    %5606 = vmatmul.bf16.gmra.mxu0 %v4779
    %v5607 = vpop.f32.mrf.mxu0
    %v5608 = vadd.f32 %v5590, %v5607
    %v5609 = vpop.f32.mrf.mxu0
    %v5610 = vadd.f32 %v5592, %v5609
    %5611 = vmatmul.bf16.gmra.mxu0 %v4790
    %v5612 = vpop.f32.mrf.mxu0
    %v5613 = vadd.f32 %v5595, %v5612
    %v5614 = vpop.f32.mrf.mxu0
    %5615 = vdwg.mxu0
    %5616 = vmatpush.bf16.msra.mxu0 %v1868
    %5617 = vmatpush.bf16.msra.mxu0 %v1865
    %5618 = vmatpush.bf16.msra.mxu0 %v1862
    %5619 = vmatpush.bf16.msra.mxu0 %v1859
    %5620 = vmatpush.bf16.msra.mxu0 %v1856
    %5621 = vmatpush.bf16.msra.mxu0 %v1853
    %5622 = vmatpush.bf16.msra.mxu0 %v1850
    %5623 = vmatpush.bf16.msra.mxu0 %v1847
    %5624 = vmatmul.bf16.gmra.mxu0 %v4780
    %v5625 = vpop.f32.mrf.mxu0
    %v5626 = vadd.f32 %v5608, %v5625
    %v5627 = vpop.f32.mrf.mxu0
    %v5628 = vadd.f32 %v5610, %v5627
    %5629 = vmatmul.bf16.gmra.mxu0 %v4791
    %v5630 = vpop.f32.mrf.mxu0
    %v5631 = vadd.f32 %v5613, %v5630
    %v5632 = vpop.f32.mrf.mxu0
    %5633 = vdwg.mxu0
    %5634 = vmatpush.bf16.msra.mxu0 %v1892
    %5635 = vmatpush.bf16.msra.mxu0 %v1889
    %5636 = vmatpush.bf16.msra.mxu0 %v1886
    %5637 = vmatpush.bf16.msra.mxu0 %v1883
    %5638 = vmatpush.bf16.msra.mxu0 %v1880
    %5639 = vmatpush.bf16.msra.mxu0 %v1877
    %5640 = vmatpush.bf16.msra.mxu0 %v1874
    %5641 = vmatpush.bf16.msra.mxu0 %v1871
    %5642 = vmatmul.bf16.gmra.mxu0 %v4781
    %v5643 = vpop.f32.mrf.mxu0
    %v5644 = vadd.f32 %v5626, %v5643
    %v5645 = vpop.f32.mrf.mxu0
    %v5646 = vadd.f32 %v5628, %v5645
    %5647 = vmatmul.bf16.gmra.mxu0 %v4792
    %v5648 = vpop.f32.mrf.mxu0
    %v5649 = vadd.f32 %v5631, %v5648
    %v5650 = vpop.f32.mrf.mxu0
    %5651 = vdwg.mxu0
    %5652 = vmatpush.bf16.msra.mxu0 %v1916
    %5653 = vmatpush.bf16.msra.mxu0 %v1913
    %5654 = vmatpush.bf16.msra.mxu0 %v1910
    %5655 = vmatpush.bf16.msra.mxu0 %v1907
    %5656 = vmatpush.bf16.msra.mxu0 %v1904
    %5657 = vmatpush.bf16.msra.mxu0 %v1901
    %5658 = vmatpush.bf16.msra.mxu0 %v1898
    %5659 = vmatpush.bf16.msra.mxu0 %v1895
    %5660 = vmatmul.bf16.gmra.mxu0 %v4782
    %v5661 = vpop.f32.mrf.mxu0
    %v5662 = vadd.f32 %v5644, %v5661
    %v5663 = vpop.f32.mrf.mxu0
    %v5664 = vadd.f32 %v5646, %v5663
    %5665 = vmatmul.bf16.gmra.mxu0 %v4793
    %v5666 = vpop.f32.mrf.mxu0
    %v5667 = vadd.f32 %v5649, %v5666
    %v5668 = vpop.f32.mrf.mxu0
    %5669 = vdwg.mxu0
    %5670 = vmatpush.bf16.msra.mxu0 0
    %5671 = vmatpush.bf16.msra.mxu0 0
    %5672 = vmatpush.bf16.msra.mxu0 0
    %5673 = vmatpush.bf16.msra.mxu0 0
    %5674 = vmatpush.bf16.msra.mxu0 %v1928
    %5675 = vmatpush.bf16.msra.mxu0 %v1925
    %5676 = vmatpush.bf16.msra.mxu0 %v1922
    %5677 = vmatpush.bf16.msra.mxu0 %v1919
    %5678 = vmatmul.bf16.gmra.mxu0 %v4816
    %v5679 = vpop.f32.mrf.mxu0
    %v5680 = vadd.f32 %v5662, %v5679
    %v5681 = vpop.f32.mrf.mxu0
    %v5682 = vadd.f32 %v5664, %v5681
    %5683 = vmatmul.bf16.gmra.mxu0 %v4819
    %v5684 = vpop.f32.mrf.mxu0
    %v5685 = vadd.f32 %v5667, %v5684
    %v5686 = vpop.f32.mrf.mxu0
    %5687 = vdwg.mxu0
    %5688 = vmatpush.bf16.msra.mxu0 %v1701
    %5689 = vmatpush.bf16.msra.mxu0 %v1698
    %5690 = vmatpush.bf16.msra.mxu0 %v1695
    %5691 = vmatpush.bf16.msra.mxu0 %v1692
    %5692 = vmatpush.bf16.msra.mxu0 %v1689
    %5693 = vmatpush.bf16.msra.mxu0 %v1686
    %5694 = vmatpush.bf16.msra.mxu0 %v1683
    %5695 = vmatpush.bf16.msra.mxu0 %v1680
    %5696 = vmatmul.bf16.gmra.mxu0 %v4773
    %v5697 = vpop.f32.mrf.mxu0
    %v5698 = vadd.f32 %v5471, %v5697
    %v5699 = vpop.f32.mrf.mxu0
    %v5700 = vadd.f32 %v5478, %v5699
    %5701 = vmatmul.bf16.gmra.mxu0 %v4784
    %v5702 = vpop.f32.mrf.mxu0
    %v5703 = vadd.f32 %v5477, %v5702
    %v5704 = vpop.f32.mrf.mxu0
    %5705 = vdwg.mxu0
    %5706 = vmatpush.bf16.msra.mxu0 %v1725
    %5707 = vmatpush.bf16.msra.mxu0 %v1722
    %5708 = vmatpush.bf16.msra.mxu0 %v1719
    %5709 = vmatpush.bf16.msra.mxu0 %v1716
    %5710 = vmatpush.bf16.msra.mxu0 %v1713
    %5711 = vmatpush.bf16.msra.mxu0 %v1710
    %5712 = vmatpush.bf16.msra.mxu0 %v1707
    %5713 = vmatpush.bf16.msra.mxu0 %v1704
    %5714 = vmatmul.bf16.gmra.mxu0 %v4774
    %v5715 = vpop.f32.mrf.mxu0
    %v5716 = vadd.f32 %v5698, %v5715
    %v5717 = vpop.f32.mrf.mxu0
    %v5718 = vadd.f32 %v5700, %v5717
    %5719 = vmatmul.bf16.gmra.mxu0 %v4785
    %v5720 = vpop.f32.mrf.mxu0
    %v5721 = vadd.f32 %v5703, %v5720
    %v5722 = vpop.f32.mrf.mxu0
    %5723 = vdwg.mxu0
    %5724 = vmatpush.bf16.msra.mxu0 %v1749
    %5725 = vmatpush.bf16.msra.mxu0 %v1746
    %5726 = vmatpush.bf16.msra.mxu0 %v1743
    %5727 = vmatpush.bf16.msra.mxu0 %v1740
    %5728 = vmatpush.bf16.msra.mxu0 %v1737
    %5729 = vmatpush.bf16.msra.mxu0 %v1734
    %5730 = vmatpush.bf16.msra.mxu0 %v1731
    %5731 = vmatpush.bf16.msra.mxu0 %v1728
    %5732 = vmatmul.bf16.gmra.mxu0 %v4775
    %v5733 = vpop.f32.mrf.mxu0
    %v5734 = vadd.f32 %v5716, %v5733
    %v5735 = vpop.f32.mrf.mxu0
    %v5736 = vadd.f32 %v5718, %v5735
    %5737 = vmatmul.bf16.gmra.mxu0 %v4786
    %v5738 = vpop.f32.mrf.mxu0
    %v5739 = vadd.f32 %v5721, %v5738
    %v5740 = vpop.f32.mrf.mxu0
    %5741 = vdwg.mxu0
    %5742 = vmatpush.bf16.msra.mxu0 %v1773
    %5743 = vmatpush.bf16.msra.mxu0 %v1770
    %5744 = vmatpush.bf16.msra.mxu0 %v1767
    %5745 = vmatpush.bf16.msra.mxu0 %v1764
    %5746 = vmatpush.bf16.msra.mxu0 %v1761
    %5747 = vmatpush.bf16.msra.mxu0 %v1758
    %5748 = vmatpush.bf16.msra.mxu0 %v1755
    %5749 = vmatpush.bf16.msra.mxu0 %v1752
    %5750 = vmatmul.bf16.gmra.mxu0 %v4776
    %v5751 = vpop.f32.mrf.mxu0
    %v5752 = vadd.f32 %v5734, %v5751
    %v5753 = vpop.f32.mrf.mxu0
    %v5754 = vadd.f32 %v5736, %v5753
    %5755 = vmatmul.bf16.gmra.mxu0 %v4787
    %v5756 = vpop.f32.mrf.mxu0
    %v5757 = vadd.f32 %v5739, %v5756
    %v5758 = vpop.f32.mrf.mxu0
    %5759 = vdwg.mxu0
    %5760 = vmatpush.bf16.msra.mxu0 %v1797
    %5761 = vmatpush.bf16.msra.mxu0 %v1794
    %5762 = vmatpush.bf16.msra.mxu0 %v1791
    %5763 = vmatpush.bf16.msra.mxu0 %v1788
    %5764 = vmatpush.bf16.msra.mxu0 %v1785
    %5765 = vmatpush.bf16.msra.mxu0 %v1782
    %5766 = vmatpush.bf16.msra.mxu0 %v1779
    %5767 = vmatpush.bf16.msra.mxu0 %v1776
    %5768 = vmatmul.bf16.gmra.mxu0 %v4777
    %v5769 = vpop.f32.mrf.mxu0
    %v5770 = vadd.f32 %v5752, %v5769
    %v5771 = vpop.f32.mrf.mxu0
    %v5772 = vadd.f32 %v5754, %v5771
    %5773 = vmatmul.bf16.gmra.mxu0 %v4788
    %v5774 = vpop.f32.mrf.mxu0
    %v5775 = vadd.f32 %v5757, %v5774
    %v5776 = vpop.f32.mrf.mxu0
    %5777 = vdwg.mxu0
    %5778 = vmatpush.bf16.msra.mxu0 %v1821
    %5779 = vmatpush.bf16.msra.mxu0 %v1818
    %5780 = vmatpush.bf16.msra.mxu0 %v1815
    %5781 = vmatpush.bf16.msra.mxu0 %v1812
    %5782 = vmatpush.bf16.msra.mxu0 %v1809
    %5783 = vmatpush.bf16.msra.mxu0 %v1806
    %5784 = vmatpush.bf16.msra.mxu0 %v1803
    %5785 = vmatpush.bf16.msra.mxu0 %v1800
    %5786 = vmatmul.bf16.gmra.mxu0 %v4778
    %v5787 = vpop.f32.mrf.mxu0
    %v5788 = vadd.f32 %v5770, %v5787
    %v5789 = vpop.f32.mrf.mxu0
    %v5790 = vadd.f32 %v5772, %v5789
    %5791 = vmatmul.bf16.gmra.mxu0 %v4789
    %v5792 = vpop.f32.mrf.mxu0
    %v5793 = vadd.f32 %v5775, %v5792
    %v5794 = vpop.f32.mrf.mxu0
    %5795 = vdwg.mxu0
    %5796 = vmatpush.bf16.msra.mxu0 %v1845
    %5797 = vmatpush.bf16.msra.mxu0 %v1842
    %5798 = vmatpush.bf16.msra.mxu0 %v1839
    %5799 = vmatpush.bf16.msra.mxu0 %v1836
    %5800 = vmatpush.bf16.msra.mxu0 %v1833
    %5801 = vmatpush.bf16.msra.mxu0 %v1830
    %5802 = vmatpush.bf16.msra.mxu0 %v1827
    %5803 = vmatpush.bf16.msra.mxu0 %v1824
    %5804 = vmatmul.bf16.gmra.mxu0 %v4779
    %v5805 = vpop.f32.mrf.mxu0
    %v5806 = vadd.f32 %v5788, %v5805
    %v5807 = vpop.f32.mrf.mxu0
    %v5808 = vadd.f32 %v5790, %v5807
    %5809 = vmatmul.bf16.gmra.mxu0 %v4790
    %v5810 = vpop.f32.mrf.mxu0
    %v5811 = vadd.f32 %v5793, %v5810
    %v5812 = vpop.f32.mrf.mxu0
    %5813 = vdwg.mxu0
    %5814 = vmatpush.bf16.msra.mxu0 %v1869
    %5815 = vmatpush.bf16.msra.mxu0 %v1866
    %5816 = vmatpush.bf16.msra.mxu0 %v1863
    %5817 = vmatpush.bf16.msra.mxu0 %v1860
    %5818 = vmatpush.bf16.msra.mxu0 %v1857
    %5819 = vmatpush.bf16.msra.mxu0 %v1854
    %5820 = vmatpush.bf16.msra.mxu0 %v1851
    %5821 = vmatpush.bf16.msra.mxu0 %v1848
    %5822 = vmatmul.bf16.gmra.mxu0 %v4780
    %v5823 = vpop.f32.mrf.mxu0
    %v5824 = vadd.f32 %v5806, %v5823
    %v5825 = vpop.f32.mrf.mxu0
    %v5826 = vadd.f32 %v5808, %v5825
    %5827 = vmatmul.bf16.gmra.mxu0 %v4791
    %v5828 = vpop.f32.mrf.mxu0
    %v5829 = vadd.f32 %v5811, %v5828
    %v5830 = vpop.f32.mrf.mxu0
    %5831 = vdwg.mxu0
    %5832 = vmatpush.bf16.msra.mxu0 %v1893
    %5833 = vmatpush.bf16.msra.mxu0 %v1890
    %5834 = vmatpush.bf16.msra.mxu0 %v1887
    %5835 = vmatpush.bf16.msra.mxu0 %v1884
    %5836 = vmatpush.bf16.msra.mxu0 %v1881
    %5837 = vmatpush.bf16.msra.mxu0 %v1878
    %5838 = vmatpush.bf16.msra.mxu0 %v1875
    %5839 = vmatpush.bf16.msra.mxu0 %v1872
    %5840 = vmatmul.bf16.gmra.mxu0 %v4781
    %v5841 = vpop.f32.mrf.mxu0
    %v5842 = vadd.f32 %v5824, %v5841
    %v5843 = vpop.f32.mrf.mxu0
    %v5844 = vadd.f32 %v5826, %v5843
    %5845 = vmatmul.bf16.gmra.mxu0 %v4792
    %v5846 = vpop.f32.mrf.mxu0
    %v5847 = vadd.f32 %v5829, %v5846
    %v5848 = vpop.f32.mrf.mxu0
    %5849 = vdwg.mxu0
    %5850 = vmatpush.bf16.msra.mxu0 %v1917
    %5851 = vmatpush.bf16.msra.mxu0 %v1914
    %5852 = vmatpush.bf16.msra.mxu0 %v1911
    %5853 = vmatpush.bf16.msra.mxu0 %v1908
    %5854 = vmatpush.bf16.msra.mxu0 %v1905
    %5855 = vmatpush.bf16.msra.mxu0 %v1902
    %5856 = vmatpush.bf16.msra.mxu0 %v1899
    %5857 = vmatpush.bf16.msra.mxu0 %v1896
    %5858 = vmatmul.bf16.gmra.mxu0 %v4782
    %v5859 = vpop.f32.mrf.mxu0
    %v5860 = vadd.f32 %v5842, %v5859
    %v5861 = vpop.f32.mrf.mxu0
    %v5862 = vadd.f32 %v5844, %v5861
    %5863 = vmatmul.bf16.gmra.mxu0 %v4793
    %v5864 = vpop.f32.mrf.mxu0
    %v5865 = vadd.f32 %v5847, %v5864
    %v5866 = vpop.f32.mrf.mxu0
    %5867 = vdwg.mxu0
    %5868 = vmatpush.bf16.msra.mxu0 0
    %5869 = vmatpush.bf16.msra.mxu0 0
    %5870 = vmatpush.bf16.msra.mxu0 0
    %5871 = vmatpush.bf16.msra.mxu0 0
    %5872 = vmatpush.bf16.msra.mxu0 %v1929
    %5873 = vmatpush.bf16.msra.mxu0 %v1926
    %5874 = vmatpush.bf16.msra.mxu0 %v1923
    %5875 = vmatpush.bf16.msra.mxu0 %v1920
    %5876 = vmatmul.bf16.gmra.mxu0 %v4816
    %v5877 = vpop.f32.mrf.mxu0
    %v5878 = vadd.f32 %v5860, %v5877
    %v5879 = vpop.f32.mrf.mxu0
    %v5880 = vadd.f32 %v5862, %v5879
    %5881 = vmatmul.bf16.gmra.mxu0 %v4819
    %v5882 = vpop.f32.mrf.mxu0
    %v5883 = vadd.f32 %v5865, %v5882
    %v5884 = vpop.f32.mrf.mxu0
    %5885 = vdwg.mxu0
    %5886 = vmatpush.bf16.msra.mxu0 %v1702
    %5887 = vmatpush.bf16.msra.mxu0 %v1699
    %5888 = vmatpush.bf16.msra.mxu0 %v1696
    %5889 = vmatpush.bf16.msra.mxu0 %v1693
    %5890 = vmatpush.bf16.msra.mxu0 %v1690
    %5891 = vmatpush.bf16.msra.mxu0 %v1687
    %5892 = vmatpush.bf16.msra.mxu0 %v1684
    %5893 = vmatpush.bf16.msra.mxu0 %v1681
    %5894 = vmatmul.bf16.gmra.mxu0 %v4773
    %v5895 = vpop.f32.mrf.mxu0
    %v5896 = vadd.f32 %v5474, %v5895
    %v5897 = vpop.f32.mrf.mxu0
    %v5898 = vadd.f32 %v5480, %v5897
    %5899 = vmatmul.bf16.gmra.mxu0 %v4784
    %v5900 = vpop.f32.mrf.mxu0
    %v5901 = vadd.f32 %v5479, %v5900
    %v5902 = vpop.f32.mrf.mxu0
    %5903 = vdwg.mxu0
    %5904 = vmatpush.bf16.msra.mxu0 %v1726
    %5905 = vmatpush.bf16.msra.mxu0 %v1723
    %5906 = vmatpush.bf16.msra.mxu0 %v1720
    %5907 = vmatpush.bf16.msra.mxu0 %v1717
    %5908 = vmatpush.bf16.msra.mxu0 %v1714
    %5909 = vmatpush.bf16.msra.mxu0 %v1711
    %5910 = vmatpush.bf16.msra.mxu0 %v1708
    %5911 = vmatpush.bf16.msra.mxu0 %v1705
    %5912 = vmatmul.bf16.gmra.mxu0 %v4774
    %v5913 = vpop.f32.mrf.mxu0
    %v5914 = vadd.f32 %v5896, %v5913
    %v5915 = vpop.f32.mrf.mxu0
    %v5916 = vadd.f32 %v5898, %v5915
    %5917 = vmatmul.bf16.gmra.mxu0 %v4785
    %v5918 = vpop.f32.mrf.mxu0
    %v5919 = vadd.f32 %v5901, %v5918
    %v5920 = vpop.f32.mrf.mxu0
    %5921 = vdwg.mxu0
    %5922 = vmatpush.bf16.msra.mxu0 %v1750
    %5923 = vmatpush.bf16.msra.mxu0 %v1747
    %5924 = vmatpush.bf16.msra.mxu0 %v1744
    %5925 = vmatpush.bf16.msra.mxu0 %v1741
    %5926 = vmatpush.bf16.msra.mxu0 %v1738
    %5927 = vmatpush.bf16.msra.mxu0 %v1735
    %5928 = vmatpush.bf16.msra.mxu0 %v1732
    %5929 = vmatpush.bf16.msra.mxu0 %v1729
    %5930 = vmatmul.bf16.gmra.mxu0 %v4775
    %v5931 = vpop.f32.mrf.mxu0
    %v5932 = vadd.f32 %v5914, %v5931
    %v5933 = vpop.f32.mrf.mxu0
    %v5934 = vadd.f32 %v5916, %v5933
    %5935 = vmatmul.bf16.gmra.mxu0 %v4786
    %v5936 = vpop.f32.mrf.mxu0
    %v5937 = vadd.f32 %v5919, %v5936
    %v5938 = vpop.f32.mrf.mxu0
    %5939 = vdwg.mxu0
    %5940 = vmatpush.bf16.msra.mxu0 %v1774
    %5941 = vmatpush.bf16.msra.mxu0 %v1771
    %5942 = vmatpush.bf16.msra.mxu0 %v1768
    %5943 = vmatpush.bf16.msra.mxu0 %v1765
    %5944 = vmatpush.bf16.msra.mxu0 %v1762
    %5945 = vmatpush.bf16.msra.mxu0 %v1759
    %5946 = vmatpush.bf16.msra.mxu0 %v1756
    %5947 = vmatpush.bf16.msra.mxu0 %v1753
    %5948 = vmatmul.bf16.gmra.mxu0 %v4776
    %v5949 = vpop.f32.mrf.mxu0
    %v5950 = vadd.f32 %v5932, %v5949
    %v5951 = vpop.f32.mrf.mxu0
    %v5952 = vadd.f32 %v5934, %v5951
    %5953 = vmatmul.bf16.gmra.mxu0 %v4787
    %v5954 = vpop.f32.mrf.mxu0
    %v5955 = vadd.f32 %v5937, %v5954
    %v5956 = vpop.f32.mrf.mxu0
    %5957 = vdwg.mxu0
    %5958 = vmatpush.bf16.msra.mxu0 %v1798
    %5959 = vmatpush.bf16.msra.mxu0 %v1795
    %5960 = vmatpush.bf16.msra.mxu0 %v1792
    %5961 = vmatpush.bf16.msra.mxu0 %v1789
    %5962 = vmatpush.bf16.msra.mxu0 %v1786
    %5963 = vmatpush.bf16.msra.mxu0 %v1783
    %5964 = vmatpush.bf16.msra.mxu0 %v1780
    %5965 = vmatpush.bf16.msra.mxu0 %v1777
    %5966 = vmatmul.bf16.gmra.mxu0 %v4777
    %v5967 = vpop.f32.mrf.mxu0
    %v5968 = vadd.f32 %v5950, %v5967
    %v5969 = vpop.f32.mrf.mxu0
    %v5970 = vadd.f32 %v5952, %v5969
    %5971 = vmatmul.bf16.gmra.mxu0 %v4788
    %v5972 = vpop.f32.mrf.mxu0
    %v5973 = vadd.f32 %v5955, %v5972
    %v5974 = vpop.f32.mrf.mxu0
    %5975 = vdwg.mxu0
    %5976 = vmatpush.bf16.msra.mxu0 %v1822
    %5977 = vmatpush.bf16.msra.mxu0 %v1819
    %5978 = vmatpush.bf16.msra.mxu0 %v1816
    %5979 = vmatpush.bf16.msra.mxu0 %v1813
    %5980 = vmatpush.bf16.msra.mxu0 %v1810
    %5981 = vmatpush.bf16.msra.mxu0 %v1807
    %5982 = vmatpush.bf16.msra.mxu0 %v1804
    %5983 = vmatpush.bf16.msra.mxu0 %v1801
    %5984 = vmatmul.bf16.gmra.mxu0 %v4778
    %v5985 = vpop.f32.mrf.mxu0
    %v5986 = vadd.f32 %v5968, %v5985
    %v5987 = vpop.f32.mrf.mxu0
    %v5988 = vadd.f32 %v5970, %v5987
    %5989 = vmatmul.bf16.gmra.mxu0 %v4789
    %v5990 = vpop.f32.mrf.mxu0
    %v5991 = vadd.f32 %v5973, %v5990
    %v5992 = vpop.f32.mrf.mxu0
    %5993 = vdwg.mxu0
    %5994 = vmatpush.bf16.msra.mxu0 %v1846
    %5995 = vmatpush.bf16.msra.mxu0 %v1843
    %5996 = vmatpush.bf16.msra.mxu0 %v1840
    %5997 = vmatpush.bf16.msra.mxu0 %v1837
    %5998 = vmatpush.bf16.msra.mxu0 %v1834
    %5999 = vmatpush.bf16.msra.mxu0 %v1831
    %6000 = vmatpush.bf16.msra.mxu0 %v1828
    %6001 = vmatpush.bf16.msra.mxu0 %v1825
    %6002 = vmatmul.bf16.gmra.mxu0 %v4779
    %v6003 = vpop.f32.mrf.mxu0
    %v6004 = vadd.f32 %v5986, %v6003
    %v6005 = vpop.f32.mrf.mxu0
    %v6006 = vadd.f32 %v5988, %v6005
    %6007 = vmatmul.bf16.gmra.mxu0 %v4790
    %v6008 = vpop.f32.mrf.mxu0
    %v6009 = vadd.f32 %v5991, %v6008
    %v6010 = vpop.f32.mrf.mxu0
    %6011 = vdwg.mxu0
    %6012 = vmatpush.bf16.msra.mxu0 %v1870
    %6013 = vmatpush.bf16.msra.mxu0 %v1867
    %6014 = vmatpush.bf16.msra.mxu0 %v1864
    %6015 = vmatpush.bf16.msra.mxu0 %v1861
    %6016 = vmatpush.bf16.msra.mxu0 %v1858
    %6017 = vmatpush.bf16.msra.mxu0 %v1855
    %6018 = vmatpush.bf16.msra.mxu0 %v1852
    %6019 = vmatpush.bf16.msra.mxu0 %v1849
    %6020 = vmatmul.bf16.gmra.mxu0 %v4780
    %v6021 = vpop.f32.mrf.mxu0
    %v6022 = vadd.f32 %v6004, %v6021
    %v6023 = vpop.f32.mrf.mxu0
    %v6024 = vadd.f32 %v6006, %v6023
    %6025 = vmatmul.bf16.gmra.mxu0 %v4791
    %v6026 = vpop.f32.mrf.mxu0
    %v6027 = vadd.f32 %v6009, %v6026
    %v6028 = vpop.f32.mrf.mxu0
    %6029 = vdwg.mxu0
    %6030 = vmatpush.bf16.msra.mxu0 %v1894
    %6031 = vmatpush.bf16.msra.mxu0 %v1891
    %6032 = vmatpush.bf16.msra.mxu0 %v1888
    %6033 = vmatpush.bf16.msra.mxu0 %v1885
    %6034 = vmatpush.bf16.msra.mxu0 %v1882
    %6035 = vmatpush.bf16.msra.mxu0 %v1879
    %6036 = vmatpush.bf16.msra.mxu0 %v1876
    %6037 = vmatpush.bf16.msra.mxu0 %v1873
    %6038 = vmatmul.bf16.gmra.mxu0 %v4781
    %v6039 = vpop.f32.mrf.mxu0
    %v6040 = vadd.f32 %v6022, %v6039
    %v6041 = vpop.f32.mrf.mxu0
    %v6042 = vadd.f32 %v6024, %v6041
    %6043 = vmatmul.bf16.gmra.mxu0 %v4792
    %v6044 = vpop.f32.mrf.mxu0
    %v6045 = vadd.f32 %v6027, %v6044
    %v6046 = vpop.f32.mrf.mxu0
    %6047 = vdwg.mxu0
    %6048 = vmatpush.bf16.msra.mxu0 %v1918
    %6049 = vmatpush.bf16.msra.mxu0 %v1915
    %6050 = vmatpush.bf16.msra.mxu0 %v1912
    %6051 = vmatpush.bf16.msra.mxu0 %v1909
    %6052 = vmatpush.bf16.msra.mxu0 %v1906
    %6053 = vmatpush.bf16.msra.mxu0 %v1903
    %6054 = vmatpush.bf16.msra.mxu0 %v1900
    %6055 = vmatpush.bf16.msra.mxu0 %v1897
    %6056 = vmatmul.bf16.gmra.mxu0 %v4782
    %v6057 = vpop.f32.mrf.mxu0
    %v6058 = vadd.f32 %v6040, %v6057
    %v6059 = vpop.f32.mrf.mxu0
    %v6060 = vadd.f32 %v6042, %v6059
    %6061 = vmatmul.bf16.gmra.mxu0 %v4793
    %v6062 = vpop.f32.mrf.mxu0
    %v6063 = vadd.f32 %v6045, %v6062
    %v6064 = vpop.f32.mrf.mxu0
    %6065 = vdwg.mxu0
    %6066 = vmatpush.bf16.msra.mxu0 0
    %6067 = vmatpush.bf16.msra.mxu0 0
    %6068 = vmatpush.bf16.msra.mxu0 0
    %6069 = vmatpush.bf16.msra.mxu0 0
    %6070 = vmatpush.bf16.msra.mxu0 %v1930
    %6071 = vmatpush.bf16.msra.mxu0 %v1927
    %6072 = vmatpush.bf16.msra.mxu0 %v1924
    %6073 = vmatpush.bf16.msra.mxu0 %v1921
    %6074 = vmatmul.bf16.gmra.mxu0 %v4816
    %v6075 = vpop.f32.mrf.mxu0
    %v6076 = vadd.f32 %v6058, %v6075
    %v6077 = vpop.f32.mrf.mxu0
    %v6078 = vadd.f32 %v6060, %v6077
    %6079 = vmatmul.bf16.gmra.mxu0 %v4819
    %v6080 = vpop.f32.mrf.mxu0
    %v6081 = vadd.f32 %v6063, %v6080
    %v6082 = vpop.f32.mrf.mxu0
    %6083 = vdwg.mxu0
    %v6084 = vadd.f32 %v5680, %v5426
    %v6085 = vadd.f32 %v5878, %v5427
    %v6086 = vadd.f32 %v6076, %v5428
    %v6087 = vadd.f32 %v5682, %v5426
    %v6088 = vadd.f32 %v5880, %v5427
    %v6089 = vadd.f32 %v6078, %v5428
    %v6090 = vadd.f32 %v5685, %v5426
    %v6091 = vadd.f32 %v5883, %v5427
    %v6092 = vadd.f32 %v6081, %v5428
    %v6093 = vmax.f32 %v6084, 0.0
    %v6094 = vmax.f32 %v6085, 0.0
    %v6095 = vmax.f32 %v6086, 0.0
    %v6096 = vmax.f32 %v6087, 0.0
    %v6097 = vmax.f32 %v6088, 0.0
    %v6098 = vmax.f32 %v6089, 0.0
    %v6099 = vmax.f32 %v6090, 0.0
    %v6100 = vmax.f32 %v6091, 0.0
    %v6101 = vmax.f32 %v6092, 0.0
    %v6102 = vpack.c.bf16 %v6096, %v6093
    %v6103 = vpack.c.bf16 %v6097, %v6094
    %v6104 = vpack.c.bf16 %v6098, %v6095
    %v6105 = vpack.c.bf16 %v6099, %v6099
    %v6106 = vpack.c.bf16 %v6100, %v6100
    %v6107 = vpack.c.bf16 %v6101, %v6101
    %v6108 = vld [vmem:[%s3] sm:$0xff]
    %v6109 = vld [vmem:[%s3 + $0x8] sm:$0xf]
    %v6110 = vld [vmem:[%s3 + $0xc] sm:$0xff]
    %v6111 = vld [vmem:[%s3 + $0x14] sm:$0xf]
    %v6112 = vld [vmem:[%s3 + $0x18] sm:$0xff]
    %v6113 = vld [vmem:[%s3 + $0x20] sm:$0xf]
    %v6114 = vld [vmem:[%s3 + $0x24] sm:$0xff]
    %v6115 = vld [vmem:[%s3 + $0x2c] sm:$0xf]
    %v6116 = vld [vmem:[%s3 + $0x30] sm:$0xff]
    %v6117 = vld [vmem:[%s3 + $0x38] sm:$0xf]
    %v6118 = vld [vmem:[%s3 + $0x3c] sm:$0xff]
    %v6119 = vld [vmem:[%s3 + $0x44] sm:$0xf]
    %v6120 = vld [vmem:[%s3 + $0x48] sm:$0xff]
    %v6121 = vld [vmem:[%s3 + $0x50] sm:$0xf]
    %v6122 = vld [vmem:[%s3 + $0x54] sm:$0xff]
    %v6123 = vld [vmem:[%s3 + $0x5c] sm:$0xf]
    %v6124 = vld [vmem:[%s3 + $0x60] sm:$0xff]
    %v6125 = vld [vmem:[%s3 + $0x68] sm:$0xf]
    %v6126 = vld [vmem:[%s3 + $0x6c] sm:$0xff]
    %v6127 = vld [vmem:[%s3 + $0x74] sm:$0xf]
    %v6128 = vld [vmem:[%s3 + $0x78] sm:$0xff]
    %v6129 = vld [vmem:[%s3 + $0x80] sm:$0xf]
    %v6130 = vld [vmem:[%s3 + $0x84] sm:$0xff]
    %v6131 = vld [vmem:[%s3 + $0x8c] sm:$0xf]
    %v6132 = vld [vmem:[%s3 + $0x90] sm:$0xff]
    %v6133 = vld [vmem:[%s3 + $0x98] sm:$0xf]
    %v6134 = vld [vmem:[%s3 + $0x9c] sm:$0xff]
    %v6135 = vld [vmem:[%s3 + $0xa4] sm:$0xf]
    %v6136 = vld [vmem:[%s3 + $0xa8] sm:$0xff]
    %v6137 = vld [vmem:[%s3 + $0xb0] sm:$0xf]
    %v6138 = vld [vmem:[%s3 + $0xb4] sm:$0xff]
    %v6139 = vld [vmem:[%s3 + $0xbc] sm:$0xf]
    %v6140 = vld [vmem:[%s3 + $0xc0] sm:$0xff]
    %v6141 = vld [vmem:[%s3 + $0xc8] sm:$0xf]
    %v6142 = vld [vmem:[%s3 + $0xcc] sm:$0xff]
    %v6143 = vld [vmem:[%s3 + $0xd4] sm:$0xf]
    %v6144 = vld [vmem:[%s3 + $0xd8] sm:$0xff]
    %v6145 = vld [vmem:[%s3 + $0xe0] sm:$0xf]
    %v6146 = vld [vmem:[%s3 + $0xe4] sm:$0xff]
    %v6147 = vld [vmem:[%s3 + $0xec] sm:$0xf]
    %v6148 = vld [vmem:[%s3 + $0xf0] sm:$0xff]
    %v6149 = vld [vmem:[%s3 + $0xf8] sm:$0xf]
    %v6150 = vld [vmem:[%s3 + $0xfc] sm:$0xff]
    %v6151 = vld [vmem:[%s3 + $0x104] sm:$0xf]
    %v6152 = vld [vmem:[%s3 + $0x108] sm:$0xff]
    %v6153 = vld [vmem:[%s3 + $0x110] sm:$0xf]
    %v6154 = vld [vmem:[%s3 + $0x114] sm:$0xff]
    %v6155 = vld [vmem:[%s3 + $0x11c] sm:$0xf]
    %v6156 = vld [vmem:[%s3 + $0x120] sm:$0xff]
    %v6157 = vld [vmem:[%s3 + $0x128] sm:$0xf]
    %v6158 = vld [vmem:[%s3 + $0x12c] sm:$0xff]
    %v6159 = vld [vmem:[%s3 + $0x134] sm:$0xf]
    %v6160 = vld [vmem:[%s3 + $0x138] sm:$0xff]
    %v6161 = vld [vmem:[%s3 + $0x140] sm:$0xf]
    %v6162 = vld [vmem:[%s3 + $0x144] sm:$0xff]
    %v6163 = vld [vmem:[%s3 + $0x14c] sm:$0xf]
    %v6164 = vld [vmem:[%s3 + $0x150] sm:$0xff]
    %v6165 = vld [vmem:[%s3 + $0x158] sm:$0xf]
    %v6166 = vld [vmem:[%s3 + $0x15c] sm:$0xff]
    %v6167 = vld [vmem:[%s3 + $0x164] sm:$0xf]
    %v6168 = vld [vmem:[%s3 + $0x168] sm:$0xff]
    %v6169 = vld [vmem:[%s3 + $0x170] sm:$0xf]
    %v6170 = vld [vmem:[%s3 + $0x174] sm:$0xff]
    %v6171 = vld [vmem:[%s3 + $0x17c] sm:$0xf]
    %v6172 = vld [vmem:[%s3 + $0x180] sm:$0xff]
    %v6173 = vld [vmem:[%s3 + $0x188] sm:$0xf]
    %v6174 = vld [vmem:[%s3 + $0x18c] sm:$0xff]
    %v6175 = vld [vmem:[%s3 + $0x194] sm:$0xf]
    %v6176 = vld [vmem:[%s3 + $0x198] sm:$0xff]
    %v6177 = vld [vmem:[%s3 + $0x1a0] sm:$0xf]
    %v6178 = vld [vmem:[%s3 + $0x1a4] sm:$0xff]
    %v6179 = vld [vmem:[%s3 + $0x1ac] sm:$0xf]
    %v6180 = vld [vmem:[%s3 + $0x1b0] sm:$0xff]
    %v6181 = vld [vmem:[%s3 + $0x1b8] sm:$0xf]
    %v6182 = vld [vmem:[%s3 + $0x1bc] sm:$0xff]
    %v6183 = vld [vmem:[%s3 + $0x1c4] sm:$0xf]
    %v6184 = vld [vmem:[%s3 + $0x1c8] sm:$0xff]
    %v6185 = vld [vmem:[%s3 + $0x1d0] sm:$0xf]
    %v6186 = vld [vmem:[%s3 + $0x1d4] sm:$0xff]
    %v6187 = vld [vmem:[%s3 + $0x1dc] sm:$0xf]
    %v6268 = vunpack.c.l.b16 %v6108
    %v6269 = vunpack.c.h.b16 %v6108
    %v6270 = vunpack.c.l.b16 %v6109
    %v6271 = vunpack.c.l.b16 %v6110
    %v6272 = vunpack.c.h.b16 %v6110
    %v6273 = vunpack.c.l.b16 %v6111
    %v6274 = vunpack.c.l.b16 %v6112
    %v6275 = vunpack.c.h.b16 %v6112
    %v6276 = vunpack.c.l.b16 %v6113
    %v6277 = vunpack.c.l.b16 %v6114
    %v6278 = vunpack.c.h.b16 %v6114
    %v6279 = vunpack.c.l.b16 %v6115
    %v6280 = vunpack.c.l.b16 %v6116
    %v6281 = vunpack.c.h.b16 %v6116
    %v6282 = vunpack.c.l.b16 %v6117
    %v6283 = vunpack.c.l.b16 %v6118
    %v6284 = vunpack.c.h.b16 %v6118
    %v6285 = vunpack.c.l.b16 %v6119
    %v6286 = vunpack.c.l.b16 %v6120
    %v6287 = vunpack.c.h.b16 %v6120
    %v6288 = vunpack.c.l.b16 %v6121
    %v6289 = vunpack.c.l.b16 %v6122
    %v6290 = vunpack.c.h.b16 %v6122
    %v6291 = vunpack.c.l.b16 %v6123
    %v6292 = vunpack.c.l.b16 %v6124
    %v6293 = vunpack.c.h.b16 %v6124
    %v6294 = vunpack.c.l.b16 %v6125
    %v6295 = vunpack.c.l.b16 %v6126
    %v6296 = vunpack.c.h.b16 %v6126
    %v6297 = vunpack.c.l.b16 %v6127
    %v6298 = vunpack.c.l.b16 %v6128
    %v6299 = vunpack.c.h.b16 %v6128
    %v6300 = vunpack.c.l.b16 %v6129
    %v6301 = vunpack.c.l.b16 %v6130
    %v6302 = vunpack.c.h.b16 %v6130
    %v6303 = vunpack.c.l.b16 %v6131
    %v6304 = vunpack.c.l.b16 %v6132
    %v6305 = vunpack.c.h.b16 %v6132
    %v6306 = vunpack.c.l.b16 %v6133
    %v6307 = vunpack.c.l.b16 %v6134
    %v6308 = vunpack.c.h.b16 %v6134
    %v6309 = vunpack.c.l.b16 %v6135
    %v6310 = vunpack.c.l.b16 %v6136
    %v6311 = vunpack.c.h.b16 %v6136
    %v6312 = vunpack.c.l.b16 %v6137
    %v6313 = vunpack.c.l.b16 %v6138
    %v6314 = vunpack.c.h.b16 %v6138
    %v6315 = vunpack.c.l.b16 %v6139
    %v6316 = vunpack.c.l.b16 %v6140
    %v6317 = vunpack.c.h.b16 %v6140
    %v6318 = vunpack.c.l.b16 %v6141
    %v6319 = vunpack.c.l.b16 %v6142
    %v6320 = vunpack.c.h.b16 %v6142
    %v6321 = vunpack.c.l.b16 %v6143
    %v6322 = vunpack.c.l.b16 %v6144
    %v6323 = vunpack.c.h.b16 %v6144
    %v6324 = vunpack.c.l.b16 %v6145
    %v6325 = vunpack.c.l.b16 %v6146
    %v6326 = vunpack.c.h.b16 %v6146
    %v6327 = vunpack.c.l.b16 %v6147
    %v6328 = vunpack.c.l.b16 %v6148
    %v6329 = vunpack.c.h.b16 %v6148
    %v6330 = vunpack.c.l.b16 %v6149
    %v6331 = vunpack.c.l.b16 %v6150
    %v6332 = vunpack.c.h.b16 %v6150
    %v6333 = vunpack.c.l.b16 %v6151
    %v6334 = vunpack.c.l.b16 %v6152
    %v6335 = vunpack.c.h.b16 %v6152
    %v6336 = vunpack.c.l.b16 %v6153
    %v6337 = vunpack.c.l.b16 %v6154
    %v6338 = vunpack.c.h.b16 %v6154
    %v6339 = vunpack.c.l.b16 %v6155
    %v6340 = vunpack.c.l.b16 %v6156
    %v6341 = vunpack.c.h.b16 %v6156
    %v6342 = vunpack.c.l.b16 %v6157
    %v6343 = vunpack.c.l.b16 %v6158
    %v6344 = vunpack.c.h.b16 %v6158
    %v6345 = vunpack.c.l.b16 %v6159
    %v6346 = vunpack.c.l.b16 %v6160
    %v6347 = vunpack.c.h.b16 %v6160
    %v6348 = vunpack.c.l.b16 %v6161
    %v6349 = vunpack.c.l.b16 %v6162
    %v6350 = vunpack.c.h.b16 %v6162
    %v6351 = vunpack.c.l.b16 %v6163
    %v6352 = vunpack.c.l.b16 %v6164
    %v6353 = vunpack.c.h.b16 %v6164
    %v6354 = vunpack.c.l.b16 %v6165
    %v6355 = vunpack.c.l.b16 %v6166
    %v6356 = vunpack.c.h.b16 %v6166
    %v6357 = vunpack.c.l.b16 %v6167
    %v6358 = vunpack.c.l.b16 %v6168
    %v6359 = vunpack.c.h.b16 %v6168
    %v6360 = vunpack.c.l.b16 %v6169
    %v6361 = vunpack.c.l.b16 %v6170
    %v6362 = vunpack.c.h.b16 %v6170
    %v6363 = vunpack.c.l.b16 %v6171
    %v6364 = vunpack.c.l.b16 %v6172
    %v6365 = vunpack.c.h.b16 %v6172
    %v6366 = vunpack.c.l.b16 %v6173
    %v6367 = vunpack.c.l.b16 %v6174
    %v6368 = vunpack.c.h.b16 %v6174
    %v6369 = vunpack.c.l.b16 %v6175
    %v6370 = vunpack.c.l.b16 %v6176
    %v6371 = vunpack.c.h.b16 %v6176
    %v6372 = vunpack.c.l.b16 %v6177
    %v6373 = vunpack.c.l.b16 %v6178
    %v6374 = vunpack.c.h.b16 %v6178
    %v6375 = vunpack.c.l.b16 %v6179
    %v6376 = vunpack.c.l.b16 %v6180
    %v6377 = vunpack.c.h.b16 %v6180
    %v6378 = vunpack.c.l.b16 %v6181
    %v6379 = vunpack.c.l.b16 %v6182
    %v6380 = vunpack.c.h.b16 %v6182
    %v6381 = vunpack.c.l.b16 %v6183
    %v6382 = vunpack.c.l.b16 %v6184
    %v6383 = vunpack.c.h.b16 %v6184
    %v6384 = vunpack.c.l.b16 %v6185
    %v6385 = vunpack.c.l.b16 %v6186
    %v6386 = vunpack.c.h.b16 %v6186
    %v6387 = vunpack.c.l.b16 %v6187
    %v6388 = vpack.c.b16 %v6271, %v6268
    %v6389 = vpack.c.b16 %v6272, %v6269
    %v6390 = vpack.c.b16 %v6273, %v6270
    %v6391 = vpack.c.b16 %v6277, %v6274
    %v6392 = vpack.c.b16 %v6278, %v6275
    %v6393 = vpack.c.b16 %v6279, %v6276
    %v6394 = vpack.c.b16 %v6283, %v6280
    %v6395 = vpack.c.b16 %v6284, %v6281
    %v6396 = vpack.c.b16 %v6285, %v6282
    %v6397 = vpack.c.b16 %v6289, %v6286
    %v6398 = vpack.c.b16 %v6290, %v6287
    %v6399 = vpack.c.b16 %v6291, %v6288
    %v6400 = vpack.c.b16 %v6295, %v6292
    %v6401 = vpack.c.b16 %v6296, %v6293
    %v6402 = vpack.c.b16 %v6297, %v6294
    %v6403 = vpack.c.b16 %v6301, %v6298
    %v6404 = vpack.c.b16 %v6302, %v6299
    %v6405 = vpack.c.b16 %v6303, %v6300
    %v6406 = vpack.c.b16 %v6307, %v6304
    %v6407 = vpack.c.b16 %v6308, %v6305
    %v6408 = vpack.c.b16 %v6309, %v6306
    %v6409 = vpack.c.b16 %v6313, %v6310
    %v6410 = vpack.c.b16 %v6314, %v6311
    %v6411 = vpack.c.b16 %v6315, %v6312
    %v6412 = vpack.c.b16 %v6319, %v6316
    %v6413 = vpack.c.b16 %v6320, %v6317
    %v6414 = vpack.c.b16 %v6321, %v6318
    %v6415 = vpack.c.b16 %v6325, %v6322
    %v6416 = vpack.c.b16 %v6326, %v6323
    %v6417 = vpack.c.b16 %v6327, %v6324
    %v6418 = vpack.c.b16 %v6331, %v6328
    %v6419 = vpack.c.b16 %v6332, %v6329
    %v6420 = vpack.c.b16 %v6333, %v6330
    %v6421 = vpack.c.b16 %v6337, %v6334
    %v6422 = vpack.c.b16 %v6338, %v6335
    %v6423 = vpack.c.b16 %v6339, %v6336
    %v6424 = vpack.c.b16 %v6343, %v6340
    %v6425 = vpack.c.b16 %v6344, %v6341
    %v6426 = vpack.c.b16 %v6345, %v6342
    %v6427 = vpack.c.b16 %v6349, %v6346
    %v6428 = vpack.c.b16 %v6350, %v6347
    %v6429 = vpack.c.b16 %v6351, %v6348
    %v6430 = vpack.c.b16 %v6355, %v6352
    %v6431 = vpack.c.b16 %v6356, %v6353
    %v6432 = vpack.c.b16 %v6357, %v6354
    %v6433 = vpack.c.b16 %v6361, %v6358
    %v6434 = vpack.c.b16 %v6362, %v6359
    %v6435 = vpack.c.b16 %v6363, %v6360
    %v6436 = vpack.c.b16 %v6367, %v6364
    %v6437 = vpack.c.b16 %v6368, %v6365
    %v6438 = vpack.c.b16 %v6369, %v6366
    %v6439 = vpack.c.b16 %v6373, %v6370
    %v6440 = vpack.c.b16 %v6374, %v6371
    %v6441 = vpack.c.b16 %v6375, %v6372
    %v6442 = vpack.c.b16 %v6379, %v6376
    %v6443 = vpack.c.b16 %v6380, %v6377
    %v6444 = vpack.c.b16 %v6381, %v6378
    %v6445 = vpack.c.b16 %v6385, %v6382
    %v6446 = vpack.c.b16 %v6386, %v6383
    %v6447 = vpack.c.b16 %v6387, %v6384
    %v6509 = vsel %vm2183, %v5452, 0
    %v6512 = vsel %vm2183, %v5455, 0
    %6514 = vmatpush.bf16.msra.mxu0 %v6409
    %6515 = vmatpush.bf16.msra.mxu0 %v6406
    %6516 = vmatpush.bf16.msra.mxu0 %v6403
    %6517 = vmatpush.bf16.msra.mxu0 %v6400
    %6518 = vmatpush.bf16.msra.mxu0 %v6397
    %6519 = vmatpush.bf16.msra.mxu0 %v6394
    %6520 = vmatpush.bf16.msra.mxu0 %v6391
    %6521 = vmatpush.bf16.msra.mxu0 %v6388
    %6522 = vmatmul.bf16.gmra.mxu0 %v5450
    %v6523 = vpop.f32.mrf.mxu0
    %v6524 = vadd.f32 0.0, %v6523
    %v6525 = vpop.f32.mrf.mxu0
    %v6526 = vadd.f32 0.0, %v6525
    %6527 = vmatmul.bf16.gmra.mxu0 %v5453
    %v6528 = vpop.f32.mrf.mxu0
    %v6529 = vadd.f32 0.0, %v6528
    %v6530 = vpop.f32.mrf.mxu0
    %6531 = vdwg.mxu0
    %6532 = vmatpush.bf16.msra.mxu0 %v6433
    %6533 = vmatpush.bf16.msra.mxu0 %v6430
    %6534 = vmatpush.bf16.msra.mxu0 %v6427
    %6535 = vmatpush.bf16.msra.mxu0 %v6424
    %6536 = vmatpush.bf16.msra.mxu0 %v6421
    %6537 = vmatpush.bf16.msra.mxu0 %v6418
    %6538 = vmatpush.bf16.msra.mxu0 %v6415
    %6539 = vmatpush.bf16.msra.mxu0 %v6412
    %6540 = vmatmul.bf16.gmra.mxu0 %v5451
    %v6541 = vpop.f32.mrf.mxu0
    %v6542 = vadd.f32 %v6524, %v6541
    %v6543 = vpop.f32.mrf.mxu0
    %v6544 = vadd.f32 %v6526, %v6543
    %6545 = vmatmul.bf16.gmra.mxu0 %v5454
    %v6546 = vpop.f32.mrf.mxu0
    %v6547 = vadd.f32 %v6529, %v6546
    %v6548 = vpop.f32.mrf.mxu0
    %6549 = vdwg.mxu0
    %6550 = vmatpush.bf16.msra.mxu0 0
    %6551 = vmatpush.bf16.msra.mxu0 0
    %6552 = vmatpush.bf16.msra.mxu0 0
    %6553 = vmatpush.bf16.msra.mxu0 0
    %6554 = vmatpush.bf16.msra.mxu0 %v6445
    %6555 = vmatpush.bf16.msra.mxu0 %v6442
    %6556 = vmatpush.bf16.msra.mxu0 %v6439
    %6557 = vmatpush.bf16.msra.mxu0 %v6436
    %6558 = vmatmul.bf16.gmra.mxu0 %v6509
    %v6559 = vpop.f32.mrf.mxu0
    %v6560 = vadd.f32 %v6542, %v6559
    %v6561 = vpop.f32.mrf.mxu0
    %v6562 = vadd.f32 %v6544, %v6561
    %6563 = vmatmul.bf16.gmra.mxu0 %v6512
    %v6564 = vpop.f32.mrf.mxu0
    %v6565 = vadd.f32 %v6547, %v6564
    %v6566 = vpop.f32.mrf.mxu0
    %6567 = vdwg.mxu0
    %6568 = vmatpush.bf16.msra.mxu0 %v6410
    %6569 = vmatpush.bf16.msra.mxu0 %v6407
    %6570 = vmatpush.bf16.msra.mxu0 %v6404
    %6571 = vmatpush.bf16.msra.mxu0 %v6401
    %6572 = vmatpush.bf16.msra.mxu0 %v6398
    %6573 = vmatpush.bf16.msra.mxu0 %v6395
    %6574 = vmatpush.bf16.msra.mxu0 %v6392
    %6575 = vmatpush.bf16.msra.mxu0 %v6389
    %6576 = vmatmul.bf16.gmra.mxu0 %v5450
    %v6577 = vpop.f32.mrf.mxu0
    %v6578 = vadd.f32 0.0, %v6577
    %v6579 = vpop.f32.mrf.mxu0
    %v6580 = vadd.f32 0.0, %v6579
    %6581 = vmatmul.bf16.gmra.mxu0 %v5453
    %v6582 = vpop.f32.mrf.mxu0
    %v6583 = vadd.f32 0.0, %v6582
    %v6584 = vpop.f32.mrf.mxu0
    %6585 = vdwg.mxu0
    %6586 = vmatpush.bf16.msra.mxu0 %v6434
    %6587 = vmatpush.bf16.msra.mxu0 %v6431
    %6588 = vmatpush.bf16.msra.mxu0 %v6428
    %6589 = vmatpush.bf16.msra.mxu0 %v6425
    %6590 = vmatpush.bf16.msra.mxu0 %v6422
    %6591 = vmatpush.bf16.msra.mxu0 %v6419
    %6592 = vmatpush.bf16.msra.mxu0 %v6416
    %6593 = vmatpush.bf16.msra.mxu0 %v6413
    %6594 = vmatmul.bf16.gmra.mxu0 %v5451
    %v6595 = vpop.f32.mrf.mxu0
    %v6596 = vadd.f32 %v6578, %v6595
    %v6597 = vpop.f32.mrf.mxu0
    %v6598 = vadd.f32 %v6580, %v6597
    %6599 = vmatmul.bf16.gmra.mxu0 %v5454
    %v6600 = vpop.f32.mrf.mxu0
    %v6601 = vadd.f32 %v6583, %v6600
    %v6602 = vpop.f32.mrf.mxu0
    %6603 = vdwg.mxu0
    %6604 = vmatpush.bf16.msra.mxu0 0
    %6605 = vmatpush.bf16.msra.mxu0 0
    %6606 = vmatpush.bf16.msra.mxu0 0
    %6607 = vmatpush.bf16.msra.mxu0 0
    %6608 = vmatpush.bf16.msra.mxu0 %v6446
    %6609 = vmatpush.bf16.msra.mxu0 %v6443
    %6610 = vmatpush.bf16.msra.mxu0 %v6440
    %6611 = vmatpush.bf16.msra.mxu0 %v6437
    %6612 = vmatmul.bf16.gmra.mxu0 %v6509
    %v6613 = vpop.f32.mrf.mxu0
    %v6614 = vadd.f32 %v6596, %v6613
    %v6615 = vpop.f32.mrf.mxu0
    %v6616 = vadd.f32 %v6598, %v6615
    %6617 = vmatmul.bf16.gmra.mxu0 %v6512
    %v6618 = vpop.f32.mrf.mxu0
    %v6619 = vadd.f32 %v6601, %v6618
    %v6620 = vpop.f32.mrf.mxu0
    %6621 = vdwg.mxu0
    %6622 = vmatpush.bf16.msra.mxu0 %v6411
    %6623 = vmatpush.bf16.msra.mxu0 %v6408
    %6624 = vmatpush.bf16.msra.mxu0 %v6405
    %6625 = vmatpush.bf16.msra.mxu0 %v6402
    %6626 = vmatpush.bf16.msra.mxu0 %v6399
    %6627 = vmatpush.bf16.msra.mxu0 %v6396
    %6628 = vmatpush.bf16.msra.mxu0 %v6393
    %6629 = vmatpush.bf16.msra.mxu0 %v6390
    %6630 = vmatmul.bf16.gmra.mxu0 %v5450
    %v6631 = vpop.f32.mrf.mxu0
    %v6632 = vadd.f32 0.0, %v6631
    %v6633 = vpop.f32.mrf.mxu0
    %v6634 = vadd.f32 0.0, %v6633
    %6635 = vmatmul.bf16.gmra.mxu0 %v5453
    %v6636 = vpop.f32.mrf.mxu0
    %v6637 = vadd.f32 0.0, %v6636
    %v6638 = vpop.f32.mrf.mxu0
    %6639 = vdwg.mxu0
    %6640 = vmatpush.bf16.msra.mxu0 %v6435
    %6641 = vmatpush.bf16.msra.mxu0 %v6432
    %6642 = vmatpush.bf16.msra.mxu0 %v6429
    %6643 = vmatpush.bf16.msra.mxu0 %v6426
    %6644 = vmatpush.bf16.msra.mxu0 %v6423
    %6645 = vmatpush.bf16.msra.mxu0 %v6420
    %6646 = vmatpush.bf16.msra.mxu0 %v6417
    %6647 = vmatpush.bf16.msra.mxu0 %v6414
    %6648 = vmatmul.bf16.gmra.mxu0 %v5451
    %v6649 = vpop.f32.mrf.mxu0
    %v6650 = vadd.f32 %v6632, %v6649
    %v6651 = vpop.f32.mrf.mxu0
    %v6652 = vadd.f32 %v6634, %v6651
    %6653 = vmatmul.bf16.gmra.mxu0 %v5454
    %v6654 = vpop.f32.mrf.mxu0
    %v6655 = vadd.f32 %v6637, %v6654
    %v6656 = vpop.f32.mrf.mxu0
    %6657 = vdwg.mxu0
    %6658 = vmatpush.bf16.msra.mxu0 0
    %6659 = vmatpush.bf16.msra.mxu0 0
    %6660 = vmatpush.bf16.msra.mxu0 0
    %6661 = vmatpush.bf16.msra.mxu0 0
    %6662 = vmatpush.bf16.msra.mxu0 %v6447
    %6663 = vmatpush.bf16.msra.mxu0 %v6444
    %6664 = vmatpush.bf16.msra.mxu0 %v6441
    %6665 = vmatpush.bf16.msra.mxu0 %v6438
    %6666 = vmatmul.bf16.gmra.mxu0 %v6509
    %v6667 = vpop.f32.mrf.mxu0
    %v6668 = vadd.f32 %v6650, %v6667
    %v6669 = vpop.f32.mrf.mxu0
    %v6670 = vadd.f32 %v6652, %v6669
    %6671 = vmatmul.bf16.gmra.mxu0 %v6512
    %v6672 = vpop.f32.mrf.mxu0
    %v6673 = vadd.f32 %v6655, %v6672
    %v6674 = vpop.f32.mrf.mxu0
    %6675 = vdwg.mxu0
    %s6676 = scalar_lea.vmem %s3, 480
    %v6677 = vld [vmem:[%s6676] sm:$0xff]
    %v6678 = vld [vmem:[%s6676 + $0x8] sm:$0xf]
    %v6679 = vld [vmem:[%s6676 + $0xc] sm:$0xff]
    %v6680 = vld [vmem:[%s6676 + $0x14] sm:$0xf]
    %v6681 = vld [vmem:[%s6676 + $0x18] sm:$0xff]
    %v6682 = vld [vmem:[%s6676 + $0x20] sm:$0xf]
    %v6683 = vld [vmem:[%s6676 + $0x24] sm:$0xff]
    %v6684 = vld [vmem:[%s6676 + $0x2c] sm:$0xf]
    %v6685 = vld [vmem:[%s6676 + $0x30] sm:$0xff]
    %v6686 = vld [vmem:[%s6676 + $0x38] sm:$0xf]
    %v6687 = vld [vmem:[%s6676 + $0x3c] sm:$0xff]
    %v6688 = vld [vmem:[%s6676 + $0x44] sm:$0xf]
    %v6689 = vld [vmem:[%s6676 + $0x48] sm:$0xff]
    %v6690 = vld [vmem:[%s6676 + $0x50] sm:$0xf]
    %v6691 = vld [vmem:[%s6676 + $0x54] sm:$0xff]
    %v6692 = vld [vmem:[%s6676 + $0x5c] sm:$0xf]
    %v6693 = vld [vmem:[%s6676 + $0x60] sm:$0xff]
    %v6694 = vld [vmem:[%s6676 + $0x68] sm:$0xf]
    %v6695 = vld [vmem:[%s6676 + $0x6c] sm:$0xff]
    %v6696 = vld [vmem:[%s6676 + $0x74] sm:$0xf]
    %v6697 = vld [vmem:[%s6676 + $0x78] sm:$0xff]
    %v6698 = vld [vmem:[%s6676 + $0x80] sm:$0xf]
    %v6699 = vld [vmem:[%s6676 + $0x84] sm:$0xff]
    %v6700 = vld [vmem:[%s6676 + $0x8c] sm:$0xf]
    %v6701 = vld [vmem:[%s6676 + $0x90] sm:$0xff]
    %v6702 = vld [vmem:[%s6676 + $0x98] sm:$0xf]
    %v6703 = vld [vmem:[%s6676 + $0x9c] sm:$0xff]
    %v6704 = vld [vmem:[%s6676 + $0xa4] sm:$0xf]
    %v6705 = vld [vmem:[%s6676 + $0xa8] sm:$0xff]
    %v6706 = vld [vmem:[%s6676 + $0xb0] sm:$0xf]
    %v6707 = vld [vmem:[%s6676 + $0xb4] sm:$0xff]
    %v6708 = vld [vmem:[%s6676 + $0xbc] sm:$0xf]
    %v6709 = vld [vmem:[%s6676 + $0xc0] sm:$0xff]
    %v6710 = vld [vmem:[%s6676 + $0xc8] sm:$0xf]
    %v6711 = vld [vmem:[%s6676 + $0xcc] sm:$0xff]
    %v6712 = vld [vmem:[%s6676 + $0xd4] sm:$0xf]
    %v6713 = vld [vmem:[%s6676 + $0xd8] sm:$0xff]
    %v6714 = vld [vmem:[%s6676 + $0xe0] sm:$0xf]
    %v6715 = vld [vmem:[%s6676 + $0xe4] sm:$0xff]
    %v6716 = vld [vmem:[%s6676 + $0xec] sm:$0xf]
    %v6717 = vld [vmem:[%s6676 + $0xf0] sm:$0xff]
    %v6718 = vld [vmem:[%s6676 + $0xf8] sm:$0xf]
    %v6719 = vld [vmem:[%s6676 + $0xfc] sm:$0xff]
    %v6720 = vld [vmem:[%s6676 + $0x104] sm:$0xf]
    %v6721 = vld [vmem:[%s6676 + $0x108] sm:$0xff]
    %v6722 = vld [vmem:[%s6676 + $0x110] sm:$0xf]
    %v6723 = vld [vmem:[%s6676 + $0x114] sm:$0xff]
    %v6724 = vld [vmem:[%s6676 + $0x11c] sm:$0xf]
    %v6725 = vld [vmem:[%s6676 + $0x120] sm:$0xff]
    %v6726 = vld [vmem:[%s6676 + $0x128] sm:$0xf]
    %v6727 = vld [vmem:[%s6676 + $0x12c] sm:$0xff]
    %v6728 = vld [vmem:[%s6676 + $0x134] sm:$0xf]
    %v6729 = vld [vmem:[%s6676 + $0x138] sm:$0xff]
    %v6730 = vld [vmem:[%s6676 + $0x140] sm:$0xf]
    %v6731 = vld [vmem:[%s6676 + $0x144] sm:$0xff]
    %v6732 = vld [vmem:[%s6676 + $0x14c] sm:$0xf]
    %v6733 = vld [vmem:[%s6676 + $0x150] sm:$0xff]
    %v6734 = vld [vmem:[%s6676 + $0x158] sm:$0xf]
    %v6735 = vld [vmem:[%s6676 + $0x15c] sm:$0xff]
    %v6736 = vld [vmem:[%s6676 + $0x164] sm:$0xf]
    %v6737 = vld [vmem:[%s6676 + $0x168] sm:$0xff]
    %v6738 = vld [vmem:[%s6676 + $0x170] sm:$0xf]
    %v6739 = vld [vmem:[%s6676 + $0x174] sm:$0xff]
    %v6740 = vld [vmem:[%s6676 + $0x17c] sm:$0xf]
    %v6741 = vld [vmem:[%s6676 + $0x180] sm:$0xff]
    %v6742 = vld [vmem:[%s6676 + $0x188] sm:$0xf]
    %v6743 = vld [vmem:[%s6676 + $0x18c] sm:$0xff]
    %v6744 = vld [vmem:[%s6676 + $0x194] sm:$0xf]
    %v6745 = vld [vmem:[%s6676 + $0x198] sm:$0xff]
    %v6746 = vld [vmem:[%s6676 + $0x1a0] sm:$0xf]
    %v6747 = vld [vmem:[%s6676 + $0x1a4] sm:$0xff]
    %v6748 = vld [vmem:[%s6676 + $0x1ac] sm:$0xf]
    %v6749 = vld [vmem:[%s6676 + $0x1b0] sm:$0xff]
    %v6750 = vld [vmem:[%s6676 + $0x1b8] sm:$0xf]
    %v6751 = vld [vmem:[%s6676 + $0x1bc] sm:$0xff]
    %v6752 = vld [vmem:[%s6676 + $0x1c4] sm:$0xf]
    %v6753 = vld [vmem:[%s6676 + $0x1c8] sm:$0xff]
    %v6754 = vld [vmem:[%s6676 + $0x1d0] sm:$0xf]
    %v6755 = vld [vmem:[%s6676 + $0x1d4] sm:$0xff]
    %v6756 = vld [vmem:[%s6676 + $0x1dc] sm:$0xf]
    %v6837 = vunpack.c.l.b16 %v6677
    %v6838 = vunpack.c.h.b16 %v6677
    %v6839 = vunpack.c.l.b16 %v6678
    %v6840 = vunpack.c.l.b16 %v6679
    %v6841 = vunpack.c.h.b16 %v6679
    %v6842 = vunpack.c.l.b16 %v6680
    %v6843 = vunpack.c.l.b16 %v6681
    %v6844 = vunpack.c.h.b16 %v6681
    %v6845 = vunpack.c.l.b16 %v6682
    %v6846 = vunpack.c.l.b16 %v6683
    %v6847 = vunpack.c.h.b16 %v6683
    %v6848 = vunpack.c.l.b16 %v6684
    %v6849 = vunpack.c.l.b16 %v6685
    %v6850 = vunpack.c.h.b16 %v6685
    %v6851 = vunpack.c.l.b16 %v6686
    %v6852 = vunpack.c.l.b16 %v6687
    %v6853 = vunpack.c.h.b16 %v6687
    %v6854 = vunpack.c.l.b16 %v6688
    %v6855 = vunpack.c.l.b16 %v6689
    %v6856 = vunpack.c.h.b16 %v6689
    %v6857 = vunpack.c.l.b16 %v6690
    %v6858 = vunpack.c.l.b16 %v6691
    %v6859 = vunpack.c.h.b16 %v6691
    %v6860 = vunpack.c.l.b16 %v6692
    %v6861 = vunpack.c.l.b16 %v6693
    %v6862 = vunpack.c.h.b16 %v6693
    %v6863 = vunpack.c.l.b16 %v6694
    %v6864 = vunpack.c.l.b16 %v6695
    %v6865 = vunpack.c.h.b16 %v6695
    %v6866 = vunpack.c.l.b16 %v6696
    %v6867 = vunpack.c.l.b16 %v6697
    %v6868 = vunpack.c.h.b16 %v6697
    %v6869 = vunpack.c.l.b16 %v6698
    %v6870 = vunpack.c.l.b16 %v6699
    %v6871 = vunpack.c.h.b16 %v6699
    %v6872 = vunpack.c.l.b16 %v6700
    %v6873 = vunpack.c.l.b16 %v6701
    %v6874 = vunpack.c.h.b16 %v6701
    %v6875 = vunpack.c.l.b16 %v6702
    %v6876 = vunpack.c.l.b16 %v6703
    %v6877 = vunpack.c.h.b16 %v6703
    %v6878 = vunpack.c.l.b16 %v6704
    %v6879 = vunpack.c.l.b16 %v6705
    %v6880 = vunpack.c.h.b16 %v6705
    %v6881 = vunpack.c.l.b16 %v6706
    %v6882 = vunpack.c.l.b16 %v6707
    %v6883 = vunpack.c.h.b16 %v6707
    %v6884 = vunpack.c.l.b16 %v6708
    %v6885 = vunpack.c.l.b16 %v6709
    %v6886 = vunpack.c.h.b16 %v6709
    %v6887 = vunpack.c.l.b16 %v6710
    %v6888 = vunpack.c.l.b16 %v6711
    %v6889 = vunpack.c.h.b16 %v6711
    %v6890 = vunpack.c.l.b16 %v6712
    %v6891 = vunpack.c.l.b16 %v6713
    %v6892 = vunpack.c.h.b16 %v6713
    %v6893 = vunpack.c.l.b16 %v6714
    %v6894 = vunpack.c.l.b16 %v6715
    %v6895 = vunpack.c.h.b16 %v6715
    %v6896 = vunpack.c.l.b16 %v6716
    %v6897 = vunpack.c.l.b16 %v6717
    %v6898 = vunpack.c.h.b16 %v6717
    %v6899 = vunpack.c.l.b16 %v6718
    %v6900 = vunpack.c.l.b16 %v6719
    %v6901 = vunpack.c.h.b16 %v6719
    %v6902 = vunpack.c.l.b16 %v6720
    %v6903 = vunpack.c.l.b16 %v6721
    %v6904 = vunpack.c.h.b16 %v6721
    %v6905 = vunpack.c.l.b16 %v6722
    %v6906 = vunpack.c.l.b16 %v6723
    %v6907 = vunpack.c.h.b16 %v6723
    %v6908 = vunpack.c.l.b16 %v6724
    %v6909 = vunpack.c.l.b16 %v6725
    %v6910 = vunpack.c.h.b16 %v6725
    %v6911 = vunpack.c.l.b16 %v6726
    %v6912 = vunpack.c.l.b16 %v6727
    %v6913 = vunpack.c.h.b16 %v6727
    %v6914 = vunpack.c.l.b16 %v6728
    %v6915 = vunpack.c.l.b16 %v6729
    %v6916 = vunpack.c.h.b16 %v6729
    %v6917 = vunpack.c.l.b16 %v6730
    %v6918 = vunpack.c.l.b16 %v6731
    %v6919 = vunpack.c.h.b16 %v6731
    %v6920 = vunpack.c.l.b16 %v6732
    %v6921 = vunpack.c.l.b16 %v6733
    %v6922 = vunpack.c.h.b16 %v6733
    %v6923 = vunpack.c.l.b16 %v6734
    %v6924 = vunpack.c.l.b16 %v6735
    %v6925 = vunpack.c.h.b16 %v6735
    %v6926 = vunpack.c.l.b16 %v6736
    %v6927 = vunpack.c.l.b16 %v6737
    %v6928 = vunpack.c.h.b16 %v6737
    %v6929 = vunpack.c.l.b16 %v6738
    %v6930 = vunpack.c.l.b16 %v6739
    %v6931 = vunpack.c.h.b16 %v6739
    %v6932 = vunpack.c.l.b16 %v6740
    %v6933 = vunpack.c.l.b16 %v6741
    %v6934 = vunpack.c.h.b16 %v6741
    %v6935 = vunpack.c.l.b16 %v6742
    %v6936 = vunpack.c.l.b16 %v6743
    %v6937 = vunpack.c.h.b16 %v6743
    %v6938 = vunpack.c.l.b16 %v6744
    %v6939 = vunpack.c.l.b16 %v6745
    %v6940 = vunpack.c.h.b16 %v6745
    %v6941 = vunpack.c.l.b16 %v6746
    %v6942 = vunpack.c.l.b16 %v6747
    %v6943 = vunpack.c.h.b16 %v6747
    %v6944 = vunpack.c.l.b16 %v6748
    %v6945 = vunpack.c.l.b16 %v6749
    %v6946 = vunpack.c.h.b16 %v6749
    %v6947 = vunpack.c.l.b16 %v6750
    %v6948 = vunpack.c.l.b16 %v6751
    %v6949 = vunpack.c.h.b16 %v6751
    %v6950 = vunpack.c.l.b16 %v6752
    %v6951 = vunpack.c.l.b16 %v6753
    %v6952 = vunpack.c.h.b16 %v6753
    %v6953 = vunpack.c.l.b16 %v6754
    %v6954 = vunpack.c.l.b16 %v6755
    %v6955 = vunpack.c.h.b16 %v6755
    %v6956 = vunpack.c.l.b16 %v6756
    %v6957 = vpack.c.b16 %v6840, %v6837
    %v6958 = vpack.c.b16 %v6841, %v6838
    %v6959 = vpack.c.b16 %v6842, %v6839
    %v6960 = vpack.c.b16 %v6846, %v6843
    %v6961 = vpack.c.b16 %v6847, %v6844
    %v6962 = vpack.c.b16 %v6848, %v6845
    %v6963 = vpack.c.b16 %v6852, %v6849
    %v6964 = vpack.c.b16 %v6853, %v6850
    %v6965 = vpack.c.b16 %v6854, %v6851
    %v6966 = vpack.c.b16 %v6858, %v6855
    %v6967 = vpack.c.b16 %v6859, %v6856
    %v6968 = vpack.c.b16 %v6860, %v6857
    %v6969 = vpack.c.b16 %v6864, %v6861
    %v6970 = vpack.c.b16 %v6865, %v6862
    %v6971 = vpack.c.b16 %v6866, %v6863
    %v6972 = vpack.c.b16 %v6870, %v6867
    %v6973 = vpack.c.b16 %v6871, %v6868
    %v6974 = vpack.c.b16 %v6872, %v6869
    %v6975 = vpack.c.b16 %v6876, %v6873
    %v6976 = vpack.c.b16 %v6877, %v6874
    %v6977 = vpack.c.b16 %v6878, %v6875
    %v6978 = vpack.c.b16 %v6882, %v6879
    %v6979 = vpack.c.b16 %v6883, %v6880
    %v6980 = vpack.c.b16 %v6884, %v6881
    %v6981 = vpack.c.b16 %v6888, %v6885
    %v6982 = vpack.c.b16 %v6889, %v6886
    %v6983 = vpack.c.b16 %v6890, %v6887
    %v6984 = vpack.c.b16 %v6894, %v6891
    %v6985 = vpack.c.b16 %v6895, %v6892
    %v6986 = vpack.c.b16 %v6896, %v6893
    %v6987 = vpack.c.b16 %v6900, %v6897
    %v6988 = vpack.c.b16 %v6901, %v6898
    %v6989 = vpack.c.b16 %v6902, %v6899
    %v6990 = vpack.c.b16 %v6906, %v6903
    %v6991 = vpack.c.b16 %v6907, %v6904
    %v6992 = vpack.c.b16 %v6908, %v6905
    %v6993 = vpack.c.b16 %v6912, %v6909
    %v6994 = vpack.c.b16 %v6913, %v6910
    %v6995 = vpack.c.b16 %v6914, %v6911
    %v6996 = vpack.c.b16 %v6918, %v6915
    %v6997 = vpack.c.b16 %v6919, %v6916
    %v6998 = vpack.c.b16 %v6920, %v6917
    %v6999 = vpack.c.b16 %v6924, %v6921
    %v7000 = vpack.c.b16 %v6925, %v6922
    %v7001 = vpack.c.b16 %v6926, %v6923
    %v7002 = vpack.c.b16 %v6930, %v6927
    %v7003 = vpack.c.b16 %v6931, %v6928
    %v7004 = vpack.c.b16 %v6932, %v6929
    %v7005 = vpack.c.b16 %v6936, %v6933
    %v7006 = vpack.c.b16 %v6937, %v6934
    %v7007 = vpack.c.b16 %v6938, %v6935
    %v7008 = vpack.c.b16 %v6942, %v6939
    %v7009 = vpack.c.b16 %v6943, %v6940
    %v7010 = vpack.c.b16 %v6944, %v6941
    %v7011 = vpack.c.b16 %v6948, %v6945
    %v7012 = vpack.c.b16 %v6949, %v6946
    %v7013 = vpack.c.b16 %v6950, %v6947
    %v7014 = vpack.c.b16 %v6954, %v6951
    %v7015 = vpack.c.b16 %v6955, %v6952
    %v7016 = vpack.c.b16 %v6956, %v6953
    %v7078 = vsel %vm2183, %v6104, 0
    %v7081 = vsel %vm2183, %v6107, 0
    %7083 = vmatpush.bf16.msra.mxu0 %v6978
    %7084 = vmatpush.bf16.msra.mxu0 %v6975
    %7085 = vmatpush.bf16.msra.mxu0 %v6972
    %7086 = vmatpush.bf16.msra.mxu0 %v6969
    %7087 = vmatpush.bf16.msra.mxu0 %v6966
    %7088 = vmatpush.bf16.msra.mxu0 %v6963
    %7089 = vmatpush.bf16.msra.mxu0 %v6960
    %7090 = vmatpush.bf16.msra.mxu0 %v6957
    %7091 = vmatmul.bf16.gmra.mxu0 %v6102
    %v7092 = vpop.f32.mrf.mxu0
    %v7093 = vadd.f32 0.0, %v7092
    %v7094 = vpop.f32.mrf.mxu0
    %v7095 = vadd.f32 0.0, %v7094
    %7096 = vmatmul.bf16.gmra.mxu0 %v6105
    %v7097 = vpop.f32.mrf.mxu0
    %v7098 = vadd.f32 0.0, %v7097
    %v7099 = vpop.f32.mrf.mxu0
    %7100 = vdwg.mxu0
    %7101 = vmatpush.bf16.msra.mxu0 %v7002
    %7102 = vmatpush.bf16.msra.mxu0 %v6999
    %7103 = vmatpush.bf16.msra.mxu0 %v6996
    %7104 = vmatpush.bf16.msra.mxu0 %v6993
    %7105 = vmatpush.bf16.msra.mxu0 %v6990
    %7106 = vmatpush.bf16.msra.mxu0 %v6987
    %7107 = vmatpush.bf16.msra.mxu0 %v6984
    %7108 = vmatpush.bf16.msra.mxu0 %v6981
    %7109 = vmatmul.bf16.gmra.mxu0 %v6103
    %v7110 = vpop.f32.mrf.mxu0
    %v7111 = vadd.f32 %v7093, %v7110
    %v7112 = vpop.f32.mrf.mxu0
    %v7113 = vadd.f32 %v7095, %v7112
    %7114 = vmatmul.bf16.gmra.mxu0 %v6106
    %v7115 = vpop.f32.mrf.mxu0
    %v7116 = vadd.f32 %v7098, %v7115
    %v7117 = vpop.f32.mrf.mxu0
    %7118 = vdwg.mxu0
    %7119 = vmatpush.bf16.msra.mxu0 0
    %7120 = vmatpush.bf16.msra.mxu0 0
    %7121 = vmatpush.bf16.msra.mxu0 0
    %7122 = vmatpush.bf16.msra.mxu0 0
    %7123 = vmatpush.bf16.msra.mxu0 %v7014
    %7124 = vmatpush.bf16.msra.mxu0 %v7011
    %7125 = vmatpush.bf16.msra.mxu0 %v7008
    %7126 = vmatpush.bf16.msra.mxu0 %v7005
    %7127 = vmatmul.bf16.gmra.mxu0 %v7078
    %v7128 = vpop.f32.mrf.mxu0
    %v7129 = vadd.f32 %v7111, %v7128
    %v7130 = vpop.f32.mrf.mxu0
    %v7131 = vadd.f32 %v7113, %v7130
    %7132 = vmatmul.bf16.gmra.mxu0 %v7081
    %v7133 = vpop.f32.mrf.mxu0
    %v7134 = vadd.f32 %v7116, %v7133
    %v7135 = vpop.f32.mrf.mxu0
    %7136 = vdwg.mxu0
    %7137 = vmatpush.bf16.msra.mxu0 %v6979
    %7138 = vmatpush.bf16.msra.mxu0 %v6976
    %7139 = vmatpush.bf16.msra.mxu0 %v6973
    %7140 = vmatpush.bf16.msra.mxu0 %v6970
    %7141 = vmatpush.bf16.msra.mxu0 %v6967
    %7142 = vmatpush.bf16.msra.mxu0 %v6964
    %7143 = vmatpush.bf16.msra.mxu0 %v6961
    %7144 = vmatpush.bf16.msra.mxu0 %v6958
    %7145 = vmatmul.bf16.gmra.mxu0 %v6102
    %v7146 = vpop.f32.mrf.mxu0
    %v7147 = vadd.f32 0.0, %v7146
    %v7148 = vpop.f32.mrf.mxu0
    %v7149 = vadd.f32 0.0, %v7148
    %7150 = vmatmul.bf16.gmra.mxu0 %v6105
    %v7151 = vpop.f32.mrf.mxu0
    %v7152 = vadd.f32 0.0, %v7151
    %v7153 = vpop.f32.mrf.mxu0
    %7154 = vdwg.mxu0
    %7155 = vmatpush.bf16.msra.mxu0 %v7003
    %7156 = vmatpush.bf16.msra.mxu0 %v7000
    %7157 = vmatpush.bf16.msra.mxu0 %v6997
    %7158 = vmatpush.bf16.msra.mxu0 %v6994
    %7159 = vmatpush.bf16.msra.mxu0 %v6991
    %7160 = vmatpush.bf16.msra.mxu0 %v6988
    %7161 = vmatpush.bf16.msra.mxu0 %v6985
    %7162 = vmatpush.bf16.msra.mxu0 %v6982
    %7163 = vmatmul.bf16.gmra.mxu0 %v6103
    %v7164 = vpop.f32.mrf.mxu0
    %v7165 = vadd.f32 %v7147, %v7164
    %v7166 = vpop.f32.mrf.mxu0
    %v7167 = vadd.f32 %v7149, %v7166
    %7168 = vmatmul.bf16.gmra.mxu0 %v6106
    %v7169 = vpop.f32.mrf.mxu0
    %v7170 = vadd.f32 %v7152, %v7169
    %v7171 = vpop.f32.mrf.mxu0
    %7172 = vdwg.mxu0
    %7173 = vmatpush.bf16.msra.mxu0 0
    %7174 = vmatpush.bf16.msra.mxu0 0
    %7175 = vmatpush.bf16.msra.mxu0 0
    %7176 = vmatpush.bf16.msra.mxu0 0
    %7177 = vmatpush.bf16.msra.mxu0 %v7015
    %7178 = vmatpush.bf16.msra.mxu0 %v7012
    %7179 = vmatpush.bf16.msra.mxu0 %v7009
    %7180 = vmatpush.bf16.msra.mxu0 %v7006
    %7181 = vmatmul.bf16.gmra.mxu0 %v7078
    %v7182 = vpop.f32.mrf.mxu0
    %v7183 = vadd.f32 %v7165, %v7182
    %v7184 = vpop.f32.mrf.mxu0
    %v7185 = vadd.f32 %v7167, %v7184
    %7186 = vmatmul.bf16.gmra.mxu0 %v7081
    %v7187 = vpop.f32.mrf.mxu0
    %v7188 = vadd.f32 %v7170, %v7187
    %v7189 = vpop.f32.mrf.mxu0
    %7190 = vdwg.mxu0
    %7191 = vmatpush.bf16.msra.mxu0 %v6980
    %7192 = vmatpush.bf16.msra.mxu0 %v6977
    %7193 = vmatpush.bf16.msra.mxu0 %v6974
    %7194 = vmatpush.bf16.msra.mxu0 %v6971
    %7195 = vmatpush.bf16.msra.mxu0 %v6968
    %7196 = vmatpush.bf16.msra.mxu0 %v6965
    %7197 = vmatpush.bf16.msra.mxu0 %v6962
    %7198 = vmatpush.bf16.msra.mxu0 %v6959
    %7199 = vmatmul.bf16.gmra.mxu0 %v6102
    %v7200 = vpop.f32.mrf.mxu0
    %v7201 = vadd.f32 0.0, %v7200
    %v7202 = vpop.f32.mrf.mxu0
    %v7203 = vadd.f32 0.0, %v7202
    %7204 = vmatmul.bf16.gmra.mxu0 %v6105
    %v7205 = vpop.f32.mrf.mxu0
    %v7206 = vadd.f32 0.0, %v7205
    %v7207 = vpop.f32.mrf.mxu0
    %7208 = vdwg.mxu0
    %7209 = vmatpush.bf16.msra.mxu0 %v7004
    %7210 = vmatpush.bf16.msra.mxu0 %v7001
    %7211 = vmatpush.bf16.msra.mxu0 %v6998
    %7212 = vmatpush.bf16.msra.mxu0 %v6995
    %7213 = vmatpush.bf16.msra.mxu0 %v6992
    %7214 = vmatpush.bf16.msra.mxu0 %v6989
    %7215 = vmatpush.bf16.msra.mxu0 %v6986
    %7216 = vmatpush.bf16.msra.mxu0 %v6983
    %7217 = vmatmul.bf16.gmra.mxu0 %v6103
    %v7218 = vpop.f32.mrf.mxu0
    %v7219 = vadd.f32 %v7201, %v7218
    %v7220 = vpop.f32.mrf.mxu0
    %v7221 = vadd.f32 %v7203, %v7220
    %7222 = vmatmul.bf16.gmra.mxu0 %v6106
    %v7223 = vpop.f32.mrf.mxu0
    %v7224 = vadd.f32 %v7206, %v7223
    %v7225 = vpop.f32.mrf.mxu0
    %7226 = vdwg.mxu0
    %7227 = vmatpush.bf16.msra.mxu0 0
    %7228 = vmatpush.bf16.msra.mxu0 0
    %7229 = vmatpush.bf16.msra.mxu0 0
    %7230 = vmatpush.bf16.msra.mxu0 0
    %7231 = vmatpush.bf16.msra.mxu0 %v7016
    %7232 = vmatpush.bf16.msra.mxu0 %v7013
    %7233 = vmatpush.bf16.msra.mxu0 %v7010
    %7234 = vmatpush.bf16.msra.mxu0 %v7007
    %7235 = vmatmul.bf16.gmra.mxu0 %v7078
    %v7236 = vpop.f32.mrf.mxu0
    %v7237 = vadd.f32 %v7219, %v7236
    %v7238 = vpop.f32.mrf.mxu0
    %v7239 = vadd.f32 %v7221, %v7238
    %7240 = vmatmul.bf16.gmra.mxu0 %v7081
    %v7241 = vpop.f32.mrf.mxu0
    %v7242 = vadd.f32 %v7224, %v7241
    %v7243 = vpop.f32.mrf.mxu0
    %7244 = vdwg.mxu0
    %s7245 = scalar_lea.vmem %s3, 960
    %v7246 = vld [vmem:[%s7245] sm:$0xff]
    %v7247 = vld [vmem:[%s7245 + $0x8] sm:$0xf]
    %v7248 = vld [vmem:[%s7245 + $0xc] sm:$0xff]
    %v7249 = vld [vmem:[%s7245 + $0x14] sm:$0xf]
    %v7250 = vld [vmem:[%s7245 + $0x18] sm:$0xff]
    %v7251 = vld [vmem:[%s7245 + $0x20] sm:$0xf]
    %v7252 = vld [vmem:[%s7245 + $0x24] sm:$0xff]
    %v7253 = vld [vmem:[%s7245 + $0x2c] sm:$0xf]
    %v7254 = vld [vmem:[%s7245 + $0x30] sm:$0xff]
    %v7255 = vld [vmem:[%s7245 + $0x38] sm:$0xf]
    %v7256 = vld [vmem:[%s7245 + $0x3c] sm:$0xff]
    %v7257 = vld [vmem:[%s7245 + $0x44] sm:$0xf]
    %v7258 = vld [vmem:[%s7245 + $0x48] sm:$0xff]
    %v7259 = vld [vmem:[%s7245 + $0x50] sm:$0xf]
    %v7260 = vld [vmem:[%s7245 + $0x54] sm:$0xff]
    %v7261 = vld [vmem:[%s7245 + $0x5c] sm:$0xf]
    %v7262 = vld [vmem:[%s7245 + $0x60] sm:$0xff]
    %v7263 = vld [vmem:[%s7245 + $0x68] sm:$0xf]
    %v7264 = vld [vmem:[%s7245 + $0x6c] sm:$0xff]
    %v7265 = vld [vmem:[%s7245 + $0x74] sm:$0xf]
    %v7266 = vld [vmem:[%s7245 + $0x78] sm:$0xff]
    %v7267 = vld [vmem:[%s7245 + $0x80] sm:$0xf]
    %v7268 = vld [vmem:[%s7245 + $0x84] sm:$0xff]
    %v7269 = vld [vmem:[%s7245 + $0x8c] sm:$0xf]
    %v7270 = vld [vmem:[%s7245 + $0x90] sm:$0xff]
    %v7271 = vld [vmem:[%s7245 + $0x98] sm:$0xf]
    %v7272 = vld [vmem:[%s7245 + $0x9c] sm:$0xff]
    %v7273 = vld [vmem:[%s7245 + $0xa4] sm:$0xf]
    %v7274 = vld [vmem:[%s7245 + $0xa8] sm:$0xff]
    %v7275 = vld [vmem:[%s7245 + $0xb0] sm:$0xf]
    %v7276 = vld [vmem:[%s7245 + $0xb4] sm:$0xff]
    %v7277 = vld [vmem:[%s7245 + $0xbc] sm:$0xf]
    %v7278 = vld [vmem:[%s7245 + $0xc0] sm:$0xff]
    %v7279 = vld [vmem:[%s7245 + $0xc8] sm:$0xf]
    %v7280 = vld [vmem:[%s7245 + $0xcc] sm:$0xff]
    %v7281 = vld [vmem:[%s7245 + $0xd4] sm:$0xf]
    %v7282 = vld [vmem:[%s7245 + $0xd8] sm:$0xff]
    %v7283 = vld [vmem:[%s7245 + $0xe0] sm:$0xf]
    %v7284 = vld [vmem:[%s7245 + $0xe4] sm:$0xff]
    %v7285 = vld [vmem:[%s7245 + $0xec] sm:$0xf]
    %v7286 = vld [vmem:[%s7245 + $0xf0] sm:$0xff]
    %v7287 = vld [vmem:[%s7245 + $0xf8] sm:$0xf]
    %v7288 = vld [vmem:[%s7245 + $0xfc] sm:$0xff]
    %v7289 = vld [vmem:[%s7245 + $0x104] sm:$0xf]
    %v7290 = vld [vmem:[%s7245 + $0x108] sm:$0xff]
    %v7291 = vld [vmem:[%s7245 + $0x110] sm:$0xf]
    %v7292 = vld [vmem:[%s7245 + $0x114] sm:$0xff]
    %v7293 = vld [vmem:[%s7245 + $0x11c] sm:$0xf]
    %v7294 = vld [vmem:[%s7245 + $0x120] sm:$0xff]
    %v7295 = vld [vmem:[%s7245 + $0x128] sm:$0xf]
    %v7296 = vld [vmem:[%s7245 + $0x12c] sm:$0xff]
    %v7297 = vld [vmem:[%s7245 + $0x134] sm:$0xf]
    %v7298 = vld [vmem:[%s7245 + $0x138] sm:$0xff]
    %v7299 = vld [vmem:[%s7245 + $0x140] sm:$0xf]
    %v7300 = vld [vmem:[%s7245 + $0x144] sm:$0xff]
    %v7301 = vld [vmem:[%s7245 + $0x14c] sm:$0xf]
    %v7302 = vld [vmem:[%s7245 + $0x150] sm:$0xff]
    %v7303 = vld [vmem:[%s7245 + $0x158] sm:$0xf]
    %v7304 = vld [vmem:[%s7245 + $0x15c] sm:$0xff]
    %v7305 = vld [vmem:[%s7245 + $0x164] sm:$0xf]
    %v7306 = vld [vmem:[%s7245 + $0x168] sm:$0xff]
    %v7307 = vld [vmem:[%s7245 + $0x170] sm:$0xf]
    %v7308 = vld [vmem:[%s7245 + $0x174] sm:$0xff]
    %v7309 = vld [vmem:[%s7245 + $0x17c] sm:$0xf]
    %v7310 = vld [vmem:[%s7245 + $0x180] sm:$0xff]
    %v7311 = vld [vmem:[%s7245 + $0x188] sm:$0xf]
    %v7312 = vld [vmem:[%s7245 + $0x18c] sm:$0xff]
    %v7313 = vld [vmem:[%s7245 + $0x194] sm:$0xf]
    %v7314 = vld [vmem:[%s7245 + $0x198] sm:$0xff]
    %v7315 = vld [vmem:[%s7245 + $0x1a0] sm:$0xf]
    %v7316 = vld [vmem:[%s7245 + $0x1a4] sm:$0xff]
    %v7317 = vld [vmem:[%s7245 + $0x1ac] sm:$0xf]
    %v7318 = vld [vmem:[%s7245 + $0x1b0] sm:$0xff]
    %v7319 = vld [vmem:[%s7245 + $0x1b8] sm:$0xf]
    %v7320 = vld [vmem:[%s7245 + $0x1bc] sm:$0xff]
    %v7321 = vld [vmem:[%s7245 + $0x1c4] sm:$0xf]
    %v7322 = vld [vmem:[%s7245 + $0x1c8] sm:$0xff]
    %v7323 = vld [vmem:[%s7245 + $0x1d0] sm:$0xf]
    %v7324 = vld [vmem:[%s7245 + $0x1d4] sm:$0xff]
    %v7325 = vld [vmem:[%s7245 + $0x1dc] sm:$0xf]
    %v7406 = vunpack.c.l.b16 %v7246
    %v7407 = vunpack.c.h.b16 %v7246
    %v7408 = vunpack.c.l.b16 %v7247
    %v7409 = vunpack.c.l.b16 %v7248
    %v7410 = vunpack.c.h.b16 %v7248
    %v7411 = vunpack.c.l.b16 %v7249
    %v7412 = vunpack.c.l.b16 %v7250
    %v7413 = vunpack.c.h.b16 %v7250
    %v7414 = vunpack.c.l.b16 %v7251
    %v7415 = vunpack.c.l.b16 %v7252
    %v7416 = vunpack.c.h.b16 %v7252
    %v7417 = vunpack.c.l.b16 %v7253
    %v7418 = vunpack.c.l.b16 %v7254
    %v7419 = vunpack.c.h.b16 %v7254
    %v7420 = vunpack.c.l.b16 %v7255
    %v7421 = vunpack.c.l.b16 %v7256
    %v7422 = vunpack.c.h.b16 %v7256
    %v7423 = vunpack.c.l.b16 %v7257
    %v7424 = vunpack.c.l.b16 %v7258
    %v7425 = vunpack.c.h.b16 %v7258
    %v7426 = vunpack.c.l.b16 %v7259
    %v7427 = vunpack.c.l.b16 %v7260
    %v7428 = vunpack.c.h.b16 %v7260
    %v7429 = vunpack.c.l.b16 %v7261
    %v7430 = vunpack.c.l.b16 %v7262
    %v7431 = vunpack.c.h.b16 %v7262
    %v7432 = vunpack.c.l.b16 %v7263
    %v7433 = vunpack.c.l.b16 %v7264
    %v7434 = vunpack.c.h.b16 %v7264
    %v7435 = vunpack.c.l.b16 %v7265
    %v7436 = vunpack.c.l.b16 %v7266
    %v7437 = vunpack.c.h.b16 %v7266
    %v7438 = vunpack.c.l.b16 %v7267
    %v7439 = vunpack.c.l.b16 %v7268
    %v7440 = vunpack.c.h.b16 %v7268
    %v7441 = vunpack.c.l.b16 %v7269
    %v7442 = vunpack.c.l.b16 %v7270
    %v7443 = vunpack.c.h.b16 %v7270
    %v7444 = vunpack.c.l.b16 %v7271
    %v7445 = vunpack.c.l.b16 %v7272
    %v7446 = vunpack.c.h.b16 %v7272
    %v7447 = vunpack.c.l.b16 %v7273
    %v7448 = vunpack.c.l.b16 %v7274
    %v7449 = vunpack.c.h.b16 %v7274
    %v7450 = vunpack.c.l.b16 %v7275
    %v7451 = vunpack.c.l.b16 %v7276
    %v7452 = vunpack.c.h.b16 %v7276
    %v7453 = vunpack.c.l.b16 %v7277
    %v7454 = vunpack.c.l.b16 %v7278
    %v7455 = vunpack.c.h.b16 %v7278
    %v7456 = vunpack.c.l.b16 %v7279
    %v7457 = vunpack.c.l.b16 %v7280
    %v7458 = vunpack.c.h.b16 %v7280
    %v7459 = vunpack.c.l.b16 %v7281
    %v7460 = vunpack.c.l.b16 %v7282
    %v7461 = vunpack.c.h.b16 %v7282
    %v7462 = vunpack.c.l.b16 %v7283
    %v7463 = vunpack.c.l.b16 %v7284
    %v7464 = vunpack.c.h.b16 %v7284
    %v7465 = vunpack.c.l.b16 %v7285
    %v7466 = vunpack.c.l.b16 %v7286
    %v7467 = vunpack.c.h.b16 %v7286
    %v7468 = vunpack.c.l.b16 %v7287
    %v7469 = vunpack.c.l.b16 %v7288
    %v7470 = vunpack.c.h.b16 %v7288
    %v7471 = vunpack.c.l.b16 %v7289
    %v7472 = vunpack.c.l.b16 %v7290
    %v7473 = vunpack.c.h.b16 %v7290
    %v7474 = vunpack.c.l.b16 %v7291
    %v7475 = vunpack.c.l.b16 %v7292
    %v7476 = vunpack.c.h.b16 %v7292
    %v7477 = vunpack.c.l.b16 %v7293
    %v7478 = vunpack.c.l.b16 %v7294
    %v7479 = vunpack.c.h.b16 %v7294
    %v7480 = vunpack.c.l.b16 %v7295
    %v7481 = vunpack.c.l.b16 %v7296
    %v7482 = vunpack.c.h.b16 %v7296
    %v7483 = vunpack.c.l.b16 %v7297
    %v7484 = vunpack.c.l.b16 %v7298
    %v7485 = vunpack.c.h.b16 %v7298
    %v7486 = vunpack.c.l.b16 %v7299
    %v7487 = vunpack.c.l.b16 %v7300
    %v7488 = vunpack.c.h.b16 %v7300
    %v7489 = vunpack.c.l.b16 %v7301
    %v7490 = vunpack.c.l.b16 %v7302
    %v7491 = vunpack.c.h.b16 %v7302
    %v7492 = vunpack.c.l.b16 %v7303
    %v7493 = vunpack.c.l.b16 %v7304
    %v7494 = vunpack.c.h.b16 %v7304
    %v7495 = vunpack.c.l.b16 %v7305
    %v7496 = vunpack.c.l.b16 %v7306
    %v7497 = vunpack.c.h.b16 %v7306
    %v7498 = vunpack.c.l.b16 %v7307
    %v7499 = vunpack.c.l.b16 %v7308
    %v7500 = vunpack.c.h.b16 %v7308
    %v7501 = vunpack.c.l.b16 %v7309
    %v7502 = vunpack.c.l.b16 %v7310
    %v7503 = vunpack.c.h.b16 %v7310
    %v7504 = vunpack.c.l.b16 %v7311
    %v7505 = vunpack.c.l.b16 %v7312
    %v7506 = vunpack.c.h.b16 %v7312
    %v7507 = vunpack.c.l.b16 %v7313
    %v7508 = vunpack.c.l.b16 %v7314
    %v7509 = vunpack.c.h.b16 %v7314
    %v7510 = vunpack.c.l.b16 %v7315
    %v7511 = vunpack.c.l.b16 %v7316
    %v7512 = vunpack.c.h.b16 %v7316
    %v7513 = vunpack.c.l.b16 %v7317
    %v7514 = vunpack.c.l.b16 %v7318
    %v7515 = vunpack.c.h.b16 %v7318
    %v7516 = vunpack.c.l.b16 %v7319
    %v7517 = vunpack.c.l.b16 %v7320
    %v7518 = vunpack.c.h.b16 %v7320
    %v7519 = vunpack.c.l.b16 %v7321
    %v7520 = vunpack.c.l.b16 %v7322
    %v7521 = vunpack.c.h.b16 %v7322
    %v7522 = vunpack.c.l.b16 %v7323
    %v7523 = vunpack.c.l.b16 %v7324
    %v7524 = vunpack.c.h.b16 %v7324
    %v7525 = vunpack.c.l.b16 %v7325
    %v7526 = vpack.c.b16 %v7409, %v7406
    %v7527 = vpack.c.b16 %v7410, %v7407
    %v7528 = vpack.c.b16 %v7411, %v7408
    %v7529 = vpack.c.b16 %v7415, %v7412
    %v7530 = vpack.c.b16 %v7416, %v7413
    %v7531 = vpack.c.b16 %v7417, %v7414
    %v7532 = vpack.c.b16 %v7421, %v7418
    %v7533 = vpack.c.b16 %v7422, %v7419
    %v7534 = vpack.c.b16 %v7423, %v7420
    %v7535 = vpack.c.b16 %v7427, %v7424
    %v7536 = vpack.c.b16 %v7428, %v7425
    %v7537 = vpack.c.b16 %v7429, %v7426
    %v7538 = vpack.c.b16 %v7433, %v7430
    %v7539 = vpack.c.b16 %v7434, %v7431
    %v7540 = vpack.c.b16 %v7435, %v7432
    %v7541 = vpack.c.b16 %v7439, %v7436
    %v7542 = vpack.c.b16 %v7440, %v7437
    %v7543 = vpack.c.b16 %v7441, %v7438
    %v7544 = vpack.c.b16 %v7445, %v7442
    %v7545 = vpack.c.b16 %v7446, %v7443
    %v7546 = vpack.c.b16 %v7447, %v7444
    %v7547 = vpack.c.b16 %v7451, %v7448
    %v7548 = vpack.c.b16 %v7452, %v7449
    %v7549 = vpack.c.b16 %v7453, %v7450
    %v7550 = vpack.c.b16 %v7457, %v7454
    %v7551 = vpack.c.b16 %v7458, %v7455
    %v7552 = vpack.c.b16 %v7459, %v7456
    %v7553 = vpack.c.b16 %v7463, %v7460
    %v7554 = vpack.c.b16 %v7464, %v7461
    %v7555 = vpack.c.b16 %v7465, %v7462
    %v7556 = vpack.c.b16 %v7469, %v7466
    %v7557 = vpack.c.b16 %v7470, %v7467
    %v7558 = vpack.c.b16 %v7471, %v7468
    %v7559 = vpack.c.b16 %v7475, %v7472
    %v7560 = vpack.c.b16 %v7476, %v7473
    %v7561 = vpack.c.b16 %v7477, %v7474
    %v7562 = vpack.c.b16 %v7481, %v7478
    %v7563 = vpack.c.b16 %v7482, %v7479
    %v7564 = vpack.c.b16 %v7483, %v7480
    %v7565 = vpack.c.b16 %v7487, %v7484
    %v7566 = vpack.c.b16 %v7488, %v7485
    %v7567 = vpack.c.b16 %v7489, %v7486
    %v7568 = vpack.c.b16 %v7493, %v7490
    %v7569 = vpack.c.b16 %v7494, %v7491
    %v7570 = vpack.c.b16 %v7495, %v7492
    %v7571 = vpack.c.b16 %v7499, %v7496
    %v7572 = vpack.c.b16 %v7500, %v7497
    %v7573 = vpack.c.b16 %v7501, %v7498
    %v7574 = vpack.c.b16 %v7505, %v7502
    %v7575 = vpack.c.b16 %v7506, %v7503
    %v7576 = vpack.c.b16 %v7507, %v7504
    %v7577 = vpack.c.b16 %v7511, %v7508
    %v7578 = vpack.c.b16 %v7512, %v7509
    %v7579 = vpack.c.b16 %v7513, %v7510
    %v7580 = vpack.c.b16 %v7517, %v7514
    %v7581 = vpack.c.b16 %v7518, %v7515
    %v7582 = vpack.c.b16 %v7519, %v7516
    %v7583 = vpack.c.b16 %v7523, %v7520
    %v7584 = vpack.c.b16 %v7524, %v7521
    %v7585 = vpack.c.b16 %v7525, %v7522
    %7646 = vmatpush.bf16.msra.mxu0 %v7547
    %7647 = vmatpush.bf16.msra.mxu0 %v7544
    %7648 = vmatpush.bf16.msra.mxu0 %v7541
    %7649 = vmatpush.bf16.msra.mxu0 %v7538
    %7650 = vmatpush.bf16.msra.mxu0 %v7535
    %7651 = vmatpush.bf16.msra.mxu0 %v7532
    %7652 = vmatpush.bf16.msra.mxu0 %v7529
    %7653 = vmatpush.bf16.msra.mxu0 %v7526
    %7654 = vmatmul.bf16.gmra.mxu0 %v5450
    %v7655 = vpop.f32.mrf.mxu0
    %v7656 = vadd.f32 0.0, %v7655
    %v7657 = vpop.f32.mrf.mxu0
    %v7658 = vadd.f32 0.0, %v7657
    %7659 = vmatmul.bf16.gmra.mxu0 %v5453
    %v7660 = vpop.f32.mrf.mxu0
    %v7661 = vadd.f32 0.0, %v7660
    %v7662 = vpop.f32.mrf.mxu0
    %7663 = vdwg.mxu0
    %7664 = vmatpush.bf16.msra.mxu0 %v7571
    %7665 = vmatpush.bf16.msra.mxu0 %v7568
    %7666 = vmatpush.bf16.msra.mxu0 %v7565
    %7667 = vmatpush.bf16.msra.mxu0 %v7562
    %7668 = vmatpush.bf16.msra.mxu0 %v7559
    %7669 = vmatpush.bf16.msra.mxu0 %v7556
    %7670 = vmatpush.bf16.msra.mxu0 %v7553
    %7671 = vmatpush.bf16.msra.mxu0 %v7550
    %7672 = vmatmul.bf16.gmra.mxu0 %v5451
    %v7673 = vpop.f32.mrf.mxu0
    %v7674 = vadd.f32 %v7656, %v7673
    %v7675 = vpop.f32.mrf.mxu0
    %v7676 = vadd.f32 %v7658, %v7675
    %7677 = vmatmul.bf16.gmra.mxu0 %v5454
    %v7678 = vpop.f32.mrf.mxu0
    %v7679 = vadd.f32 %v7661, %v7678
    %v7680 = vpop.f32.mrf.mxu0
    %7681 = vdwg.mxu0
    %7682 = vmatpush.bf16.msra.mxu0 0
    %7683 = vmatpush.bf16.msra.mxu0 0
    %7684 = vmatpush.bf16.msra.mxu0 0
    %7685 = vmatpush.bf16.msra.mxu0 0
    %7686 = vmatpush.bf16.msra.mxu0 %v7583
    %7687 = vmatpush.bf16.msra.mxu0 %v7580
    %7688 = vmatpush.bf16.msra.mxu0 %v7577
    %7689 = vmatpush.bf16.msra.mxu0 %v7574
    %7690 = vmatmul.bf16.gmra.mxu0 %v6509
    %v7691 = vpop.f32.mrf.mxu0
    %v7692 = vadd.f32 %v7674, %v7691
    %v7693 = vpop.f32.mrf.mxu0
    %v7694 = vadd.f32 %v7676, %v7693
    %7695 = vmatmul.bf16.gmra.mxu0 %v6512
    %v7696 = vpop.f32.mrf.mxu0
    %v7697 = vadd.f32 %v7679, %v7696
    %v7698 = vpop.f32.mrf.mxu0
    %7699 = vdwg.mxu0
    %7700 = vmatpush.bf16.msra.mxu0 %v7548
    %7701 = vmatpush.bf16.msra.mxu0 %v7545
    %7702 = vmatpush.bf16.msra.mxu0 %v7542
    %7703 = vmatpush.bf16.msra.mxu0 %v7539
    %7704 = vmatpush.bf16.msra.mxu0 %v7536
    %7705 = vmatpush.bf16.msra.mxu0 %v7533
    %7706 = vmatpush.bf16.msra.mxu0 %v7530
    %7707 = vmatpush.bf16.msra.mxu0 %v7527
    %7708 = vmatmul.bf16.gmra.mxu0 %v5450
    %v7709 = vpop.f32.mrf.mxu0
    %v7710 = vadd.f32 0.0, %v7709
    %v7711 = vpop.f32.mrf.mxu0
    %v7712 = vadd.f32 0.0, %v7711
    %7713 = vmatmul.bf16.gmra.mxu0 %v5453
    %v7714 = vpop.f32.mrf.mxu0
    %v7715 = vadd.f32 0.0, %v7714
    %v7716 = vpop.f32.mrf.mxu0
    %7717 = vdwg.mxu0
    %7718 = vmatpush.bf16.msra.mxu0 %v7572
    %7719 = vmatpush.bf16.msra.mxu0 %v7569
    %7720 = vmatpush.bf16.msra.mxu0 %v7566
    %7721 = vmatpush.bf16.msra.mxu0 %v7563
    %7722 = vmatpush.bf16.msra.mxu0 %v7560
    %7723 = vmatpush.bf16.msra.mxu0 %v7557
    %7724 = vmatpush.bf16.msra.mxu0 %v7554
    %7725 = vmatpush.bf16.msra.mxu0 %v7551
    %7726 = vmatmul.bf16.gmra.mxu0 %v5451
    %v7727 = vpop.f32.mrf.mxu0
    %v7728 = vadd.f32 %v7710, %v7727
    %v7729 = vpop.f32.mrf.mxu0
    %v7730 = vadd.f32 %v7712, %v7729
    %7731 = vmatmul.bf16.gmra.mxu0 %v5454
    %v7732 = vpop.f32.mrf.mxu0
    %v7733 = vadd.f32 %v7715, %v7732
    %v7734 = vpop.f32.mrf.mxu0
    %7735 = vdwg.mxu0
    %7736 = vmatpush.bf16.msra.mxu0 0
    %7737 = vmatpush.bf16.msra.mxu0 0
    %7738 = vmatpush.bf16.msra.mxu0 0
    %7739 = vmatpush.bf16.msra.mxu0 0
    %7740 = vmatpush.bf16.msra.mxu0 %v7584
    %7741 = vmatpush.bf16.msra.mxu0 %v7581
    %7742 = vmatpush.bf16.msra.mxu0 %v7578
    %7743 = vmatpush.bf16.msra.mxu0 %v7575
    %7744 = vmatmul.bf16.gmra.mxu0 %v6509
    %v7745 = vpop.f32.mrf.mxu0
    %v7746 = vadd.f32 %v7728, %v7745
    %v7747 = vpop.f32.mrf.mxu0
    %v7748 = vadd.f32 %v7730, %v7747
    %7749 = vmatmul.bf16.gmra.mxu0 %v6512
    %v7750 = vpop.f32.mrf.mxu0
    %v7751 = vadd.f32 %v7733, %v7750
    %v7752 = vpop.f32.mrf.mxu0
    %7753 = vdwg.mxu0
    %7754 = vmatpush.bf16.msra.mxu0 %v7549
    %7755 = vmatpush.bf16.msra.mxu0 %v7546
    %7756 = vmatpush.bf16.msra.mxu0 %v7543
    %7757 = vmatpush.bf16.msra.mxu0 %v7540
    %7758 = vmatpush.bf16.msra.mxu0 %v7537
    %7759 = vmatpush.bf16.msra.mxu0 %v7534
    %7760 = vmatpush.bf16.msra.mxu0 %v7531
    %7761 = vmatpush.bf16.msra.mxu0 %v7528
    %7762 = vmatmul.bf16.gmra.mxu0 %v5450
    %v7763 = vpop.f32.mrf.mxu0
    %v7764 = vadd.f32 0.0, %v7763
    %v7765 = vpop.f32.mrf.mxu0
    %v7766 = vadd.f32 0.0, %v7765
    %7767 = vmatmul.bf16.gmra.mxu0 %v5453
    %v7768 = vpop.f32.mrf.mxu0
    %v7769 = vadd.f32 0.0, %v7768
    %v7770 = vpop.f32.mrf.mxu0
    %7771 = vdwg.mxu0
    %7772 = vmatpush.bf16.msra.mxu0 %v7573
    %7773 = vmatpush.bf16.msra.mxu0 %v7570
    %7774 = vmatpush.bf16.msra.mxu0 %v7567
    %7775 = vmatpush.bf16.msra.mxu0 %v7564
    %7776 = vmatpush.bf16.msra.mxu0 %v7561
    %7777 = vmatpush.bf16.msra.mxu0 %v7558
    %7778 = vmatpush.bf16.msra.mxu0 %v7555
    %7779 = vmatpush.bf16.msra.mxu0 %v7552
    %7780 = vmatmul.bf16.gmra.mxu0 %v5451
    %v7781 = vpop.f32.mrf.mxu0
    %v7782 = vadd.f32 %v7764, %v7781
    %v7783 = vpop.f32.mrf.mxu0
    %v7784 = vadd.f32 %v7766, %v7783
    %7785 = vmatmul.bf16.gmra.mxu0 %v5454
    %v7786 = vpop.f32.mrf.mxu0
    %v7787 = vadd.f32 %v7769, %v7786
    %v7788 = vpop.f32.mrf.mxu0
    %7789 = vdwg.mxu0
    %7790 = vmatpush.bf16.msra.mxu0 0
    %7791 = vmatpush.bf16.msra.mxu0 0
    %7792 = vmatpush.bf16.msra.mxu0 0
    %7793 = vmatpush.bf16.msra.mxu0 0
    %7794 = vmatpush.bf16.msra.mxu0 %v7585
    %7795 = vmatpush.bf16.msra.mxu0 %v7582
    %7796 = vmatpush.bf16.msra.mxu0 %v7579
    %7797 = vmatpush.bf16.msra.mxu0 %v7576
    %7798 = vmatmul.bf16.gmra.mxu0 %v6509
    %v7799 = vpop.f32.mrf.mxu0
    %v7800 = vadd.f32 %v7782, %v7799
    %v7801 = vpop.f32.mrf.mxu0
    %v7802 = vadd.f32 %v7784, %v7801
    %7803 = vmatmul.bf16.gmra.mxu0 %v6512
    %v7804 = vpop.f32.mrf.mxu0
    %v7805 = vadd.f32 %v7787, %v7804
    %v7806 = vpop.f32.mrf.mxu0
    %7807 = vdwg.mxu0
    %s7808 = scalar_lea.vmem %s3, 1440
    %v7809 = vld [vmem:[%s7808] sm:$0xff]
    %v7810 = vld [vmem:[%s7808 + $0x8] sm:$0xf]
    %v7811 = vld [vmem:[%s7808 + $0xc] sm:$0xff]
    %v7812 = vld [vmem:[%s7808 + $0x14] sm:$0xf]
    %v7813 = vld [vmem:[%s7808 + $0x18] sm:$0xff]
    %v7814 = vld [vmem:[%s7808 + $0x20] sm:$0xf]
    %v7815 = vld [vmem:[%s7808 + $0x24] sm:$0xff]
    %v7816 = vld [vmem:[%s7808 + $0x2c] sm:$0xf]
    %v7817 = vld [vmem:[%s7808 + $0x30] sm:$0xff]
    %v7818 = vld [vmem:[%s7808 + $0x38] sm:$0xf]
    %v7819 = vld [vmem:[%s7808 + $0x3c] sm:$0xff]
    %v7820 = vld [vmem:[%s7808 + $0x44] sm:$0xf]
    %v7821 = vld [vmem:[%s7808 + $0x48] sm:$0xff]
    %v7822 = vld [vmem:[%s7808 + $0x50] sm:$0xf]
    %v7823 = vld [vmem:[%s7808 + $0x54] sm:$0xff]
    %v7824 = vld [vmem:[%s7808 + $0x5c] sm:$0xf]
    %v7825 = vld [vmem:[%s7808 + $0x60] sm:$0xff]
    %v7826 = vld [vmem:[%s7808 + $0x68] sm:$0xf]
    %v7827 = vld [vmem:[%s7808 + $0x6c] sm:$0xff]
    %v7828 = vld [vmem:[%s7808 + $0x74] sm:$0xf]
    %v7829 = vld [vmem:[%s7808 + $0x78] sm:$0xff]
    %v7830 = vld [vmem:[%s7808 + $0x80] sm:$0xf]
    %v7831 = vld [vmem:[%s7808 + $0x84] sm:$0xff]
    %v7832 = vld [vmem:[%s7808 + $0x8c] sm:$0xf]
    %v7833 = vld [vmem:[%s7808 + $0x90] sm:$0xff]
    %v7834 = vld [vmem:[%s7808 + $0x98] sm:$0xf]
    %v7835 = vld [vmem:[%s7808 + $0x9c] sm:$0xff]
    %v7836 = vld [vmem:[%s7808 + $0xa4] sm:$0xf]
    %v7837 = vld [vmem:[%s7808 + $0xa8] sm:$0xff]
    %v7838 = vld [vmem:[%s7808 + $0xb0] sm:$0xf]
    %v7839 = vld [vmem:[%s7808 + $0xb4] sm:$0xff]
    %v7840 = vld [vmem:[%s7808 + $0xbc] sm:$0xf]
    %v7841 = vld [vmem:[%s7808 + $0xc0] sm:$0xff]
    %v7842 = vld [vmem:[%s7808 + $0xc8] sm:$0xf]
    %v7843 = vld [vmem:[%s7808 + $0xcc] sm:$0xff]
    %v7844 = vld [vmem:[%s7808 + $0xd4] sm:$0xf]
    %v7845 = vld [vmem:[%s7808 + $0xd8] sm:$0xff]
    %v7846 = vld [vmem:[%s7808 + $0xe0] sm:$0xf]
    %v7847 = vld [vmem:[%s7808 + $0xe4] sm:$0xff]
    %v7848 = vld [vmem:[%s7808 + $0xec] sm:$0xf]
    %v7849 = vld [vmem:[%s7808 + $0xf0] sm:$0xff]
    %v7850 = vld [vmem:[%s7808 + $0xf8] sm:$0xf]
    %v7851 = vld [vmem:[%s7808 + $0xfc] sm:$0xff]
    %v7852 = vld [vmem:[%s7808 + $0x104] sm:$0xf]
    %v7853 = vld [vmem:[%s7808 + $0x108] sm:$0xff]
    %v7854 = vld [vmem:[%s7808 + $0x110] sm:$0xf]
    %v7855 = vld [vmem:[%s7808 + $0x114] sm:$0xff]
    %v7856 = vld [vmem:[%s7808 + $0x11c] sm:$0xf]
    %v7857 = vld [vmem:[%s7808 + $0x120] sm:$0xff]
    %v7858 = vld [vmem:[%s7808 + $0x128] sm:$0xf]
    %v7859 = vld [vmem:[%s7808 + $0x12c] sm:$0xff]
    %v7860 = vld [vmem:[%s7808 + $0x134] sm:$0xf]
    %v7861 = vld [vmem:[%s7808 + $0x138] sm:$0xff]
    %v7862 = vld [vmem:[%s7808 + $0x140] sm:$0xf]
    %v7863 = vld [vmem:[%s7808 + $0x144] sm:$0xff]
    %v7864 = vld [vmem:[%s7808 + $0x14c] sm:$0xf]
    %v7865 = vld [vmem:[%s7808 + $0x150] sm:$0xff]
    %v7866 = vld [vmem:[%s7808 + $0x158] sm:$0xf]
    %v7867 = vld [vmem:[%s7808 + $0x15c] sm:$0xff]
    %v7868 = vld [vmem:[%s7808 + $0x164] sm:$0xf]
    %v7869 = vld [vmem:[%s7808 + $0x168] sm:$0xff]
    %v7870 = vld [vmem:[%s7808 + $0x170] sm:$0xf]
    %v7871 = vld [vmem:[%s7808 + $0x174] sm:$0xff]
    %v7872 = vld [vmem:[%s7808 + $0x17c] sm:$0xf]
    %v7873 = vld [vmem:[%s7808 + $0x180] sm:$0xff]
    %v7874 = vld [vmem:[%s7808 + $0x188] sm:$0xf]
    %v7875 = vld [vmem:[%s7808 + $0x18c] sm:$0xff]
    %v7876 = vld [vmem:[%s7808 + $0x194] sm:$0xf]
    %v7877 = vld [vmem:[%s7808 + $0x198] sm:$0xff]
    %v7878 = vld [vmem:[%s7808 + $0x1a0] sm:$0xf]
    %v7879 = vld [vmem:[%s7808 + $0x1a4] sm:$0xff]
    %v7880 = vld [vmem:[%s7808 + $0x1ac] sm:$0xf]
    %v7881 = vld [vmem:[%s7808 + $0x1b0] sm:$0xff]
    %v7882 = vld [vmem:[%s7808 + $0x1b8] sm:$0xf]
    %v7883 = vld [vmem:[%s7808 + $0x1bc] sm:$0xff]
    %v7884 = vld [vmem:[%s7808 + $0x1c4] sm:$0xf]
    %v7885 = vld [vmem:[%s7808 + $0x1c8] sm:$0xff]
    %v7886 = vld [vmem:[%s7808 + $0x1d0] sm:$0xf]
    %v7887 = vld [vmem:[%s7808 + $0x1d4] sm:$0xff]
    %v7888 = vld [vmem:[%s7808 + $0x1dc] sm:$0xf]
    %v7969 = vunpack.c.l.b16 %v7809
    %v7970 = vunpack.c.h.b16 %v7809
    %v7971 = vunpack.c.l.b16 %v7810
    %v7972 = vunpack.c.l.b16 %v7811
    %v7973 = vunpack.c.h.b16 %v7811
    %v7974 = vunpack.c.l.b16 %v7812
    %v7975 = vunpack.c.l.b16 %v7813
    %v7976 = vunpack.c.h.b16 %v7813
    %v7977 = vunpack.c.l.b16 %v7814
    %v7978 = vunpack.c.l.b16 %v7815
    %v7979 = vunpack.c.h.b16 %v7815
    %v7980 = vunpack.c.l.b16 %v7816
    %v7981 = vunpack.c.l.b16 %v7817
    %v7982 = vunpack.c.h.b16 %v7817
    %v7983 = vunpack.c.l.b16 %v7818
    %v7984 = vunpack.c.l.b16 %v7819
    %v7985 = vunpack.c.h.b16 %v7819
    %v7986 = vunpack.c.l.b16 %v7820
    %v7987 = vunpack.c.l.b16 %v7821
    %v7988 = vunpack.c.h.b16 %v7821
    %v7989 = vunpack.c.l.b16 %v7822
    %v7990 = vunpack.c.l.b16 %v7823
    %v7991 = vunpack.c.h.b16 %v7823
    %v7992 = vunpack.c.l.b16 %v7824
    %v7993 = vunpack.c.l.b16 %v7825
    %v7994 = vunpack.c.h.b16 %v7825
    %v7995 = vunpack.c.l.b16 %v7826
    %v7996 = vunpack.c.l.b16 %v7827
    %v7997 = vunpack.c.h.b16 %v7827
    %v7998 = vunpack.c.l.b16 %v7828
    %v7999 = vunpack.c.l.b16 %v7829
    %v8000 = vunpack.c.h.b16 %v7829
    %v8001 = vunpack.c.l.b16 %v7830
    %v8002 = vunpack.c.l.b16 %v7831
    %v8003 = vunpack.c.h.b16 %v7831
    %v8004 = vunpack.c.l.b16 %v7832
    %v8005 = vunpack.c.l.b16 %v7833
    %v8006 = vunpack.c.h.b16 %v7833
    %v8007 = vunpack.c.l.b16 %v7834
    %v8008 = vunpack.c.l.b16 %v7835
    %v8009 = vunpack.c.h.b16 %v7835
    %v8010 = vunpack.c.l.b16 %v7836
    %v8011 = vunpack.c.l.b16 %v7837
    %v8012 = vunpack.c.h.b16 %v7837
    %v8013 = vunpack.c.l.b16 %v7838
    %v8014 = vunpack.c.l.b16 %v7839
    %v8015 = vunpack.c.h.b16 %v7839
    %v8016 = vunpack.c.l.b16 %v7840
    %v8017 = vunpack.c.l.b16 %v7841
    %v8018 = vunpack.c.h.b16 %v7841
    %v8019 = vunpack.c.l.b16 %v7842
    %v8020 = vunpack.c.l.b16 %v7843
    %v8021 = vunpack.c.h.b16 %v7843
    %v8022 = vunpack.c.l.b16 %v7844
    %v8023 = vunpack.c.l.b16 %v7845
    %v8024 = vunpack.c.h.b16 %v7845
    %v8025 = vunpack.c.l.b16 %v7846
    %v8026 = vunpack.c.l.b16 %v7847
    %v8027 = vunpack.c.h.b16 %v7847
    %v8028 = vunpack.c.l.b16 %v7848
    %v8029 = vunpack.c.l.b16 %v7849
    %v8030 = vunpack.c.h.b16 %v7849
    %v8031 = vunpack.c.l.b16 %v7850
    %v8032 = vunpack.c.l.b16 %v7851
    %v8033 = vunpack.c.h.b16 %v7851
    %v8034 = vunpack.c.l.b16 %v7852
    %v8035 = vunpack.c.l.b16 %v7853
    %v8036 = vunpack.c.h.b16 %v7853
    %v8037 = vunpack.c.l.b16 %v7854
    %v8038 = vunpack.c.l.b16 %v7855
    %v8039 = vunpack.c.h.b16 %v7855
    %v8040 = vunpack.c.l.b16 %v7856
    %v8041 = vunpack.c.l.b16 %v7857
    %v8042 = vunpack.c.h.b16 %v7857
    %v8043 = vunpack.c.l.b16 %v7858
    %v8044 = vunpack.c.l.b16 %v7859
    %v8045 = vunpack.c.h.b16 %v7859
    %v8046 = vunpack.c.l.b16 %v7860
    %v8047 = vunpack.c.l.b16 %v7861
    %v8048 = vunpack.c.h.b16 %v7861
    %v8049 = vunpack.c.l.b16 %v7862
    %v8050 = vunpack.c.l.b16 %v7863
    %v8051 = vunpack.c.h.b16 %v7863
    %v8052 = vunpack.c.l.b16 %v7864
    %v8053 = vunpack.c.l.b16 %v7865
    %v8054 = vunpack.c.h.b16 %v7865
    %v8055 = vunpack.c.l.b16 %v7866
    %v8056 = vunpack.c.l.b16 %v7867
    %v8057 = vunpack.c.h.b16 %v7867
    %v8058 = vunpack.c.l.b16 %v7868
    %v8059 = vunpack.c.l.b16 %v7869
    %v8060 = vunpack.c.h.b16 %v7869
    %v8061 = vunpack.c.l.b16 %v7870
    %v8062 = vunpack.c.l.b16 %v7871
    %v8063 = vunpack.c.h.b16 %v7871
    %v8064 = vunpack.c.l.b16 %v7872
    %v8065 = vunpack.c.l.b16 %v7873
    %v8066 = vunpack.c.h.b16 %v7873
    %v8067 = vunpack.c.l.b16 %v7874
    %v8068 = vunpack.c.l.b16 %v7875
    %v8069 = vunpack.c.h.b16 %v7875
    %v8070 = vunpack.c.l.b16 %v7876
    %v8071 = vunpack.c.l.b16 %v7877
    %v8072 = vunpack.c.h.b16 %v7877
    %v8073 = vunpack.c.l.b16 %v7878
    %v8074 = vunpack.c.l.b16 %v7879
    %v8075 = vunpack.c.h.b16 %v7879
    %v8076 = vunpack.c.l.b16 %v7880
    %v8077 = vunpack.c.l.b16 %v7881
    %v8078 = vunpack.c.h.b16 %v7881
    %v8079 = vunpack.c.l.b16 %v7882
    %v8080 = vunpack.c.l.b16 %v7883
    %v8081 = vunpack.c.h.b16 %v7883
    %v8082 = vunpack.c.l.b16 %v7884
    %v8083 = vunpack.c.l.b16 %v7885
    %v8084 = vunpack.c.h.b16 %v7885
    %v8085 = vunpack.c.l.b16 %v7886
    %v8086 = vunpack.c.l.b16 %v7887
    %v8087 = vunpack.c.h.b16 %v7887
    %v8088 = vunpack.c.l.b16 %v7888
    %v8089 = vpack.c.b16 %v7972, %v7969
    %v8090 = vpack.c.b16 %v7973, %v7970
    %v8091 = vpack.c.b16 %v7974, %v7971
    %v8092 = vpack.c.b16 %v7978, %v7975
    %v8093 = vpack.c.b16 %v7979, %v7976
    %v8094 = vpack.c.b16 %v7980, %v7977
    %v8095 = vpack.c.b16 %v7984, %v7981
    %v8096 = vpack.c.b16 %v7985, %v7982
    %v8097 = vpack.c.b16 %v7986, %v7983
    %v8098 = vpack.c.b16 %v7990, %v7987
    %v8099 = vpack.c.b16 %v7991, %v7988
    %v8100 = vpack.c.b16 %v7992, %v7989
    %v8101 = vpack.c.b16 %v7996, %v7993
    %v8102 = vpack.c.b16 %v7997, %v7994
    %v8103 = vpack.c.b16 %v7998, %v7995
    %v8104 = vpack.c.b16 %v8002, %v7999
    %v8105 = vpack.c.b16 %v8003, %v8000
    %v8106 = vpack.c.b16 %v8004, %v8001
    %v8107 = vpack.c.b16 %v8008, %v8005
    %v8108 = vpack.c.b16 %v8009, %v8006
    %v8109 = vpack.c.b16 %v8010, %v8007
    %v8110 = vpack.c.b16 %v8014, %v8011
    %v8111 = vpack.c.b16 %v8015, %v8012
    %v8112 = vpack.c.b16 %v8016, %v8013
    %v8113 = vpack.c.b16 %v8020, %v8017
    %v8114 = vpack.c.b16 %v8021, %v8018
    %v8115 = vpack.c.b16 %v8022, %v8019
    %v8116 = vpack.c.b16 %v8026, %v8023
    %v8117 = vpack.c.b16 %v8027, %v8024
    %v8118 = vpack.c.b16 %v8028, %v8025
    %v8119 = vpack.c.b16 %v8032, %v8029
    %v8120 = vpack.c.b16 %v8033, %v8030
    %v8121 = vpack.c.b16 %v8034, %v8031
    %v8122 = vpack.c.b16 %v8038, %v8035
    %v8123 = vpack.c.b16 %v8039, %v8036
    %v8124 = vpack.c.b16 %v8040, %v8037
    %v8125 = vpack.c.b16 %v8044, %v8041
    %v8126 = vpack.c.b16 %v8045, %v8042
    %v8127 = vpack.c.b16 %v8046, %v8043
    %v8128 = vpack.c.b16 %v8050, %v8047
    %v8129 = vpack.c.b16 %v8051, %v8048
    %v8130 = vpack.c.b16 %v8052, %v8049
    %v8131 = vpack.c.b16 %v8056, %v8053
    %v8132 = vpack.c.b16 %v8057, %v8054
    %v8133 = vpack.c.b16 %v8058, %v8055
    %v8134 = vpack.c.b16 %v8062, %v8059
    %v8135 = vpack.c.b16 %v8063, %v8060
    %v8136 = vpack.c.b16 %v8064, %v8061
    %v8137 = vpack.c.b16 %v8068, %v8065
    %v8138 = vpack.c.b16 %v8069, %v8066
    %v8139 = vpack.c.b16 %v8070, %v8067
    %v8140 = vpack.c.b16 %v8074, %v8071
    %v8141 = vpack.c.b16 %v8075, %v8072
    %v8142 = vpack.c.b16 %v8076, %v8073
    %v8143 = vpack.c.b16 %v8080, %v8077
    %v8144 = vpack.c.b16 %v8081, %v8078
    %v8145 = vpack.c.b16 %v8082, %v8079
    %v8146 = vpack.c.b16 %v8086, %v8083
    %v8147 = vpack.c.b16 %v8087, %v8084
    %v8148 = vpack.c.b16 %v8088, %v8085
    %8209 = vmatpush.bf16.msra.mxu0 %v8110
    %8210 = vmatpush.bf16.msra.mxu0 %v8107
    %8211 = vmatpush.bf16.msra.mxu0 %v8104
    %8212 = vmatpush.bf16.msra.mxu0 %v8101
    %8213 = vmatpush.bf16.msra.mxu0 %v8098
    %8214 = vmatpush.bf16.msra.mxu0 %v8095
    %8215 = vmatpush.bf16.msra.mxu0 %v8092
    %8216 = vmatpush.bf16.msra.mxu0 %v8089
    %8217 = vmatmul.bf16.gmra.mxu0 %v6102
    %v8218 = vpop.f32.mrf.mxu0
    %v8219 = vadd.f32 0.0, %v8218
    %v8220 = vpop.f32.mrf.mxu0
    %v8221 = vadd.f32 0.0, %v8220
    %8222 = vmatmul.bf16.gmra.mxu0 %v6105
    %v8223 = vpop.f32.mrf.mxu0
    %v8224 = vadd.f32 0.0, %v8223
    %v8225 = vpop.f32.mrf.mxu0
    %8226 = vdwg.mxu0
    %8227 = vmatpush.bf16.msra.mxu0 %v8134
    %8228 = vmatpush.bf16.msra.mxu0 %v8131
    %8229 = vmatpush.bf16.msra.mxu0 %v8128
    %8230 = vmatpush.bf16.msra.mxu0 %v8125
    %8231 = vmatpush.bf16.msra.mxu0 %v8122
    %8232 = vmatpush.bf16.msra.mxu0 %v8119
    %8233 = vmatpush.bf16.msra.mxu0 %v8116
    %8234 = vmatpush.bf16.msra.mxu0 %v8113
    %8235 = vmatmul.bf16.gmra.mxu0 %v6103
    %v8236 = vpop.f32.mrf.mxu0
    %v8237 = vadd.f32 %v8219, %v8236
    %v8238 = vpop.f32.mrf.mxu0
    %v8239 = vadd.f32 %v8221, %v8238
    %8240 = vmatmul.bf16.gmra.mxu0 %v6106
    %v8241 = vpop.f32.mrf.mxu0
    %v8242 = vadd.f32 %v8224, %v8241
    %v8243 = vpop.f32.mrf.mxu0
    %8244 = vdwg.mxu0
    %8245 = vmatpush.bf16.msra.mxu0 0
    %8246 = vmatpush.bf16.msra.mxu0 0
    %8247 = vmatpush.bf16.msra.mxu0 0
    %8248 = vmatpush.bf16.msra.mxu0 0
    %8249 = vmatpush.bf16.msra.mxu0 %v8146
    %8250 = vmatpush.bf16.msra.mxu0 %v8143
    %8251 = vmatpush.bf16.msra.mxu0 %v8140
    %8252 = vmatpush.bf16.msra.mxu0 %v8137
    %8253 = vmatmul.bf16.gmra.mxu0 %v7078
    %v8254 = vpop.f32.mrf.mxu0
    %v8255 = vadd.f32 %v8237, %v8254
    %v8256 = vpop.f32.mrf.mxu0
    %v8257 = vadd.f32 %v8239, %v8256
    %8258 = vmatmul.bf16.gmra.mxu0 %v7081
    %v8259 = vpop.f32.mrf.mxu0
    %v8260 = vadd.f32 %v8242, %v8259
    %v8261 = vpop.f32.mrf.mxu0
    %8262 = vdwg.mxu0
    %8263 = vmatpush.bf16.msra.mxu0 %v8111
    %8264 = vmatpush.bf16.msra.mxu0 %v8108
    %8265 = vmatpush.bf16.msra.mxu0 %v8105
    %8266 = vmatpush.bf16.msra.mxu0 %v8102
    %8267 = vmatpush.bf16.msra.mxu0 %v8099
    %8268 = vmatpush.bf16.msra.mxu0 %v8096
    %8269 = vmatpush.bf16.msra.mxu0 %v8093
    %8270 = vmatpush.bf16.msra.mxu0 %v8090
    %8271 = vmatmul.bf16.gmra.mxu0 %v6102
    %v8272 = vpop.f32.mrf.mxu0
    %v8273 = vadd.f32 0.0, %v8272
    %v8274 = vpop.f32.mrf.mxu0
    %v8275 = vadd.f32 0.0, %v8274
    %8276 = vmatmul.bf16.gmra.mxu0 %v6105
    %v8277 = vpop.f32.mrf.mxu0
    %v8278 = vadd.f32 0.0, %v8277
    %v8279 = vpop.f32.mrf.mxu0
    %8280 = vdwg.mxu0
    %8281 = vmatpush.bf16.msra.mxu0 %v8135
    %8282 = vmatpush.bf16.msra.mxu0 %v8132
    %8283 = vmatpush.bf16.msra.mxu0 %v8129
    %8284 = vmatpush.bf16.msra.mxu0 %v8126
    %8285 = vmatpush.bf16.msra.mxu0 %v8123
    %8286 = vmatpush.bf16.msra.mxu0 %v8120
    %8287 = vmatpush.bf16.msra.mxu0 %v8117
    %8288 = vmatpush.bf16.msra.mxu0 %v8114
    %8289 = vmatmul.bf16.gmra.mxu0 %v6103
    %v8290 = vpop.f32.mrf.mxu0
    %v8291 = vadd.f32 %v8273, %v8290
    %v8292 = vpop.f32.mrf.mxu0
    %v8293 = vadd.f32 %v8275, %v8292
    %8294 = vmatmul.bf16.gmra.mxu0 %v6106
    %v8295 = vpop.f32.mrf.mxu0
    %v8296 = vadd.f32 %v8278, %v8295
    %v8297 = vpop.f32.mrf.mxu0
    %8298 = vdwg.mxu0
    %8299 = vmatpush.bf16.msra.mxu0 0
    %8300 = vmatpush.bf16.msra.mxu0 0
    %8301 = vmatpush.bf16.msra.mxu0 0
    %8302 = vmatpush.bf16.msra.mxu0 0
    %8303 = vmatpush.bf16.msra.mxu0 %v8147
    %8304 = vmatpush.bf16.msra.mxu0 %v8144
    %8305 = vmatpush.bf16.msra.mxu0 %v8141
    %8306 = vmatpush.bf16.msra.mxu0 %v8138
    %8307 = vmatmul.bf16.gmra.mxu0 %v7078
    %v8308 = vpop.f32.mrf.mxu0
    %v8309 = vadd.f32 %v8291, %v8308
    %v8310 = vpop.f32.mrf.mxu0
    %v8311 = vadd.f32 %v8293, %v8310
    %8312 = vmatmul.bf16.gmra.mxu0 %v7081
    %v8313 = vpop.f32.mrf.mxu0
    %v8314 = vadd.f32 %v8296, %v8313
    %v8315 = vpop.f32.mrf.mxu0
    %8316 = vdwg.mxu0
    %8317 = vmatpush.bf16.msra.mxu0 %v8112
    %8318 = vmatpush.bf16.msra.mxu0 %v8109
    %8319 = vmatpush.bf16.msra.mxu0 %v8106
    %8320 = vmatpush.bf16.msra.mxu0 %v8103
    %8321 = vmatpush.bf16.msra.mxu0 %v8100
    %8322 = vmatpush.bf16.msra.mxu0 %v8097
    %8323 = vmatpush.bf16.msra.mxu0 %v8094
    %8324 = vmatpush.bf16.msra.mxu0 %v8091
    %8325 = vmatmul.bf16.gmra.mxu0 %v6102
    %v8326 = vpop.f32.mrf.mxu0
    %v8327 = vadd.f32 0.0, %v8326
    %v8328 = vpop.f32.mrf.mxu0
    %v8329 = vadd.f32 0.0, %v8328
    %8330 = vmatmul.bf16.gmra.mxu0 %v6105
    %v8331 = vpop.f32.mrf.mxu0
    %v8332 = vadd.f32 0.0, %v8331
    %v8333 = vpop.f32.mrf.mxu0
    %8334 = vdwg.mxu0
    %8335 = vmatpush.bf16.msra.mxu0 %v8136
    %8336 = vmatpush.bf16.msra.mxu0 %v8133
    %8337 = vmatpush.bf16.msra.mxu0 %v8130
    %8338 = vmatpush.bf16.msra.mxu0 %v8127
    %8339 = vmatpush.bf16.msra.mxu0 %v8124
    %8340 = vmatpush.bf16.msra.mxu0 %v8121
    %8341 = vmatpush.bf16.msra.mxu0 %v8118
    %8342 = vmatpush.bf16.msra.mxu0 %v8115
    %8343 = vmatmul.bf16.gmra.mxu0 %v6103
    %v8344 = vpop.f32.mrf.mxu0
    %v8345 = vadd.f32 %v8327, %v8344
    %v8346 = vpop.f32.mrf.mxu0
    %v8347 = vadd.f32 %v8329, %v8346
    %8348 = vmatmul.bf16.gmra.mxu0 %v6106
    %v8349 = vpop.f32.mrf.mxu0
    %v8350 = vadd.f32 %v8332, %v8349
    %v8351 = vpop.f32.mrf.mxu0
    %8352 = vdwg.mxu0
    %8353 = vmatpush.bf16.msra.mxu0 0
    %8354 = vmatpush.bf16.msra.mxu0 0
    %8355 = vmatpush.bf16.msra.mxu0 0
    %8356 = vmatpush.bf16.msra.mxu0 0
    %8357 = vmatpush.bf16.msra.mxu0 %v8148
    %8358 = vmatpush.bf16.msra.mxu0 %v8145
    %8359 = vmatpush.bf16.msra.mxu0 %v8142
    %8360 = vmatpush.bf16.msra.mxu0 %v8139
    %8361 = vmatmul.bf16.gmra.mxu0 %v7078
    %v8362 = vpop.f32.mrf.mxu0
    %v8363 = vadd.f32 %v8345, %v8362
    %v8364 = vpop.f32.mrf.mxu0
    %v8365 = vadd.f32 %v8347, %v8364
    %8366 = vmatmul.bf16.gmra.mxu0 %v7081
    %v8367 = vpop.f32.mrf.mxu0
    %v8368 = vadd.f32 %v8350, %v8367
    %v8369 = vpop.f32.mrf.mxu0
    %8370 = vdwg.mxu0
    %v8371 = vld [vmem:[%s5] sm:$0x7]
    %v8372 = vadd.f32 %v6560, %v7129
    %v8373 = vadd.f32 %v6614, %v7183
    %v8374 = vadd.f32 %v6668, %v7237
    %v8375 = vadd.f32 %v6562, %v7131
    %v8376 = vadd.f32 %v6616, %v7185
    %v8377 = vadd.f32 %v6670, %v7239
    %v8378 = vadd.f32 %v6565, %v7134
    %v8379 = vadd.f32 %v6619, %v7188
    %v8380 = vadd.f32 %v6673, %v7242
    %v8390 = vrot.slane %v7692, 2
    %v8391 = vrot.slane %v7694, 2
    %v8392 = vsel %vm5465, %v8390, %v8391
    %v8393 = vrot.slane %v7746, 2
    %v8394 = vrot.slane %v7748, 2
    %v8395 = vsel %vm5465, %v8393, %v8394
    %v8396 = vrot.slane %v7800, 2
    %v8397 = vrot.slane %v7802, 2
    %v8398 = vsel %vm5465, %v8396, %v8397
    %v8399 = vrot.slane %v7697, 2
    %v8400 = vsel %vm5465, %v8391, %v8399
    %v8401 = vrot.slane %v7751, 2
    %v8402 = vsel %vm5465, %v8394, %v8401
    %v8403 = vrot.slane %v7805, 2
    %v8404 = vsel %vm5465, %v8397, %v8403
    %v8414 = vadd.f32 %v8372, %v8392
    %v8415 = vadd.f32 %v8373, %v8395
    %v8416 = vadd.f32 %v8374, %v8398
    %v8417 = vadd.f32 %v8375, %v8400
    %v8418 = vadd.f32 %v8376, %v8402
    %v8419 = vadd.f32 %v8377, %v8404
    %v8420 = vadd.f32 %v8378, %v8399
    %v8421 = vadd.f32 %v8379, %v8401
    %v8422 = vadd.f32 %v8380, %v8403
    %v8432 = vrot.slane %v8255, 2
    %v8433 = vrot.slane %v8257, 2
    %v8434 = vsel %vm5465, %v8432, %v8433
    %v8435 = vrot.slane %v8309, 2
    %v8436 = vrot.slane %v8311, 2
    %v8437 = vsel %vm5465, %v8435, %v8436
    %v8438 = vrot.slane %v8363, 2
    %v8439 = vrot.slane %v8365, 2
    %v8440 = vsel %vm5465, %v8438, %v8439
    %v8441 = vrot.slane %v8260, 2
    %v8442 = vsel %vm5465, %v8433, %v8441
    %v8443 = vrot.slane %v8314, 2
    %v8444 = vsel %vm5465, %v8436, %v8443
    %v8445 = vrot.slane %v8368, 2
    %v8446 = vsel %vm5465, %v8439, %v8445
    %v8456 = vadd.f32 %v8414, %v8434
    %v8457 = vadd.f32 %v8415, %v8437
    %v8458 = vadd.f32 %v8416, %v8440
    %v8459 = vadd.f32 %v8417, %v8442
    %v8460 = vadd.f32 %v8418, %v8444
    %v8461 = vadd.f32 %v8419, %v8446
    %v8462 = vadd.f32 %v8420, %v8441
    %v8463 = vadd.f32 %v8421, %v8443
    %v8464 = vadd.f32 %v8422, %v8445
    %v8466 = vperm.slane %v8371, 0
    %v8467 = vperm.slane %v8371, 1
    %v8468 = vperm.slane %v8371, 2
    %v8472 = vadd.f32 %v8456, %v8466
    %v8473 = vadd.f32 %v8457, %v8467
    %v8474 = vadd.f32 %v8458, %v8468
    %v8475 = vadd.f32 %v8459, %v8466
    %v8476 = vadd.f32 %v8460, %v8467
    %v8477 = vadd.f32 %v8461, %v8468
    %v8478 = vadd.f32 %v8462, %v8466
    %v8479 = vadd.f32 %v8463, %v8467
    %v8480 = vadd.f32 %v8464, %v8468
    %v8481 = vmax.f32 %v8472, 0.0
    %v8482 = vmax.f32 %v8473, 0.0
    %v8483 = vmax.f32 %v8474, 0.0
    %v8484 = vmax.f32 %v8475, 0.0
    %v8485 = vmax.f32 %v8476, 0.0
    %v8486 = vmax.f32 %v8477, 0.0
    %v8487 = vmax.f32 %v8478, 0.0
    %v8488 = vmax.f32 %v8479, 0.0
    %v8489 = vmax.f32 %v8480, 0.0
    %v8490 = vpack.c.bf16 %v8482, %v8481
    %v8491 = vpack.c.bf16 %v8483, %v8483
    %v8492 = vpack.c.bf16 %v8485, %v8484
    %v8493 = vpack.c.bf16 %v8486, %v8486
    %v8494 = vpack.c.bf16 %v8488, %v8487
    %v8495 = vpack.c.bf16 %v8489, %v8489
    %v8496 = vld [vmem:[%s6] sm:$0xff]
    %v8497 = vld [vmem:[%s6 + $0x8] sm:$0xff]
    %v8498 = vld [vmem:[%s6 + $0x10] sm:$0xff]
    %v8499 = vld [vmem:[%s6 + $0x18] sm:$0xff]
    %v8500 = vld [vmem:[%s6 + $0x20] sm:$0xff]
    %v8501 = vld [vmem:[%s6 + $0x28] sm:$0xff]
    %v8502 = vld [vmem:[%s6 + $0x30] sm:$0xff]
    %v8503 = vld [vmem:[%s6 + $0x38] sm:$0xff]
    %v8504 = vld [vmem:[%s6 + $0x40] sm:$0xff]
    %v8505 = vld [vmem:[%s6 + $0x48] sm:$0xff]
    %v8506 = vld [vmem:[%s6 + $0x50] sm:$0xff]
    %v8507 = vld [vmem:[%s6 + $0x58] sm:$0xff]
    %v8508 = vld [vmem:[%s6 + $0x60] sm:$0xff]
    %v8509 = vld [vmem:[%s6 + $0x68] sm:$0xff]
    %v8510 = vld [vmem:[%s6 + $0x70] sm:$0xff]
    %v8511 = vld [vmem:[%s6 + $0x78] sm:$0xff]
    %v8512 = vld [vmem:[%s6 + $0x80] sm:$0xff]
    %v8513 = vld [vmem:[%s6 + $0x88] sm:$0xff]
    %v8514 = vld [vmem:[%s6 + $0x90] sm:$0xff]
    %v8515 = vld [vmem:[%s6 + $0x98] sm:$0xff]
    %v8516 = vld [vmem:[%s6 + $0xa0] sm:$0xff]
    %v8517 = vld [vmem:[%s6 + $0xa8] sm:$0xff]
    %v8518 = vld [vmem:[%s6 + $0xb0] sm:$0xff]
    %v8519 = vld [vmem:[%s6 + $0xb8] sm:$0xff]
    %v8520 = vld [vmem:[%s6 + $0xc0] sm:$0xff]
    %v8521 = vld [vmem:[%s6 + $0xc8] sm:$0xff]
    %v8522 = vld [vmem:[%s6 + $0xd0] sm:$0xff]
    %v8523 = vld [vmem:[%s6 + $0xd8] sm:$0xff]
    %v8524 = vld [vmem:[%s6 + $0xe0] sm:$0xff]
    %v8525 = vld [vmem:[%s6 + $0xe8] sm:$0xff]
    %v8526 = vld [vmem:[%s6 + $0xf0] sm:$0xff]
    %v8527 = vld [vmem:[%s6 + $0xf8] sm:$0xff]
    %v8528 = vld [vmem:[%s6 + $0x100] sm:$0xff]
    %v8529 = vld [vmem:[%s6 + $0x108] sm:$0xff]
    %v8530 = vld [vmem:[%s6 + $0x110] sm:$0xff]
    %v8531 = vld [vmem:[%s6 + $0x118] sm:$0xff]
    %s8532 = scalar_lea.vmem %s6, 288
    %v8533 = vld [vmem:[%s8532] sm:$0xff]
    %v8534 = vld [vmem:[%s8532 + $0x8] sm:$0xff]
    %v8535 = vld [vmem:[%s8532 + $0x10] sm:$0xff]
    %v8536 = vld [vmem:[%s8532 + $0x18] sm:$0xff]
    %v8537 = vld [vmem:[%s8532 + $0x20] sm:$0xff]
    %v8538 = vld [vmem:[%s8532 + $0x28] sm:$0xff]
    %v8539 = vld [vmem:[%s8532 + $0x30] sm:$0xff]
    %v8540 = vld [vmem:[%s8532 + $0x38] sm:$0xff]
    %v8541 = vld [vmem:[%s8532 + $0x40] sm:$0xff]
    %v8542 = vld [vmem:[%s8532 + $0x48] sm:$0xff]
    %v8543 = vld [vmem:[%s8532 + $0x50] sm:$0xff]
    %v8544 = vld [vmem:[%s8532 + $0x58] sm:$0xff]
    %v8545 = vld [vmem:[%s8532 + $0x60] sm:$0xff]
    %v8546 = vld [vmem:[%s8532 + $0x68] sm:$0xff]
    %v8547 = vld [vmem:[%s8532 + $0x70] sm:$0xff]
    %v8548 = vld [vmem:[%s8532 + $0x78] sm:$0xff]
    %v8549 = vld [vmem:[%s8532 + $0x80] sm:$0xff]
    %v8550 = vld [vmem:[%s8532 + $0x88] sm:$0xff]
    %v8551 = vld [vmem:[%s8532 + $0x90] sm:$0xff]
    %v8552 = vld [vmem:[%s8532 + $0x98] sm:$0xff]
    %v8553 = vld [vmem:[%s8532 + $0xa0] sm:$0xff]
    %v8554 = vld [vmem:[%s8532 + $0xa8] sm:$0xff]
    %v8555 = vld [vmem:[%s8532 + $0xb0] sm:$0xff]
    %v8556 = vld [vmem:[%s8532 + $0xb8] sm:$0xff]
    %v8557 = vld [vmem:[%s8532 + $0xc0] sm:$0xff]
    %v8558 = vld [vmem:[%s8532 + $0xc8] sm:$0xff]
    %v8559 = vld [vmem:[%s8532 + $0xd0] sm:$0xff]
    %v8560 = vld [vmem:[%s8532 + $0xd8] sm:$0xff]
    %v8561 = vld [vmem:[%s8532 + $0xe0] sm:$0xff]
    %v8562 = vld [vmem:[%s8532 + $0xe8] sm:$0xff]
    %v8563 = vld [vmem:[%s8532 + $0xf0] sm:$0xff]
    %v8564 = vld [vmem:[%s8532 + $0xf8] sm:$0xff]
    %v8565 = vld [vmem:[%s8532 + $0x100] sm:$0xff]
    %v8566 = vld [vmem:[%s8532 + $0x108] sm:$0xff]
    %v8567 = vld [vmem:[%s8532 + $0x110] sm:$0xff]
    %v8568 = vld [vmem:[%s8532 + $0x118] sm:$0xff]
    %v8571 = vunpack.c.l.b16 %v8490
    %v8572 = vunpack.c.h.b16 %v8490
    %v8573 = vunpack.c.l.b16 %v8491
    %v8574 = vpack.c.b16 %v8571, %v8571
    %v8575 = vpack.c.b16 %v8572, %v8572
    %v8576 = vpack.c.b16 %v8573, %v8573
    %v8577 = vrot.slane %v8574, 1
    %v8578 = vrot.slane %v8575, 1
    %v8579 = vrot.slane %v8576, 1
    %v8618 = vunpack.c.l.b16 %v8533
    %v8619 = vunpack.c.h.b16 %v8533
    %v8620 = vunpack.c.l.b16 %v8534
    %v8621 = vunpack.c.h.b16 %v8534
    %v8622 = vunpack.c.l.b16 %v8535
    %v8623 = vunpack.c.h.b16 %v8535
    %v8624 = vunpack.c.l.b16 %v8536
    %v8625 = vunpack.c.h.b16 %v8536
    %v8626 = vunpack.c.l.b16 %v8537
    %v8627 = vunpack.c.h.b16 %v8537
    %v8628 = vunpack.c.l.b16 %v8538
    %v8629 = vunpack.c.h.b16 %v8538
    %v8630 = vunpack.c.l.b16 %v8539
    %v8631 = vunpack.c.h.b16 %v8539
    %v8632 = vunpack.c.l.b16 %v8540
    %v8633 = vunpack.c.h.b16 %v8540
    %v8634 = vunpack.c.l.b16 %v8541
    %v8635 = vunpack.c.h.b16 %v8541
    %v8636 = vunpack.c.l.b16 %v8542
    %v8637 = vunpack.c.h.b16 %v8542
    %v8638 = vunpack.c.l.b16 %v8543
    %v8639 = vunpack.c.h.b16 %v8543
    %v8640 = vunpack.c.l.b16 %v8544
    %v8641 = vunpack.c.h.b16 %v8544
    %v8642 = vunpack.c.l.b16 %v8545
    %v8643 = vunpack.c.h.b16 %v8545
    %v8644 = vunpack.c.l.b16 %v8546
    %v8645 = vunpack.c.h.b16 %v8546
    %v8646 = vunpack.c.l.b16 %v8547
    %v8647 = vunpack.c.h.b16 %v8547
    %v8648 = vunpack.c.l.b16 %v8548
    %v8649 = vunpack.c.h.b16 %v8548
    %v8650 = vunpack.c.l.b16 %v8549
    %v8651 = vunpack.c.h.b16 %v8549
    %v8652 = vunpack.c.l.b16 %v8550
    %v8653 = vunpack.c.h.b16 %v8550
    %v8654 = vunpack.c.l.b16 %v8551
    %v8655 = vunpack.c.h.b16 %v8551
    %v8656 = vunpack.c.l.b16 %v8552
    %v8657 = vunpack.c.h.b16 %v8552
    %v8658 = vunpack.c.l.b16 %v8553
    %v8659 = vunpack.c.h.b16 %v8553
    %v8660 = vunpack.c.l.b16 %v8554
    %v8661 = vunpack.c.h.b16 %v8554
    %v8662 = vunpack.c.l.b16 %v8555
    %v8663 = vunpack.c.h.b16 %v8555
    %v8664 = vunpack.c.l.b16 %v8556
    %v8665 = vunpack.c.h.b16 %v8556
    %v8666 = vunpack.c.l.b16 %v8557
    %v8667 = vunpack.c.h.b16 %v8557
    %v8668 = vunpack.c.l.b16 %v8558
    %v8669 = vunpack.c.h.b16 %v8558
    %v8670 = vunpack.c.l.b16 %v8559
    %v8671 = vunpack.c.h.b16 %v8559
    %v8672 = vunpack.c.l.b16 %v8560
    %v8673 = vunpack.c.h.b16 %v8560
    %v8674 = vunpack.c.l.b16 %v8561
    %v8675 = vunpack.c.h.b16 %v8561
    %v8676 = vunpack.c.l.b16 %v8562
    %v8677 = vunpack.c.h.b16 %v8562
    %v8678 = vunpack.c.l.b16 %v8563
    %v8679 = vunpack.c.h.b16 %v8563
    %v8680 = vunpack.c.l.b16 %v8564
    %v8681 = vunpack.c.h.b16 %v8564
    %v8682 = vunpack.c.l.b16 %v8565
    %v8683 = vunpack.c.h.b16 %v8565
    %v8684 = vunpack.c.l.b16 %v8566
    %v8685 = vunpack.c.h.b16 %v8566
    %v8686 = vunpack.c.l.b16 %v8567
    %v8687 = vunpack.c.h.b16 %v8567
    %v8688 = vunpack.c.l.b16 %v8568
    %v8689 = vunpack.c.h.b16 %v8568
    %v8690 = vpack.c.b16 %v8620, %v8618
    %v8691 = vpack.c.b16 %v8621, %v8619
    %v8692 = vpack.c.b16 %v8624, %v8622
    %v8693 = vpack.c.b16 %v8625, %v8623
    %v8694 = vpack.c.b16 %v8628, %v8626
    %v8695 = vpack.c.b16 %v8629, %v8627
    %v8696 = vpack.c.b16 %v8632, %v8630
    %v8697 = vpack.c.b16 %v8633, %v8631
    %v8698 = vpack.c.b16 %v8636, %v8634
    %v8699 = vpack.c.b16 %v8637, %v8635
    %v8700 = vpack.c.b16 %v8640, %v8638
    %v8701 = vpack.c.b16 %v8641, %v8639
    %v8702 = vpack.c.b16 %v8644, %v8642
    %v8703 = vpack.c.b16 %v8645, %v8643
    %v8704 = vpack.c.b16 %v8648, %v8646
    %v8705 = vpack.c.b16 %v8649, %v8647
    %v8706 = vpack.c.b16 %v8652, %v8650
    %v8707 = vpack.c.b16 %v8653, %v8651
    %v8708 = vpack.c.b16 %v8656, %v8654
    %v8709 = vpack.c.b16 %v8657, %v8655
    %v8710 = vpack.c.b16 %v8660, %v8658
    %v8711 = vpack.c.b16 %v8661, %v8659
    %v8712 = vpack.c.b16 %v8664, %v8662
    %v8713 = vpack.c.b16 %v8665, %v8663
    %v8714 = vpack.c.b16 %v8668, %v8666
    %v8715 = vpack.c.b16 %v8669, %v8667
    %v8716 = vpack.c.b16 %v8672, %v8670
    %v8717 = vpack.c.b16 %v8673, %v8671
    %v8718 = vpack.c.b16 %v8676, %v8674
    %v8719 = vpack.c.b16 %v8677, %v8675
    %v8720 = vpack.c.b16 %v8680, %v8678
    %v8721 = vpack.c.b16 %v8681, %v8679
    %v8722 = vpack.c.b16 %v8684, %v8682
    %v8723 = vpack.c.b16 %v8685, %v8683
    %v8724 = vpack.c.b16 %v8688, %v8686
    %v8725 = vpack.c.b16 %v8689, %v8687
    %vm8762 = vcmask 261120
    %v8764 = vsel %vm8762, %v8579, 0
    %8766 = vmatpush.bf16.msra.mxu0 %v8704
    %8767 = vmatpush.bf16.msra.mxu0 %v8702
    %8768 = vmatpush.bf16.msra.mxu0 %v8700
    %8769 = vmatpush.bf16.msra.mxu0 %v8698
    %8770 = vmatpush.bf16.msra.mxu0 %v8696
    %8771 = vmatpush.bf16.msra.mxu0 %v8694
    %8772 = vmatpush.bf16.msra.mxu0 %v8692
    %8773 = vmatpush.bf16.msra.mxu0 %v8690
    %8774 = vmatmul.bf16.gmra.mxu0 %v8577
    %v8775 = vpop.f32.mrf.mxu0
    %v8776 = vadd.f32 0.0, %v8775
    %v8777 = vpop.f32.mrf.mxu0
    %8778 = vdwg.mxu0
    %8779 = vmatpush.bf16.msra.mxu0 %v8720
    %8780 = vmatpush.bf16.msra.mxu0 %v8718
    %8781 = vmatpush.bf16.msra.mxu0 %v8716
    %8782 = vmatpush.bf16.msra.mxu0 %v8714
    %8783 = vmatpush.bf16.msra.mxu0 %v8712
    %8784 = vmatpush.bf16.msra.mxu0 %v8710
    %8785 = vmatpush.bf16.msra.mxu0 %v8708
    %8786 = vmatpush.bf16.msra.mxu0 %v8706
    %8787 = vmatmul.bf16.gmra.mxu0 %v8578
    %v8788 = vpop.f32.mrf.mxu0
    %v8789 = vadd.f32 %v8776, %v8788
    %v8790 = vpop.f32.mrf.mxu0
    %8791 = vdwg.mxu0
    %8792 = vmatpush.bf16.msra.mxu0 0
    %8793 = vmatpush.bf16.msra.mxu0 0
    %8794 = vmatpush.bf16.msra.mxu0 0
    %8795 = vmatpush.bf16.msra.mxu0 0
    %8796 = vmatpush.bf16.msra.mxu0 0
    %8797 = vmatpush.bf16.msra.mxu0 0
    %8798 = vmatpush.bf16.msra.mxu0 %v8724
    %8799 = vmatpush.bf16.msra.mxu0 %v8722
    %8800 = vmatmul.bf16.gmra.mxu0 %v8764
    %v8801 = vpop.f32.mrf.mxu0
    %v8802 = vadd.f32 %v8789, %v8801
    %v8803 = vpop.f32.mrf.mxu0
    %8804 = vdwg.mxu0
    %8805 = vmatpush.bf16.msra.mxu0 %v8705
    %8806 = vmatpush.bf16.msra.mxu0 %v8703
    %8807 = vmatpush.bf16.msra.mxu0 %v8701
    %8808 = vmatpush.bf16.msra.mxu0 %v8699
    %8809 = vmatpush.bf16.msra.mxu0 %v8697
    %8810 = vmatpush.bf16.msra.mxu0 %v8695
    %8811 = vmatpush.bf16.msra.mxu0 %v8693
    %8812 = vmatpush.bf16.msra.mxu0 %v8691
    %8813 = vmatmul.bf16.gmra.mxu0 %v8577
    %v8814 = vpop.f32.mrf.mxu0
    %v8815 = vadd.f32 0.0, %v8814
    %v8816 = vpop.f32.mrf.mxu0
    %8817 = vdwg.mxu0
    %8818 = vmatpush.bf16.msra.mxu0 %v8721
    %8819 = vmatpush.bf16.msra.mxu0 %v8719
    %8820 = vmatpush.bf16.msra.mxu0 %v8717
    %8821 = vmatpush.bf16.msra.mxu0 %v8715
    %8822 = vmatpush.bf16.msra.mxu0 %v8713
    %8823 = vmatpush.bf16.msra.mxu0 %v8711
    %8824 = vmatpush.bf16.msra.mxu0 %v8709
    %8825 = vmatpush.bf16.msra.mxu0 %v8707
    %8826 = vmatmul.bf16.gmra.mxu0 %v8578
    %v8827 = vpop.f32.mrf.mxu0
    %v8828 = vadd.f32 %v8815, %v8827
    %v8829 = vpop.f32.mrf.mxu0
    %8830 = vdwg.mxu0
    %8831 = vmatpush.bf16.msra.mxu0 0
    %8832 = vmatpush.bf16.msra.mxu0 0
    %8833 = vmatpush.bf16.msra.mxu0 0
    %8834 = vmatpush.bf16.msra.mxu0 0
    %8835 = vmatpush.bf16.msra.mxu0 0
    %8836 = vmatpush.bf16.msra.mxu0 0
    %8837 = vmatpush.bf16.msra.mxu0 %v8725
    %8838 = vmatpush.bf16.msra.mxu0 %v8723
    %8839 = vmatmul.bf16.gmra.mxu0 %v8764
    %v8840 = vpop.f32.mrf.mxu0
    %v8841 = vadd.f32 %v8828, %v8840
    %v8842 = vpop.f32.mrf.mxu0
    %8843 = vdwg.mxu0
    %v8882 = vunpack.c.l.b16 %v8496
    %v8883 = vunpack.c.h.b16 %v8496
    %v8884 = vunpack.c.l.b16 %v8497
    %v8885 = vunpack.c.h.b16 %v8497
    %v8886 = vunpack.c.l.b16 %v8498
    %v8887 = vunpack.c.h.b16 %v8498
    %v8888 = vunpack.c.l.b16 %v8499
    %v8889 = vunpack.c.h.b16 %v8499
    %v8890 = vunpack.c.l.b16 %v8500
    %v8891 = vunpack.c.h.b16 %v8500
    %v8892 = vunpack.c.l.b16 %v8501
    %v8893 = vunpack.c.h.b16 %v8501
    %v8894 = vunpack.c.l.b16 %v8502
    %v8895 = vunpack.c.h.b16 %v8502
    %v8896 = vunpack.c.l.b16 %v8503
    %v8897 = vunpack.c.h.b16 %v8503
    %v8898 = vunpack.c.l.b16 %v8504
    %v8899 = vunpack.c.h.b16 %v8504
    %v8900 = vunpack.c.l.b16 %v8505
    %v8901 = vunpack.c.h.b16 %v8505
    %v8902 = vunpack.c.l.b16 %v8506
    %v8903 = vunpack.c.h.b16 %v8506
    %v8904 = vunpack.c.l.b16 %v8507
    %v8905 = vunpack.c.h.b16 %v8507
    %v8906 = vunpack.c.l.b16 %v8508
    %v8907 = vunpack.c.h.b16 %v8508
    %v8908 = vunpack.c.l.b16 %v8509
    %v8909 = vunpack.c.h.b16 %v8509
    %v8910 = vunpack.c.l.b16 %v8510
    %v8911 = vunpack.c.h.b16 %v8510
    %v8912 = vunpack.c.l.b16 %v8511
    %v8913 = vunpack.c.h.b16 %v8511
    %v8914 = vunpack.c.l.b16 %v8512
    %v8915 = vunpack.c.h.b16 %v8512
    %v8916 = vunpack.c.l.b16 %v8513
    %v8917 = vunpack.c.h.b16 %v8513
    %v8918 = vunpack.c.l.b16 %v8514
    %v8919 = vunpack.c.h.b16 %v8514
    %v8920 = vunpack.c.l.b16 %v8515
    %v8921 = vunpack.c.h.b16 %v8515
    %v8922 = vunpack.c.l.b16 %v8516
    %v8923 = vunpack.c.h.b16 %v8516
    %v8924 = vunpack.c.l.b16 %v8517
    %v8925 = vunpack.c.h.b16 %v8517
    %v8926 = vunpack.c.l.b16 %v8518
    %v8927 = vunpack.c.h.b16 %v8518
    %v8928 = vunpack.c.l.b16 %v8519
    %v8929 = vunpack.c.h.b16 %v8519
    %v8930 = vunpack.c.l.b16 %v8520
    %v8931 = vunpack.c.h.b16 %v8520
    %v8932 = vunpack.c.l.b16 %v8521
    %v8933 = vunpack.c.h.b16 %v8521
    %v8934 = vunpack.c.l.b16 %v8522
    %v8935 = vunpack.c.h.b16 %v8522
    %v8936 = vunpack.c.l.b16 %v8523
    %v8937 = vunpack.c.h.b16 %v8523
    %v8938 = vunpack.c.l.b16 %v8524
    %v8939 = vunpack.c.h.b16 %v8524
    %v8940 = vunpack.c.l.b16 %v8525
    %v8941 = vunpack.c.h.b16 %v8525
    %v8942 = vunpack.c.l.b16 %v8526
    %v8943 = vunpack.c.h.b16 %v8526
    %v8944 = vunpack.c.l.b16 %v8527
    %v8945 = vunpack.c.h.b16 %v8527
    %v8946 = vunpack.c.l.b16 %v8528
    %v8947 = vunpack.c.h.b16 %v8528
    %v8948 = vunpack.c.l.b16 %v8529
    %v8949 = vunpack.c.h.b16 %v8529
    %v8950 = vunpack.c.l.b16 %v8530
    %v8951 = vunpack.c.h.b16 %v8530
    %v8952 = vunpack.c.l.b16 %v8531
    %v8953 = vunpack.c.h.b16 %v8531
    %v8954 = vpack.c.b16 %v8884, %v8882
    %v8955 = vpack.c.b16 %v8885, %v8883
    %v8956 = vpack.c.b16 %v8888, %v8886
    %v8957 = vpack.c.b16 %v8889, %v8887
    %v8958 = vpack.c.b16 %v8892, %v8890
    %v8959 = vpack.c.b16 %v8893, %v8891
    %v8960 = vpack.c.b16 %v8896, %v8894
    %v8961 = vpack.c.b16 %v8897, %v8895
    %v8962 = vpack.c.b16 %v8900, %v8898
    %v8963 = vpack.c.b16 %v8901, %v8899
    %v8964 = vpack.c.b16 %v8904, %v8902
    %v8965 = vpack.c.b16 %v8905, %v8903
    %v8966 = vpack.c.b16 %v8908, %v8906
    %v8967 = vpack.c.b16 %v8909, %v8907
    %v8968 = vpack.c.b16 %v8912, %v8910
    %v8969 = vpack.c.b16 %v8913, %v8911
    %v8970 = vpack.c.b16 %v8916, %v8914
    %v8971 = vpack.c.b16 %v8917, %v8915
    %v8972 = vpack.c.b16 %v8920, %v8918
    %v8973 = vpack.c.b16 %v8921, %v8919
    %v8974 = vpack.c.b16 %v8924, %v8922
    %v8975 = vpack.c.b16 %v8925, %v8923
    %v8976 = vpack.c.b16 %v8928, %v8926
    %v8977 = vpack.c.b16 %v8929, %v8927
    %v8978 = vpack.c.b16 %v8932, %v8930
    %v8979 = vpack.c.b16 %v8933, %v8931
    %v8980 = vpack.c.b16 %v8936, %v8934
    %v8981 = vpack.c.b16 %v8937, %v8935
    %v8982 = vpack.c.b16 %v8940, %v8938
    %v8983 = vpack.c.b16 %v8941, %v8939
    %v8984 = vpack.c.b16 %v8944, %v8942
    %v8985 = vpack.c.b16 %v8945, %v8943
    %v8986 = vpack.c.b16 %v8948, %v8946
    %v8987 = vpack.c.b16 %v8949, %v8947
    %v8988 = vpack.c.b16 %v8952, %v8950
    %v8989 = vpack.c.b16 %v8953, %v8951
    %v9027 = vsel %vm8762, %v8576, 0
    %9029 = vmatpush.bf16.msra.mxu0 %v8968
    %9030 = vmatpush.bf16.msra.mxu0 %v8966
    %9031 = vmatpush.bf16.msra.mxu0 %v8964
    %9032 = vmatpush.bf16.msra.mxu0 %v8962
    %9033 = vmatpush.bf16.msra.mxu0 %v8960
    %9034 = vmatpush.bf16.msra.mxu0 %v8958
    %9035 = vmatpush.bf16.msra.mxu0 %v8956
    %9036 = vmatpush.bf16.msra.mxu0 %v8954
    %9037 = vmatmul.bf16.gmra.mxu0 %v8574
    %v9038 = vpop.f32.mrf.mxu0
    %v9039 = vadd.f32 %v8802, %v9038
    %v9040 = vpop.f32.mrf.mxu0
    %9041 = vdwg.mxu0
    %9042 = vmatpush.bf16.msra.mxu0 %v8984
    %9043 = vmatpush.bf16.msra.mxu0 %v8982
    %9044 = vmatpush.bf16.msra.mxu0 %v8980
    %9045 = vmatpush.bf16.msra.mxu0 %v8978
    %9046 = vmatpush.bf16.msra.mxu0 %v8976
    %9047 = vmatpush.bf16.msra.mxu0 %v8974
    %9048 = vmatpush.bf16.msra.mxu0 %v8972
    %9049 = vmatpush.bf16.msra.mxu0 %v8970
    %9050 = vmatmul.bf16.gmra.mxu0 %v8575
    %v9051 = vpop.f32.mrf.mxu0
    %v9052 = vadd.f32 %v9039, %v9051
    %v9053 = vpop.f32.mrf.mxu0
    %9054 = vdwg.mxu0
    %9055 = vmatpush.bf16.msra.mxu0 0
    %9056 = vmatpush.bf16.msra.mxu0 0
    %9057 = vmatpush.bf16.msra.mxu0 0
    %9058 = vmatpush.bf16.msra.mxu0 0
    %9059 = vmatpush.bf16.msra.mxu0 0
    %9060 = vmatpush.bf16.msra.mxu0 0
    %9061 = vmatpush.bf16.msra.mxu0 %v8988
    %9062 = vmatpush.bf16.msra.mxu0 %v8986
    %9063 = vmatmul.bf16.gmra.mxu0 %v9027
    %v9064 = vpop.f32.mrf.mxu0
    %v9065 = vadd.f32 %v9052, %v9064
    %v9066 = vpop.f32.mrf.mxu0
    %9067 = vdwg.mxu0
    %9068 = vmatpush.bf16.msra.mxu0 %v8969
    %9069 = vmatpush.bf16.msra.mxu0 %v8967
    %9070 = vmatpush.bf16.msra.mxu0 %v8965
    %9071 = vmatpush.bf16.msra.mxu0 %v8963
    %9072 = vmatpush.bf16.msra.mxu0 %v8961
    %9073 = vmatpush.bf16.msra.mxu0 %v8959
    %9074 = vmatpush.bf16.msra.mxu0 %v8957
    %9075 = vmatpush.bf16.msra.mxu0 %v8955
    %9076 = vmatmul.bf16.gmra.mxu0 %v8574
    %v9077 = vpop.f32.mrf.mxu0
    %v9078 = vadd.f32 %v8841, %v9077
    %v9079 = vpop.f32.mrf.mxu0
    %9080 = vdwg.mxu0
    %9081 = vmatpush.bf16.msra.mxu0 %v8985
    %9082 = vmatpush.bf16.msra.mxu0 %v8983
    %9083 = vmatpush.bf16.msra.mxu0 %v8981
    %9084 = vmatpush.bf16.msra.mxu0 %v8979
    %9085 = vmatpush.bf16.msra.mxu0 %v8977
    %9086 = vmatpush.bf16.msra.mxu0 %v8975
    %9087 = vmatpush.bf16.msra.mxu0 %v8973
    %9088 = vmatpush.bf16.msra.mxu0 %v8971
    %9089 = vmatmul.bf16.gmra.mxu0 %v8575
    %v9090 = vpop.f32.mrf.mxu0
    %v9091 = vadd.f32 %v9078, %v9090
    %v9092 = vpop.f32.mrf.mxu0
    %9093 = vdwg.mxu0
    %9094 = vmatpush.bf16.msra.mxu0 0
    %9095 = vmatpush.bf16.msra.mxu0 0
    %9096 = vmatpush.bf16.msra.mxu0 0
    %9097 = vmatpush.bf16.msra.mxu0 0
    %9098 = vmatpush.bf16.msra.mxu0 0
    %9099 = vmatpush.bf16.msra.mxu0 0
    %9100 = vmatpush.bf16.msra.mxu0 %v8989
    %9101 = vmatpush.bf16.msra.mxu0 %v8987
    %9102 = vmatmul.bf16.gmra.mxu0 %v9027
    %v9103 = vpop.f32.mrf.mxu0
    %v9104 = vadd.f32 %v9091, %v9103
    %v9105 = vpop.f32.mrf.mxu0
    %9106 = vdwg.mxu0
    %s9107 = scalar_lea.vmem %s6, 576
    %v9108 = vld [vmem:[%s9107] sm:$0xff]
    %v9109 = vld [vmem:[%s9107 + $0x8] sm:$0xff]
    %v9110 = vld [vmem:[%s9107 + $0x10] sm:$0xff]
    %v9111 = vld [vmem:[%s9107 + $0x18] sm:$0xff]
    %v9112 = vld [vmem:[%s9107 + $0x20] sm:$0xff]
    %v9113 = vld [vmem:[%s9107 + $0x28] sm:$0xff]
    %v9114 = vld [vmem:[%s9107 + $0x30] sm:$0xff]
    %v9115 = vld [vmem:[%s9107 + $0x38] sm:$0xff]
    %v9116 = vld [vmem:[%s9107 + $0x40] sm:$0xff]
    %v9117 = vld [vmem:[%s9107 + $0x48] sm:$0xff]
    %v9118 = vld [vmem:[%s9107 + $0x50] sm:$0xff]
    %v9119 = vld [vmem:[%s9107 + $0x58] sm:$0xff]
    %v9120 = vld [vmem:[%s9107 + $0x60] sm:$0xff]
    %v9121 = vld [vmem:[%s9107 + $0x68] sm:$0xff]
    %v9122 = vld [vmem:[%s9107 + $0x70] sm:$0xff]
    %v9123 = vld [vmem:[%s9107 + $0x78] sm:$0xff]
    %v9124 = vld [vmem:[%s9107 + $0x80] sm:$0xff]
    %v9125 = vld [vmem:[%s9107 + $0x88] sm:$0xff]
    %v9126 = vld [vmem:[%s9107 + $0x90] sm:$0xff]
    %v9127 = vld [vmem:[%s9107 + $0x98] sm:$0xff]
    %v9128 = vld [vmem:[%s9107 + $0xa0] sm:$0xff]
    %v9129 = vld [vmem:[%s9107 + $0xa8] sm:$0xff]
    %v9130 = vld [vmem:[%s9107 + $0xb0] sm:$0xff]
    %v9131 = vld [vmem:[%s9107 + $0xb8] sm:$0xff]
    %v9132 = vld [vmem:[%s9107 + $0xc0] sm:$0xff]
    %v9133 = vld [vmem:[%s9107 + $0xc8] sm:$0xff]
    %v9134 = vld [vmem:[%s9107 + $0xd0] sm:$0xff]
    %v9135 = vld [vmem:[%s9107 + $0xd8] sm:$0xff]
    %v9136 = vld [vmem:[%s9107 + $0xe0] sm:$0xff]
    %v9137 = vld [vmem:[%s9107 + $0xe8] sm:$0xff]
    %v9138 = vld [vmem:[%s9107 + $0xf0] sm:$0xff]
    %v9139 = vld [vmem:[%s9107 + $0xf8] sm:$0xff]
    %v9140 = vld [vmem:[%s9107 + $0x100] sm:$0xff]
    %v9141 = vld [vmem:[%s9107 + $0x108] sm:$0xff]
    %v9142 = vld [vmem:[%s9107 + $0x110] sm:$0xff]
    %v9143 = vld [vmem:[%s9107 + $0x118] sm:$0xff]
    %v9144 = vrot.slane %v8574, 2
    %v9145 = vrot.slane %v8575, 2
    %v9146 = vrot.slane %v8576, 2
    %v9185 = vunpack.c.l.b16 %v9108
    %v9186 = vunpack.c.h.b16 %v9108
    %v9187 = vunpack.c.l.b16 %v9109
    %v9188 = vunpack.c.h.b16 %v9109
    %v9189 = vunpack.c.l.b16 %v9110
    %v9190 = vunpack.c.h.b16 %v9110
    %v9191 = vunpack.c.l.b16 %v9111
    %v9192 = vunpack.c.h.b16 %v9111
    %v9193 = vunpack.c.l.b16 %v9112
    %v9194 = vunpack.c.h.b16 %v9112
    %v9195 = vunpack.c.l.b16 %v9113
    %v9196 = vunpack.c.h.b16 %v9113
    %v9197 = vunpack.c.l.b16 %v9114
    %v9198 = vunpack.c.h.b16 %v9114
    %v9199 = vunpack.c.l.b16 %v9115
    %v9200 = vunpack.c.h.b16 %v9115
    %v9201 = vunpack.c.l.b16 %v9116
    %v9202 = vunpack.c.h.b16 %v9116
    %v9203 = vunpack.c.l.b16 %v9117
    %v9204 = vunpack.c.h.b16 %v9117
    %v9205 = vunpack.c.l.b16 %v9118
    %v9206 = vunpack.c.h.b16 %v9118
    %v9207 = vunpack.c.l.b16 %v9119
    %v9208 = vunpack.c.h.b16 %v9119
    %v9209 = vunpack.c.l.b16 %v9120
    %v9210 = vunpack.c.h.b16 %v9120
    %v9211 = vunpack.c.l.b16 %v9121
    %v9212 = vunpack.c.h.b16 %v9121
    %v9213 = vunpack.c.l.b16 %v9122
    %v9214 = vunpack.c.h.b16 %v9122
    %v9215 = vunpack.c.l.b16 %v9123
    %v9216 = vunpack.c.h.b16 %v9123
    %v9217 = vunpack.c.l.b16 %v9124
    %v9218 = vunpack.c.h.b16 %v9124
    %v9219 = vunpack.c.l.b16 %v9125
    %v9220 = vunpack.c.h.b16 %v9125
    %v9221 = vunpack.c.l.b16 %v9126
    %v9222 = vunpack.c.h.b16 %v9126
    %v9223 = vunpack.c.l.b16 %v9127
    %v9224 = vunpack.c.h.b16 %v9127
    %v9225 = vunpack.c.l.b16 %v9128
    %v9226 = vunpack.c.h.b16 %v9128
    %v9227 = vunpack.c.l.b16 %v9129
    %v9228 = vunpack.c.h.b16 %v9129
    %v9229 = vunpack.c.l.b16 %v9130
    %v9230 = vunpack.c.h.b16 %v9130
    %v9231 = vunpack.c.l.b16 %v9131
    %v9232 = vunpack.c.h.b16 %v9131
    %v9233 = vunpack.c.l.b16 %v9132
    %v9234 = vunpack.c.h.b16 %v9132
    %v9235 = vunpack.c.l.b16 %v9133
    %v9236 = vunpack.c.h.b16 %v9133
    %v9237 = vunpack.c.l.b16 %v9134
    %v9238 = vunpack.c.h.b16 %v9134
    %v9239 = vunpack.c.l.b16 %v9135
    %v9240 = vunpack.c.h.b16 %v9135
    %v9241 = vunpack.c.l.b16 %v9136
    %v9242 = vunpack.c.h.b16 %v9136
    %v9243 = vunpack.c.l.b16 %v9137
    %v9244 = vunpack.c.h.b16 %v9137
    %v9245 = vunpack.c.l.b16 %v9138
    %v9246 = vunpack.c.h.b16 %v9138
    %v9247 = vunpack.c.l.b16 %v9139
    %v9248 = vunpack.c.h.b16 %v9139
    %v9249 = vunpack.c.l.b16 %v9140
    %v9250 = vunpack.c.h.b16 %v9140
    %v9251 = vunpack.c.l.b16 %v9141
    %v9252 = vunpack.c.h.b16 %v9141
    %v9253 = vunpack.c.l.b16 %v9142
    %v9254 = vunpack.c.h.b16 %v9142
    %v9255 = vunpack.c.l.b16 %v9143
    %v9256 = vunpack.c.h.b16 %v9143
    %v9257 = vpack.c.b16 %v9187, %v9185
    %v9258 = vpack.c.b16 %v9188, %v9186
    %v9259 = vpack.c.b16 %v9191, %v9189
    %v9260 = vpack.c.b16 %v9192, %v9190
    %v9261 = vpack.c.b16 %v9195, %v9193
    %v9262 = vpack.c.b16 %v9196, %v9194
    %v9263 = vpack.c.b16 %v9199, %v9197
    %v9264 = vpack.c.b16 %v9200, %v9198
    %v9265 = vpack.c.b16 %v9203, %v9201
    %v9266 = vpack.c.b16 %v9204, %v9202
    %v9267 = vpack.c.b16 %v9207, %v9205
    %v9268 = vpack.c.b16 %v9208, %v9206
    %v9269 = vpack.c.b16 %v9211, %v9209
    %v9270 = vpack.c.b16 %v9212, %v9210
    %v9271 = vpack.c.b16 %v9215, %v9213
    %v9272 = vpack.c.b16 %v9216, %v9214
    %v9273 = vpack.c.b16 %v9219, %v9217
    %v9274 = vpack.c.b16 %v9220, %v9218
    %v9275 = vpack.c.b16 %v9223, %v9221
    %v9276 = vpack.c.b16 %v9224, %v9222
    %v9277 = vpack.c.b16 %v9227, %v9225
    %v9278 = vpack.c.b16 %v9228, %v9226
    %v9279 = vpack.c.b16 %v9231, %v9229
    %v9280 = vpack.c.b16 %v9232, %v9230
    %v9281 = vpack.c.b16 %v9235, %v9233
    %v9282 = vpack.c.b16 %v9236, %v9234
    %v9283 = vpack.c.b16 %v9239, %v9237
    %v9284 = vpack.c.b16 %v9240, %v9238
    %v9285 = vpack.c.b16 %v9243, %v9241
    %v9286 = vpack.c.b16 %v9244, %v9242
    %v9287 = vpack.c.b16 %v9247, %v9245
    %v9288 = vpack.c.b16 %v9248, %v9246
    %v9289 = vpack.c.b16 %v9251, %v9249
    %v9290 = vpack.c.b16 %v9252, %v9250
    %v9291 = vpack.c.b16 %v9255, %v9253
    %v9292 = vpack.c.b16 %v9256, %v9254
    %v9330 = vsel %vm8762, %v9146, 0
    %9332 = vmatpush.bf16.msra.mxu0 %v9271
    %9333 = vmatpush.bf16.msra.mxu0 %v9269
    %9334 = vmatpush.bf16.msra.mxu0 %v9267
    %9335 = vmatpush.bf16.msra.mxu0 %v9265
    %9336 = vmatpush.bf16.msra.mxu0 %v9263
    %9337 = vmatpush.bf16.msra.mxu0 %v9261
    %9338 = vmatpush.bf16.msra.mxu0 %v9259
    %9339 = vmatpush.bf16.msra.mxu0 %v9257
    %9340 = vmatmul.bf16.gmra.mxu0 %v9144
    %v9341 = vpop.f32.mrf.mxu0
    %v9342 = vadd.f32 0.0, %v9341
    %v9343 = vpop.f32.mrf.mxu0
    %9344 = vdwg.mxu0
    %9345 = vmatpush.bf16.msra.mxu0 %v9287
    %9346 = vmatpush.bf16.msra.mxu0 %v9285
    %9347 = vmatpush.bf16.msra.mxu0 %v9283
    %9348 = vmatpush.bf16.msra.mxu0 %v9281
    %9349 = vmatpush.bf16.msra.mxu0 %v9279
    %9350 = vmatpush.bf16.msra.mxu0 %v9277
    %9351 = vmatpush.bf16.msra.mxu0 %v9275
    %9352 = vmatpush.bf16.msra.mxu0 %v9273
    %9353 = vmatmul.bf16.gmra.mxu0 %v9145
    %v9354 = vpop.f32.mrf.mxu0
    %v9355 = vadd.f32 %v9342, %v9354
    %v9356 = vpop.f32.mrf.mxu0
    %9357 = vdwg.mxu0
    %9358 = vmatpush.bf16.msra.mxu0 0
    %9359 = vmatpush.bf16.msra.mxu0 0
    %9360 = vmatpush.bf16.msra.mxu0 0
    %9361 = vmatpush.bf16.msra.mxu0 0
    %9362 = vmatpush.bf16.msra.mxu0 0
    %9363 = vmatpush.bf16.msra.mxu0 0
    %9364 = vmatpush.bf16.msra.mxu0 %v9291
    %9365 = vmatpush.bf16.msra.mxu0 %v9289
    %9366 = vmatmul.bf16.gmra.mxu0 %v9330
    %v9367 = vpop.f32.mrf.mxu0
    %v9368 = vadd.f32 %v9355, %v9367
    %v9369 = vpop.f32.mrf.mxu0
    %9370 = vdwg.mxu0
    %9371 = vmatpush.bf16.msra.mxu0 %v9272
    %9372 = vmatpush.bf16.msra.mxu0 %v9270
    %9373 = vmatpush.bf16.msra.mxu0 %v9268
    %9374 = vmatpush.bf16.msra.mxu0 %v9266
    %9375 = vmatpush.bf16.msra.mxu0 %v9264
    %9376 = vmatpush.bf16.msra.mxu0 %v9262
    %9377 = vmatpush.bf16.msra.mxu0 %v9260
    %9378 = vmatpush.bf16.msra.mxu0 %v9258
    %9379 = vmatmul.bf16.gmra.mxu0 %v9144
    %v9380 = vpop.f32.mrf.mxu0
    %v9381 = vadd.f32 0.0, %v9380
    %v9382 = vpop.f32.mrf.mxu0
    %9383 = vdwg.mxu0
    %9384 = vmatpush.bf16.msra.mxu0 %v9288
    %9385 = vmatpush.bf16.msra.mxu0 %v9286
    %9386 = vmatpush.bf16.msra.mxu0 %v9284
    %9387 = vmatpush.bf16.msra.mxu0 %v9282
    %9388 = vmatpush.bf16.msra.mxu0 %v9280
    %9389 = vmatpush.bf16.msra.mxu0 %v9278
    %9390 = vmatpush.bf16.msra.mxu0 %v9276
    %9391 = vmatpush.bf16.msra.mxu0 %v9274
    %9392 = vmatmul.bf16.gmra.mxu0 %v9145
    %v9393 = vpop.f32.mrf.mxu0
    %v9394 = vadd.f32 %v9381, %v9393
    %v9395 = vpop.f32.mrf.mxu0
    %9396 = vdwg.mxu0
    %9397 = vmatpush.bf16.msra.mxu0 0
    %9398 = vmatpush.bf16.msra.mxu0 0
    %9399 = vmatpush.bf16.msra.mxu0 0
    %9400 = vmatpush.bf16.msra.mxu0 0
    %9401 = vmatpush.bf16.msra.mxu0 0
    %9402 = vmatpush.bf16.msra.mxu0 0
    %9403 = vmatpush.bf16.msra.mxu0 %v9292
    %9404 = vmatpush.bf16.msra.mxu0 %v9290
    %9405 = vmatmul.bf16.gmra.mxu0 %v9330
    %v9406 = vpop.f32.mrf.mxu0
    %v9407 = vadd.f32 %v9394, %v9406
    %v9408 = vpop.f32.mrf.mxu0
    %9409 = vdwg.mxu0
    %v9410 = vadd.f32 %v9065, %v9368
    %v9411 = vadd.f32 %v9104, %v9407
    %s9412 = scalar_lea.vmem %s6, 864
    %v9413 = vld [vmem:[%s9412] sm:$0xff]
    %v9414 = vld [vmem:[%s9412 + $0x8] sm:$0xff]
    %v9415 = vld [vmem:[%s9412 + $0x10] sm:$0xff]
    %v9416 = vld [vmem:[%s9412 + $0x18] sm:$0xff]
    %v9417 = vld [vmem:[%s9412 + $0x20] sm:$0xff]
    %v9418 = vld [vmem:[%s9412 + $0x28] sm:$0xff]
    %v9419 = vld [vmem:[%s9412 + $0x30] sm:$0xff]
    %v9420 = vld [vmem:[%s9412 + $0x38] sm:$0xff]
    %v9421 = vld [vmem:[%s9412 + $0x40] sm:$0xff]
    %v9422 = vld [vmem:[%s9412 + $0x48] sm:$0xff]
    %v9423 = vld [vmem:[%s9412 + $0x50] sm:$0xff]
    %v9424 = vld [vmem:[%s9412 + $0x58] sm:$0xff]
    %v9425 = vld [vmem:[%s9412 + $0x60] sm:$0xff]
    %v9426 = vld [vmem:[%s9412 + $0x68] sm:$0xff]
    %v9427 = vld [vmem:[%s9412 + $0x70] sm:$0xff]
    %v9428 = vld [vmem:[%s9412 + $0x78] sm:$0xff]
    %v9429 = vld [vmem:[%s9412 + $0x80] sm:$0xff]
    %v9430 = vld [vmem:[%s9412 + $0x88] sm:$0xff]
    %v9431 = vld [vmem:[%s9412 + $0x90] sm:$0xff]
    %v9432 = vld [vmem:[%s9412 + $0x98] sm:$0xff]
    %v9433 = vld [vmem:[%s9412 + $0xa0] sm:$0xff]
    %v9434 = vld [vmem:[%s9412 + $0xa8] sm:$0xff]
    %v9435 = vld [vmem:[%s9412 + $0xb0] sm:$0xff]
    %v9436 = vld [vmem:[%s9412 + $0xb8] sm:$0xff]
    %v9437 = vld [vmem:[%s9412 + $0xc0] sm:$0xff]
    %v9438 = vld [vmem:[%s9412 + $0xc8] sm:$0xff]
    %v9439 = vld [vmem:[%s9412 + $0xd0] sm:$0xff]
    %v9440 = vld [vmem:[%s9412 + $0xd8] sm:$0xff]
    %v9441 = vld [vmem:[%s9412 + $0xe0] sm:$0xff]
    %v9442 = vld [vmem:[%s9412 + $0xe8] sm:$0xff]
    %v9443 = vld [vmem:[%s9412 + $0xf0] sm:$0xff]
    %v9444 = vld [vmem:[%s9412 + $0xf8] sm:$0xff]
    %v9445 = vld [vmem:[%s9412 + $0x100] sm:$0xff]
    %v9446 = vld [vmem:[%s9412 + $0x108] sm:$0xff]
    %v9447 = vld [vmem:[%s9412 + $0x110] sm:$0xff]
    %v9448 = vld [vmem:[%s9412 + $0x118] sm:$0xff]
    %v9449 = vrot.slane %v8574, 3
    %v9450 = vrot.slane %v8575, 3
    %v9451 = vrot.slane %v8576, 3
    %v9490 = vunpack.c.l.b16 %v9413
    %v9491 = vunpack.c.h.b16 %v9413
    %v9492 = vunpack.c.l.b16 %v9414
    %v9493 = vunpack.c.h.b16 %v9414
    %v9494 = vunpack.c.l.b16 %v9415
    %v9495 = vunpack.c.h.b16 %v9415
    %v9496 = vunpack.c.l.b16 %v9416
    %v9497 = vunpack.c.h.b16 %v9416
    %v9498 = vunpack.c.l.b16 %v9417
    %v9499 = vunpack.c.h.b16 %v9417
    %v9500 = vunpack.c.l.b16 %v9418
    %v9501 = vunpack.c.h.b16 %v9418
    %v9502 = vunpack.c.l.b16 %v9419
    %v9503 = vunpack.c.h.b16 %v9419
    %v9504 = vunpack.c.l.b16 %v9420
    %v9505 = vunpack.c.h.b16 %v9420
    %v9506 = vunpack.c.l.b16 %v9421
    %v9507 = vunpack.c.h.b16 %v9421
    %v9508 = vunpack.c.l.b16 %v9422
    %v9509 = vunpack.c.h.b16 %v9422
    %v9510 = vunpack.c.l.b16 %v9423
    %v9511 = vunpack.c.h.b16 %v9423
    %v9512 = vunpack.c.l.b16 %v9424
    %v9513 = vunpack.c.h.b16 %v9424
    %v9514 = vunpack.c.l.b16 %v9425
    %v9515 = vunpack.c.h.b16 %v9425
    %v9516 = vunpack.c.l.b16 %v9426
    %v9517 = vunpack.c.h.b16 %v9426
    %v9518 = vunpack.c.l.b16 %v9427
    %v9519 = vunpack.c.h.b16 %v9427
    %v9520 = vunpack.c.l.b16 %v9428
    %v9521 = vunpack.c.h.b16 %v9428
    %v9522 = vunpack.c.l.b16 %v9429
    %v9523 = vunpack.c.h.b16 %v9429
    %v9524 = vunpack.c.l.b16 %v9430
    %v9525 = vunpack.c.h.b16 %v9430
    %v9526 = vunpack.c.l.b16 %v9431
    %v9527 = vunpack.c.h.b16 %v9431
    %v9528 = vunpack.c.l.b16 %v9432
    %v9529 = vunpack.c.h.b16 %v9432
    %v9530 = vunpack.c.l.b16 %v9433
    %v9531 = vunpack.c.h.b16 %v9433
    %v9532 = vunpack.c.l.b16 %v9434
    %v9533 = vunpack.c.h.b16 %v9434
    %v9534 = vunpack.c.l.b16 %v9435
    %v9535 = vunpack.c.h.b16 %v9435
    %v9536 = vunpack.c.l.b16 %v9436
    %v9537 = vunpack.c.h.b16 %v9436
    %v9538 = vunpack.c.l.b16 %v9437
    %v9539 = vunpack.c.h.b16 %v9437
    %v9540 = vunpack.c.l.b16 %v9438
    %v9541 = vunpack.c.h.b16 %v9438
    %v9542 = vunpack.c.l.b16 %v9439
    %v9543 = vunpack.c.h.b16 %v9439
    %v9544 = vunpack.c.l.b16 %v9440
    %v9545 = vunpack.c.h.b16 %v9440
    %v9546 = vunpack.c.l.b16 %v9441
    %v9547 = vunpack.c.h.b16 %v9441
    %v9548 = vunpack.c.l.b16 %v9442
    %v9549 = vunpack.c.h.b16 %v9442
    %v9550 = vunpack.c.l.b16 %v9443
    %v9551 = vunpack.c.h.b16 %v9443
    %v9552 = vunpack.c.l.b16 %v9444
    %v9553 = vunpack.c.h.b16 %v9444
    %v9554 = vunpack.c.l.b16 %v9445
    %v9555 = vunpack.c.h.b16 %v9445
    %v9556 = vunpack.c.l.b16 %v9446
    %v9557 = vunpack.c.h.b16 %v9446
    %v9558 = vunpack.c.l.b16 %v9447
    %v9559 = vunpack.c.h.b16 %v9447
    %v9560 = vunpack.c.l.b16 %v9448
    %v9561 = vunpack.c.h.b16 %v9448
    %v9562 = vpack.c.b16 %v9492, %v9490
    %v9563 = vpack.c.b16 %v9493, %v9491
    %v9564 = vpack.c.b16 %v9496, %v9494
    %v9565 = vpack.c.b16 %v9497, %v9495
    %v9566 = vpack.c.b16 %v9500, %v9498
    %v9567 = vpack.c.b16 %v9501, %v9499
    %v9568 = vpack.c.b16 %v9504, %v9502
    %v9569 = vpack.c.b16 %v9505, %v9503
    %v9570 = vpack.c.b16 %v9508, %v9506
    %v9571 = vpack.c.b16 %v9509, %v9507
    %v9572 = vpack.c.b16 %v9512, %v9510
    %v9573 = vpack.c.b16 %v9513, %v9511
    %v9574 = vpack.c.b16 %v9516, %v9514
    %v9575 = vpack.c.b16 %v9517, %v9515
    %v9576 = vpack.c.b16 %v9520, %v9518
    %v9577 = vpack.c.b16 %v9521, %v9519
    %v9578 = vpack.c.b16 %v9524, %v9522
    %v9579 = vpack.c.b16 %v9525, %v9523
    %v9580 = vpack.c.b16 %v9528, %v9526
    %v9581 = vpack.c.b16 %v9529, %v9527
    %v9582 = vpack.c.b16 %v9532, %v9530
    %v9583 = vpack.c.b16 %v9533, %v9531
    %v9584 = vpack.c.b16 %v9536, %v9534
    %v9585 = vpack.c.b16 %v9537, %v9535
    %v9586 = vpack.c.b16 %v9540, %v9538
    %v9587 = vpack.c.b16 %v9541, %v9539
    %v9588 = vpack.c.b16 %v9544, %v9542
    %v9589 = vpack.c.b16 %v9545, %v9543
    %v9590 = vpack.c.b16 %v9548, %v9546
    %v9591 = vpack.c.b16 %v9549, %v9547
    %v9592 = vpack.c.b16 %v9552, %v9550
    %v9593 = vpack.c.b16 %v9553, %v9551
    %v9594 = vpack.c.b16 %v9556, %v9554
    %v9595 = vpack.c.b16 %v9557, %v9555
    %v9596 = vpack.c.b16 %v9560, %v9558
    %v9597 = vpack.c.b16 %v9561, %v9559
    %v9635 = vsel %vm8762, %v9451, 0
    %9637 = vmatpush.bf16.msra.mxu0 %v9576
    %9638 = vmatpush.bf16.msra.mxu0 %v9574
    %9639 = vmatpush.bf16.msra.mxu0 %v9572
    %9640 = vmatpush.bf16.msra.mxu0 %v9570
    %9641 = vmatpush.bf16.msra.mxu0 %v9568
    %9642 = vmatpush.bf16.msra.mxu0 %v9566
    %9643 = vmatpush.bf16.msra.mxu0 %v9564
    %9644 = vmatpush.bf16.msra.mxu0 %v9562
    %9645 = vmatmul.bf16.gmra.mxu0 %v9449
    %v9646 = vpop.f32.mrf.mxu0
    %v9647 = vadd.f32 0.0, %v9646
    %v9648 = vpop.f32.mrf.mxu0
    %9649 = vdwg.mxu0
    %9650 = vmatpush.bf16.msra.mxu0 %v9592
    %9651 = vmatpush.bf16.msra.mxu0 %v9590
    %9652 = vmatpush.bf16.msra.mxu0 %v9588
    %9653 = vmatpush.bf16.msra.mxu0 %v9586
    %9654 = vmatpush.bf16.msra.mxu0 %v9584
    %9655 = vmatpush.bf16.msra.mxu0 %v9582
    %9656 = vmatpush.bf16.msra.mxu0 %v9580
    %9657 = vmatpush.bf16.msra.mxu0 %v9578
    %9658 = vmatmul.bf16.gmra.mxu0 %v9450
    %v9659 = vpop.f32.mrf.mxu0
    %v9660 = vadd.f32 %v9647, %v9659
    %v9661 = vpop.f32.mrf.mxu0
    %9662 = vdwg.mxu0
    %9663 = vmatpush.bf16.msra.mxu0 0
    %9664 = vmatpush.bf16.msra.mxu0 0
    %9665 = vmatpush.bf16.msra.mxu0 0
    %9666 = vmatpush.bf16.msra.mxu0 0
    %9667 = vmatpush.bf16.msra.mxu0 0
    %9668 = vmatpush.bf16.msra.mxu0 0
    %9669 = vmatpush.bf16.msra.mxu0 %v9596
    %9670 = vmatpush.bf16.msra.mxu0 %v9594
    %9671 = vmatmul.bf16.gmra.mxu0 %v9635
    %v9672 = vpop.f32.mrf.mxu0
    %v9673 = vadd.f32 %v9660, %v9672
    %v9674 = vpop.f32.mrf.mxu0
    %9675 = vdwg.mxu0
    %9676 = vmatpush.bf16.msra.mxu0 %v9577
    %9677 = vmatpush.bf16.msra.mxu0 %v9575
    %9678 = vmatpush.bf16.msra.mxu0 %v9573
    %9679 = vmatpush.bf16.msra.mxu0 %v9571
    %9680 = vmatpush.bf16.msra.mxu0 %v9569
    %9681 = vmatpush.bf16.msra.mxu0 %v9567
    %9682 = vmatpush.bf16.msra.mxu0 %v9565
    %9683 = vmatpush.bf16.msra.mxu0 %v9563
    %9684 = vmatmul.bf16.gmra.mxu0 %v9449
    %v9685 = vpop.f32.mrf.mxu0
    %v9686 = vadd.f32 0.0, %v9685
    %v9687 = vpop.f32.mrf.mxu0
    %9688 = vdwg.mxu0
    %9689 = vmatpush.bf16.msra.mxu0 %v9593
    %9690 = vmatpush.bf16.msra.mxu0 %v9591
    %9691 = vmatpush.bf16.msra.mxu0 %v9589
    %9692 = vmatpush.bf16.msra.mxu0 %v9587
    %9693 = vmatpush.bf16.msra.mxu0 %v9585
    %9694 = vmatpush.bf16.msra.mxu0 %v9583
    %9695 = vmatpush.bf16.msra.mxu0 %v9581
    %9696 = vmatpush.bf16.msra.mxu0 %v9579
    %9697 = vmatmul.bf16.gmra.mxu0 %v9450
    %v9698 = vpop.f32.mrf.mxu0
    %v9699 = vadd.f32 %v9686, %v9698
    %v9700 = vpop.f32.mrf.mxu0
    %9701 = vdwg.mxu0
    %9702 = vmatpush.bf16.msra.mxu0 0
    %9703 = vmatpush.bf16.msra.mxu0 0
    %9704 = vmatpush.bf16.msra.mxu0 0
    %9705 = vmatpush.bf16.msra.mxu0 0
    %9706 = vmatpush.bf16.msra.mxu0 0
    %9707 = vmatpush.bf16.msra.mxu0 0
    %9708 = vmatpush.bf16.msra.mxu0 %v9597
    %9709 = vmatpush.bf16.msra.mxu0 %v9595
    %9710 = vmatmul.bf16.gmra.mxu0 %v9635
    %v9711 = vpop.f32.mrf.mxu0
    %v9712 = vadd.f32 %v9699, %v9711
    %v9713 = vpop.f32.mrf.mxu0
    %9714 = vdwg.mxu0
    %v9715 = vadd.f32 %v9410, %v9673
    %v9716 = vadd.f32 %v9411, %v9712
    %s9717 = scalar_lea.vmem %s6, 1152
    %v9718 = vld [vmem:[%s9717] sm:$0xff]
    %v9719 = vld [vmem:[%s9717 + $0x8] sm:$0xff]
    %v9720 = vld [vmem:[%s9717 + $0x10] sm:$0xff]
    %v9721 = vld [vmem:[%s9717 + $0x18] sm:$0xff]
    %v9722 = vld [vmem:[%s9717 + $0x20] sm:$0xff]
    %v9723 = vld [vmem:[%s9717 + $0x28] sm:$0xff]
    %v9724 = vld [vmem:[%s9717 + $0x30] sm:$0xff]
    %v9725 = vld [vmem:[%s9717 + $0x38] sm:$0xff]
    %v9726 = vld [vmem:[%s9717 + $0x40] sm:$0xff]
    %v9727 = vld [vmem:[%s9717 + $0x48] sm:$0xff]
    %v9728 = vld [vmem:[%s9717 + $0x50] sm:$0xff]
    %v9729 = vld [vmem:[%s9717 + $0x58] sm:$0xff]
    %v9730 = vld [vmem:[%s9717 + $0x60] sm:$0xff]
    %v9731 = vld [vmem:[%s9717 + $0x68] sm:$0xff]
    %v9732 = vld [vmem:[%s9717 + $0x70] sm:$0xff]
    %v9733 = vld [vmem:[%s9717 + $0x78] sm:$0xff]
    %v9734 = vld [vmem:[%s9717 + $0x80] sm:$0xff]
    %v9735 = vld [vmem:[%s9717 + $0x88] sm:$0xff]
    %v9736 = vld [vmem:[%s9717 + $0x90] sm:$0xff]
    %v9737 = vld [vmem:[%s9717 + $0x98] sm:$0xff]
    %v9738 = vld [vmem:[%s9717 + $0xa0] sm:$0xff]
    %v9739 = vld [vmem:[%s9717 + $0xa8] sm:$0xff]
    %v9740 = vld [vmem:[%s9717 + $0xb0] sm:$0xff]
    %v9741 = vld [vmem:[%s9717 + $0xb8] sm:$0xff]
    %v9742 = vld [vmem:[%s9717 + $0xc0] sm:$0xff]
    %v9743 = vld [vmem:[%s9717 + $0xc8] sm:$0xff]
    %v9744 = vld [vmem:[%s9717 + $0xd0] sm:$0xff]
    %v9745 = vld [vmem:[%s9717 + $0xd8] sm:$0xff]
    %v9746 = vld [vmem:[%s9717 + $0xe0] sm:$0xff]
    %v9747 = vld [vmem:[%s9717 + $0xe8] sm:$0xff]
    %v9748 = vld [vmem:[%s9717 + $0xf0] sm:$0xff]
    %v9749 = vld [vmem:[%s9717 + $0xf8] sm:$0xff]
    %v9750 = vld [vmem:[%s9717 + $0x100] sm:$0xff]
    %v9751 = vld [vmem:[%s9717 + $0x108] sm:$0xff]
    %v9752 = vld [vmem:[%s9717 + $0x110] sm:$0xff]
    %v9753 = vld [vmem:[%s9717 + $0x118] sm:$0xff]
    %v9756 = vunpack.c.l.b16 %v8492
    %v9757 = vunpack.c.h.b16 %v8492
    %v9758 = vunpack.c.l.b16 %v8493
    %v9759 = vpack.c.b16 %v9756, %v9756
    %v9760 = vpack.c.b16 %v9757, %v9757
    %v9761 = vpack.c.b16 %v9758, %v9758
    %v9800 = vunpack.c.l.b16 %v9718
    %v9801 = vunpack.c.h.b16 %v9718
    %v9802 = vunpack.c.l.b16 %v9719
    %v9803 = vunpack.c.h.b16 %v9719
    %v9804 = vunpack.c.l.b16 %v9720
    %v9805 = vunpack.c.h.b16 %v9720
    %v9806 = vunpack.c.l.b16 %v9721
    %v9807 = vunpack.c.h.b16 %v9721
    %v9808 = vunpack.c.l.b16 %v9722
    %v9809 = vunpack.c.h.b16 %v9722
    %v9810 = vunpack.c.l.b16 %v9723
    %v9811 = vunpack.c.h.b16 %v9723
    %v9812 = vunpack.c.l.b16 %v9724
    %v9813 = vunpack.c.h.b16 %v9724
    %v9814 = vunpack.c.l.b16 %v9725
    %v9815 = vunpack.c.h.b16 %v9725
    %v9816 = vunpack.c.l.b16 %v9726
    %v9817 = vunpack.c.h.b16 %v9726
    %v9818 = vunpack.c.l.b16 %v9727
    %v9819 = vunpack.c.h.b16 %v9727
    %v9820 = vunpack.c.l.b16 %v9728
    %v9821 = vunpack.c.h.b16 %v9728
    %v9822 = vunpack.c.l.b16 %v9729
    %v9823 = vunpack.c.h.b16 %v9729
    %v9824 = vunpack.c.l.b16 %v9730
    %v9825 = vunpack.c.h.b16 %v9730
    %v9826 = vunpack.c.l.b16 %v9731
    %v9827 = vunpack.c.h.b16 %v9731
    %v9828 = vunpack.c.l.b16 %v9732
    %v9829 = vunpack.c.h.b16 %v9732
    %v9830 = vunpack.c.l.b16 %v9733
    %v9831 = vunpack.c.h.b16 %v9733
    %v9832 = vunpack.c.l.b16 %v9734
    %v9833 = vunpack.c.h.b16 %v9734
    %v9834 = vunpack.c.l.b16 %v9735
    %v9835 = vunpack.c.h.b16 %v9735
    %v9836 = vunpack.c.l.b16 %v9736
    %v9837 = vunpack.c.h.b16 %v9736
    %v9838 = vunpack.c.l.b16 %v9737
    %v9839 = vunpack.c.h.b16 %v9737
    %v9840 = vunpack.c.l.b16 %v9738
    %v9841 = vunpack.c.h.b16 %v9738
    %v9842 = vunpack.c.l.b16 %v9739
    %v9843 = vunpack.c.h.b16 %v9739
    %v9844 = vunpack.c.l.b16 %v9740
    %v9845 = vunpack.c.h.b16 %v9740
    %v9846 = vunpack.c.l.b16 %v9741
    %v9847 = vunpack.c.h.b16 %v9741
    %v9848 = vunpack.c.l.b16 %v9742
    %v9849 = vunpack.c.h.b16 %v9742
    %v9850 = vunpack.c.l.b16 %v9743
    %v9851 = vunpack.c.h.b16 %v9743
    %v9852 = vunpack.c.l.b16 %v9744
    %v9853 = vunpack.c.h.b16 %v9744
    %v9854 = vunpack.c.l.b16 %v9745
    %v9855 = vunpack.c.h.b16 %v9745
    %v9856 = vunpack.c.l.b16 %v9746
    %v9857 = vunpack.c.h.b16 %v9746
    %v9858 = vunpack.c.l.b16 %v9747
    %v9859 = vunpack.c.h.b16 %v9747
    %v9860 = vunpack.c.l.b16 %v9748
    %v9861 = vunpack.c.h.b16 %v9748
    %v9862 = vunpack.c.l.b16 %v9749
    %v9863 = vunpack.c.h.b16 %v9749
    %v9864 = vunpack.c.l.b16 %v9750
    %v9865 = vunpack.c.h.b16 %v9750
    %v9866 = vunpack.c.l.b16 %v9751
    %v9867 = vunpack.c.h.b16 %v9751
    %v9868 = vunpack.c.l.b16 %v9752
    %v9869 = vunpack.c.h.b16 %v9752
    %v9870 = vunpack.c.l.b16 %v9753
    %v9871 = vunpack.c.h.b16 %v9753
    %v9872 = vpack.c.b16 %v9802, %v9800
    %v9873 = vpack.c.b16 %v9803, %v9801
    %v9874 = vpack.c.b16 %v9806, %v9804
    %v9875 = vpack.c.b16 %v9807, %v9805
    %v9876 = vpack.c.b16 %v9810, %v9808
    %v9877 = vpack.c.b16 %v9811, %v9809
    %v9878 = vpack.c.b16 %v9814, %v9812
    %v9879 = vpack.c.b16 %v9815, %v9813
    %v9880 = vpack.c.b16 %v9818, %v9816
    %v9881 = vpack.c.b16 %v9819, %v9817
    %v9882 = vpack.c.b16 %v9822, %v9820
    %v9883 = vpack.c.b16 %v9823, %v9821
    %v9884 = vpack.c.b16 %v9826, %v9824
    %v9885 = vpack.c.b16 %v9827, %v9825
    %v9886 = vpack.c.b16 %v9830, %v9828
    %v9887 = vpack.c.b16 %v9831, %v9829
    %v9888 = vpack.c.b16 %v9834, %v9832
    %v9889 = vpack.c.b16 %v9835, %v9833
    %v9890 = vpack.c.b16 %v9838, %v9836
    %v9891 = vpack.c.b16 %v9839, %v9837
    %v9892 = vpack.c.b16 %v9842, %v9840
    %v9893 = vpack.c.b16 %v9843, %v9841
    %v9894 = vpack.c.b16 %v9846, %v9844
    %v9895 = vpack.c.b16 %v9847, %v9845
    %v9896 = vpack.c.b16 %v9850, %v9848
    %v9897 = vpack.c.b16 %v9851, %v9849
    %v9898 = vpack.c.b16 %v9854, %v9852
    %v9899 = vpack.c.b16 %v9855, %v9853
    %v9900 = vpack.c.b16 %v9858, %v9856
    %v9901 = vpack.c.b16 %v9859, %v9857
    %v9902 = vpack.c.b16 %v9862, %v9860
    %v9903 = vpack.c.b16 %v9863, %v9861
    %v9904 = vpack.c.b16 %v9866, %v9864
    %v9905 = vpack.c.b16 %v9867, %v9865
    %v9906 = vpack.c.b16 %v9870, %v9868
    %v9907 = vpack.c.b16 %v9871, %v9869
    %v9945 = vsel %vm8762, %v9761, 0
    %9947 = vmatpush.bf16.msra.mxu0 %v9886
    %9948 = vmatpush.bf16.msra.mxu0 %v9884
    %9949 = vmatpush.bf16.msra.mxu0 %v9882
    %9950 = vmatpush.bf16.msra.mxu0 %v9880
    %9951 = vmatpush.bf16.msra.mxu0 %v9878
    %9952 = vmatpush.bf16.msra.mxu0 %v9876
    %9953 = vmatpush.bf16.msra.mxu0 %v9874
    %9954 = vmatpush.bf16.msra.mxu0 %v9872
    %9955 = vmatmul.bf16.gmra.mxu0 %v9759
    %v9956 = vpop.f32.mrf.mxu0
    %v9957 = vadd.f32 0.0, %v9956
    %v9958 = vpop.f32.mrf.mxu0
    %9959 = vdwg.mxu0
    %9960 = vmatpush.bf16.msra.mxu0 %v9902
    %9961 = vmatpush.bf16.msra.mxu0 %v9900
    %9962 = vmatpush.bf16.msra.mxu0 %v9898
    %9963 = vmatpush.bf16.msra.mxu0 %v9896
    %9964 = vmatpush.bf16.msra.mxu0 %v9894
    %9965 = vmatpush.bf16.msra.mxu0 %v9892
    %9966 = vmatpush.bf16.msra.mxu0 %v9890
    %9967 = vmatpush.bf16.msra.mxu0 %v9888
    %9968 = vmatmul.bf16.gmra.mxu0 %v9760
    %v9969 = vpop.f32.mrf.mxu0
    %v9970 = vadd.f32 %v9957, %v9969
    %v9971 = vpop.f32.mrf.mxu0
    %9972 = vdwg.mxu0
    %9973 = vmatpush.bf16.msra.mxu0 0
    %9974 = vmatpush.bf16.msra.mxu0 0
    %9975 = vmatpush.bf16.msra.mxu0 0
    %9976 = vmatpush.bf16.msra.mxu0 0
    %9977 = vmatpush.bf16.msra.mxu0 0
    %9978 = vmatpush.bf16.msra.mxu0 0
    %9979 = vmatpush.bf16.msra.mxu0 %v9906
    %9980 = vmatpush.bf16.msra.mxu0 %v9904
    %9981 = vmatmul.bf16.gmra.mxu0 %v9945
    %v9982 = vpop.f32.mrf.mxu0
    %v9983 = vadd.f32 %v9970, %v9982
    %v9984 = vpop.f32.mrf.mxu0
    %9985 = vdwg.mxu0
    %9986 = vmatpush.bf16.msra.mxu0 %v9887
    %9987 = vmatpush.bf16.msra.mxu0 %v9885
    %9988 = vmatpush.bf16.msra.mxu0 %v9883
    %9989 = vmatpush.bf16.msra.mxu0 %v9881
    %9990 = vmatpush.bf16.msra.mxu0 %v9879
    %9991 = vmatpush.bf16.msra.mxu0 %v9877
    %9992 = vmatpush.bf16.msra.mxu0 %v9875
    %9993 = vmatpush.bf16.msra.mxu0 %v9873
    %9994 = vmatmul.bf16.gmra.mxu0 %v9759
    %v9995 = vpop.f32.mrf.mxu0
    %v9996 = vadd.f32 0.0, %v9995
    %v9997 = vpop.f32.mrf.mxu0
    %9998 = vdwg.mxu0
    %9999 = vmatpush.bf16.msra.mxu0 %v9903
    %10000 = vmatpush.bf16.msra.mxu0 %v9901
    %10001 = vmatpush.bf16.msra.mxu0 %v9899
    %10002 = vmatpush.bf16.msra.mxu0 %v9897
    %10003 = vmatpush.bf16.msra.mxu0 %v9895
    %10004 = vmatpush.bf16.msra.mxu0 %v9893
    %10005 = vmatpush.bf16.msra.mxu0 %v9891
    %10006 = vmatpush.bf16.msra.mxu0 %v9889
    %10007 = vmatmul.bf16.gmra.mxu0 %v9760
    %v10008 = vpop.f32.mrf.mxu0
    %v10009 = vadd.f32 %v9996, %v10008
    %v10010 = vpop.f32.mrf.mxu0
    %10011 = vdwg.mxu0
    %10012 = vmatpush.bf16.msra.mxu0 0
    %10013 = vmatpush.bf16.msra.mxu0 0
    %10014 = vmatpush.bf16.msra.mxu0 0
    %10015 = vmatpush.bf16.msra.mxu0 0
    %10016 = vmatpush.bf16.msra.mxu0 0
    %10017 = vmatpush.bf16.msra.mxu0 0
    %10018 = vmatpush.bf16.msra.mxu0 %v9907
    %10019 = vmatpush.bf16.msra.mxu0 %v9905
    %10020 = vmatmul.bf16.gmra.mxu0 %v9945
    %v10021 = vpop.f32.mrf.mxu0
    %v10022 = vadd.f32 %v10009, %v10021
    %v10023 = vpop.f32.mrf.mxu0
    %10024 = vdwg.mxu0
    %v10025 = vadd.f32 %v9715, %v9983
    %v10026 = vadd.f32 %v9716, %v10022
    %s10027 = scalar_lea.vmem %s6, 1440
    %v10028 = vld [vmem:[%s10027] sm:$0xff]
    %v10029 = vld [vmem:[%s10027 + $0x8] sm:$0xff]
    %v10030 = vld [vmem:[%s10027 + $0x10] sm:$0xff]
    %v10031 = vld [vmem:[%s10027 + $0x18] sm:$0xff]
    %v10032 = vld [vmem:[%s10027 + $0x20] sm:$0xff]
    %v10033 = vld [vmem:[%s10027 + $0x28] sm:$0xff]
    %v10034 = vld [vmem:[%s10027 + $0x30] sm:$0xff]
    %v10035 = vld [vmem:[%s10027 + $0x38] sm:$0xff]
    %v10036 = vld [vmem:[%s10027 + $0x40] sm:$0xff]
    %v10037 = vld [vmem:[%s10027 + $0x48] sm:$0xff]
    %v10038 = vld [vmem:[%s10027 + $0x50] sm:$0xff]
    %v10039 = vld [vmem:[%s10027 + $0x58] sm:$0xff]
    %v10040 = vld [vmem:[%s10027 + $0x60] sm:$0xff]
    %v10041 = vld [vmem:[%s10027 + $0x68] sm:$0xff]
    %v10042 = vld [vmem:[%s10027 + $0x70] sm:$0xff]
    %v10043 = vld [vmem:[%s10027 + $0x78] sm:$0xff]
    %v10044 = vld [vmem:[%s10027 + $0x80] sm:$0xff]
    %v10045 = vld [vmem:[%s10027 + $0x88] sm:$0xff]
    %v10046 = vld [vmem:[%s10027 + $0x90] sm:$0xff]
    %v10047 = vld [vmem:[%s10027 + $0x98] sm:$0xff]
    %v10048 = vld [vmem:[%s10027 + $0xa0] sm:$0xff]
    %v10049 = vld [vmem:[%s10027 + $0xa8] sm:$0xff]
    %v10050 = vld [vmem:[%s10027 + $0xb0] sm:$0xff]
    %v10051 = vld [vmem:[%s10027 + $0xb8] sm:$0xff]
    %v10052 = vld [vmem:[%s10027 + $0xc0] sm:$0xff]
    %v10053 = vld [vmem:[%s10027 + $0xc8] sm:$0xff]
    %v10054 = vld [vmem:[%s10027 + $0xd0] sm:$0xff]
    %v10055 = vld [vmem:[%s10027 + $0xd8] sm:$0xff]
    %v10056 = vld [vmem:[%s10027 + $0xe0] sm:$0xff]
    %v10057 = vld [vmem:[%s10027 + $0xe8] sm:$0xff]
    %v10058 = vld [vmem:[%s10027 + $0xf0] sm:$0xff]
    %v10059 = vld [vmem:[%s10027 + $0xf8] sm:$0xff]
    %v10060 = vld [vmem:[%s10027 + $0x100] sm:$0xff]
    %v10061 = vld [vmem:[%s10027 + $0x108] sm:$0xff]
    %v10062 = vld [vmem:[%s10027 + $0x110] sm:$0xff]
    %v10063 = vld [vmem:[%s10027 + $0x118] sm:$0xff]
    %v10064 = vrot.slane %v9759, 1
    %v10065 = vrot.slane %v9760, 1
    %v10066 = vrot.slane %v9761, 1
    %v10105 = vunpack.c.l.b16 %v10028
    %v10106 = vunpack.c.h.b16 %v10028
    %v10107 = vunpack.c.l.b16 %v10029
    %v10108 = vunpack.c.h.b16 %v10029
    %v10109 = vunpack.c.l.b16 %v10030
    %v10110 = vunpack.c.h.b16 %v10030
    %v10111 = vunpack.c.l.b16 %v10031
    %v10112 = vunpack.c.h.b16 %v10031
    %v10113 = vunpack.c.l.b16 %v10032
    %v10114 = vunpack.c.h.b16 %v10032
    %v10115 = vunpack.c.l.b16 %v10033
    %v10116 = vunpack.c.h.b16 %v10033
    %v10117 = vunpack.c.l.b16 %v10034
    %v10118 = vunpack.c.h.b16 %v10034
    %v10119 = vunpack.c.l.b16 %v10035
    %v10120 = vunpack.c.h.b16 %v10035
    %v10121 = vunpack.c.l.b16 %v10036
    %v10122 = vunpack.c.h.b16 %v10036
    %v10123 = vunpack.c.l.b16 %v10037
    %v10124 = vunpack.c.h.b16 %v10037
    %v10125 = vunpack.c.l.b16 %v10038
    %v10126 = vunpack.c.h.b16 %v10038
    %v10127 = vunpack.c.l.b16 %v10039
    %v10128 = vunpack.c.h.b16 %v10039
    %v10129 = vunpack.c.l.b16 %v10040
    %v10130 = vunpack.c.h.b16 %v10040
    %v10131 = vunpack.c.l.b16 %v10041
    %v10132 = vunpack.c.h.b16 %v10041
    %v10133 = vunpack.c.l.b16 %v10042
    %v10134 = vunpack.c.h.b16 %v10042
    %v10135 = vunpack.c.l.b16 %v10043
    %v10136 = vunpack.c.h.b16 %v10043
    %v10137 = vunpack.c.l.b16 %v10044
    %v10138 = vunpack.c.h.b16 %v10044
    %v10139 = vunpack.c.l.b16 %v10045
    %v10140 = vunpack.c.h.b16 %v10045
    %v10141 = vunpack.c.l.b16 %v10046
    %v10142 = vunpack.c.h.b16 %v10046
    %v10143 = vunpack.c.l.b16 %v10047
    %v10144 = vunpack.c.h.b16 %v10047
    %v10145 = vunpack.c.l.b16 %v10048
    %v10146 = vunpack.c.h.b16 %v10048
    %v10147 = vunpack.c.l.b16 %v10049
    %v10148 = vunpack.c.h.b16 %v10049
    %v10149 = vunpack.c.l.b16 %v10050
    %v10150 = vunpack.c.h.b16 %v10050
    %v10151 = vunpack.c.l.b16 %v10051
    %v10152 = vunpack.c.h.b16 %v10051
    %v10153 = vunpack.c.l.b16 %v10052
    %v10154 = vunpack.c.h.b16 %v10052
    %v10155 = vunpack.c.l.b16 %v10053
    %v10156 = vunpack.c.h.b16 %v10053
    %v10157 = vunpack.c.l.b16 %v10054
    %v10158 = vunpack.c.h.b16 %v10054
    %v10159 = vunpack.c.l.b16 %v10055
    %v10160 = vunpack.c.h.b16 %v10055
    %v10161 = vunpack.c.l.b16 %v10056
    %v10162 = vunpack.c.h.b16 %v10056
    %v10163 = vunpack.c.l.b16 %v10057
    %v10164 = vunpack.c.h.b16 %v10057
    %v10165 = vunpack.c.l.b16 %v10058
    %v10166 = vunpack.c.h.b16 %v10058
    %v10167 = vunpack.c.l.b16 %v10059
    %v10168 = vunpack.c.h.b16 %v10059
    %v10169 = vunpack.c.l.b16 %v10060
    %v10170 = vunpack.c.h.b16 %v10060
    %v10171 = vunpack.c.l.b16 %v10061
    %v10172 = vunpack.c.h.b16 %v10061
    %v10173 = vunpack.c.l.b16 %v10062
    %v10174 = vunpack.c.h.b16 %v10062
    %v10175 = vunpack.c.l.b16 %v10063
    %v10176 = vunpack.c.h.b16 %v10063
    %v10177 = vpack.c.b16 %v10107, %v10105
    %v10178 = vpack.c.b16 %v10108, %v10106
    %v10179 = vpack.c.b16 %v10111, %v10109
    %v10180 = vpack.c.b16 %v10112, %v10110
    %v10181 = vpack.c.b16 %v10115, %v10113
    %v10182 = vpack.c.b16 %v10116, %v10114
    %v10183 = vpack.c.b16 %v10119, %v10117
    %v10184 = vpack.c.b16 %v10120, %v10118
    %v10185 = vpack.c.b16 %v10123, %v10121
    %v10186 = vpack.c.b16 %v10124, %v10122
    %v10187 = vpack.c.b16 %v10127, %v10125
    %v10188 = vpack.c.b16 %v10128, %v10126
    %v10189 = vpack.c.b16 %v10131, %v10129
    %v10190 = vpack.c.b16 %v10132, %v10130
    %v10191 = vpack.c.b16 %v10135, %v10133
    %v10192 = vpack.c.b16 %v10136, %v10134
    %v10193 = vpack.c.b16 %v10139, %v10137
    %v10194 = vpack.c.b16 %v10140, %v10138
    %v10195 = vpack.c.b16 %v10143, %v10141
    %v10196 = vpack.c.b16 %v10144, %v10142
    %v10197 = vpack.c.b16 %v10147, %v10145
    %v10198 = vpack.c.b16 %v10148, %v10146
    %v10199 = vpack.c.b16 %v10151, %v10149
    %v10200 = vpack.c.b16 %v10152, %v10150
    %v10201 = vpack.c.b16 %v10155, %v10153
    %v10202 = vpack.c.b16 %v10156, %v10154
    %v10203 = vpack.c.b16 %v10159, %v10157
    %v10204 = vpack.c.b16 %v10160, %v10158
    %v10205 = vpack.c.b16 %v10163, %v10161
    %v10206 = vpack.c.b16 %v10164, %v10162
    %v10207 = vpack.c.b16 %v10167, %v10165
    %v10208 = vpack.c.b16 %v10168, %v10166
    %v10209 = vpack.c.b16 %v10171, %v10169
    %v10210 = vpack.c.b16 %v10172, %v10170
    %v10211 = vpack.c.b16 %v10175, %v10173
    %v10212 = vpack.c.b16 %v10176, %v10174
    %v10250 = vsel %vm8762, %v10066, 0
    %10252 = vmatpush.bf16.msra.mxu0 %v10191
    %10253 = vmatpush.bf16.msra.mxu0 %v10189
    %10254 = vmatpush.bf16.msra.mxu0 %v10187
    %10255 = vmatpush.bf16.msra.mxu0 %v10185
    %10256 = vmatpush.bf16.msra.mxu0 %v10183
    %10257 = vmatpush.bf16.msra.mxu0 %v10181
    %10258 = vmatpush.bf16.msra.mxu0 %v10179
    %10259 = vmatpush.bf16.msra.mxu0 %v10177
    %10260 = vmatmul.bf16.gmra.mxu0 %v10064
    %v10261 = vpop.f32.mrf.mxu0
    %v10262 = vadd.f32 0.0, %v10261
    %v10263 = vpop.f32.mrf.mxu0
    %10264 = vdwg.mxu0
    %10265 = vmatpush.bf16.msra.mxu0 %v10207
    %10266 = vmatpush.bf16.msra.mxu0 %v10205
    %10267 = vmatpush.bf16.msra.mxu0 %v10203
    %10268 = vmatpush.bf16.msra.mxu0 %v10201
    %10269 = vmatpush.bf16.msra.mxu0 %v10199
    %10270 = vmatpush.bf16.msra.mxu0 %v10197
    %10271 = vmatpush.bf16.msra.mxu0 %v10195
    %10272 = vmatpush.bf16.msra.mxu0 %v10193
    %10273 = vmatmul.bf16.gmra.mxu0 %v10065
    %v10274 = vpop.f32.mrf.mxu0
    %v10275 = vadd.f32 %v10262, %v10274
    %v10276 = vpop.f32.mrf.mxu0
    %10277 = vdwg.mxu0
    %10278 = vmatpush.bf16.msra.mxu0 0
    %10279 = vmatpush.bf16.msra.mxu0 0
    %10280 = vmatpush.bf16.msra.mxu0 0
    %10281 = vmatpush.bf16.msra.mxu0 0
    %10282 = vmatpush.bf16.msra.mxu0 0
    %10283 = vmatpush.bf16.msra.mxu0 0
    %10284 = vmatpush.bf16.msra.mxu0 %v10211
    %10285 = vmatpush.bf16.msra.mxu0 %v10209
    %10286 = vmatmul.bf16.gmra.mxu0 %v10250
    %v10287 = vpop.f32.mrf.mxu0
    %v10288 = vadd.f32 %v10275, %v10287
    %v10289 = vpop.f32.mrf.mxu0
    %10290 = vdwg.mxu0
    %10291 = vmatpush.bf16.msra.mxu0 %v10192
    %10292 = vmatpush.bf16.msra.mxu0 %v10190
    %10293 = vmatpush.bf16.msra.mxu0 %v10188
    %10294 = vmatpush.bf16.msra.mxu0 %v10186
    %10295 = vmatpush.bf16.msra.mxu0 %v10184
    %10296 = vmatpush.bf16.msra.mxu0 %v10182
    %10297 = vmatpush.bf16.msra.mxu0 %v10180
    %10298 = vmatpush.bf16.msra.mxu0 %v10178
    %10299 = vmatmul.bf16.gmra.mxu0 %v10064
    %v10300 = vpop.f32.mrf.mxu0
    %v10301 = vadd.f32 0.0, %v10300
    %v10302 = vpop.f32.mrf.mxu0
    %10303 = vdwg.mxu0
    %10304 = vmatpush.bf16.msra.mxu0 %v10208
    %10305 = vmatpush.bf16.msra.mxu0 %v10206
    %10306 = vmatpush.bf16.msra.mxu0 %v10204
    %10307 = vmatpush.bf16.msra.mxu0 %v10202
    %10308 = vmatpush.bf16.msra.mxu0 %v10200
    %10309 = vmatpush.bf16.msra.mxu0 %v10198
    %10310 = vmatpush.bf16.msra.mxu0 %v10196
    %10311 = vmatpush.bf16.msra.mxu0 %v10194
    %10312 = vmatmul.bf16.gmra.mxu0 %v10065
    %v10313 = vpop.f32.mrf.mxu0
    %v10314 = vadd.f32 %v10301, %v10313
    %v10315 = vpop.f32.mrf.mxu0
    %10316 = vdwg.mxu0
    %10317 = vmatpush.bf16.msra.mxu0 0
    %10318 = vmatpush.bf16.msra.mxu0 0
    %10319 = vmatpush.bf16.msra.mxu0 0
    %10320 = vmatpush.bf16.msra.mxu0 0
    %10321 = vmatpush.bf16.msra.mxu0 0
    %10322 = vmatpush.bf16.msra.mxu0 0
    %10323 = vmatpush.bf16.msra.mxu0 %v10212
    %10324 = vmatpush.bf16.msra.mxu0 %v10210
    %10325 = vmatmul.bf16.gmra.mxu0 %v10250
    %v10326 = vpop.f32.mrf.mxu0
    %v10327 = vadd.f32 %v10314, %v10326
    %v10328 = vpop.f32.mrf.mxu0
    %10329 = vdwg.mxu0
    %v10330 = vadd.f32 %v10025, %v10288
    %v10331 = vadd.f32 %v10026, %v10327
    %s10332 = scalar_lea.vmem %s6, 1728
    %v10333 = vld [vmem:[%s10332] sm:$0xff]
    %v10334 = vld [vmem:[%s10332 + $0x8] sm:$0xff]
    %v10335 = vld [vmem:[%s10332 + $0x10] sm:$0xff]
    %v10336 = vld [vmem:[%s10332 + $0x18] sm:$0xff]
    %v10337 = vld [vmem:[%s10332 + $0x20] sm:$0xff]
    %v10338 = vld [vmem:[%s10332 + $0x28] sm:$0xff]
    %v10339 = vld [vmem:[%s10332 + $0x30] sm:$0xff]
    %v10340 = vld [vmem:[%s10332 + $0x38] sm:$0xff]
    %v10341 = vld [vmem:[%s10332 + $0x40] sm:$0xff]
    %v10342 = vld [vmem:[%s10332 + $0x48] sm:$0xff]
    %v10343 = vld [vmem:[%s10332 + $0x50] sm:$0xff]
    %v10344 = vld [vmem:[%s10332 + $0x58] sm:$0xff]
    %v10345 = vld [vmem:[%s10332 + $0x60] sm:$0xff]
    %v10346 = vld [vmem:[%s10332 + $0x68] sm:$0xff]
    %v10347 = vld [vmem:[%s10332 + $0x70] sm:$0xff]
    %v10348 = vld [vmem:[%s10332 + $0x78] sm:$0xff]
    %v10349 = vld [vmem:[%s10332 + $0x80] sm:$0xff]
    %v10350 = vld [vmem:[%s10332 + $0x88] sm:$0xff]
    %v10351 = vld [vmem:[%s10332 + $0x90] sm:$0xff]
    %v10352 = vld [vmem:[%s10332 + $0x98] sm:$0xff]
    %v10353 = vld [vmem:[%s10332 + $0xa0] sm:$0xff]
    %v10354 = vld [vmem:[%s10332 + $0xa8] sm:$0xff]
    %v10355 = vld [vmem:[%s10332 + $0xb0] sm:$0xff]
    %v10356 = vld [vmem:[%s10332 + $0xb8] sm:$0xff]
    %v10357 = vld [vmem:[%s10332 + $0xc0] sm:$0xff]
    %v10358 = vld [vmem:[%s10332 + $0xc8] sm:$0xff]
    %v10359 = vld [vmem:[%s10332 + $0xd0] sm:$0xff]
    %v10360 = vld [vmem:[%s10332 + $0xd8] sm:$0xff]
    %v10361 = vld [vmem:[%s10332 + $0xe0] sm:$0xff]
    %v10362 = vld [vmem:[%s10332 + $0xe8] sm:$0xff]
    %v10363 = vld [vmem:[%s10332 + $0xf0] sm:$0xff]
    %v10364 = vld [vmem:[%s10332 + $0xf8] sm:$0xff]
    %v10365 = vld [vmem:[%s10332 + $0x100] sm:$0xff]
    %v10366 = vld [vmem:[%s10332 + $0x108] sm:$0xff]
    %v10367 = vld [vmem:[%s10332 + $0x110] sm:$0xff]
    %v10368 = vld [vmem:[%s10332 + $0x118] sm:$0xff]
    %v10369 = vrot.slane %v9759, 2
    %v10370 = vrot.slane %v9760, 2
    %v10371 = vrot.slane %v9761, 2
    %v10410 = vunpack.c.l.b16 %v10333
    %v10411 = vunpack.c.h.b16 %v10333
    %v10412 = vunpack.c.l.b16 %v10334
    %v10413 = vunpack.c.h.b16 %v10334
    %v10414 = vunpack.c.l.b16 %v10335
    %v10415 = vunpack.c.h.b16 %v10335
    %v10416 = vunpack.c.l.b16 %v10336
    %v10417 = vunpack.c.h.b16 %v10336
    %v10418 = vunpack.c.l.b16 %v10337
    %v10419 = vunpack.c.h.b16 %v10337
    %v10420 = vunpack.c.l.b16 %v10338
    %v10421 = vunpack.c.h.b16 %v10338
    %v10422 = vunpack.c.l.b16 %v10339
    %v10423 = vunpack.c.h.b16 %v10339
    %v10424 = vunpack.c.l.b16 %v10340
    %v10425 = vunpack.c.h.b16 %v10340
    %v10426 = vunpack.c.l.b16 %v10341
    %v10427 = vunpack.c.h.b16 %v10341
    %v10428 = vunpack.c.l.b16 %v10342
    %v10429 = vunpack.c.h.b16 %v10342
    %v10430 = vunpack.c.l.b16 %v10343
    %v10431 = vunpack.c.h.b16 %v10343
    %v10432 = vunpack.c.l.b16 %v10344
    %v10433 = vunpack.c.h.b16 %v10344
    %v10434 = vunpack.c.l.b16 %v10345
    %v10435 = vunpack.c.h.b16 %v10345
    %v10436 = vunpack.c.l.b16 %v10346
    %v10437 = vunpack.c.h.b16 %v10346
    %v10438 = vunpack.c.l.b16 %v10347
    %v10439 = vunpack.c.h.b16 %v10347
    %v10440 = vunpack.c.l.b16 %v10348
    %v10441 = vunpack.c.h.b16 %v10348
    %v10442 = vunpack.c.l.b16 %v10349
    %v10443 = vunpack.c.h.b16 %v10349
    %v10444 = vunpack.c.l.b16 %v10350
    %v10445 = vunpack.c.h.b16 %v10350
    %v10446 = vunpack.c.l.b16 %v10351
    %v10447 = vunpack.c.h.b16 %v10351
    %v10448 = vunpack.c.l.b16 %v10352
    %v10449 = vunpack.c.h.b16 %v10352
    %v10450 = vunpack.c.l.b16 %v10353
    %v10451 = vunpack.c.h.b16 %v10353
    %v10452 = vunpack.c.l.b16 %v10354
    %v10453 = vunpack.c.h.b16 %v10354
    %v10454 = vunpack.c.l.b16 %v10355
    %v10455 = vunpack.c.h.b16 %v10355
    %v10456 = vunpack.c.l.b16 %v10356
    %v10457 = vunpack.c.h.b16 %v10356
    %v10458 = vunpack.c.l.b16 %v10357
    %v10459 = vunpack.c.h.b16 %v10357
    %v10460 = vunpack.c.l.b16 %v10358
    %v10461 = vunpack.c.h.b16 %v10358
    %v10462 = vunpack.c.l.b16 %v10359
    %v10463 = vunpack.c.h.b16 %v10359
    %v10464 = vunpack.c.l.b16 %v10360
    %v10465 = vunpack.c.h.b16 %v10360
    %v10466 = vunpack.c.l.b16 %v10361
    %v10467 = vunpack.c.h.b16 %v10361
    %v10468 = vunpack.c.l.b16 %v10362
    %v10469 = vunpack.c.h.b16 %v10362
    %v10470 = vunpack.c.l.b16 %v10363
    %v10471 = vunpack.c.h.b16 %v10363
    %v10472 = vunpack.c.l.b16 %v10364
    %v10473 = vunpack.c.h.b16 %v10364
    %v10474 = vunpack.c.l.b16 %v10365
    %v10475 = vunpack.c.h.b16 %v10365
    %v10476 = vunpack.c.l.b16 %v10366
    %v10477 = vunpack.c.h.b16 %v10366
    %v10478 = vunpack.c.l.b16 %v10367
    %v10479 = vunpack.c.h.b16 %v10367
    %v10480 = vunpack.c.l.b16 %v10368
    %v10481 = vunpack.c.h.b16 %v10368
    %v10482 = vpack.c.b16 %v10412, %v10410
    %v10483 = vpack.c.b16 %v10413, %v10411
    %v10484 = vpack.c.b16 %v10416, %v10414
    %v10485 = vpack.c.b16 %v10417, %v10415
    %v10486 = vpack.c.b16 %v10420, %v10418
    %v10487 = vpack.c.b16 %v10421, %v10419
    %v10488 = vpack.c.b16 %v10424, %v10422
    %v10489 = vpack.c.b16 %v10425, %v10423
    %v10490 = vpack.c.b16 %v10428, %v10426
    %v10491 = vpack.c.b16 %v10429, %v10427
    %v10492 = vpack.c.b16 %v10432, %v10430
    %v10493 = vpack.c.b16 %v10433, %v10431
    %v10494 = vpack.c.b16 %v10436, %v10434
    %v10495 = vpack.c.b16 %v10437, %v10435
    %v10496 = vpack.c.b16 %v10440, %v10438
    %v10497 = vpack.c.b16 %v10441, %v10439
    %v10498 = vpack.c.b16 %v10444, %v10442
    %v10499 = vpack.c.b16 %v10445, %v10443
    %v10500 = vpack.c.b16 %v10448, %v10446
    %v10501 = vpack.c.b16 %v10449, %v10447
    %v10502 = vpack.c.b16 %v10452, %v10450
    %v10503 = vpack.c.b16 %v10453, %v10451
    %v10504 = vpack.c.b16 %v10456, %v10454
    %v10505 = vpack.c.b16 %v10457, %v10455
    %v10506 = vpack.c.b16 %v10460, %v10458
    %v10507 = vpack.c.b16 %v10461, %v10459
    %v10508 = vpack.c.b16 %v10464, %v10462
    %v10509 = vpack.c.b16 %v10465, %v10463
    %v10510 = vpack.c.b16 %v10468, %v10466
    %v10511 = vpack.c.b16 %v10469, %v10467
    %v10512 = vpack.c.b16 %v10472, %v10470
    %v10513 = vpack.c.b16 %v10473, %v10471
    %v10514 = vpack.c.b16 %v10476, %v10474
    %v10515 = vpack.c.b16 %v10477, %v10475
    %v10516 = vpack.c.b16 %v10480, %v10478
    %v10517 = vpack.c.b16 %v10481, %v10479
    %v10555 = vsel %vm8762, %v10371, 0
    %10557 = vmatpush.bf16.msra.mxu0 %v10496
    %10558 = vmatpush.bf16.msra.mxu0 %v10494
    %10559 = vmatpush.bf16.msra.mxu0 %v10492
    %10560 = vmatpush.bf16.msra.mxu0 %v10490
    %10561 = vmatpush.bf16.msra.mxu0 %v10488
    %10562 = vmatpush.bf16.msra.mxu0 %v10486
    %10563 = vmatpush.bf16.msra.mxu0 %v10484
    %10564 = vmatpush.bf16.msra.mxu0 %v10482
    %10565 = vmatmul.bf16.gmra.mxu0 %v10369
    %v10566 = vpop.f32.mrf.mxu0
    %v10567 = vadd.f32 0.0, %v10566
    %v10568 = vpop.f32.mrf.mxu0
    %10569 = vdwg.mxu0
    %10570 = vmatpush.bf16.msra.mxu0 %v10512
    %10571 = vmatpush.bf16.msra.mxu0 %v10510
    %10572 = vmatpush.bf16.msra.mxu0 %v10508
    %10573 = vmatpush.bf16.msra.mxu0 %v10506
    %10574 = vmatpush.bf16.msra.mxu0 %v10504
    %10575 = vmatpush.bf16.msra.mxu0 %v10502
    %10576 = vmatpush.bf16.msra.mxu0 %v10500
    %10577 = vmatpush.bf16.msra.mxu0 %v10498
    %10578 = vmatmul.bf16.gmra.mxu0 %v10370
    %v10579 = vpop.f32.mrf.mxu0
    %v10580 = vadd.f32 %v10567, %v10579
    %v10581 = vpop.f32.mrf.mxu0
    %10582 = vdwg.mxu0
    %10583 = vmatpush.bf16.msra.mxu0 0
    %10584 = vmatpush.bf16.msra.mxu0 0
    %10585 = vmatpush.bf16.msra.mxu0 0
    %10586 = vmatpush.bf16.msra.mxu0 0
    %10587 = vmatpush.bf16.msra.mxu0 0
    %10588 = vmatpush.bf16.msra.mxu0 0
    %10589 = vmatpush.bf16.msra.mxu0 %v10516
    %10590 = vmatpush.bf16.msra.mxu0 %v10514
    %10591 = vmatmul.bf16.gmra.mxu0 %v10555
    %v10592 = vpop.f32.mrf.mxu0
    %v10593 = vadd.f32 %v10580, %v10592
    %v10594 = vpop.f32.mrf.mxu0
    %10595 = vdwg.mxu0
    %10596 = vmatpush.bf16.msra.mxu0 %v10497
    %10597 = vmatpush.bf16.msra.mxu0 %v10495
    %10598 = vmatpush.bf16.msra.mxu0 %v10493
    %10599 = vmatpush.bf16.msra.mxu0 %v10491
    %10600 = vmatpush.bf16.msra.mxu0 %v10489
    %10601 = vmatpush.bf16.msra.mxu0 %v10487
    %10602 = vmatpush.bf16.msra.mxu0 %v10485
    %10603 = vmatpush.bf16.msra.mxu0 %v10483
    %10604 = vmatmul.bf16.gmra.mxu0 %v10369
    %v10605 = vpop.f32.mrf.mxu0
    %v10606 = vadd.f32 0.0, %v10605
    %v10607 = vpop.f32.mrf.mxu0
    %10608 = vdwg.mxu0
    %10609 = vmatpush.bf16.msra.mxu0 %v10513
    %10610 = vmatpush.bf16.msra.mxu0 %v10511
    %10611 = vmatpush.bf16.msra.mxu0 %v10509
    %10612 = vmatpush.bf16.msra.mxu0 %v10507
    %10613 = vmatpush.bf16.msra.mxu0 %v10505
    %10614 = vmatpush.bf16.msra.mxu0 %v10503
    %10615 = vmatpush.bf16.msra.mxu0 %v10501
    %10616 = vmatpush.bf16.msra.mxu0 %v10499
    %10617 = vmatmul.bf16.gmra.mxu0 %v10370
    %v10618 = vpop.f32.mrf.mxu0
    %v10619 = vadd.f32 %v10606, %v10618
    %v10620 = vpop.f32.mrf.mxu0
    %10621 = vdwg.mxu0
    %10622 = vmatpush.bf16.msra.mxu0 0
    %10623 = vmatpush.bf16.msra.mxu0 0
    %10624 = vmatpush.bf16.msra.mxu0 0
    %10625 = vmatpush.bf16.msra.mxu0 0
    %10626 = vmatpush.bf16.msra.mxu0 0
    %10627 = vmatpush.bf16.msra.mxu0 0
    %10628 = vmatpush.bf16.msra.mxu0 %v10517
    %10629 = vmatpush.bf16.msra.mxu0 %v10515
    %10630 = vmatmul.bf16.gmra.mxu0 %v10555
    %v10631 = vpop.f32.mrf.mxu0
    %v10632 = vadd.f32 %v10619, %v10631
    %v10633 = vpop.f32.mrf.mxu0
    %10634 = vdwg.mxu0
    %v10635 = vadd.f32 %v10330, %v10593
    %v10636 = vadd.f32 %v10331, %v10632
    %s10637 = scalar_lea.vmem %s6, 2016
    %v10638 = vld [vmem:[%s10637] sm:$0xff]
    %v10639 = vld [vmem:[%s10637 + $0x8] sm:$0xff]
    %v10640 = vld [vmem:[%s10637 + $0x10] sm:$0xff]
    %v10641 = vld [vmem:[%s10637 + $0x18] sm:$0xff]
    %v10642 = vld [vmem:[%s10637 + $0x20] sm:$0xff]
    %v10643 = vld [vmem:[%s10637 + $0x28] sm:$0xff]
    %v10644 = vld [vmem:[%s10637 + $0x30] sm:$0xff]
    %v10645 = vld [vmem:[%s10637 + $0x38] sm:$0xff]
    %v10646 = vld [vmem:[%s10637 + $0x40] sm:$0xff]
    %v10647 = vld [vmem:[%s10637 + $0x48] sm:$0xff]
    %v10648 = vld [vmem:[%s10637 + $0x50] sm:$0xff]
    %v10649 = vld [vmem:[%s10637 + $0x58] sm:$0xff]
    %v10650 = vld [vmem:[%s10637 + $0x60] sm:$0xff]
    %v10651 = vld [vmem:[%s10637 + $0x68] sm:$0xff]
    %v10652 = vld [vmem:[%s10637 + $0x70] sm:$0xff]
    %v10653 = vld [vmem:[%s10637 + $0x78] sm:$0xff]
    %v10654 = vld [vmem:[%s10637 + $0x80] sm:$0xff]
    %v10655 = vld [vmem:[%s10637 + $0x88] sm:$0xff]
    %v10656 = vld [vmem:[%s10637 + $0x90] sm:$0xff]
    %v10657 = vld [vmem:[%s10637 + $0x98] sm:$0xff]
    %v10658 = vld [vmem:[%s10637 + $0xa0] sm:$0xff]
    %v10659 = vld [vmem:[%s10637 + $0xa8] sm:$0xff]
    %v10660 = vld [vmem:[%s10637 + $0xb0] sm:$0xff]
    %v10661 = vld [vmem:[%s10637 + $0xb8] sm:$0xff]
    %v10662 = vld [vmem:[%s10637 + $0xc0] sm:$0xff]
    %v10663 = vld [vmem:[%s10637 + $0xc8] sm:$0xff]
    %v10664 = vld [vmem:[%s10637 + $0xd0] sm:$0xff]
    %v10665 = vld [vmem:[%s10637 + $0xd8] sm:$0xff]
    %v10666 = vld [vmem:[%s10637 + $0xe0] sm:$0xff]
    %v10667 = vld [vmem:[%s10637 + $0xe8] sm:$0xff]
    %v10668 = vld [vmem:[%s10637 + $0xf0] sm:$0xff]
    %v10669 = vld [vmem:[%s10637 + $0xf8] sm:$0xff]
    %v10670 = vld [vmem:[%s10637 + $0x100] sm:$0xff]
    %v10671 = vld [vmem:[%s10637 + $0x108] sm:$0xff]
    %v10672 = vld [vmem:[%s10637 + $0x110] sm:$0xff]
    %v10673 = vld [vmem:[%s10637 + $0x118] sm:$0xff]
    %v10674 = vrot.slane %v9759, 3
    %v10675 = vrot.slane %v9760, 3
    %v10676 = vrot.slane %v9761, 3
    %v10715 = vunpack.c.l.b16 %v10638
    %v10716 = vunpack.c.h.b16 %v10638
    %v10717 = vunpack.c.l.b16 %v10639
    %v10718 = vunpack.c.h.b16 %v10639
    %v10719 = vunpack.c.l.b16 %v10640
    %v10720 = vunpack.c.h.b16 %v10640
    %v10721 = vunpack.c.l.b16 %v10641
    %v10722 = vunpack.c.h.b16 %v10641
    %v10723 = vunpack.c.l.b16 %v10642
    %v10724 = vunpack.c.h.b16 %v10642
    %v10725 = vunpack.c.l.b16 %v10643
    %v10726 = vunpack.c.h.b16 %v10643
    %v10727 = vunpack.c.l.b16 %v10644
    %v10728 = vunpack.c.h.b16 %v10644
    %v10729 = vunpack.c.l.b16 %v10645
    %v10730 = vunpack.c.h.b16 %v10645
    %v10731 = vunpack.c.l.b16 %v10646
    %v10732 = vunpack.c.h.b16 %v10646
    %v10733 = vunpack.c.l.b16 %v10647
    %v10734 = vunpack.c.h.b16 %v10647
    %v10735 = vunpack.c.l.b16 %v10648
    %v10736 = vunpack.c.h.b16 %v10648
    %v10737 = vunpack.c.l.b16 %v10649
    %v10738 = vunpack.c.h.b16 %v10649
    %v10739 = vunpack.c.l.b16 %v10650
    %v10740 = vunpack.c.h.b16 %v10650
    %v10741 = vunpack.c.l.b16 %v10651
    %v10742 = vunpack.c.h.b16 %v10651
    %v10743 = vunpack.c.l.b16 %v10652
    %v10744 = vunpack.c.h.b16 %v10652
    %v10745 = vunpack.c.l.b16 %v10653
    %v10746 = vunpack.c.h.b16 %v10653
    %v10747 = vunpack.c.l.b16 %v10654
    %v10748 = vunpack.c.h.b16 %v10654
    %v10749 = vunpack.c.l.b16 %v10655
    %v10750 = vunpack.c.h.b16 %v10655
    %v10751 = vunpack.c.l.b16 %v10656
    %v10752 = vunpack.c.h.b16 %v10656
    %v10753 = vunpack.c.l.b16 %v10657
    %v10754 = vunpack.c.h.b16 %v10657
    %v10755 = vunpack.c.l.b16 %v10658
    %v10756 = vunpack.c.h.b16 %v10658
    %v10757 = vunpack.c.l.b16 %v10659
    %v10758 = vunpack.c.h.b16 %v10659
    %v10759 = vunpack.c.l.b16 %v10660
    %v10760 = vunpack.c.h.b16 %v10660
    %v10761 = vunpack.c.l.b16 %v10661
    %v10762 = vunpack.c.h.b16 %v10661
    %v10763 = vunpack.c.l.b16 %v10662
    %v10764 = vunpack.c.h.b16 %v10662
    %v10765 = vunpack.c.l.b16 %v10663
    %v10766 = vunpack.c.h.b16 %v10663
    %v10767 = vunpack.c.l.b16 %v10664
    %v10768 = vunpack.c.h.b16 %v10664
    %v10769 = vunpack.c.l.b16 %v10665
    %v10770 = vunpack.c.h.b16 %v10665
    %v10771 = vunpack.c.l.b16 %v10666
    %v10772 = vunpack.c.h.b16 %v10666
    %v10773 = vunpack.c.l.b16 %v10667
    %v10774 = vunpack.c.h.b16 %v10667
    %v10775 = vunpack.c.l.b16 %v10668
    %v10776 = vunpack.c.h.b16 %v10668
    %v10777 = vunpack.c.l.b16 %v10669
    %v10778 = vunpack.c.h.b16 %v10669
    %v10779 = vunpack.c.l.b16 %v10670
    %v10780 = vunpack.c.h.b16 %v10670
    %v10781 = vunpack.c.l.b16 %v10671
    %v10782 = vunpack.c.h.b16 %v10671
    %v10783 = vunpack.c.l.b16 %v10672
    %v10784 = vunpack.c.h.b16 %v10672
    %v10785 = vunpack.c.l.b16 %v10673
    %v10786 = vunpack.c.h.b16 %v10673
    %v10787 = vpack.c.b16 %v10717, %v10715
    %v10788 = vpack.c.b16 %v10718, %v10716
    %v10789 = vpack.c.b16 %v10721, %v10719
    %v10790 = vpack.c.b16 %v10722, %v10720
    %v10791 = vpack.c.b16 %v10725, %v10723
    %v10792 = vpack.c.b16 %v10726, %v10724
    %v10793 = vpack.c.b16 %v10729, %v10727
    %v10794 = vpack.c.b16 %v10730, %v10728
    %v10795 = vpack.c.b16 %v10733, %v10731
    %v10796 = vpack.c.b16 %v10734, %v10732
    %v10797 = vpack.c.b16 %v10737, %v10735
    %v10798 = vpack.c.b16 %v10738, %v10736
    %v10799 = vpack.c.b16 %v10741, %v10739
    %v10800 = vpack.c.b16 %v10742, %v10740
    %v10801 = vpack.c.b16 %v10745, %v10743
    %v10802 = vpack.c.b16 %v10746, %v10744
    %v10803 = vpack.c.b16 %v10749, %v10747
    %v10804 = vpack.c.b16 %v10750, %v10748
    %v10805 = vpack.c.b16 %v10753, %v10751
    %v10806 = vpack.c.b16 %v10754, %v10752
    %v10807 = vpack.c.b16 %v10757, %v10755
    %v10808 = vpack.c.b16 %v10758, %v10756
    %v10809 = vpack.c.b16 %v10761, %v10759
    %v10810 = vpack.c.b16 %v10762, %v10760
    %v10811 = vpack.c.b16 %v10765, %v10763
    %v10812 = vpack.c.b16 %v10766, %v10764
    %v10813 = vpack.c.b16 %v10769, %v10767
    %v10814 = vpack.c.b16 %v10770, %v10768
    %v10815 = vpack.c.b16 %v10773, %v10771
    %v10816 = vpack.c.b16 %v10774, %v10772
    %v10817 = vpack.c.b16 %v10777, %v10775
    %v10818 = vpack.c.b16 %v10778, %v10776
    %v10819 = vpack.c.b16 %v10781, %v10779
    %v10820 = vpack.c.b16 %v10782, %v10780
    %v10821 = vpack.c.b16 %v10785, %v10783
    %v10822 = vpack.c.b16 %v10786, %v10784
    %v10860 = vsel %vm8762, %v10676, 0
    %10862 = vmatpush.bf16.msra.mxu0 %v10801
    %10863 = vmatpush.bf16.msra.mxu0 %v10799
    %10864 = vmatpush.bf16.msra.mxu0 %v10797
    %10865 = vmatpush.bf16.msra.mxu0 %v10795
    %10866 = vmatpush.bf16.msra.mxu0 %v10793
    %10867 = vmatpush.bf16.msra.mxu0 %v10791
    %10868 = vmatpush.bf16.msra.mxu0 %v10789
    %10869 = vmatpush.bf16.msra.mxu0 %v10787
    %10870 = vmatmul.bf16.gmra.mxu0 %v10674
    %v10871 = vpop.f32.mrf.mxu0
    %v10872 = vadd.f32 0.0, %v10871
    %v10873 = vpop.f32.mrf.mxu0
    %10874 = vdwg.mxu0
    %10875 = vmatpush.bf16.msra.mxu0 %v10817
    %10876 = vmatpush.bf16.msra.mxu0 %v10815
    %10877 = vmatpush.bf16.msra.mxu0 %v10813
    %10878 = vmatpush.bf16.msra.mxu0 %v10811
    %10879 = vmatpush.bf16.msra.mxu0 %v10809
    %10880 = vmatpush.bf16.msra.mxu0 %v10807
    %10881 = vmatpush.bf16.msra.mxu0 %v10805
    %10882 = vmatpush.bf16.msra.mxu0 %v10803
    %10883 = vmatmul.bf16.gmra.mxu0 %v10675
    %v10884 = vpop.f32.mrf.mxu0
    %v10885 = vadd.f32 %v10872, %v10884
    %v10886 = vpop.f32.mrf.mxu0
    %10887 = vdwg.mxu0
    %10888 = vmatpush.bf16.msra.mxu0 0
    %10889 = vmatpush.bf16.msra.mxu0 0
    %10890 = vmatpush.bf16.msra.mxu0 0
    %10891 = vmatpush.bf16.msra.mxu0 0
    %10892 = vmatpush.bf16.msra.mxu0 0
    %10893 = vmatpush.bf16.msra.mxu0 0
    %10894 = vmatpush.bf16.msra.mxu0 %v10821
    %10895 = vmatpush.bf16.msra.mxu0 %v10819
    %10896 = vmatmul.bf16.gmra.mxu0 %v10860
    %v10897 = vpop.f32.mrf.mxu0
    %v10898 = vadd.f32 %v10885, %v10897
    %v10899 = vpop.f32.mrf.mxu0
    %10900 = vdwg.mxu0
    %10901 = vmatpush.bf16.msra.mxu0 %v10802
    %10902 = vmatpush.bf16.msra.mxu0 %v10800
    %10903 = vmatpush.bf16.msra.mxu0 %v10798
    %10904 = vmatpush.bf16.msra.mxu0 %v10796
    %10905 = vmatpush.bf16.msra.mxu0 %v10794
    %10906 = vmatpush.bf16.msra.mxu0 %v10792
    %10907 = vmatpush.bf16.msra.mxu0 %v10790
    %10908 = vmatpush.bf16.msra.mxu0 %v10788
    %10909 = vmatmul.bf16.gmra.mxu0 %v10674
    %v10910 = vpop.f32.mrf.mxu0
    %v10911 = vadd.f32 0.0, %v10910
    %v10912 = vpop.f32.mrf.mxu0
    %10913 = vdwg.mxu0
    %10914 = vmatpush.bf16.msra.mxu0 %v10818
    %10915 = vmatpush.bf16.msra.mxu0 %v10816
    %10916 = vmatpush.bf16.msra.mxu0 %v10814
    %10917 = vmatpush.bf16.msra.mxu0 %v10812
    %10918 = vmatpush.bf16.msra.mxu0 %v10810
    %10919 = vmatpush.bf16.msra.mxu0 %v10808
    %10920 = vmatpush.bf16.msra.mxu0 %v10806
    %10921 = vmatpush.bf16.msra.mxu0 %v10804
    %10922 = vmatmul.bf16.gmra.mxu0 %v10675
    %v10923 = vpop.f32.mrf.mxu0
    %v10924 = vadd.f32 %v10911, %v10923
    %v10925 = vpop.f32.mrf.mxu0
    %10926 = vdwg.mxu0
    %10927 = vmatpush.bf16.msra.mxu0 0
    %10928 = vmatpush.bf16.msra.mxu0 0
    %10929 = vmatpush.bf16.msra.mxu0 0
    %10930 = vmatpush.bf16.msra.mxu0 0
    %10931 = vmatpush.bf16.msra.mxu0 0
    %10932 = vmatpush.bf16.msra.mxu0 0
    %10933 = vmatpush.bf16.msra.mxu0 %v10822
    %10934 = vmatpush.bf16.msra.mxu0 %v10820
    %10935 = vmatmul.bf16.gmra.mxu0 %v10860
    %v10936 = vpop.f32.mrf.mxu0
    %v10937 = vadd.f32 %v10924, %v10936
    %v10938 = vpop.f32.mrf.mxu0
    %10939 = vdwg.mxu0
    %v10940 = vadd.f32 %v10635, %v10898
    %v10941 = vadd.f32 %v10636, %v10937
    %s10942 = scalar_lea.vmem %s6, 2304
    %v10943 = vld [vmem:[%s10942] sm:$0xff]
    %v10944 = vld [vmem:[%s10942 + $0x8] sm:$0xff]
    %v10945 = vld [vmem:[%s10942 + $0x10] sm:$0xff]
    %v10946 = vld [vmem:[%s10942 + $0x18] sm:$0xff]
    %v10947 = vld [vmem:[%s10942 + $0x20] sm:$0xff]
    %v10948 = vld [vmem:[%s10942 + $0x28] sm:$0xff]
    %v10949 = vld [vmem:[%s10942 + $0x30] sm:$0xff]
    %v10950 = vld [vmem:[%s10942 + $0x38] sm:$0xff]
    %v10951 = vld [vmem:[%s10942 + $0x40] sm:$0xff]
    %v10952 = vld [vmem:[%s10942 + $0x48] sm:$0xff]
    %v10953 = vld [vmem:[%s10942 + $0x50] sm:$0xff]
    %v10954 = vld [vmem:[%s10942 + $0x58] sm:$0xff]
    %v10955 = vld [vmem:[%s10942 + $0x60] sm:$0xff]
    %v10956 = vld [vmem:[%s10942 + $0x68] sm:$0xff]
    %v10957 = vld [vmem:[%s10942 + $0x70] sm:$0xff]
    %v10958 = vld [vmem:[%s10942 + $0x78] sm:$0xff]
    %v10959 = vld [vmem:[%s10942 + $0x80] sm:$0xff]
    %v10960 = vld [vmem:[%s10942 + $0x88] sm:$0xff]
    %v10961 = vld [vmem:[%s10942 + $0x90] sm:$0xff]
    %v10962 = vld [vmem:[%s10942 + $0x98] sm:$0xff]
    %v10963 = vld [vmem:[%s10942 + $0xa0] sm:$0xff]
    %v10964 = vld [vmem:[%s10942 + $0xa8] sm:$0xff]
    %v10965 = vld [vmem:[%s10942 + $0xb0] sm:$0xff]
    %v10966 = vld [vmem:[%s10942 + $0xb8] sm:$0xff]
    %v10967 = vld [vmem:[%s10942 + $0xc0] sm:$0xff]
    %v10968 = vld [vmem:[%s10942 + $0xc8] sm:$0xff]
    %v10969 = vld [vmem:[%s10942 + $0xd0] sm:$0xff]
    %v10970 = vld [vmem:[%s10942 + $0xd8] sm:$0xff]
    %v10971 = vld [vmem:[%s10942 + $0xe0] sm:$0xff]
    %v10972 = vld [vmem:[%s10942 + $0xe8] sm:$0xff]
    %v10973 = vld [vmem:[%s10942 + $0xf0] sm:$0xff]
    %v10974 = vld [vmem:[%s10942 + $0xf8] sm:$0xff]
    %v10975 = vld [vmem:[%s10942 + $0x100] sm:$0xff]
    %v10976 = vld [vmem:[%s10942 + $0x108] sm:$0xff]
    %v10977 = vld [vmem:[%s10942 + $0x110] sm:$0xff]
    %v10978 = vld [vmem:[%s10942 + $0x118] sm:$0xff]
    %v10981 = vunpack.c.l.b16 %v8494
    %v10982 = vunpack.c.h.b16 %v8494
    %v10983 = vunpack.c.l.b16 %v8495
    %v10984 = vpack.c.b16 %v10981, %v10981
    %v10985 = vpack.c.b16 %v10982, %v10982
    %v10986 = vpack.c.b16 %v10983, %v10983
    %v11025 = vunpack.c.l.b16 %v10943
    %v11026 = vunpack.c.h.b16 %v10943
    %v11027 = vunpack.c.l.b16 %v10944
    %v11028 = vunpack.c.h.b16 %v10944
    %v11029 = vunpack.c.l.b16 %v10945
    %v11030 = vunpack.c.h.b16 %v10945
    %v11031 = vunpack.c.l.b16 %v10946
    %v11032 = vunpack.c.h.b16 %v10946
    %v11033 = vunpack.c.l.b16 %v10947
    %v11034 = vunpack.c.h.b16 %v10947
    %v11035 = vunpack.c.l.b16 %v10948
    %v11036 = vunpack.c.h.b16 %v10948
    %v11037 = vunpack.c.l.b16 %v10949
    %v11038 = vunpack.c.h.b16 %v10949
    %v11039 = vunpack.c.l.b16 %v10950
    %v11040 = vunpack.c.h.b16 %v10950
    %v11041 = vunpack.c.l.b16 %v10951
    %v11042 = vunpack.c.h.b16 %v10951
    %v11043 = vunpack.c.l.b16 %v10952
    %v11044 = vunpack.c.h.b16 %v10952
    %v11045 = vunpack.c.l.b16 %v10953
    %v11046 = vunpack.c.h.b16 %v10953
    %v11047 = vunpack.c.l.b16 %v10954
    %v11048 = vunpack.c.h.b16 %v10954
    %v11049 = vunpack.c.l.b16 %v10955
    %v11050 = vunpack.c.h.b16 %v10955
    %v11051 = vunpack.c.l.b16 %v10956
    %v11052 = vunpack.c.h.b16 %v10956
    %v11053 = vunpack.c.l.b16 %v10957
    %v11054 = vunpack.c.h.b16 %v10957
    %v11055 = vunpack.c.l.b16 %v10958
    %v11056 = vunpack.c.h.b16 %v10958
    %v11057 = vunpack.c.l.b16 %v10959
    %v11058 = vunpack.c.h.b16 %v10959
    %v11059 = vunpack.c.l.b16 %v10960
    %v11060 = vunpack.c.h.b16 %v10960
    %v11061 = vunpack.c.l.b16 %v10961
    %v11062 = vunpack.c.h.b16 %v10961
    %v11063 = vunpack.c.l.b16 %v10962
    %v11064 = vunpack.c.h.b16 %v10962
    %v11065 = vunpack.c.l.b16 %v10963
    %v11066 = vunpack.c.h.b16 %v10963
    %v11067 = vunpack.c.l.b16 %v10964
    %v11068 = vunpack.c.h.b16 %v10964
    %v11069 = vunpack.c.l.b16 %v10965
    %v11070 = vunpack.c.h.b16 %v10965
    %v11071 = vunpack.c.l.b16 %v10966
    %v11072 = vunpack.c.h.b16 %v10966
    %v11073 = vunpack.c.l.b16 %v10967
    %v11074 = vunpack.c.h.b16 %v10967
    %v11075 = vunpack.c.l.b16 %v10968
    %v11076 = vunpack.c.h.b16 %v10968
    %v11077 = vunpack.c.l.b16 %v10969
    %v11078 = vunpack.c.h.b16 %v10969
    %v11079 = vunpack.c.l.b16 %v10970
    %v11080 = vunpack.c.h.b16 %v10970
    %v11081 = vunpack.c.l.b16 %v10971
    %v11082 = vunpack.c.h.b16 %v10971
    %v11083 = vunpack.c.l.b16 %v10972
    %v11084 = vunpack.c.h.b16 %v10972
    %v11085 = vunpack.c.l.b16 %v10973
    %v11086 = vunpack.c.h.b16 %v10973
    %v11087 = vunpack.c.l.b16 %v10974
    %v11088 = vunpack.c.h.b16 %v10974
    %v11089 = vunpack.c.l.b16 %v10975
    %v11090 = vunpack.c.h.b16 %v10975
    %v11091 = vunpack.c.l.b16 %v10976
    %v11092 = vunpack.c.h.b16 %v10976
    %v11093 = vunpack.c.l.b16 %v10977
    %v11094 = vunpack.c.h.b16 %v10977
    %v11095 = vunpack.c.l.b16 %v10978
    %v11096 = vunpack.c.h.b16 %v10978
    %v11097 = vpack.c.b16 %v11027, %v11025
    %v11098 = vpack.c.b16 %v11028, %v11026
    %v11099 = vpack.c.b16 %v11031, %v11029
    %v11100 = vpack.c.b16 %v11032, %v11030
    %v11101 = vpack.c.b16 %v11035, %v11033
    %v11102 = vpack.c.b16 %v11036, %v11034
    %v11103 = vpack.c.b16 %v11039, %v11037
    %v11104 = vpack.c.b16 %v11040, %v11038
    %v11105 = vpack.c.b16 %v11043, %v11041
    %v11106 = vpack.c.b16 %v11044, %v11042
    %v11107 = vpack.c.b16 %v11047, %v11045
    %v11108 = vpack.c.b16 %v11048, %v11046
    %v11109 = vpack.c.b16 %v11051, %v11049
    %v11110 = vpack.c.b16 %v11052, %v11050
    %v11111 = vpack.c.b16 %v11055, %v11053
    %v11112 = vpack.c.b16 %v11056, %v11054
    %v11113 = vpack.c.b16 %v11059, %v11057
    %v11114 = vpack.c.b16 %v11060, %v11058
    %v11115 = vpack.c.b16 %v11063, %v11061
    %v11116 = vpack.c.b16 %v11064, %v11062
    %v11117 = vpack.c.b16 %v11067, %v11065
    %v11118 = vpack.c.b16 %v11068, %v11066
    %v11119 = vpack.c.b16 %v11071, %v11069
    %v11120 = vpack.c.b16 %v11072, %v11070
    %v11121 = vpack.c.b16 %v11075, %v11073
    %v11122 = vpack.c.b16 %v11076, %v11074
    %v11123 = vpack.c.b16 %v11079, %v11077
    %v11124 = vpack.c.b16 %v11080, %v11078
    %v11125 = vpack.c.b16 %v11083, %v11081
    %v11126 = vpack.c.b16 %v11084, %v11082
    %v11127 = vpack.c.b16 %v11087, %v11085
    %v11128 = vpack.c.b16 %v11088, %v11086
    %v11129 = vpack.c.b16 %v11091, %v11089
    %v11130 = vpack.c.b16 %v11092, %v11090
    %v11131 = vpack.c.b16 %v11095, %v11093
    %v11132 = vpack.c.b16 %v11096, %v11094
    %v11170 = vsel %vm8762, %v10986, 0
    %11172 = vmatpush.bf16.msra.mxu0 %v11111
    %11173 = vmatpush.bf16.msra.mxu0 %v11109
    %11174 = vmatpush.bf16.msra.mxu0 %v11107
    %11175 = vmatpush.bf16.msra.mxu0 %v11105
    %11176 = vmatpush.bf16.msra.mxu0 %v11103
    %11177 = vmatpush.bf16.msra.mxu0 %v11101
    %11178 = vmatpush.bf16.msra.mxu0 %v11099
    %11179 = vmatpush.bf16.msra.mxu0 %v11097
    %11180 = vmatmul.bf16.gmra.mxu0 %v10984
    %v11181 = vpop.f32.mrf.mxu0
    %v11182 = vadd.f32 0.0, %v11181
    %v11183 = vpop.f32.mrf.mxu0
    %11184 = vdwg.mxu0
    %11185 = vmatpush.bf16.msra.mxu0 %v11127
    %11186 = vmatpush.bf16.msra.mxu0 %v11125
    %11187 = vmatpush.bf16.msra.mxu0 %v11123
    %11188 = vmatpush.bf16.msra.mxu0 %v11121
    %11189 = vmatpush.bf16.msra.mxu0 %v11119
    %11190 = vmatpush.bf16.msra.mxu0 %v11117
    %11191 = vmatpush.bf16.msra.mxu0 %v11115
    %11192 = vmatpush.bf16.msra.mxu0 %v11113
    %11193 = vmatmul.bf16.gmra.mxu0 %v10985
    %v11194 = vpop.f32.mrf.mxu0
    %v11195 = vadd.f32 %v11182, %v11194
    %v11196 = vpop.f32.mrf.mxu0
    %11197 = vdwg.mxu0
    %11198 = vmatpush.bf16.msra.mxu0 0
    %11199 = vmatpush.bf16.msra.mxu0 0
    %11200 = vmatpush.bf16.msra.mxu0 0
    %11201 = vmatpush.bf16.msra.mxu0 0
    %11202 = vmatpush.bf16.msra.mxu0 0
    %11203 = vmatpush.bf16.msra.mxu0 0
    %11204 = vmatpush.bf16.msra.mxu0 %v11131
    %11205 = vmatpush.bf16.msra.mxu0 %v11129
    %11206 = vmatmul.bf16.gmra.mxu0 %v11170
    %v11207 = vpop.f32.mrf.mxu0
    %v11208 = vadd.f32 %v11195, %v11207
    %v11209 = vpop.f32.mrf.mxu0
    %11210 = vdwg.mxu0
    %11211 = vmatpush.bf16.msra.mxu0 %v11112
    %11212 = vmatpush.bf16.msra.mxu0 %v11110
    %11213 = vmatpush.bf16.msra.mxu0 %v11108
    %11214 = vmatpush.bf16.msra.mxu0 %v11106
    %11215 = vmatpush.bf16.msra.mxu0 %v11104
    %11216 = vmatpush.bf16.msra.mxu0 %v11102
    %11217 = vmatpush.bf16.msra.mxu0 %v11100
    %11218 = vmatpush.bf16.msra.mxu0 %v11098
    %11219 = vmatmul.bf16.gmra.mxu0 %v10984
    %v11220 = vpop.f32.mrf.mxu0
    %v11221 = vadd.f32 0.0, %v11220
    %v11222 = vpop.f32.mrf.mxu0
    %11223 = vdwg.mxu0
    %11224 = vmatpush.bf16.msra.mxu0 %v11128
    %11225 = vmatpush.bf16.msra.mxu0 %v11126
    %11226 = vmatpush.bf16.msra.mxu0 %v11124
    %11227 = vmatpush.bf16.msra.mxu0 %v11122
    %11228 = vmatpush.bf16.msra.mxu0 %v11120
    %11229 = vmatpush.bf16.msra.mxu0 %v11118
    %11230 = vmatpush.bf16.msra.mxu0 %v11116
    %11231 = vmatpush.bf16.msra.mxu0 %v11114
    %11232 = vmatmul.bf16.gmra.mxu0 %v10985
    %v11233 = vpop.f32.mrf.mxu0
    %v11234 = vadd.f32 %v11221, %v11233
    %v11235 = vpop.f32.mrf.mxu0
    %11236 = vdwg.mxu0
    %11237 = vmatpush.bf16.msra.mxu0 0
    %11238 = vmatpush.bf16.msra.mxu0 0
    %11239 = vmatpush.bf16.msra.mxu0 0
    %11240 = vmatpush.bf16.msra.mxu0 0
    %11241 = vmatpush.bf16.msra.mxu0 0
    %11242 = vmatpush.bf16.msra.mxu0 0
    %11243 = vmatpush.bf16.msra.mxu0 %v11132
    %11244 = vmatpush.bf16.msra.mxu0 %v11130
    %11245 = vmatmul.bf16.gmra.mxu0 %v11170
    %v11246 = vpop.f32.mrf.mxu0
    %v11247 = vadd.f32 %v11234, %v11246
    %v11248 = vpop.f32.mrf.mxu0
    %11249 = vdwg.mxu0
    %v11250 = vadd.f32 %v10940, %v11208
    %v11251 = vadd.f32 %v10941, %v11247
    %v11252 = vld [vmem:[%s7] sm:$0x3]
    %v11254 = vperm.slane %v11252, 0
    %v11255 = vperm.slane %v11252, 1
    %v11258 = vadd.f32 %v11250, %v11254
    %v11259 = vadd.f32 %v11251, %v11255
    %v11260 = vmax.f32 %v11258, 0.0
    %v11261 = vmax.f32 %v11259, 0.0
    %v11262 = vpack.c.bf16 %v11260, %v11260
    %v11263 = vpack.c.bf16 %v11261, %v11261
    %v11264 = vld [vmem:[%s8] sm:$0xf]
    %v11265 = vld [vmem:[%s8 + $0x4] sm:$0xf]
    %v11266 = vld [vmem:[%s8 + $0x8] sm:$0xf]
    %v11267 = vld [vmem:[%s8 + $0xc] sm:$0xf]
    %v11268 = vld [vmem:[%s8 + $0x10] sm:$0xf]
    %v11269 = vld [vmem:[%s8 + $0x14] sm:$0xf]
    %v11270 = vld [vmem:[%s8 + $0x18] sm:$0xf]
    %v11271 = vld [vmem:[%s8 + $0x1c] sm:$0xf]
    %v11272 = vld [vmem:[%s8 + $0x20] sm:$0xf]
    %v11273 = vld [vmem:[%s8 + $0x24] sm:$0xf]
    %v11274 = vld [vmem:[%s8 + $0x28] sm:$0xf]
    %v11275 = vld [vmem:[%s8 + $0x2c] sm:$0xf]
    %v11276 = vld [vmem:[%s8 + $0x30] sm:$0xf]
    %v11277 = vld [vmem:[%s8 + $0x34] sm:$0xf]
    %v11278 = vld [vmem:[%s8 + $0x38] sm:$0xf]
    %v11279 = vld [vmem:[%s8 + $0x3c] sm:$0xf]
    %v11280 = vld [vmem:[%s8 + $0x40] sm:$0xf]
    %v11281 = vld [vmem:[%s8 + $0x44] sm:$0xf]
    %v11282 = vld [vmem:[%s8 + $0x48] sm:$0xf]
    %v11283 = vld [vmem:[%s8 + $0x4c] sm:$0xf]
    %v11284 = vld [vmem:[%s8 + $0x50] sm:$0xf]
    %v11285 = vld [vmem:[%s8 + $0x54] sm:$0xf]
    %v11286 = vld [vmem:[%s8 + $0x58] sm:$0xf]
    %v11287 = vld [vmem:[%s8 + $0x5c] sm:$0xf]
    %v11288 = vld [vmem:[%s8 + $0x60] sm:$0xf]
    %v11289 = vld [vmem:[%s8 + $0x64] sm:$0xf]
    %v11290 = vld [vmem:[%s8 + $0x68] sm:$0xf]
    %v11291 = vld [vmem:[%s8 + $0x6c] sm:$0xf]
    %v11292 = vld [vmem:[%s8 + $0x70] sm:$0xf]
    %v11293 = vld [vmem:[%s8 + $0x74] sm:$0xf]
    %v11294 = vld [vmem:[%s8 + $0x78] sm:$0xf]
    %v11295 = vld [vmem:[%s8 + $0x7c] sm:$0xf]
    %v11296 = vld [vmem:[%s9] sm:$0x1]
    %v11298 = vperm.slane %v11296, 0
    %v11332 = vunpack.c.l.b16 %v11264
    %v11333 = vunpack.c.l.b16 %v11265
    %v11334 = vunpack.c.l.b16 %v11266
    %v11335 = vunpack.c.l.b16 %v11267
    %v11336 = vunpack.c.l.b16 %v11268
    %v11337 = vunpack.c.l.b16 %v11269
    %v11338 = vunpack.c.l.b16 %v11270
    %v11339 = vunpack.c.l.b16 %v11271
    %v11340 = vunpack.c.l.b16 %v11272
    %v11341 = vunpack.c.l.b16 %v11273
    %v11342 = vunpack.c.l.b16 %v11274
    %v11343 = vunpack.c.l.b16 %v11275
    %v11344 = vunpack.c.l.b16 %v11276
    %v11345 = vunpack.c.l.b16 %v11277
    %v11346 = vunpack.c.l.b16 %v11278
    %v11347 = vunpack.c.l.b16 %v11279
    %v11348 = vunpack.c.l.b16 %v11280
    %v11349 = vunpack.c.l.b16 %v11281
    %v11350 = vunpack.c.l.b16 %v11282
    %v11351 = vunpack.c.l.b16 %v11283
    %v11352 = vunpack.c.l.b16 %v11284
    %v11353 = vunpack.c.l.b16 %v11285
    %v11354 = vunpack.c.l.b16 %v11286
    %v11355 = vunpack.c.l.b16 %v11287
    %v11356 = vunpack.c.l.b16 %v11288
    %v11357 = vunpack.c.l.b16 %v11289
    %v11358 = vunpack.c.l.b16 %v11290
    %v11359 = vunpack.c.l.b16 %v11291
    %v11360 = vunpack.c.l.b16 %v11292
    %v11361 = vunpack.c.l.b16 %v11293
    %v11362 = vunpack.c.l.b16 %v11294
    %v11363 = vunpack.c.l.b16 %v11295
    %v11364 = vpack.c.b16 %v11333, %v11332
    %v11365 = vpack.c.b16 %v11335, %v11334
    %v11366 = vpack.c.b16 %v11337, %v11336
    %v11367 = vpack.c.b16 %v11339, %v11338
    %v11368 = vpack.c.b16 %v11341, %v11340
    %v11369 = vpack.c.b16 %v11343, %v11342
    %v11370 = vpack.c.b16 %v11345, %v11344
    %v11371 = vpack.c.b16 %v11347, %v11346
    %v11372 = vpack.c.b16 %v11349, %v11348
    %v11373 = vpack.c.b16 %v11351, %v11350
    %v11374 = vpack.c.b16 %v11353, %v11352
    %v11375 = vpack.c.b16 %v11355, %v11354
    %v11376 = vpack.c.b16 %v11357, %v11356
    %v11377 = vpack.c.b16 %v11359, %v11358
    %v11378 = vpack.c.b16 %v11361, %v11360
    %v11379 = vpack.c.b16 %v11363, %v11362
    %11396 = vmatpush.bf16.msra.mxu0 %v11371
    %11397 = vmatpush.bf16.msra.mxu0 %v11370
    %11398 = vmatpush.bf16.msra.mxu0 %v11369
    %11399 = vmatpush.bf16.msra.mxu0 %v11368
    %11400 = vmatpush.bf16.msra.mxu0 %v11367
    %11401 = vmatpush.bf16.msra.mxu0 %v11366
    %11402 = vmatpush.bf16.msra.mxu0 %v11365
    %11403 = vmatpush.bf16.msra.mxu0 %v11364
    %11404 = vmatmul.bf16.gmra.mxu0 %v11262
    %v11405 = vpop.f32.mrf.mxu0
    %v11406 = vadd.f32 %v11298, %v11405
    %v11407 = vpop.f32.mrf.mxu0
    %11408 = vdwg.mxu0
    %11409 = vmatpush.bf16.msra.mxu0 %v11379
    %11410 = vmatpush.bf16.msra.mxu0 %v11378
    %11411 = vmatpush.bf16.msra.mxu0 %v11377
    %11412 = vmatpush.bf16.msra.mxu0 %v11376
    %11413 = vmatpush.bf16.msra.mxu0 %v11375
    %11414 = vmatpush.bf16.msra.mxu0 %v11374
    %11415 = vmatpush.bf16.msra.mxu0 %v11373
    %11416 = vmatpush.bf16.msra.mxu0 %v11372
    %11417 = vmatmul.bf16.gmra.mxu0 %v11263
    %v11418 = vpop.f32.mrf.mxu0
    %v11419 = vadd.f32 %v11406, %v11418
    %v11420 = vpop.f32.mrf.mxu0
    %11421 = vdwg.mxu0
    %11422 = vst [vmem:[#allocation2] sm:$0x3] %v11419
    // Predicated region
    $region42: #{forward.1} parent=1 // pred_check
      _
    $region43: #{forward.1} parent=1 // pred_check_branch
      %11424 = sbr.rel (0) target = $region45
    $region44: #{forward.1} parent=1 // pred_region
      %11426 = vsyncadd [#allocation3], 0
      %s11428 = sshll.u32 [#allocation2], 4
      %s11429 = int_to_ptr.vmem [resolvable:$true] %s11428
      %s11430 = sshll.u32 %s10, 4
      %s11431 = int_to_ptr.hbm [resolvable:$true] %s11430
      %11433 = dma.vmem_to_hbm [thread:$0]  %s11429, 32, %s11431, [#allocation3]
    $region45: #{forward.1} parent=1 // pred_fallthru
      _
    // Predicated region
    $region46: #{forward.1} parent=1 // pred_check
      _
    $region47: #{forward.1} parent=1 // pred_check_branch
      %11435 = sbr.rel (0) target = $region49
    $region48: #{forward.1} parent=1 // pred_region
      %11437 = dma.done [#allocation3], 32
    $region49: #{forward.1} parent=1 // pred_fallthru
      _
    %11438 = vsyncpa [#allocation3], 1

</llo_original>
